<compile_context>
chip_gen: v7x
topology: tpu7x:2x2x1
jax: 0.10.0
libtpu: 0.0.40
codegen_flags: <defaults>
</compile_context>

<pallas_src>
import functools
import math

import jax
import jax.numpy as jnp
from jax.experimental import pallas as pl
from jax.experimental.pallas import tpu as pltpu

D_MODEL = 32          # divisible by num_heads=8
NUM_HEADS = 8
D_FF = 2048           # hardcoded in DecoderLayer(d_model, d_feedforward=2048)
NUM_LAYERS = 2
LN_EPS = 1e-5         # PyTorch nn.LayerNorm default
FFN_CHUNK = 512       # MLP hidden-dim tile (review #4)


# ----------------------------- in-kernel helpers -----------------------------

def _layer_norm(x, g, b):
    """LayerNorm over last dim. x: [M, C] f32, g/b: [1, C] f32."""
    mean = jnp.mean(x, axis=-1, keepdims=True)
    c = x - mean
    var = jnp.mean(c * c, axis=-1, keepdims=True)
    return c * jax.lax.rsqrt(var + LN_EPS) * g + b


def _attn(xq, xk, xv, wqkv, bqkv, wo, bo, mask, *, heads, d_head, shared_qk):
    """Multi-head attention with fused projections and batch-fused scores.

    xq: [Mq, C] f32, xk/xv: [Mk, C] f32.
    wqkv: [C, 3C] bf16 (q block pre-scaled by head_dim**-0.5),
    bqkv: [1, 3C] f32 (q bias pre-scaled), wo: [C, C] bf16, bo: [1, C] f32.
    mask: [Mq, Mk] f32 additive mask (-1e9 on cross-batch blocks).
    """
    C = heads * d_head
    xq16 = xq.astype(jnp.bfloat16)
    if shared_qk:
        # q and k share the same input -> one [C, 2C] projection dot.
        qk = jnp.dot(xq16, wqkv[:, :2 * C],
                     preferred_element_type=jnp.float32) + bqkv[:, :2 * C]
        q, k = qk[:, :C], qk[:, C:]
    else:
        q = jnp.dot(xq16, wqkv[:, :C],
                    preferred_element_type=jnp.float32) + bqkv[:, :C]
        k = jnp.dot(xk.astype(jnp.bfloat16), wqkv[:, C:2 * C],
                    preferred_element_type=jnp.float32) + bqkv[:, C:2 * C]
    v = jnp.dot(xv.astype(jnp.bfloat16), wqkv[:, 2 * C:],
                preferred_element_type=jnp.float32) + bqkv[:, 2 * C:]

    q16 = q.astype(jnp.bfloat16)
    k16 = k.astype(jnp.bfloat16)
    v16 = v.astype(jnp.bfloat16)

    head_outs = []
    for h in range(heads):
        sl = slice(h * d_head, (h + 1) * d_head)
        # scores for ALL batches at once; cross-batch blocks masked out.
        s = jax.lax.dot_general(q16[:, sl], k16[:, sl],
                                (((1,), (1,)), ((), ())),
                                preferred_element_type=jnp.float32)   # [Mq, Mk]
        s = s + mask
        s = s - jnp.max(s, axis=-1, keepdims=True)
        p = jnp.exp(s)
        p = p / jnp.sum(p, axis=-1, keepdims=True)
        head_outs.append(jnp.dot(p.astype(jnp.bfloat16), v16[:, sl],
                                 preferred_element_type=jnp.float32))  # [Mq, DH]

    # lane-concat the heads (XLU — free slot) and do one dense output projection.
    o = jnp.concatenate(head_outs, axis=-1)                            # [Mq, C]
    return jnp.dot(o.astype(jnp.bfloat16), wo,
                   preferred_element_type=jnp.float32) + bo


def _mlp(t, w1_ref, b1_ref, w2t_ref, b2_ref, layer, *, d_ff, chunk):
    """MLP tiled over the hidden (D_FF) dimension; bf16 at the MXU boundary."""
    t16 = t.astype(jnp.bfloat16)
    acc = jnp.zeros(t.shape, jnp.float32)
    for fc in range(0, d_ff, chunk):
        w1c = w1_ref[layer, :, fc:fc + chunk]     # [C, chunk] bf16
        b1c = b1_ref[layer, :, fc:fc + chunk]     # [1, chunk] f32
        w2c = w2t_ref[layer, :, fc:fc + chunk]    # [C, chunk] bf16 (transposed w2)
        h = jnp.dot(t16, w1c, preferred_element_type=jnp.float32) + b1c
        h = jnp.maximum(h, 0.0)
        acc = acc + jax.lax.dot_general(h.astype(jnp.bfloat16), w2c,
                                        (((1,), (1,)), ((), ())),
                                        preferred_element_type=jnp.float32)
    return acc + b2_ref[layer]


# ----------------------------- fused decoder kernel -----------------------------

def _decoder_kernel(t_ref, qe_ref, x_ref, xpe_ref, mtt_ref, mtx_ref,
                    wqkv_t_ref, bqkv_t_ref, wo_t_ref, bo_t_ref,
                    wqkv_x_ref, bqkv_x_ref, wo_x_ref, bo_x_ref,
                    w1_ref, b1_ref, w2t_ref, b2_ref,
                    lng_ref, lnb_ref, fng_ref, fnb_ref,
                    out_ref,
                    *, num_layers, heads, d_head, d_ff, ffn_chunk):
    t = t_ref[...].astype(jnp.float32)         # [B*Nt, C]  carried state
    qe = qe_ref[...].astype(jnp.float32)       # [B*Nt, C]
    x = x_ref[...].astype(jnp.float32)         # [B*Nx, C]  (cross-attn values)
    xpe = xpe_ref[...].astype(jnp.float32)     # [B*Nx, C]  (x + pos-enc, keys)
    mtt = mtt_ref[...]                         # [B*Nt, B*Nt] additive block mask
    mtx = mtx_ref[...]                         # [B*Nt, B*Nx]
    fng = fng_ref[...]                         # [1, C]
    fnb = fnb_ref[...]                         # [1, C]

    for l in range(num_layers):                # L is small & static -> unroll
        # --- self attention over target tokens (attn_t) + residual + norm1 ---
        tq = t + qe
        a_t = _attn(tq, tq, t,
                    wqkv_t_ref[l], bqkv_t_ref[l], wo_t_ref[l], bo_t_ref[l],
                    mtt, heads=heads, d_head=d_head, shared_qk=True)
        t = _layer_norm(t + a_t, lng_ref[l, 0], lnb_ref[l, 0])

        # --- cross attention target <- memory (attn_x) + residual + norm2 ---
        tq = t + qe
        a_x = _attn(tq, xpe, x,
                    wqkv_x_ref[l], bqkv_x_ref[l], wo_x_ref[l], bo_x_ref[l],
                    mtx, heads=heads, d_head=d_head, shared_qk=False)
        t = _layer_norm(t + a_x, lng_ref[l, 1], lnb_ref[l, 1])

        # --- MLP (tiled over D_FF, bf16 at MXU) + residual + norm3 ---
        m = _mlp(t, w1_ref, b1_ref, w2t_ref, b2_ref, l,
                 d_ff=d_ff, chunk=ffn_chunk)
        t = _layer_norm(t + m, lng_ref[l, 2], lnb_ref[l, 2])

        # --- decoder-level shared final norm, stacked per layer ---
        out_ref[l] = _layer_norm(t, fng, fnb).astype(out_ref.dtype)


# ----------------------------- wrapper -----------------------------

def get_positional_encoding(x):
    # TODO(synk): get_positional_encoding is not defined in the provided source;
    # using the standard interleaved sinusoidal positional encoding over (seq, C).
    B, N, C = x.shape
    pos = jnp.arange(N, dtype=jnp.float32)[:, None]
    div = jnp.exp(jnp.arange(0, C, 2, dtype=jnp.float32) * (-math.log(10000.0) / C))
    pe = jnp.zeros((N, C), dtype=jnp.float32)
    pe = pe.at[:, 0::2].set(jnp.sin(pos * div))
    pe = pe.at[:, 1::2].set(jnp.cos(pos * div))
    return jnp.broadcast_to(pe[None], (B, N, C)).astype(x.dtype)


def _block_mask(batch, nq, nk):
    """Additive mask that blocks attention across different batch elements."""
    rq = jnp.repeat(jnp.arange(batch), nq)         # [batch*nq]
    rk = jnp.repeat(jnp.arange(batch), nk)         # [batch*nk]
    return jnp.where(rq[:, None] == rk[None, :], 0.0, -1e9).astype(jnp.float32)


def decoder_forward(packed, t, x, query_embed, *, num_heads=NUM_HEADS):
    B, Nt, C = t.shape
    Nx = x.shape[1]
    L = packed["w1"].shape[0]
    F = packed["w1"].shape[-1]
    H = num_heads
    DH = C // H
    chunk = FFN_CHUNK if F % FFN_CHUNK == 0 else F

    pe = get_positional_encoding(x)
    t2d = t.reshape(B * Nt, C).astype(jnp.float32)
    qe2d = query_embed.reshape(B * Nt, C).astype(jnp.float32)
    x2d = x.reshape(B * Nx, C).astype(jnp.float32)
    xpe2d = (x + pe).reshape(B * Nx, C).astype(jnp.float32)
    mask_tt = _block_mask(B, Nt, Nt)
    mask_tx = _block_mask(B, Nt, Nx)

    kernel = functools.partial(_decoder_kernel, num_layers=L, heads=H,
                               d_head=DH, d_ff=F, ffn_chunk=chunk)

    # No grid: the whole (tiny) problem runs in one kernel invocation with every
    # operand resident in VMEM (default full-array blocks).  See review item #8.
    out = pl.pallas_call(
        kernel,
        out_shape=jax.ShapeDtypeStruct((L, B * Nt, C), jnp.float32),
        compiler_params=pltpu.CompilerParams(vmem_limit_bytes=32 * 1024 * 1024),
    )(t2d, qe2d, x2d, xpe2d, mask_tt, mask_tx,
      packed["wqkv_t"], packed["bqkv_t"], packed["wo_t"], packed["bo_t"],
      packed["wqkv_x"], packed["bqkv_x"], packed["wo_x"], packed["bo_x"],
      packed["w1"], packed["b1"], packed["w2t"], packed["b2"],
      packed["lng"], packed["lnb"], packed["fng"], packed["fnb"])

    return out.reshape(L, B, Nt, C)


# ----------------------------- parameter init & packing -----------------------------

def init_linear(key, fan_in, fan_out):
    kw, kb = jax.random.split(key)
    bound = 1.0 / math.sqrt(fan_in)
    w = jax.random.uniform(kw, (fan_in, fan_out), jnp.float32, -bound, bound)
    b = jax.random.uniform(kb, (fan_out,), jnp.float32, -bound, bound)
    return w, b


def init_mha(key, dim):
    ks = jax.random.split(key, 4)
    wq, bq = init_linear(ks[0], dim, dim)
    wk, bk = init_linear(ks[1], dim, dim)
    wv, bv = init_linear(ks[2], dim, dim)
    wp, bp = init_linear(ks[3], dim, dim)
    return dict(wq=wq, bq=bq, wk=wk, bk=bk, wv=wv, bv=bv, wp=wp, bp=bp)


def init_layer(key, d_model, d_ff):
    ks = jax.random.split(key, 4)
    w1, b1 = init_linear(ks[2], d_model, d_ff)
    w2, b2 = init_linear(ks[3], d_ff, d_model)
    ln = lambda: (jnp.ones((d_model,), jnp.float32), jnp.zeros((d_model,), jnp.float32))
    return dict(attn_t=init_mha(ks[0], d_model),
                attn_x=init_mha(ks[1], d_model),
                mlp=dict(w1=w1, b1=b1, w2=w2, b2=b2),
                norm1=ln(), norm2=ln(), norm3=ln())


def init_decoder(key, d_model, d_ff, num_layers):
    ks = jax.random.split(key, num_layers)
    return dict(
        layers=[init_layer(ks[i], d_model, d_ff) for i in range(num_layers)],
        norm=(jnp.ones((d_model,), jnp.float32), jnp.zeros((d_model,), jnp.float32)),
    )


def pack_decoder_params(params, num_heads=NUM_HEADS):
    """Repack natural (PyTorch-layout) params into the lane-dense fused layout."""
    layers = params["layers"]
    C = layers[0]["attn_t"]["wq"].shape[0]
    DH = C // num_heads
    scale = DH ** -0.5

    def pack_mha(p):
        # fold the softmax scale into the q projection (free at pack time)
        wq = p["wq"] * scale
        bq = p["bq"] * scale
        wqkv = jnp.concatenate([wq, p["wk"], p["wv"]], axis=1)          # [C, 3C]
        bqkv = jnp.concatenate([bq, p["bk"], p["bv"]], axis=0).reshape(1, 3 * C)
        return (wqkv.astype(jnp.bfloat16),
                bqkv.astype(jnp.float32),
                p["wp"].astype(jnp.bfloat16),                           # [C, C]
                p["bp"].reshape(1, C).astype(jnp.float32))

    at = [pack_mha(lp["attn_t"]) for lp in layers]
    ax = [pack_mha(lp["attn_x"]) for lp in layers]

    return dict(
        wqkv_t=jnp.stack([a[0] for a in at]), bqkv_t=jnp.stack([a[1] for a in at]),
        wo_t=jnp.stack([a[2] for a in at]),   bo_t=jnp.stack([a[3] for a in at]),
        wqkv_x=jnp.stack([a[0] for a in ax]), bqkv_x=jnp.stack([a[1] for a in ax]),
        wo_x=jnp.stack([a[2] for a in ax]),   bo_x=jnp.stack([a[3] for a in ax]),
        # MLP weights stored bf16, w2 transposed so the lane dim is D_FF (dense).
        w1=jnp.stack([lp["mlp"]["w1"] for lp in layers]).astype(jnp.bfloat16),      # [L, C, F]
        b1=jnp.stack([lp["mlp"]["b1"].reshape(1, -1) for lp in layers]),            # [L, 1, F]
        w2t=jnp.stack([lp["mlp"]["w2"].T for lp in layers]).astype(jnp.bfloat16),   # [L, C, F]
        b2=jnp.stack([lp["mlp"]["b2"].reshape(1, -1) for lp in layers]),            # [L, 1, C]
        lng=jnp.stack([jnp.stack([lp["norm1"][0], lp["norm2"][0], lp["norm3"][0]]
                                 ).reshape(3, 1, C) for lp in layers]),
        lnb=jnp.stack([jnp.stack([lp["norm1"][1], lp["norm2"][1], lp["norm3"][1]]
                                 ).reshape(3, 1, C) for lp in layers]),
        fng=params["norm"][0].reshape(1, C),
        fnb=params["norm"][1].reshape(1, C),
    )


# ----------------------------- main -----------------------------

if __name__ == "__main__":
    key = jax.random.PRNGKey(0)
    kp, kt, kx, kq = jax.random.split(key, 4)

    params = init_decoder(kp, D_MODEL, D_FF, NUM_LAYERS)
    packed = pack_decoder_params(params, NUM_HEADS)

    B, N_T, N_X = 2, 8, 16
    t = jax.random.normal(kt, (B, N_T, D_MODEL), jnp.float32)
    x = jax.random.normal(kx, (B, N_X, D_MODEL), jnp.float32)
    query_embed = jax.random.normal(kq, (B, N_T, D_MODEL), jnp.float32)

    fwd = jax.jit(functools.partial(decoder_forward, num_heads=NUM_HEADS))
    out = fwd(packed, t, x, query_embed)
    out = jax.block_until_ready(out)

    assert out.shape == (NUM_LAYERS, B, N_T, D_MODEL), out.shape
    assert bool(jnp.all(jnp.isfinite(out)))
    print("KERNEL_OK")
</pallas_src>

<mosaic_0001>
module attributes {stable_mosaic.version = 11 : i64} {
  func.func @_decoder_kernel(%arg0: memref<16x32xf32, #tpu.memory_space<vmem>>, %arg1: memref<16x32xf32, #tpu.memory_space<vmem>>, %arg2: memref<32x32xf32, #tpu.memory_space<vmem>>, %arg3: memref<32x32xf32, #tpu.memory_space<vmem>>, %arg4: memref<16x16xf32, #tpu.memory_space<vmem>>, %arg5: memref<16x32xf32, #tpu.memory_space<vmem>>, %arg6: memref<2x32x96xbf16, #tpu.memory_space<vmem>>, %arg7: memref<2x1x96xf32, #tpu.memory_space<vmem>>, %arg8: memref<2x32x32xbf16, #tpu.memory_space<vmem>>, %arg9: memref<2x1x32xf32, #tpu.memory_space<vmem>>, %arg10: memref<2x32x96xbf16, #tpu.memory_space<vmem>>, %arg11: memref<2x1x96xf32, #tpu.memory_space<vmem>>, %arg12: memref<2x32x32xbf16, #tpu.memory_space<vmem>>, %arg13: memref<2x1x32xf32, #tpu.memory_space<vmem>>, %arg14: memref<2x32x2048xbf16, #tpu.memory_space<vmem>>, %arg15: memref<2x1x2048xf32, #tpu.memory_space<vmem>>, %arg16: memref<2x32x2048xbf16, #tpu.memory_space<vmem>>, %arg17: memref<2x1x32xf32, #tpu.memory_space<vmem>>, %arg18: memref<2x3x1x32xf32, #tpu.memory_space<vmem>>, %arg19: memref<2x3x1x32xf32, #tpu.memory_space<vmem>>, %arg20: memref<1x32xf32, #tpu.memory_space<vmem>>, %arg21: memref<1x32xf32, #tpu.memory_space<vmem>>, %arg22: memref<2x16x32xf32, #tpu.memory_space<vmem>>) attributes {dimension_semantics = [], scalar_prefetch = 0 : i64, scratch_operands = 0 : i64, tpu.core_type = #tpu.core_type<tc>} {
    %c0 = arith.constant 0 : index
    %c0_0 = arith.constant 0 : index
    %0 = vector.load %arg0[%c0, %c0_0] : memref<16x32xf32, #tpu.memory_space<vmem>>, vector<16x32xf32>
    %c0_1 = arith.constant 0 : index
    %c0_2 = arith.constant 0 : index
    %1 = vector.load %arg1[%c0_1, %c0_2] : memref<16x32xf32, #tpu.memory_space<vmem>>, vector<16x32xf32>
    %c0_3 = arith.constant 0 : index
    %c0_4 = arith.constant 0 : index
    %2 = vector.load %arg2[%c0_3, %c0_4] : memref<32x32xf32, #tpu.memory_space<vmem>>, vector<32x32xf32>
    %c0_5 = arith.constant 0 : index
    %c0_6 = arith.constant 0 : index
    %3 = vector.load %arg3[%c0_5, %c0_6] : memref<32x32xf32, #tpu.memory_space<vmem>>, vector<32x32xf32>
    %c0_7 = arith.constant 0 : index
    %c0_8 = arith.constant 0 : index
    %4 = vector.load %arg4[%c0_7, %c0_8] : memref<16x16xf32, #tpu.memory_space<vmem>>, vector<16x16xf32>
    %c0_9 = arith.constant 0 : index
    %c0_10 = arith.constant 0 : index
    %5 = vector.load %arg5[%c0_9, %c0_10] : memref<16x32xf32, #tpu.memory_space<vmem>>, vector<16x32xf32>
    %c0_11 = arith.constant 0 : index
    %c0_12 = arith.constant 0 : index
    %6 = vector.load %arg20[%c0_11, %c0_12] : memref<1x32xf32, #tpu.memory_space<vmem>>, vector<1x32xf32>
    %c0_13 = arith.constant 0 : index
    %c0_14 = arith.constant 0 : index
    %7 = vector.load %arg21[%c0_13, %c0_14] : memref<1x32xf32, #tpu.memory_space<vmem>>, vector<1x32xf32>
    %8 = arith.addf %0, %1 : vector<16x32xf32>
    %c0_15 = arith.constant 0 : index
    %c0_16 = arith.constant 0 : index
    %c0_17 = arith.constant 0 : index
    %9 = vector.load %arg6[%c0_15, %c0_16, %c0_17] : memref<2x32x96xbf16, #tpu.memory_space<vmem>>, vector<1x32x96xbf16>
    %10 = vector.shape_cast %9 : vector<1x32x96xbf16> to vector<32x96xbf16>
    %c0_18 = arith.constant 0 : index
    %c0_19 = arith.constant 0 : index
    %c0_20 = arith.constant 0 : index
    %11 = vector.load %arg7[%c0_18, %c0_19, %c0_20] : memref<2x1x96xf32, #tpu.memory_space<vmem>>, vector<1x1x96xf32>
    %12 = vector.shape_cast %11 : vector<1x1x96xf32> to vector<1x96xf32>
    %c0_21 = arith.constant 0 : index
    %c0_22 = arith.constant 0 : index
    %c0_23 = arith.constant 0 : index
    %13 = vector.load %arg8[%c0_21, %c0_22, %c0_23] : memref<2x32x32xbf16, #tpu.memory_space<vmem>>, vector<1x32x32xbf16>
    %14 = vector.shape_cast %13 : vector<1x32x32xbf16> to vector<32x32xbf16>
    %c0_24 = arith.constant 0 : index
    %c0_25 = arith.constant 0 : index
    %c0_26 = arith.constant 0 : index
    %15 = vector.load %arg9[%c0_24, %c0_25, %c0_26] : memref<2x1x32xf32, #tpu.memory_space<vmem>>, vector<1x1x32xf32>
    %16 = vector.shape_cast %15 : vector<1x1x32xf32> to vector<1x32xf32>
    %17 = arith.truncf %8 : vector<16x32xf32> to vector<16x32xbf16>
    %18 = vector.extract_strided_slice %10 {offsets = [0, 0], sizes = [32, 64], strides = [1, 1]} : vector<32x96xbf16> to vector<32x64xbf16>
    %cst = arith.constant dense<0.000000e+00> : vector<16x64xf32>
    %19 = tpu.matmul %17, %18, %cst {dimension_numbers = #tpu.dot_dimension_numbers<[1], [0], [0], [1], [0, 0, 1, 1], [], []>} : vector<16x32xbf16>, vector<32x64xbf16>, vector<16x64xf32> -> vector<16x64xf32>
    %20 = vector.extract_strided_slice %12 {offsets = [0, 0], sizes = [1, 64], strides = [1, 1]} : vector<1x96xf32> to vector<1x64xf32>
    %21 = vector.broadcast %20 : vector<1x64xf32> to vector<16x64xf32>
    %22 = arith.addf %19, %21 : vector<16x64xf32>
    %23 = vector.extract_strided_slice %22 {offsets = [0, 0], sizes = [16, 32], strides = [1, 1]} : vector<16x64xf32> to vector<16x32xf32>
    %24 = vector.extract_strided_slice %22 {offsets = [0, 32], sizes = [16, 32], strides = [1, 1]} : vector<16x64xf32> to vector<16x32xf32>
    %25 = arith.truncf %0 : vector<16x32xf32> to vector<16x32xbf16>
    %26 = vector.extract_strided_slice %10 {offsets = [0, 64], sizes = [32, 32], strides = [1, 1]} : vector<32x96xbf16> to vector<32x32xbf16>
    %cst_27 = arith.constant dense<0.000000e+00> : vector<16x32xf32>
    %27 = tpu.matmul %25, %26, %cst_27 {dimension_numbers = #tpu.dot_dimension_numbers<[1], [0], [0], [1], [0, 0, 1, 1], [], []>} : vector<16x32xbf16>, vector<32x32xbf16>, vector<16x32xf32> -> vector<16x32xf32>
    %28 = vector.extract_strided_slice %12 {offsets = [0, 64], sizes = [1, 32], strides = [1, 1]} : vector<1x96xf32> to vector<1x32xf32>
    %29 = vector.broadcast %28 : vector<1x32xf32> to vector<16x32xf32>
    %30 = arith.addf %27, %29 : vector<16x32xf32>
    %31 = arith.truncf %23 : vector<16x32xf32> to vector<16x32xbf16>
    %32 = arith.truncf %24 : vector<16x32xf32> to vector<16x32xbf16>
    %33 = arith.truncf %30 : vector<16x32xf32> to vector<16x32xbf16>
    %34 = vector.extract_strided_slice %31 {offsets = [0, 0], sizes = [16, 4], strides = [1, 1]} : vector<16x32xbf16> to vector<16x4xbf16>
    %35 = vector.extract_strided_slice %32 {offsets = [0, 0], sizes = [16, 4], strides = [1, 1]} : vector<16x32xbf16> to vector<16x4xbf16>
    %cst_28 = arith.constant dense<0.000000e+00> : vector<16x16xf32>
    %36 = tpu.matmul %34, %35, %cst_28 {dimension_numbers = #tpu.dot_dimension_numbers<[1], [1], [0], [0], [0, 0, 1, 0], [], []>} : vector<16x4xbf16>, vector<16x4xbf16>, vector<16x16xf32> -> vector<16x16xf32>
    %37 = arith.addf %36, %4 : vector<16x16xf32>
    %cst_29 = arith.constant dense<0xFF800000> : vector<16xf32>
    %38 = vector.multi_reduction <maximumf>, %37, %cst_29 [1] : vector<16x16xf32> to vector<16xf32>
    %39 = vector.shape_cast %38 : vector<16xf32> to vector<16x1xf32>
    %40 = vector.broadcast %39 : vector<16x1xf32> to vector<16x16xf32>
    %41 = arith.subf %37, %40 : vector<16x16xf32>
    %42 = math.exp %41 : vector<16x16xf32>
    %cst_30 = arith.constant dense<0.000000e+00> : vector<16xf32>
    %43 = vector.multi_reduction <add>, %42, %cst_30 [1] : vector<16x16xf32> to vector<16xf32>
    %44 = vector.shape_cast %43 : vector<16xf32> to vector<16x1xf32>
    %45 = vector.broadcast %44 : vector<16x1xf32> to vector<16x16xf32>
    %46 = arith.divf %42, %45 : vector<16x16xf32>
    %47 = arith.truncf %46 : vector<16x16xf32> to vector<16x16xbf16>
    %48 = vector.extract_strided_slice %33 {offsets = [0, 0], sizes = [16, 4], strides = [1, 1]} : vector<16x32xbf16> to vector<16x4xbf16>
    %cst_31 = arith.constant dense<0.000000e+00> : vector<16x4xf32>
    %49 = tpu.matmul %47, %48, %cst_31 {dimension_numbers = #tpu.dot_dimension_numbers<[1], [0], [0], [1], [0, 0, 1, 1], [], []>} : vector<16x16xbf16>, vector<16x4xbf16>, vector<16x4xf32> -> vector<16x4xf32>
    %50 = vector.extract_strided_slice %31 {offsets = [0, 4], sizes = [16, 4], strides = [1, 1]} : vector<16x32xbf16> to vector<16x4xbf16>
    %51 = vector.extract_strided_slice %32 {offsets = [0, 4], sizes = [16, 4], strides = [1, 1]} : vector<16x32xbf16> to vector<16x4xbf16>
    %cst_32 = arith.constant dense<0.000000e+00> : vector<16x16xf32>
    %52 = tpu.matmul %50, %51, %cst_32 {dimension_numbers = #tpu.dot_dimension_numbers<[1], [1], [0], [0], [0, 0, 1, 0], [], []>} : vector<16x4xbf16>, vector<16x4xbf16>, vector<16x16xf32> -> vector<16x16xf32>
    %53 = arith.addf %52, %4 : vector<16x16xf32>
    %cst_33 = arith.constant dense<0xFF800000> : vector<16xf32>
    %54 = vector.multi_reduction <maximumf>, %53, %cst_33 [1] : vector<16x16xf32> to vector<16xf32>
    %55 = vector.shape_cast %54 : vector<16xf32> to vector<16x1xf32>
    %56 = vector.broadcast %55 : vector<16x1xf32> to vector<16x16xf32>
    %57 = arith.subf %53, %56 : vector<16x16xf32>
    %58 = math.exp %57 : vector<16x16xf32>
    %cst_34 = arith.constant dense<0.000000e+00> : vector<16xf32>
    %59 = vector.multi_reduction <add>, %58, %cst_34 [1] : vector<16x16xf32> to vector<16xf32>
    %60 = vector.shape_cast %59 : vector<16xf32> to vector<16x1xf32>
    %61 = vector.broadcast %60 : vector<16x1xf32> to vector<16x16xf32>
    %62 = arith.divf %58, %61 : vector<16x16xf32>
    %63 = arith.truncf %62 : vector<16x16xf32> to vector<16x16xbf16>
    %64 = vector.extract_strided_slice %33 {offsets = [0, 4], sizes = [16, 4], strides = [1, 1]} : vector<16x32xbf16> to vector<16x4xbf16>
    %cst_35 = arith.constant dense<0.000000e+00> : vector<16x4xf32>
    %65 = tpu.matmul %63, %64, %cst_35 {dimension_numbers = #tpu.dot_dimension_numbers<[1], [0], [0], [1], [0, 0, 1, 1], [], []>} : vector<16x16xbf16>, vector<16x4xbf16>, vector<16x4xf32> -> vector<16x4xf32>
    %66 = vector.extract_strided_slice %31 {offsets = [0, 8], sizes = [16, 4], strides = [1, 1]} : vector<16x32xbf16> to vector<16x4xbf16>
    %67 = vector.extract_strided_slice %32 {offsets = [0, 8], sizes = [16, 4], strides = [1, 1]} : vector<16x32xbf16> to vector<16x4xbf16>
    %cst_36 = arith.constant dense<0.000000e+00> : vector<16x16xf32>
    %68 = tpu.matmul %66, %67, %cst_36 {dimension_numbers = #tpu.dot_dimension_numbers<[1], [1], [0], [0], [0, 0, 1, 0], [], []>} : vector<16x4xbf16>, vector<16x4xbf16>, vector<16x16xf32> -> vector<16x16xf32>
    %69 = arith.addf %68, %4 : vector<16x16xf32>
    %cst_37 = arith.constant dense<0xFF800000> : vector<16xf32>
    %70 = vector.multi_reduction <maximumf>, %69, %cst_37 [1] : vector<16x16xf32> to vector<16xf32>
    %71 = vector.shape_cast %70 : vector<16xf32> to vector<16x1xf32>
    %72 = vector.broadcast %71 : vector<16x1xf32> to vector<16x16xf32>
    %73 = arith.subf %69, %72 : vector<16x16xf32>
    %74 = math.exp %73 : vector<16x16xf32>
    %cst_38 = arith.constant dense<0.000000e+00> : vector<16xf32>
    %75 = vector.multi_reduction <add>, %74, %cst_38 [1] : vector<16x16xf32> to vector<16xf32>
    %76 = vector.shape_cast %75 : vector<16xf32> to vector<16x1xf32>
    %77 = vector.broadcast %76 : vector<16x1xf32> to vector<16x16xf32>
    %78 = arith.divf %74, %77 : vector<16x16xf32>
    %79 = arith.truncf %78 : vector<16x16xf32> to vector<16x16xbf16>
    %80 = vector.extract_strided_slice %33 {offsets = [0, 8], sizes = [16, 4], strides = [1, 1]} : vector<16x32xbf16> to vector<16x4xbf16>
    %cst_39 = arith.constant dense<0.000000e+00> : vector<16x4xf32>
    %81 = tpu.matmul %79, %80, %cst_39 {dimension_numbers = #tpu.dot_dimension_numbers<[1], [0], [0], [1], [0, 0, 1, 1], [], []>} : vector<16x16xbf16>, vector<16x4xbf16>, vector<16x4xf32> -> vector<16x4xf32>
    %82 = vector.extract_strided_slice %31 {offsets = [0, 12], sizes = [16, 4], strides = [1, 1]} : vector<16x32xbf16> to vector<16x4xbf16>
    %83 = vector.extract_strided_slice %32 {offsets = [0, 12], sizes = [16, 4], strides = [1, 1]} : vector<16x32xbf16> to vector<16x4xbf16>
    %cst_40 = arith.constant dense<0.000000e+00> : vector<16x16xf32>
    %84 = tpu.matmul %82, %83, %cst_40 {dimension_numbers = #tpu.dot_dimension_numbers<[1], [1], [0], [0], [0, 0, 1, 0], [], []>} : vector<16x4xbf16>, vector<16x4xbf16>, vector<16x16xf32> -> vector<16x16xf32>
    %85 = arith.addf %84, %4 : vector<16x16xf32>
    %cst_41 = arith.constant dense<0xFF800000> : vector<16xf32>
    %86 = vector.multi_reduction <maximumf>, %85, %cst_41 [1] : vector<16x16xf32> to vector<16xf32>
    %87 = vector.shape_cast %86 : vector<16xf32> to vector<16x1xf32>
    %88 = vector.broadcast %87 : vector<16x1xf32> to vector<16x16xf32>
    %89 = arith.subf %85, %88 : vector<16x16xf32>
    %90 = math.exp %89 : vector<16x16xf32>
    %cst_42 = arith.constant dense<0.000000e+00> : vector<16xf32>
    %91 = vector.multi_reduction <add>, %90, %cst_42 [1] : vector<16x16xf32> to vector<16xf32>
    %92 = vector.shape_cast %91 : vector<16xf32> to vector<16x1xf32>
    %93 = vector.broadcast %92 : vector<16x1xf32> to vector<16x16xf32>
    %94 = arith.divf %90, %93 : vector<16x16xf32>
    %95 = arith.truncf %94 : vector<16x16xf32> to vector<16x16xbf16>
    %96 = vector.extract_strided_slice %33 {offsets = [0, 12], sizes = [16, 4], strides = [1, 1]} : vector<16x32xbf16> to vector<16x4xbf16>
    %cst_43 = arith.constant dense<0.000000e+00> : vector<16x4xf32>
    %97 = tpu.matmul %95, %96, %cst_43 {dimension_numbers = #tpu.dot_dimension_numbers<[1], [0], [0], [1], [0, 0, 1, 1], [], []>} : vector<16x16xbf16>, vector<16x4xbf16>, vector<16x4xf32> -> vector<16x4xf32>
    %98 = vector.extract_strided_slice %31 {offsets = [0, 16], sizes = [16, 4], strides = [1, 1]} : vector<16x32xbf16> to vector<16x4xbf16>
    %99 = vector.extract_strided_slice %32 {offsets = [0, 16], sizes = [16, 4], strides = [1, 1]} : vector<16x32xbf16> to vector<16x4xbf16>
    %cst_44 = arith.constant dense<0.000000e+00> : vector<16x16xf32>
    %100 = tpu.matmul %98, %99, %cst_44 {dimension_numbers = #tpu.dot_dimension_numbers<[1], [1], [0], [0], [0, 0, 1, 0], [], []>} : vector<16x4xbf16>, vector<16x4xbf16>, vector<16x16xf32> -> vector<16x16xf32>
    %101 = arith.addf %100, %4 : vector<16x16xf32>
    %cst_45 = arith.constant dense<0xFF800000> : vector<16xf32>
    %102 = vector.multi_reduction <maximumf>, %101, %cst_45 [1] : vector<16x16xf32> to vector<16xf32>
    %103 = vector.shape_cast %102 : vector<16xf32> to vector<16x1xf32>
    %104 = vector.broadcast %103 : vector<16x1xf32> to vector<16x16xf32>
    %105 = arith.subf %101, %104 : vector<16x16xf32>
    %106 = math.exp %105 : vector<16x16xf32>
    %cst_46 = arith.constant dense<0.000000e+00> : vector<16xf32>
    %107 = vector.multi_reduction <add>, %106, %cst_46 [1] : vector<16x16xf32> to vector<16xf32>
    %108 = vector.shape_cast %107 : vector<16xf32> to vector<16x1xf32>
    %109 = vector.broadcast %108 : vector<16x1xf32> to vector<16x16xf32>
    %110 = arith.divf %106, %109 : vector<16x16xf32>
    %111 = arith.truncf %110 : vector<16x16xf32> to vector<16x16xbf16>
    %112 = vector.extract_strided_slice %33 {offsets = [0, 16], sizes = [16, 4], strides = [1, 1]} : vector<16x32xbf16> to vector<16x4xbf16>
    %cst_47 = arith.constant dense<0.000000e+00> : vector<16x4xf32>
    %113 = tpu.matmul %111, %112, %cst_47 {dimension_numbers = #tpu.dot_dimension_numbers<[1], [0], [0], [1], [0, 0, 1, 1], [], []>} : vector<16x16xbf16>, vector<16x4xbf16>, vector<16x4xf32> -> vector<16x4xf32>
    %114 = vector.extract_strided_slice %31 {offsets = [0, 20], sizes = [16, 4], strides = [1, 1]} : vector<16x32xbf16> to vector<16x4xbf16>
    %115 = vector.extract_strided_slice %32 {offsets = [0, 20], sizes = [16, 4], strides = [1, 1]} : vector<16x32xbf16> to vector<16x4xbf16>
    %cst_48 = arith.constant dense<0.000000e+00> : vector<16x16xf32>
    %116 = tpu.matmul %114, %115, %cst_48 {dimension_numbers = #tpu.dot_dimension_numbers<[1], [1], [0], [0], [0, 0, 1, 0], [], []>} : vector<16x4xbf16>, vector<16x4xbf16>, vector<16x16xf32> -> vector<16x16xf32>
    %117 = arith.addf %116, %4 : vector<16x16xf32>
    %cst_49 = arith.constant dense<0xFF800000> : vector<16xf32>
    %118 = vector.multi_reduction <maximumf>, %117, %cst_49 [1] : vector<16x16xf32> to vector<16xf32>
    %119 = vector.shape_cast %118 : vector<16xf32> to vector<16x1xf32>
    %120 = vector.broadcast %119 : vector<16x1xf32> to vector<16x16xf32>
    %121 = arith.subf %117, %120 : vector<16x16xf32>
    %122 = math.exp %121 : vector<16x16xf32>
    %cst_50 = arith.constant dense<0.000000e+00> : vector<16xf32>
    %123 = vector.multi_reduction <add>, %122, %cst_50 [1] : vector<16x16xf32> to vector<16xf32>
    %124 = vector.shape_cast %123 : vector<16xf32> to vector<16x1xf32>
    %125 = vector.broadcast %124 : vector<16x1xf32> to vector<16x16xf32>
    %126 = arith.divf %122, %125 : vector<16x16xf32>
    %127 = arith.truncf %126 : vector<16x16xf32> to vector<16x16xbf16>
    %128 = vector.extract_strided_slice %33 {offsets = [0, 20], sizes = [16, 4], strides = [1, 1]} : vector<16x32xbf16> to vector<16x4xbf16>
    %cst_51 = arith.constant dense<0.000000e+00> : vector<16x4xf32>
    %129 = tpu.matmul %127, %128, %cst_51 {dimension_numbers = #tpu.dot_dimension_numbers<[1], [0], [0], [1], [0, 0, 1, 1], [], []>} : vector<16x16xbf16>, vector<16x4xbf16>, vector<16x4xf32> -> vector<16x4xf32>
    %130 = vector.extract_strided_slice %31 {offsets = [0, 24], sizes = [16, 4], strides = [1, 1]} : vector<16x32xbf16> to vector<16x4xbf16>
    %131 = vector.extract_strided_slice %32 {offsets = [0, 24], sizes = [16, 4], strides = [1, 1]} : vector<16x32xbf16> to vector<16x4xbf16>
    %cst_52 = arith.constant dense<0.000000e+00> : vector<16x16xf32>
    %132 = tpu.matmul %130, %131, %cst_52 {dimension_numbers = #tpu.dot_dimension_numbers<[1], [1], [0], [0], [0, 0, 1, 0], [], []>} : vector<16x4xbf16>, vector<16x4xbf16>, vector<16x16xf32> -> vector<16x16xf32>
    %133 = arith.addf %132, %4 : vector<16x16xf32>
    %cst_53 = arith.constant dense<0xFF800000> : vector<16xf32>
    %134 = vector.multi_reduction <maximumf>, %133, %cst_53 [1] : vector<16x16xf32> to vector<16xf32>
    %135 = vector.shape_cast %134 : vector<16xf32> to vector<16x1xf32>
    %136 = vector.broadcast %135 : vector<16x1xf32> to vector<16x16xf32>
    %137 = arith.subf %133, %136 : vector<16x16xf32>
    %138 = math.exp %137 : vector<16x16xf32>
    %cst_54 = arith.constant dense<0.000000e+00> : vector<16xf32>
    %139 = vector.multi_reduction <add>, %138, %cst_54 [1] : vector<16x16xf32> to vector<16xf32>
    %140 = vector.shape_cast %139 : vector<16xf32> to vector<16x1xf32>
    %141 = vector.broadcast %140 : vector<16x1xf32> to vector<16x16xf32>
    %142 = arith.divf %138, %141 : vector<16x16xf32>
    %143 = arith.truncf %142 : vector<16x16xf32> to vector<16x16xbf16>
    %144 = vector.extract_strided_slice %33 {offsets = [0, 24], sizes = [16, 4], strides = [1, 1]} : vector<16x32xbf16> to vector<16x4xbf16>
    %cst_55 = arith.constant dense<0.000000e+00> : vector<16x4xf32>
    %145 = tpu.matmul %143, %144, %cst_55 {dimension_numbers = #tpu.dot_dimension_numbers<[1], [0], [0], [1], [0, 0, 1, 1], [], []>} : vector<16x16xbf16>, vector<16x4xbf16>, vector<16x4xf32> -> vector<16x4xf32>
    %146 = vector.extract_strided_slice %31 {offsets = [0, 28], sizes = [16, 4], strides = [1, 1]} : vector<16x32xbf16> to vector<16x4xbf16>
    %147 = vector.extract_strided_slice %32 {offsets = [0, 28], sizes = [16, 4], strides = [1, 1]} : vector<16x32xbf16> to vector<16x4xbf16>
    %cst_56 = arith.constant dense<0.000000e+00> : vector<16x16xf32>
    %148 = tpu.matmul %146, %147, %cst_56 {dimension_numbers = #tpu.dot_dimension_numbers<[1], [1], [0], [0], [0, 0, 1, 0], [], []>} : vector<16x4xbf16>, vector<16x4xbf16>, vector<16x16xf32> -> vector<16x16xf32>
    %149 = arith.addf %148, %4 : vector<16x16xf32>
    %cst_57 = arith.constant dense<0xFF800000> : vector<16xf32>
    %150 = vector.multi_reduction <maximumf>, %149, %cst_57 [1] : vector<16x16xf32> to vector<16xf32>
    %151 = vector.shape_cast %150 : vector<16xf32> to vector<16x1xf32>
    %152 = vector.broadcast %151 : vector<16x1xf32> to vector<16x16xf32>
    %153 = arith.subf %149, %152 : vector<16x16xf32>
    %154 = math.exp %153 : vector<16x16xf32>
    %cst_58 = arith.constant dense<0.000000e+00> : vector<16xf32>
    %155 = vector.multi_reduction <add>, %154, %cst_58 [1] : vector<16x16xf32> to vector<16xf32>
    %156 = vector.shape_cast %155 : vector<16xf32> to vector<16x1xf32>
    %157 = vector.broadcast %156 : vector<16x1xf32> to vector<16x16xf32>
    %158 = arith.divf %154, %157 : vector<16x16xf32>
    %159 = arith.truncf %158 : vector<16x16xf32> to vector<16x16xbf16>
    %160 = vector.extract_strided_slice %33 {offsets = [0, 28], sizes = [16, 4], strides = [1, 1]} : vector<16x32xbf16> to vector<16x4xbf16>
    %cst_59 = arith.constant dense<0.000000e+00> : vector<16x4xf32>
    %161 = tpu.matmul %159, %160, %cst_59 {dimension_numbers = #tpu.dot_dimension_numbers<[1], [0], [0], [1], [0, 0, 1, 1], [], []>} : vector<16x16xbf16>, vector<16x4xbf16>, vector<16x4xf32> -> vector<16x4xf32>
    %162 = tpu.concatenate %49, %65, %81, %97, %113, %129, %145, %161 in 1 : vector<16x4xf32>, vector<16x4xf32>, vector<16x4xf32>, vector<16x4xf32>, vector<16x4xf32>, vector<16x4xf32>, vector<16x4xf32>, vector<16x4xf32> -> vector<16x32xf32>
    %163 = arith.truncf %162 : vector<16x32xf32> to vector<16x32xbf16>
    %cst_60 = arith.constant dense<0.000000e+00> : vector<16x32xf32>
    %164 = tpu.matmul %163, %14, %cst_60 {dimension_numbers = #tpu.dot_dimension_numbers<[1], [0], [0], [1], [0, 0, 1, 1], [], []>} : vector<16x32xbf16>, vector<32x32xbf16>, vector<16x32xf32> -> vector<16x32xf32>
    %165 = vector.broadcast %16 : vector<1x32xf32> to vector<16x32xf32>
    %166 = arith.addf %164, %165 : vector<16x32xf32>
    %167 = arith.addf %0, %166 : vector<16x32xf32>
    %c0_61 = arith.constant 0 : index
    %c0_62 = arith.constant 0 : index
    %c0_63 = arith.constant 0 : index
    %c0_64 = arith.constant 0 : index
    %168 = vector.load %arg18[%c0_61, %c0_62, %c0_63, %c0_64] : memref<2x3x1x32xf32, #tpu.memory_space<vmem>>, vector<1x1x1x32xf32>
    %169 = vector.shape_cast %168 : vector<1x1x1x32xf32> to vector<1x32xf32>
    %c0_65 = arith.constant 0 : index
    %c0_66 = arith.constant 0 : index
    %c0_67 = arith.constant 0 : index
    %c0_68 = arith.constant 0 : index
    %170 = vector.load %arg19[%c0_65, %c0_66, %c0_67, %c0_68] : memref<2x3x1x32xf32, #tpu.memory_space<vmem>>, vector<1x1x1x32xf32>
    %171 = vector.shape_cast %170 : vector<1x1x1x32xf32> to vector<1x32xf32>
    %cst_69 = arith.constant dense<0.000000e+00> : vector<16xf32>
    %172 = vector.multi_reduction <add>, %167, %cst_69 [1] : vector<16x32xf32> to vector<16xf32>
    %173 = vector.shape_cast %172 : vector<16xf32> to vector<16x1xf32>
    %cst_70 = arith.constant 3.200000e+01 : f32
    %174 = vector.broadcast %cst_70 : f32 to vector<16x1xf32>
    %175 = arith.divf %173, %174 : vector<16x1xf32>
    %176 = vector.broadcast %175 : vector<16x1xf32> to vector<16x32xf32>
    %177 = arith.subf %167, %176 : vector<16x32xf32>
    %178 = arith.mulf %177, %177 : vector<16x32xf32>
    %cst_71 = arith.constant dense<0.000000e+00> : vector<16xf32>
    %179 = vector.multi_reduction <add>, %178, %cst_71 [1] : vector<16x32xf32> to vector<16xf32>
    %180 = vector.shape_cast %179 : vector<16xf32> to vector<16x1xf32>
    %cst_72 = arith.constant 3.200000e+01 : f32
    %181 = vector.broadcast %cst_72 : f32 to vector<16x1xf32>
    %182 = arith.divf %180, %181 : vector<16x1xf32>
    %cst_73 = arith.constant 9.99999974E-6 : f32
    %183 = vector.broadcast %cst_73 : f32 to vector<16x1xf32>
    %184 = arith.addf %182, %183 : vector<16x1xf32>
    %185 = math.rsqrt %184 : vector<16x1xf32>
    %186 = vector.broadcast %185 : vector<16x1xf32> to vector<16x32xf32>
    %187 = arith.mulf %177, %186 : vector<16x32xf32>
    %188 = vector.broadcast %169 : vector<1x32xf32> to vector<16x32xf32>
    %189 = arith.mulf %187, %188 : vector<16x32xf32>
    %190 = vector.broadcast %171 : vector<1x32xf32> to vector<16x32xf32>
    %191 = arith.addf %189, %190 : vector<16x32xf32>
    %192 = arith.addf %191, %1 : vector<16x32xf32>
    %c0_74 = arith.constant 0 : index
    %c0_75 = arith.constant 0 : index
    %c0_76 = arith.constant 0 : index
    %193 = vector.load %arg10[%c0_74, %c0_75, %c0_76] : memref<2x32x96xbf16, #tpu.memory_space<vmem>>, vector<1x32x96xbf16>
    %194 = vector.shape_cast %193 : vector<1x32x96xbf16> to vector<32x96xbf16>
    %c0_77 = arith.constant 0 : index
    %c0_78 = arith.constant 0 : index
    %c0_79 = arith.constant 0 : index
    %195 = vector.load %arg11[%c0_77, %c0_78, %c0_79] : memref<2x1x96xf32, #tpu.memory_space<vmem>>, vector<1x1x96xf32>
    %196 = vector.shape_cast %195 : vector<1x1x96xf32> to vector<1x96xf32>
    %c0_80 = arith.constant 0 : index
    %c0_81 = arith.constant 0 : index
    %c0_82 = arith.constant 0 : index
    %197 = vector.load %arg12[%c0_80, %c0_81, %c0_82] : memref<2x32x32xbf16, #tpu.memory_space<vmem>>, vector<1x32x32xbf16>
    %198 = vector.shape_cast %197 : vector<1x32x32xbf16> to vector<32x32xbf16>
    %c0_83 = arith.constant 0 : index
    %c0_84 = arith.constant 0 : index
    %c0_85 = arith.constant 0 : index
    %199 = vector.load %arg13[%c0_83, %c0_84, %c0_85] : memref<2x1x32xf32, #tpu.memory_space<vmem>>, vector<1x1x32xf32>
    %200 = vector.shape_cast %199 : vector<1x1x32xf32> to vector<1x32xf32>
    %201 = arith.truncf %192 : vector<16x32xf32> to vector<16x32xbf16>
    %202 = vector.extract_strided_slice %194 {offsets = [0, 0], sizes = [32, 32], strides = [1, 1]} : vector<32x96xbf16> to vector<32x32xbf16>
    %cst_86 = arith.constant dense<0.000000e+00> : vector<16x32xf32>
    %203 = tpu.matmul %201, %202, %cst_86 {dimension_numbers = #tpu.dot_dimension_numbers<[1], [0], [0], [1], [0, 0, 1, 1], [], []>} : vector<16x32xbf16>, vector<32x32xbf16>, vector<16x32xf32> -> vector<16x32xf32>
    %204 = vector.extract_strided_slice %196 {offsets = [0, 0], sizes = [1, 32], strides = [1, 1]} : vector<1x96xf32> to vector<1x32xf32>
    %205 = vector.broadcast %204 : vector<1x32xf32> to vector<16x32xf32>
    %206 = arith.addf %203, %205 : vector<16x32xf32>
    %207 = arith.truncf %3 : vector<32x32xf32> to vector<32x32xbf16>
    %208 = vector.extract_strided_slice %194 {offsets = [0, 32], sizes = [32, 32], strides = [1, 1]} : vector<32x96xbf16> to vector<32x32xbf16>
    %cst_87 = arith.constant dense<0.000000e+00> : vector<32x32xf32>
    %209 = tpu.matmul %207, %208, %cst_87 {dimension_numbers = #tpu.dot_dimension_numbers<[1], [0], [0], [1], [0, 0, 1, 1], [], []>} : vector<32x32xbf16>, vector<32x32xbf16>, vector<32x32xf32> -> vector<32x32xf32>
    %210 = vector.extract_strided_slice %196 {offsets = [0, 32], sizes = [1, 32], strides = [1, 1]} : vector<1x96xf32> to vector<1x32xf32>
    %211 = vector.broadcast %210 : vector<1x32xf32> to vector<32x32xf32>
    %212 = arith.addf %209, %211 : vector<32x32xf32>
    %213 = arith.truncf %2 : vector<32x32xf32> to vector<32x32xbf16>
    %214 = vector.extract_strided_slice %194 {offsets = [0, 64], sizes = [32, 32], strides = [1, 1]} : vector<32x96xbf16> to vector<32x32xbf16>
    %cst_88 = arith.constant dense<0.000000e+00> : vector<32x32xf32>
    %215 = tpu.matmul %213, %214, %cst_88 {dimension_numbers = #tpu.dot_dimension_numbers<[1], [0], [0], [1], [0, 0, 1, 1], [], []>} : vector<32x32xbf16>, vector<32x32xbf16>, vector<32x32xf32> -> vector<32x32xf32>
    %216 = vector.extract_strided_slice %196 {offsets = [0, 64], sizes = [1, 32], strides = [1, 1]} : vector<1x96xf32> to vector<1x32xf32>
    %217 = vector.broadcast %216 : vector<1x32xf32> to vector<32x32xf32>
    %218 = arith.addf %215, %217 : vector<32x32xf32>
    %219 = arith.truncf %206 : vector<16x32xf32> to vector<16x32xbf16>
    %220 = arith.truncf %212 : vector<32x32xf32> to vector<32x32xbf16>
    %221 = arith.truncf %218 : vector<32x32xf32> to vector<32x32xbf16>
    %222 = vector.extract_strided_slice %219 {offsets = [0, 0], sizes = [16, 4], strides = [1, 1]} : vector<16x32xbf16> to vector<16x4xbf16>
    %223 = vector.extract_strided_slice %220 {offsets = [0, 0], sizes = [32, 4], strides = [1, 1]} : vector<32x32xbf16> to vector<32x4xbf16>
    %cst_89 = arith.constant dense<0.000000e+00> : vector<16x32xf32>
    %224 = tpu.matmul %222, %223, %cst_89 {dimension_numbers = #tpu.dot_dimension_numbers<[1], [1], [0], [0], [0, 0, 1, 0], [], []>} : vector<16x4xbf16>, vector<32x4xbf16>, vector<16x32xf32> -> vector<16x32xf32>
    %225 = arith.addf %224, %5 : vector<16x32xf32>
    %cst_90 = arith.constant dense<0xFF800000> : vector<16xf32>
    %226 = vector.multi_reduction <maximumf>, %225, %cst_90 [1] : vector<16x32xf32> to vector<16xf32>
    %227 = vector.shape_cast %226 : vector<16xf32> to vector<16x1xf32>
    %228 = vector.broadcast %227 : vector<16x1xf32> to vector<16x32xf32>
    %229 = arith.subf %225, %228 : vector<16x32xf32>
    %230 = math.exp %229 : vector<16x32xf32>
    %cst_91 = arith.constant dense<0.000000e+00> : vector<16xf32>
    %231 = vector.multi_reduction <add>, %230, %cst_91 [1] : vector<16x32xf32> to vector<16xf32>
    %232 = vector.shape_cast %231 : vector<16xf32> to vector<16x1xf32>
    %233 = vector.broadcast %232 : vector<16x1xf32> to vector<16x32xf32>
    %234 = arith.divf %230, %233 : vector<16x32xf32>
    %235 = arith.truncf %234 : vector<16x32xf32> to vector<16x32xbf16>
    %236 = vector.extract_strided_slice %221 {offsets = [0, 0], sizes = [32, 4], strides = [1, 1]} : vector<32x32xbf16> to vector<32x4xbf16>
    %cst_92 = arith.constant dense<0.000000e+00> : vector<16x4xf32>
    %237 = tpu.matmul %235, %236, %cst_92 {dimension_numbers = #tpu.dot_dimension_numbers<[1], [0], [0], [1], [0, 0, 1, 1], [], []>} : vector<16x32xbf16>, vector<32x4xbf16>, vector<16x4xf32> -> vector<16x4xf32>
    %238 = vector.extract_strided_slice %219 {offsets = [0, 4], sizes = [16, 4], strides = [1, 1]} : vector<16x32xbf16> to vector<16x4xbf16>
    %239 = vector.extract_strided_slice %220 {offsets = [0, 4], sizes = [32, 4], strides = [1, 1]} : vector<32x32xbf16> to vector<32x4xbf16>
    %cst_93 = arith.constant dense<0.000000e+00> : vector<16x32xf32>
    %240 = tpu.matmul %238, %239, %cst_93 {dimension_numbers = #tpu.dot_dimension_numbers<[1], [1], [0], [0], [0, 0, 1, 0], [], []>} : vector<16x4xbf16>, vector<32x4xbf16>, vector<16x32xf32> -> vector<16x32xf32>
    %241 = arith.addf %240, %5 : vector<16x32xf32>
    %cst_94 = arith.constant dense<0xFF800000> : vector<16xf32>
    %242 = vector.multi_reduction <maximumf>, %241, %cst_94 [1] : vector<16x32xf32> to vector<16xf32>
    %243 = vector.shape_cast %242 : vector<16xf32> to vector<16x1xf32>
    %244 = vector.broadcast %243 : vector<16x1xf32> to vector<16x32xf32>
    %245 = arith.subf %241, %244 : vector<16x32xf32>
    %246 = math.exp %245 : vector<16x32xf32>
    %cst_95 = arith.constant dense<0.000000e+00> : vector<16xf32>
    %247 = vector.multi_reduction <add>, %246, %cst_95 [1] : vector<16x32xf32> to vector<16xf32>
    %248 = vector.shape_cast %247 : vector<16xf32> to vector<16x1xf32>
    %249 = vector.broadcast %248 : vector<16x1xf32> to vector<16x32xf32>
    %250 = arith.divf %246, %249 : vector<16x32xf32>
    %251 = arith.truncf %250 : vector<16x32xf32> to vector<16x32xbf16>
    %252 = vector.extract_strided_slice %221 {offsets = [0, 4], sizes = [32, 4], strides = [1, 1]} : vector<32x32xbf16> to vector<32x4xbf16>
    %cst_96 = arith.constant dense<0.000000e+00> : vector<16x4xf32>
    %253 = tpu.matmul %251, %252, %cst_96 {dimension_numbers = #tpu.dot_dimension_numbers<[1], [0], [0], [1], [0, 0, 1, 1], [], []>} : vector<16x32xbf16>, vector<32x4xbf16>, vector<16x4xf32> -> vector<16x4xf32>
    %254 = vector.extract_strided_slice %219 {offsets = [0, 8], sizes = [16, 4], strides = [1, 1]} : vector<16x32xbf16> to vector<16x4xbf16>
    %255 = vector.extract_strided_slice %220 {offsets = [0, 8], sizes = [32, 4], strides = [1, 1]} : vector<32x32xbf16> to vector<32x4xbf16>
    %cst_97 = arith.constant dense<0.000000e+00> : vector<16x32xf32>
    %256 = tpu.matmul %254, %255, %cst_97 {dimension_numbers = #tpu.dot_dimension_numbers<[1], [1], [0], [0], [0, 0, 1, 0], [], []>} : vector<16x4xbf16>, vector<32x4xbf16>, vector<16x32xf32> -> vector<16x32xf32>
    %257 = arith.addf %256, %5 : vector<16x32xf32>
    %cst_98 = arith.constant dense<0xFF800000> : vector<16xf32>
    %258 = vector.multi_reduction <maximumf>, %257, %cst_98 [1] : vector<16x32xf32> to vector<16xf32>
    %259 = vector.shape_cast %258 : vector<16xf32> to vector<16x1xf32>
    %260 = vector.broadcast %259 : vector<16x1xf32> to vector<16x32xf32>
    %261 = arith.subf %257, %260 : vector<16x32xf32>
    %262 = math.exp %261 : vector<16x32xf32>
    %cst_99 = arith.constant dense<0.000000e+00> : vector<16xf32>
    %263 = vector.multi_reduction <add>, %262, %cst_99 [1] : vector<16x32xf32> to vector<16xf32>
    %264 = vector.shape_cast %263 : vector<16xf32> to vector<16x1xf32>
    %265 = vector.broadcast %264 : vector<16x1xf32> to vector<16x32xf32>
    %266 = arith.divf %262, %265 : vector<16x32xf32>
    %267 = arith.truncf %266 : vector<16x32xf32> to vector<16x32xbf16>
    %268 = vector.extract_strided_slice %221 {offsets = [0, 8], sizes = [32, 4], strides = [1, 1]} : vector<32x32xbf16> to vector<32x4xbf16>
    %cst_100 = arith.constant dense<0.000000e+00> : vector<16x4xf32>
    %269 = tpu.matmul %267, %268, %cst_100 {dimension_numbers = #tpu.dot_dimension_numbers<[1], [0], [0], [1], [0, 0, 1, 1], [], []>} : vector<16x32xbf16>, vector<32x4xbf16>, vector<16x4xf32> -> vector<16x4xf32>
    %270 = vector.extract_strided_slice %219 {offsets = [0, 12], sizes = [16, 4], strides = [1, 1]} : vector<16x32xbf16> to vector<16x4xbf16>
    %271 = vector.extract_strided_slice %220 {offsets = [0, 12], sizes = [32, 4], strides = [1, 1]} : vector<32x32xbf16> to vector<32x4xbf16>
    %cst_101 = arith.constant dense<0.000000e+00> : vector<16x32xf32>
    %272 = tpu.matmul %270, %271, %cst_101 {dimension_numbers = #tpu.dot_dimension_numbers<[1], [1], [0], [0], [0, 0, 1, 0], [], []>} : vector<16x4xbf16>, vector<32x4xbf16>, vector<16x32xf32> -> vector<16x32xf32>
    %273 = arith.addf %272, %5 : vector<16x32xf32>
    %cst_102 = arith.constant dense<0xFF800000> : vector<16xf32>
    %274 = vector.multi_reduction <maximumf>, %273, %cst_102 [1] : vector<16x32xf32> to vector<16xf32>
    %275 = vector.shape_cast %274 : vector<16xf32> to vector<16x1xf32>
    %276 = vector.broadcast %275 : vector<16x1xf32> to vector<16x32xf32>
    %277 = arith.subf %273, %276 : vector<16x32xf32>
    %278 = math.exp %277 : vector<16x32xf32>
    %cst_103 = arith.constant dense<0.000000e+00> : vector<16xf32>
    %279 = vector.multi_reduction <add>, %278, %cst_103 [1] : vector<16x32xf32> to vector<16xf32>
    %280 = vector.shape_cast %279 : vector<16xf32> to vector<16x1xf32>
    %281 = vector.broadcast %280 : vector<16x1xf32> to vector<16x32xf32>
    %282 = arith.divf %278, %281 : vector<16x32xf32>
    %283 = arith.truncf %282 : vector<16x32xf32> to vector<16x32xbf16>
    %284 = vector.extract_strided_slice %221 {offsets = [0, 12], sizes = [32, 4], strides = [1, 1]} : vector<32x32xbf16> to vector<32x4xbf16>
    %cst_104 = arith.constant dense<0.000000e+00> : vector<16x4xf32>
    %285 = tpu.matmul %283, %284, %cst_104 {dimension_numbers = #tpu.dot_dimension_numbers<[1], [0], [0], [1], [0, 0, 1, 1], [], []>} : vector<16x32xbf16>, vector<32x4xbf16>, vector<16x4xf32> -> vector<16x4xf32>
    %286 = vector.extract_strided_slice %219 {offsets = [0, 16], sizes = [16, 4], strides = [1, 1]} : vector<16x32xbf16> to vector<16x4xbf16>
    %287 = vector.extract_strided_slice %220 {offsets = [0, 16], sizes = [32, 4], strides = [1, 1]} : vector<32x32xbf16> to vector<32x4xbf16>
    %cst_105 = arith.constant dense<0.000000e+00> : vector<16x32xf32>
    %288 = tpu.matmul %286, %287, %cst_105 {dimension_numbers = #tpu.dot_dimension_numbers<[1], [1], [0], [0], [0, 0, 1, 0], [], []>} : vector<16x4xbf16>, vector<32x4xbf16>, vector<16x32xf32> -> vector<16x32xf32>
    %289 = arith.addf %288, %5 : vector<16x32xf32>
    %cst_106 = arith.constant dense<0xFF800000> : vector<16xf32>
    %290 = vector.multi_reduction <maximumf>, %289, %cst_106 [1] : vector<16x32xf32> to vector<16xf32>
    %291 = vector.shape_cast %290 : vector<16xf32> to vector<16x1xf32>
    %292 = vector.broadcast %291 : vector<16x1xf32> to vector<16x32xf32>
    %293 = arith.subf %289, %292 : vector<16x32xf32>
    %294 = math.exp %293 : vector<16x32xf32>
    %cst_107 = arith.constant dense<0.000000e+00> : vector<16xf32>
    %295 = vector.multi_reduction <add>, %294, %cst_107 [1] : vector<16x32xf32> to vector<16xf32>
    %296 = vector.shape_cast %295 : vector<16xf32> to vector<16x1xf32>
    %297 = vector.broadcast %296 : vector<16x1xf32> to vector<16x32xf32>
    %298 = arith.divf %294, %297 : vector<16x32xf32>
    %299 = arith.truncf %298 : vector<16x32xf32> to vector<16x32xbf16>
    %300 = vector.extract_strided_slice %221 {offsets = [0, 16], sizes = [32, 4], strides = [1, 1]} : vector<32x32xbf16> to vector<32x4xbf16>
    %cst_108 = arith.constant dense<0.000000e+00> : vector<16x4xf32>
    %301 = tpu.matmul %299, %300, %cst_108 {dimension_numbers = #tpu.dot_dimension_numbers<[1], [0], [0], [1], [0, 0, 1, 1], [], []>} : vector<16x32xbf16>, vector<32x4xbf16>, vector<16x4xf32> -> vector<16x4xf32>
    %302 = vector.extract_strided_slice %219 {offsets = [0, 20], sizes = [16, 4], strides = [1, 1]} : vector<16x32xbf16> to vector<16x4xbf16>
    %303 = vector.extract_strided_slice %220 {offsets = [0, 20], sizes = [32, 4], strides = [1, 1]} : vector<32x32xbf16> to vector<32x4xbf16>
    %cst_109 = arith.constant dense<0.000000e+00> : vector<16x32xf32>
    %304 = tpu.matmul %302, %303, %cst_109 {dimension_numbers = #tpu.dot_dimension_numbers<[1], [1], [0], [0], [0, 0, 1, 0], [], []>} : vector<16x4xbf16>, vector<32x4xbf16>, vector<16x32xf32> -> vector<16x32xf32>
    %305 = arith.addf %304, %5 : vector<16x32xf32>
    %cst_110 = arith.constant dense<0xFF800000> : vector<16xf32>
    %306 = vector.multi_reduction <maximumf>, %305, %cst_110 [1] : vector<16x32xf32> to vector<16xf32>
    %307 = vector.shape_cast %306 : vector<16xf32> to vector<16x1xf32>
    %308 = vector.broadcast %307 : vector<16x1xf32> to vector<16x32xf32>
    %309 = arith.subf %305, %308 : vector<16x32xf32>
    %310 = math.exp %309 : vector<16x32xf32>
    %cst_111 = arith.constant dense<0.000000e+00> : vector<16xf32>
    %311 = vector.multi_reduction <add>, %310, %cst_111 [1] : vector<16x32xf32> to vector<16xf32>
    %312 = vector.shape_cast %311 : vector<16xf32> to vector<16x1xf32>
    %313 = vector.broadcast %312 : vector<16x1xf32> to vector<16x32xf32>
    %314 = arith.divf %310, %313 : vector<16x32xf32>
    %315 = arith.truncf %314 : vector<16x32xf32> to vector<16x32xbf16>
    %316 = vector.extract_strided_slice %221 {offsets = [0, 20], sizes = [32, 4], strides = [1, 1]} : vector<32x32xbf16> to vector<32x4xbf16>
    %cst_112 = arith.constant dense<0.000000e+00> : vector<16x4xf32>
    %317 = tpu.matmul %315, %316, %cst_112 {dimension_numbers = #tpu.dot_dimension_numbers<[1], [0], [0], [1], [0, 0, 1, 1], [], []>} : vector<16x32xbf16>, vector<32x4xbf16>, vector<16x4xf32> -> vector<16x4xf32>
    %318 = vector.extract_strided_slice %219 {offsets = [0, 24], sizes = [16, 4], strides = [1, 1]} : vector<16x32xbf16> to vector<16x4xbf16>
    %319 = vector.extract_strided_slice %220 {offsets = [0, 24], sizes = [32, 4], strides = [1, 1]} : vector<32x32xbf16> to vector<32x4xbf16>
    %cst_113 = arith.constant dense<0.000000e+00> : vector<16x32xf32>
    %320 = tpu.matmul %318, %319, %cst_113 {dimension_numbers = #tpu.dot_dimension_numbers<[1], [1], [0], [0], [0, 0, 1, 0], [], []>} : vector<16x4xbf16>, vector<32x4xbf16>, vector<16x32xf32> -> vector<16x32xf32>
    %321 = arith.addf %320, %5 : vector<16x32xf32>
    %cst_114 = arith.constant dense<0xFF800000> : vector<16xf32>
    %322 = vector.multi_reduction <maximumf>, %321, %cst_114 [1] : vector<16x32xf32> to vector<16xf32>
    %323 = vector.shape_cast %322 : vector<16xf32> to vector<16x1xf32>
    %324 = vector.broadcast %323 : vector<16x1xf32> to vector<16x32xf32>
    %325 = arith.subf %321, %324 : vector<16x32xf32>
    %326 = math.exp %325 : vector<16x32xf32>
    %cst_115 = arith.constant dense<0.000000e+00> : vector<16xf32>
    %327 = vector.multi_reduction <add>, %326, %cst_115 [1] : vector<16x32xf32> to vector<16xf32>
    %328 = vector.shape_cast %327 : vector<16xf32> to vector<16x1xf32>
    %329 = vector.broadcast %328 : vector<16x1xf32> to vector<16x32xf32>
    %330 = arith.divf %326, %329 : vector<16x32xf32>
    %331 = arith.truncf %330 : vector<16x32xf32> to vector<16x32xbf16>
    %332 = vector.extract_strided_slice %221 {offsets = [0, 24], sizes = [32, 4], strides = [1, 1]} : vector<32x32xbf16> to vector<32x4xbf16>
    %cst_116 = arith.constant dense<0.000000e+00> : vector<16x4xf32>
    %333 = tpu.matmul %331, %332, %cst_116 {dimension_numbers = #tpu.dot_dimension_numbers<[1], [0], [0], [1], [0, 0, 1, 1], [], []>} : vector<16x32xbf16>, vector<32x4xbf16>, vector<16x4xf32> -> vector<16x4xf32>
    %334 = vector.extract_strided_slice %219 {offsets = [0, 28], sizes = [16, 4], strides = [1, 1]} : vector<16x32xbf16> to vector<16x4xbf16>
    %335 = vector.extract_strided_slice %220 {offsets = [0, 28], sizes = [32, 4], strides = [1, 1]} : vector<32x32xbf16> to vector<32x4xbf16>
    %cst_117 = arith.constant dense<0.000000e+00> : vector<16x32xf32>
    %336 = tpu.matmul %334, %335, %cst_117 {dimension_numbers = #tpu.dot_dimension_numbers<[1], [1], [0], [0], [0, 0, 1, 0], [], []>} : vector<16x4xbf16>, vector<32x4xbf16>, vector<16x32xf32> -> vector<16x32xf32>
    %337 = arith.addf %336, %5 : vector<16x32xf32>
    %cst_118 = arith.constant dense<0xFF800000> : vector<16xf32>
    %338 = vector.multi_reduction <maximumf>, %337, %cst_118 [1] : vector<16x32xf32> to vector<16xf32>
    %339 = vector.shape_cast %338 : vector<16xf32> to vector<16x1xf32>
    %340 = vector.broadcast %339 : vector<16x1xf32> to vector<16x32xf32>
    %341 = arith.subf %337, %340 : vector<16x32xf32>
    %342 = math.exp %341 : vector<16x32xf32>
    %cst_119 = arith.constant dense<0.000000e+00> : vector<16xf32>
    %343 = vector.multi_reduction <add>, %342, %cst_119 [1] : vector<16x32xf32> to vector<16xf32>
    %344 = vector.shape_cast %343 : vector<16xf32> to vector<16x1xf32>
    %345 = vector.broadcast %344 : vector<16x1xf32> to vector<16x32xf32>
    %346 = arith.divf %342, %345 : vector<16x32xf32>
    %347 = arith.truncf %346 : vector<16x32xf32> to vector<16x32xbf16>
    %348 = vector.extract_strided_slice %221 {offsets = [0, 28], sizes = [32, 4], strides = [1, 1]} : vector<32x32xbf16> to vector<32x4xbf16>
    %cst_120 = arith.constant dense<0.000000e+00> : vector<16x4xf32>
    %349 = tpu.matmul %347, %348, %cst_120 {dimension_numbers = #tpu.dot_dimension_numbers<[1], [0], [0], [1], [0, 0, 1, 1], [], []>} : vector<16x32xbf16>, vector<32x4xbf16>, vector<16x4xf32> -> vector<16x4xf32>
    %350 = tpu.concatenate %237, %253, %269, %285, %301, %317, %333, %349 in 1 : vector<16x4xf32>, vector<16x4xf32>, vector<16x4xf32>, vector<16x4xf32>, vector<16x4xf32>, vector<16x4xf32>, vector<16x4xf32>, vector<16x4xf32> -> vector<16x32xf32>
    %351 = arith.truncf %350 : vector<16x32xf32> to vector<16x32xbf16>
    %cst_121 = arith.constant dense<0.000000e+00> : vector<16x32xf32>
    %352 = tpu.matmul %351, %198, %cst_121 {dimension_numbers = #tpu.dot_dimension_numbers<[1], [0], [0], [1], [0, 0, 1, 1], [], []>} : vector<16x32xbf16>, vector<32x32xbf16>, vector<16x32xf32> -> vector<16x32xf32>
    %353 = vector.broadcast %200 : vector<1x32xf32> to vector<16x32xf32>
    %354 = arith.addf %352, %353 : vector<16x32xf32>
    %355 = arith.addf %191, %354 : vector<16x32xf32>
    %c0_122 = arith.constant 0 : index
    %c1 = arith.constant 1 : index
    %c0_123 = arith.constant 0 : index
    %c0_124 = arith.constant 0 : index
    %356 = vector.load %arg18[%c0_122, %c1, %c0_123, %c0_124] : memref<2x3x1x32xf32, #tpu.memory_space<vmem>>, vector<1x1x1x32xf32>
    %357 = vector.shape_cast %356 : vector<1x1x1x32xf32> to vector<1x32xf32>
    %c0_125 = arith.constant 0 : index
    %c1_126 = arith.constant 1 : index
    %c0_127 = arith.constant 0 : index
    %c0_128 = arith.constant 0 : index
    %358 = vector.load %arg19[%c0_125, %c1_126, %c0_127, %c0_128] : memref<2x3x1x32xf32, #tpu.memory_space<vmem>>, vector<1x1x1x32xf32>
    %359 = vector.shape_cast %358 : vector<1x1x1x32xf32> to vector<1x32xf32>
    %cst_129 = arith.constant dense<0.000000e+00> : vector<16xf32>
    %360 = vector.multi_reduction <add>, %355, %cst_129 [1] : vector<16x32xf32> to vector<16xf32>
    %361 = vector.shape_cast %360 : vector<16xf32> to vector<16x1xf32>
    %cst_130 = arith.constant 3.200000e+01 : f32
    %362 = vector.broadcast %cst_130 : f32 to vector<16x1xf32>
    %363 = arith.divf %361, %362 : vector<16x1xf32>
    %364 = vector.broadcast %363 : vector<16x1xf32> to vector<16x32xf32>
    %365 = arith.subf %355, %364 : vector<16x32xf32>
    %366 = arith.mulf %365, %365 : vector<16x32xf32>
    %cst_131 = arith.constant dense<0.000000e+00> : vector<16xf32>
    %367 = vector.multi_reduction <add>, %366, %cst_131 [1] : vector<16x32xf32> to vector<16xf32>
    %368 = vector.shape_cast %367 : vector<16xf32> to vector<16x1xf32>
    %cst_132 = arith.constant 3.200000e+01 : f32
    %369 = vector.broadcast %cst_132 : f32 to vector<16x1xf32>
    %370 = arith.divf %368, %369 : vector<16x1xf32>
    %cst_133 = arith.constant 9.99999974E-6 : f32
    %371 = vector.broadcast %cst_133 : f32 to vector<16x1xf32>
    %372 = arith.addf %370, %371 : vector<16x1xf32>
    %373 = math.rsqrt %372 : vector<16x1xf32>
    %374 = vector.broadcast %373 : vector<16x1xf32> to vector<16x32xf32>
    %375 = arith.mulf %365, %374 : vector<16x32xf32>
    %376 = vector.broadcast %357 : vector<1x32xf32> to vector<16x32xf32>
    %377 = arith.mulf %375, %376 : vector<16x32xf32>
    %378 = vector.broadcast %359 : vector<1x32xf32> to vector<16x32xf32>
    %379 = arith.addf %377, %378 : vector<16x32xf32>
    %380 = arith.truncf %379 : vector<16x32xf32> to vector<16x32xbf16>
    %cst_134 = arith.constant 0.000000e+00 : f32
    %381 = vector.broadcast %cst_134 : f32 to vector<16x32xf32>
    %c0_135 = arith.constant 0 : index
    %c0_136 = arith.constant 0 : index
    %c0_137 = arith.constant 0 : index
    %382 = vector.load %arg14[%c0_135, %c0_136, %c0_137] : memref<2x32x2048xbf16, #tpu.memory_space<vmem>>, vector<1x32x512xbf16>
    %383 = vector.shape_cast %382 : vector<1x32x512xbf16> to vector<32x512xbf16>
    %c0_138 = arith.constant 0 : index
    %c0_139 = arith.constant 0 : index
    %c0_140 = arith.constant 0 : index
    %384 = vector.load %arg15[%c0_138, %c0_139, %c0_140] : memref<2x1x2048xf32, #tpu.memory_space<vmem>>, vector<1x1x512xf32>
    %385 = vector.shape_cast %384 : vector<1x1x512xf32> to vector<1x512xf32>
    %c0_141 = arith.constant 0 : index
    %c0_142 = arith.constant 0 : index
    %c0_143 = arith.constant 0 : index
    %386 = vector.load %arg16[%c0_141, %c0_142, %c0_143] : memref<2x32x2048xbf16, #tpu.memory_space<vmem>>, vector<1x32x512xbf16>
    %387 = vector.shape_cast %386 : vector<1x32x512xbf16> to vector<32x512xbf16>
    %cst_144 = arith.constant dense<0.000000e+00> : vector<16x512xf32>
    %388 = tpu.matmul %380, %383, %cst_144 {dimension_numbers = #tpu.dot_dimension_numbers<[1], [0], [0], [1], [0, 0, 1, 1], [], []>} : vector<16x32xbf16>, vector<32x512xbf16>, vector<16x512xf32> -> vector<16x512xf32>
    %389 = vector.broadcast %385 : vector<1x512xf32> to vector<16x512xf32>
    %390 = arith.addf %388, %389 : vector<16x512xf32>
    %cst_145 = arith.constant 0.000000e+00 : f32
    %391 = vector.broadcast %cst_145 : f32 to vector<16x512xf32>
    %392 = arith.maximumf %390, %391 : vector<16x512xf32>
    %393 = arith.truncf %392 : vector<16x512xf32> to vector<16x512xbf16>
    %cst_146 = arith.constant dense<0.000000e+00> : vector<16x32xf32>
    %394 = tpu.matmul %393, %387, %cst_146 {dimension_numbers = #tpu.dot_dimension_numbers<[1], [1], [0], [0], [0, 0, 1, 0], [], []>} : vector<16x512xbf16>, vector<32x512xbf16>, vector<16x32xf32> -> vector<16x32xf32>
    %395 = arith.addf %381, %394 : vector<16x32xf32>
    %c0_147 = arith.constant 0 : index
    %c0_148 = arith.constant 0 : index
    %c512 = arith.constant 512 : index
    %396 = vector.load %arg14[%c0_147, %c0_148, %c512] : memref<2x32x2048xbf16, #tpu.memory_space<vmem>>, vector<1x32x512xbf16>
    %397 = vector.shape_cast %396 : vector<1x32x512xbf16> to vector<32x512xbf16>
    %c0_149 = arith.constant 0 : index
    %c0_150 = arith.constant 0 : index
    %c512_151 = arith.constant 512 : index
    %398 = vector.load %arg15[%c0_149, %c0_150, %c512_151] : memref<2x1x2048xf32, #tpu.memory_space<vmem>>, vector<1x1x512xf32>
    %399 = vector.shape_cast %398 : vector<1x1x512xf32> to vector<1x512xf32>
    %c0_152 = arith.constant 0 : index
    %c0_153 = arith.constant 0 : index
    %c512_154 = arith.constant 512 : index
    %400 = vector.load %arg16[%c0_152, %c0_153, %c512_154] : memref<2x32x2048xbf16, #tpu.memory_space<vmem>>, vector<1x32x512xbf16>
    %401 = vector.shape_cast %400 : vector<1x32x512xbf16> to vector<32x512xbf16>
    %cst_155 = arith.constant dense<0.000000e+00> : vector<16x512xf32>
    %402 = tpu.matmul %380, %397, %cst_155 {dimension_numbers = #tpu.dot_dimension_numbers<[1], [0], [0], [1], [0, 0, 1, 1], [], []>} : vector<16x32xbf16>, vector<32x512xbf16>, vector<16x512xf32> -> vector<16x512xf32>
    %403 = vector.broadcast %399 : vector<1x512xf32> to vector<16x512xf32>
    %404 = arith.addf %402, %403 : vector<16x512xf32>
    %cst_156 = arith.constant 0.000000e+00 : f32
    %405 = vector.broadcast %cst_156 : f32 to vector<16x512xf32>
    %406 = arith.maximumf %404, %405 : vector<16x512xf32>
    %407 = arith.truncf %406 : vector<16x512xf32> to vector<16x512xbf16>
    %cst_157 = arith.constant dense<0.000000e+00> : vector<16x32xf32>
    %408 = tpu.matmul %407, %401, %cst_157 {dimension_numbers = #tpu.dot_dimension_numbers<[1], [1], [0], [0], [0, 0, 1, 0], [], []>} : vector<16x512xbf16>, vector<32x512xbf16>, vector<16x32xf32> -> vector<16x32xf32>
    %409 = arith.addf %395, %408 : vector<16x32xf32>
    %c0_158 = arith.constant 0 : index
    %c0_159 = arith.constant 0 : index
    %c1024 = arith.constant 1024 : index
    %410 = vector.load %arg14[%c0_158, %c0_159, %c1024] : memref<2x32x2048xbf16, #tpu.memory_space<vmem>>, vector<1x32x512xbf16>
    %411 = vector.shape_cast %410 : vector<1x32x512xbf16> to vector<32x512xbf16>
    %c0_160 = arith.constant 0 : index
    %c0_161 = arith.constant 0 : index
    %c1024_162 = arith.constant 1024 : index
    %412 = vector.load %arg15[%c0_160, %c0_161, %c1024_162] : memref<2x1x2048xf32, #tpu.memory_space<vmem>>, vector<1x1x512xf32>
    %413 = vector.shape_cast %412 : vector<1x1x512xf32> to vector<1x512xf32>
    %c0_163 = arith.constant 0 : index
    %c0_164 = arith.constant 0 : index
    %c1024_165 = arith.constant 1024 : index
    %414 = vector.load %arg16[%c0_163, %c0_164, %c1024_165] : memref<2x32x2048xbf16, #tpu.memory_space<vmem>>, vector<1x32x512xbf16>
    %415 = vector.shape_cast %414 : vector<1x32x512xbf16> to vector<32x512xbf16>
    %cst_166 = arith.constant dense<0.000000e+00> : vector<16x512xf32>
    %416 = tpu.matmul %380, %411, %cst_166 {dimension_numbers = #tpu.dot_dimension_numbers<[1], [0], [0], [1], [0, 0, 1, 1], [], []>} : vector<16x32xbf16>, vector<32x512xbf16>, vector<16x512xf32> -> vector<16x512xf32>
    %417 = vector.broadcast %413 : vector<1x512xf32> to vector<16x512xf32>
    %418 = arith.addf %416, %417 : vector<16x512xf32>
    %cst_167 = arith.constant 0.000000e+00 : f32
    %419 = vector.broadcast %cst_167 : f32 to vector<16x512xf32>
    %420 = arith.maximumf %418, %419 : vector<16x512xf32>
    %421 = arith.truncf %420 : vector<16x512xf32> to vector<16x512xbf16>
    %cst_168 = arith.constant dense<0.000000e+00> : vector<16x32xf32>
    %422 = tpu.matmul %421, %415, %cst_168 {dimension_numbers = #tpu.dot_dimension_numbers<[1], [1], [0], [0], [0, 0, 1, 0], [], []>} : vector<16x512xbf16>, vector<32x512xbf16>, vector<16x32xf32> -> vector<16x32xf32>
    %423 = arith.addf %409, %422 : vector<16x32xf32>
    %c0_169 = arith.constant 0 : index
    %c0_170 = arith.constant 0 : index
    %c1536 = arith.constant 1536 : index
    %424 = vector.load %arg14[%c0_169, %c0_170, %c1536] : memref<2x32x2048xbf16, #tpu.memory_space<vmem>>, vector<1x32x512xbf16>
    %425 = vector.shape_cast %424 : vector<1x32x512xbf16> to vector<32x512xbf16>
    %c0_171 = arith.constant 0 : index
    %c0_172 = arith.constant 0 : index
    %c1536_173 = arith.constant 1536 : index
    %426 = vector.load %arg15[%c0_171, %c0_172, %c1536_173] : memref<2x1x2048xf32, #tpu.memory_space<vmem>>, vector<1x1x512xf32>
    %427 = vector.shape_cast %426 : vector<1x1x512xf32> to vector<1x512xf32>
    %c0_174 = arith.constant 0 : index
    %c0_175 = arith.constant 0 : index
    %c1536_176 = arith.constant 1536 : index
    %428 = vector.load %arg16[%c0_174, %c0_175, %c1536_176] : memref<2x32x2048xbf16, #tpu.memory_space<vmem>>, vector<1x32x512xbf16>
    %429 = vector.shape_cast %428 : vector<1x32x512xbf16> to vector<32x512xbf16>
    %cst_177 = arith.constant dense<0.000000e+00> : vector<16x512xf32>
    %430 = tpu.matmul %380, %425, %cst_177 {dimension_numbers = #tpu.dot_dimension_numbers<[1], [0], [0], [1], [0, 0, 1, 1], [], []>} : vector<16x32xbf16>, vector<32x512xbf16>, vector<16x512xf32> -> vector<16x512xf32>
    %431 = vector.broadcast %427 : vector<1x512xf32> to vector<16x512xf32>
    %432 = arith.addf %430, %431 : vector<16x512xf32>
    %cst_178 = arith.constant 0.000000e+00 : f32
    %433 = vector.broadcast %cst_178 : f32 to vector<16x512xf32>
    %434 = arith.maximumf %432, %433 : vector<16x512xf32>
    %435 = arith.truncf %434 : vector<16x512xf32> to vector<16x512xbf16>
    %cst_179 = arith.constant dense<0.000000e+00> : vector<16x32xf32>
    %436 = tpu.matmul %435, %429, %cst_179 {dimension_numbers = #tpu.dot_dimension_numbers<[1], [1], [0], [0], [0, 0, 1, 0], [], []>} : vector<16x512xbf16>, vector<32x512xbf16>, vector<16x32xf32> -> vector<16x32xf32>
    %437 = arith.addf %423, %436 : vector<16x32xf32>
    %c0_180 = arith.constant 0 : index
    %c0_181 = arith.constant 0 : index
    %c0_182 = arith.constant 0 : index
    %438 = vector.load %arg17[%c0_180, %c0_181, %c0_182] : memref<2x1x32xf32, #tpu.memory_space<vmem>>, vector<1x1x32xf32>
    %439 = vector.shape_cast %438 : vector<1x1x32xf32> to vector<1x32xf32>
    %440 = vector.broadcast %439 : vector<1x32xf32> to vector<16x32xf32>
    %441 = arith.addf %437, %440 : vector<16x32xf32>
    %442 = arith.addf %379, %441 : vector<16x32xf32>
    %c0_183 = arith.constant 0 : index
    %c2 = arith.constant 2 : index
    %c0_184 = arith.constant 0 : index
    %c0_185 = arith.constant 0 : index
    %443 = vector.load %arg18[%c0_183, %c2, %c0_184, %c0_185] : memref<2x3x1x32xf32, #tpu.memory_space<vmem>>, vector<1x1x1x32xf32>
    %444 = vector.shape_cast %443 : vector<1x1x1x32xf32> to vector<1x32xf32>
    %c0_186 = arith.constant 0 : index
    %c2_187 = arith.constant 2 : index
    %c0_188 = arith.constant 0 : index
    %c0_189 = arith.constant 0 : index
    %445 = vector.load %arg19[%c0_186, %c2_187, %c0_188, %c0_189] : memref<2x3x1x32xf32, #tpu.memory_space<vmem>>, vector<1x1x1x32xf32>
    %446 = vector.shape_cast %445 : vector<1x1x1x32xf32> to vector<1x32xf32>
    %cst_190 = arith.constant dense<0.000000e+00> : vector<16xf32>
    %447 = vector.multi_reduction <add>, %442, %cst_190 [1] : vector<16x32xf32> to vector<16xf32>
    %448 = vector.shape_cast %447 : vector<16xf32> to vector<16x1xf32>
    %cst_191 = arith.constant 3.200000e+01 : f32
    %449 = vector.broadcast %cst_191 : f32 to vector<16x1xf32>
    %450 = arith.divf %448, %449 : vector<16x1xf32>
    %451 = vector.broadcast %450 : vector<16x1xf32> to vector<16x32xf32>
    %452 = arith.subf %442, %451 : vector<16x32xf32>
    %453 = arith.mulf %452, %452 : vector<16x32xf32>
    %cst_192 = arith.constant dense<0.000000e+00> : vector<16xf32>
    %454 = vector.multi_reduction <add>, %453, %cst_192 [1] : vector<16x32xf32> to vector<16xf32>
    %455 = vector.shape_cast %454 : vector<16xf32> to vector<16x1xf32>
    %cst_193 = arith.constant 3.200000e+01 : f32
    %456 = vector.broadcast %cst_193 : f32 to vector<16x1xf32>
    %457 = arith.divf %455, %456 : vector<16x1xf32>
    %cst_194 = arith.constant 9.99999974E-6 : f32
    %458 = vector.broadcast %cst_194 : f32 to vector<16x1xf32>
    %459 = arith.addf %457, %458 : vector<16x1xf32>
    %460 = math.rsqrt %459 : vector<16x1xf32>
    %461 = vector.broadcast %460 : vector<16x1xf32> to vector<16x32xf32>
    %462 = arith.mulf %452, %461 : vector<16x32xf32>
    %463 = vector.broadcast %444 : vector<1x32xf32> to vector<16x32xf32>
    %464 = arith.mulf %462, %463 : vector<16x32xf32>
    %465 = vector.broadcast %446 : vector<1x32xf32> to vector<16x32xf32>
    %466 = arith.addf %464, %465 : vector<16x32xf32>
    %cst_195 = arith.constant dense<0.000000e+00> : vector<16xf32>
    %467 = vector.multi_reduction <add>, %466, %cst_195 [1] : vector<16x32xf32> to vector<16xf32>
    %468 = vector.shape_cast %467 : vector<16xf32> to vector<16x1xf32>
    %cst_196 = arith.constant 3.200000e+01 : f32
    %469 = vector.broadcast %cst_196 : f32 to vector<16x1xf32>
    %470 = arith.divf %468, %469 : vector<16x1xf32>
    %471 = vector.broadcast %470 : vector<16x1xf32> to vector<16x32xf32>
    %472 = arith.subf %466, %471 : vector<16x32xf32>
    %473 = arith.mulf %472, %472 : vector<16x32xf32>
    %cst_197 = arith.constant dense<0.000000e+00> : vector<16xf32>
    %474 = vector.multi_reduction <add>, %473, %cst_197 [1] : vector<16x32xf32> to vector<16xf32>
    %475 = vector.shape_cast %474 : vector<16xf32> to vector<16x1xf32>
    %cst_198 = arith.constant 3.200000e+01 : f32
    %476 = vector.broadcast %cst_198 : f32 to vector<16x1xf32>
    %477 = arith.divf %475, %476 : vector<16x1xf32>
    %cst_199 = arith.constant 9.99999974E-6 : f32
    %478 = vector.broadcast %cst_199 : f32 to vector<16x1xf32>
    %479 = arith.addf %477, %478 : vector<16x1xf32>
    %480 = math.rsqrt %479 : vector<16x1xf32>
    %481 = vector.broadcast %480 : vector<16x1xf32> to vector<16x32xf32>
    %482 = arith.mulf %472, %481 : vector<16x32xf32>
    %483 = vector.broadcast %6 : vector<1x32xf32> to vector<16x32xf32>
    %484 = arith.mulf %482, %483 : vector<16x32xf32>
    %485 = vector.broadcast %7 : vector<1x32xf32> to vector<16x32xf32>
    %486 = arith.addf %484, %485 : vector<16x32xf32>
    %c0_200 = arith.constant 0 : index
    %c0_201 = arith.constant 0 : index
    %c0_202 = arith.constant 0 : index
    %487 = vector.load %arg22[%c0_200, %c0_201, %c0_202] : memref<2x16x32xf32, #tpu.memory_space<vmem>>, vector<1x16x32xf32>
    %488 = vector.shape_cast %487 : vector<1x16x32xf32> to vector<16x32xf32>
    %489 = vector.shape_cast %486 : vector<16x32xf32> to vector<1x16x32xf32>
    tpu.vector_store %arg22[%c0_200, %c0_201, %c0_202], %489 {strides = array<i32>} : memref<2x16x32xf32, #tpu.memory_space<vmem>>, vector<1x16x32xf32>,
    %490 = arith.addf %466, %1 : vector<16x32xf32>
    %c1_203 = arith.constant 1 : index
    %c0_204 = arith.constant 0 : index
    %c0_205 = arith.constant 0 : index
    %491 = vector.load %arg6[%c1_203, %c0_204, %c0_205] : memref<2x32x96xbf16, #tpu.memory_space<vmem>>, vector<1x32x96xbf16>
    %492 = vector.shape_cast %491 : vector<1x32x96xbf16> to vector<32x96xbf16>
    %c1_206 = arith.constant 1 : index
    %c0_207 = arith.constant 0 : index
    %c0_208 = arith.constant 0 : index
    %493 = vector.load %arg7[%c1_206, %c0_207, %c0_208] : memref<2x1x96xf32, #tpu.memory_space<vmem>>, vector<1x1x96xf32>
    %494 = vector.shape_cast %493 : vector<1x1x96xf32> to vector<1x96xf32>
    %c1_209 = arith.constant 1 : index
    %c0_210 = arith.constant 0 : index
    %c0_211 = arith.constant 0 : index
    %495 = vector.load %arg8[%c1_209, %c0_210, %c0_211] : memref<2x32x32xbf16, #tpu.memory_space<vmem>>, vector<1x32x32xbf16>
    %496 = vector.shape_cast %495 : vector<1x32x32xbf16> to vector<32x32xbf16>
    %c1_212 = arith.constant 1 : index
    %c0_213 = arith.constant 0 : index
    %c0_214 = arith.constant 0 : index
    %497 = vector.load %arg9[%c1_212, %c0_213, %c0_214] : memref<2x1x32xf32, #tpu.memory_space<vmem>>, vector<1x1x32xf32>
    %498 = vector.shape_cast %497 : vector<1x1x32xf32> to vector<1x32xf32>
    %499 = arith.truncf %490 : vector<16x32xf32> to vector<16x32xbf16>
    %500 = vector.extract_strided_slice %492 {offsets = [0, 0], sizes = [32, 64], strides = [1, 1]} : vector<32x96xbf16> to vector<32x64xbf16>
    %cst_215 = arith.constant dense<0.000000e+00> : vector<16x64xf32>
    %501 = tpu.matmul %499, %500, %cst_215 {dimension_numbers = #tpu.dot_dimension_numbers<[1], [0], [0], [1], [0, 0, 1, 1], [], []>} : vector<16x32xbf16>, vector<32x64xbf16>, vector<16x64xf32> -> vector<16x64xf32>
    %502 = vector.extract_strided_slice %494 {offsets = [0, 0], sizes = [1, 64], strides = [1, 1]} : vector<1x96xf32> to vector<1x64xf32>
    %503 = vector.broadcast %502 : vector<1x64xf32> to vector<16x64xf32>
    %504 = arith.addf %501, %503 : vector<16x64xf32>
    %505 = vector.extract_strided_slice %504 {offsets = [0, 0], sizes = [16, 32], strides = [1, 1]} : vector<16x64xf32> to vector<16x32xf32>
    %506 = vector.extract_strided_slice %504 {offsets = [0, 32], sizes = [16, 32], strides = [1, 1]} : vector<16x64xf32> to vector<16x32xf32>
    %507 = arith.truncf %466 : vector<16x32xf32> to vector<16x32xbf16>
    %508 = vector.extract_strided_slice %492 {offsets = [0, 64], sizes = [32, 32], strides = [1, 1]} : vector<32x96xbf16> to vector<32x32xbf16>
    %cst_216 = arith.constant dense<0.000000e+00> : vector<16x32xf32>
    %509 = tpu.matmul %507, %508, %cst_216 {dimension_numbers = #tpu.dot_dimension_numbers<[1], [0], [0], [1], [0, 0, 1, 1], [], []>} : vector<16x32xbf16>, vector<32x32xbf16>, vector<16x32xf32> -> vector<16x32xf32>
    %510 = vector.extract_strided_slice %494 {offsets = [0, 64], sizes = [1, 32], strides = [1, 1]} : vector<1x96xf32> to vector<1x32xf32>
    %511 = vector.broadcast %510 : vector<1x32xf32> to vector<16x32xf32>
    %512 = arith.addf %509, %511 : vector<16x32xf32>
    %513 = arith.truncf %505 : vector<16x32xf32> to vector<16x32xbf16>
    %514 = arith.truncf %506 : vector<16x32xf32> to vector<16x32xbf16>
    %515 = arith.truncf %512 : vector<16x32xf32> to vector<16x32xbf16>
    %516 = vector.extract_strided_slice %513 {offsets = [0, 0], sizes = [16, 4], strides = [1, 1]} : vector<16x32xbf16> to vector<16x4xbf16>
    %517 = vector.extract_strided_slice %514 {offsets = [0, 0], sizes = [16, 4], strides = [1, 1]} : vector<16x32xbf16> to vector<16x4xbf16>
    %cst_217 = arith.constant dense<0.000000e+00> : vector<16x16xf32>
    %518 = tpu.matmul %516, %517, %cst_217 {dimension_numbers = #tpu.dot_dimension_numbers<[1], [1], [0], [0], [0, 0, 1, 0], [], []>} : vector<16x4xbf16>, vector<16x4xbf16>, vector<16x16xf32> -> vector<16x16xf32>
    %519 = arith.addf %518, %4 : vector<16x16xf32>
    %cst_218 = arith.constant dense<0xFF800000> : vector<16xf32>
    %520 = vector.multi_reduction <maximumf>, %519, %cst_218 [1] : vector<16x16xf32> to vector<16xf32>
    %521 = vector.shape_cast %520 : vector<16xf32> to vector<16x1xf32>
    %522 = vector.broadcast %521 : vector<16x1xf32> to vector<16x16xf32>
    %523 = arith.subf %519, %522 : vector<16x16xf32>
    %524 = math.exp %523 : vector<16x16xf32>
    %cst_219 = arith.constant dense<0.000000e+00> : vector<16xf32>
    %525 = vector.multi_reduction <add>, %524, %cst_219 [1] : vector<16x16xf32> to vector<16xf32>
    %526 = vector.shape_cast %525 : vector<16xf32> to vector<16x1xf32>
    %527 = vector.broadcast %526 : vector<16x1xf32> to vector<16x16xf32>
    %528 = arith.divf %524, %527 : vector<16x16xf32>
    %529 = arith.truncf %528 : vector<16x16xf32> to vector<16x16xbf16>
    %530 = vector.extract_strided_slice %515 {offsets = [0, 0], sizes = [16, 4], strides = [1, 1]} : vector<16x32xbf16> to vector<16x4xbf16>
    %cst_220 = arith.constant dense<0.000000e+00> : vector<16x4xf32>
    %531 = tpu.matmul %529, %530, %cst_220 {dimension_numbers = #tpu.dot_dimension_numbers<[1], [0], [0], [1], [0, 0, 1, 1], [], []>} : vector<16x16xbf16>, vector<16x4xbf16>, vector<16x4xf32> -> vector<16x4xf32>
    %532 = vector.extract_strided_slice %513 {offsets = [0, 4], sizes = [16, 4], strides = [1, 1]} : vector<16x32xbf16> to vector<16x4xbf16>
    %533 = vector.extract_strided_slice %514 {offsets = [0, 4], sizes = [16, 4], strides = [1, 1]} : vector<16x32xbf16> to vector<16x4xbf16>
    %cst_221 = arith.constant dense<0.000000e+00> : vector<16x16xf32>
    %534 = tpu.matmul %532, %533, %cst_221 {dimension_numbers = #tpu.dot_dimension_numbers<[1], [1], [0], [0], [0, 0, 1, 0], [], []>} : vector<16x4xbf16>, vector<16x4xbf16>, vector<16x16xf32> -> vector<16x16xf32>
    %535 = arith.addf %534, %4 : vector<16x16xf32>
    %cst_222 = arith.constant dense<0xFF800000> : vector<16xf32>
    %536 = vector.multi_reduction <maximumf>, %535, %cst_222 [1] : vector<16x16xf32> to vector<16xf32>
    %537 = vector.shape_cast %536 : vector<16xf32> to vector<16x1xf32>
    %538 = vector.broadcast %537 : vector<16x1xf32> to vector<16x16xf32>
    %539 = arith.subf %535, %538 : vector<16x16xf32>
    %540 = math.exp %539 : vector<16x16xf32>
    %cst_223 = arith.constant dense<0.000000e+00> : vector<16xf32>
    %541 = vector.multi_reduction <add>, %540, %cst_223 [1] : vector<16x16xf32> to vector<16xf32>
    %542 = vector.shape_cast %541 : vector<16xf32> to vector<16x1xf32>
    %543 = vector.broadcast %542 : vector<16x1xf32> to vector<16x16xf32>
    %544 = arith.divf %540, %543 : vector<16x16xf32>
    %545 = arith.truncf %544 : vector<16x16xf32> to vector<16x16xbf16>
    %546 = vector.extract_strided_slice %515 {offsets = [0, 4], sizes = [16, 4], strides = [1, 1]} : vector<16x32xbf16> to vector<16x4xbf16>
    %cst_224 = arith.constant dense<0.000000e+00> : vector<16x4xf32>
    %547 = tpu.matmul %545, %546, %cst_224 {dimension_numbers = #tpu.dot_dimension_numbers<[1], [0], [0], [1], [0, 0, 1, 1], [], []>} : vector<16x16xbf16>, vector<16x4xbf16>, vector<16x4xf32> -> vector<16x4xf32>
    %548 = vector.extract_strided_slice %513 {offsets = [0, 8], sizes = [16, 4], strides = [1, 1]} : vector<16x32xbf16> to vector<16x4xbf16>
    %549 = vector.extract_strided_slice %514 {offsets = [0, 8], sizes = [16, 4], strides = [1, 1]} : vector<16x32xbf16> to vector<16x4xbf16>
    %cst_225 = arith.constant dense<0.000000e+00> : vector<16x16xf32>
    %550 = tpu.matmul %548, %549, %cst_225 {dimension_numbers = #tpu.dot_dimension_numbers<[1], [1], [0], [0], [0, 0, 1, 0], [], []>} : vector<16x4xbf16>, vector<16x4xbf16>, vector<16x16xf32> -> vector<16x16xf32>
    %551 = arith.addf %550, %4 : vector<16x16xf32>
    %cst_226 = arith.constant dense<0xFF800000> : vector<16xf32>
    %552 = vector.multi_reduction <maximumf>, %551, %cst_226 [1] : vector<16x16xf32> to vector<16xf32>
    %553 = vector.shape_cast %552 : vector<16xf32> to vector<16x1xf32>
    %554 = vector.broadcast %553 : vector<16x1xf32> to vector<16x16xf32>
    %555 = arith.subf %551, %554 : vector<16x16xf32>
    %556 = math.exp %555 : vector<16x16xf32>
    %cst_227 = arith.constant dense<0.000000e+00> : vector<16xf32>
    %557 = vector.multi_reduction <add>, %556, %cst_227 [1] : vector<16x16xf32> to vector<16xf32>
    %558 = vector.shape_cast %557 : vector<16xf32> to vector<16x1xf32>
    %559 = vector.broadcast %558 : vector<16x1xf32> to vector<16x16xf32>
    %560 = arith.divf %556, %559 : vector<16x16xf32>
    %561 = arith.truncf %560 : vector<16x16xf32> to vector<16x16xbf16>
    %562 = vector.extract_strided_slice %515 {offsets = [0, 8], sizes = [16, 4], strides = [1, 1]} : vector<16x32xbf16> to vector<16x4xbf16>
    %cst_228 = arith.constant dense<0.000000e+00> : vector<16x4xf32>
    %563 = tpu.matmul %561, %562, %cst_228 {dimension_numbers = #tpu.dot_dimension_numbers<[1], [0], [0], [1], [0, 0, 1, 1], [], []>} : vector<16x16xbf16>, vector<16x4xbf16>, vector<16x4xf32> -> vector<16x4xf32>
    %564 = vector.extract_strided_slice %513 {offsets = [0, 12], sizes = [16, 4], strides = [1, 1]} : vector<16x32xbf16> to vector<16x4xbf16>
    %565 = vector.extract_strided_slice %514 {offsets = [0, 12], sizes = [16, 4], strides = [1, 1]} : vector<16x32xbf16> to vector<16x4xbf16>
    %cst_229 = arith.constant dense<0.000000e+00> : vector<16x16xf32>
    %566 = tpu.matmul %564, %565, %cst_229 {dimension_numbers = #tpu.dot_dimension_numbers<[1], [1], [0], [0], [0, 0, 1, 0], [], []>} : vector<16x4xbf16>, vector<16x4xbf16>, vector<16x16xf32> -> vector<16x16xf32>
    %567 = arith.addf %566, %4 : vector<16x16xf32>
    %cst_230 = arith.constant dense<0xFF800000> : vector<16xf32>
    %568 = vector.multi_reduction <maximumf>, %567, %cst_230 [1] : vector<16x16xf32> to vector<16xf32>
    %569 = vector.shape_cast %568 : vector<16xf32> to vector<16x1xf32>
    %570 = vector.broadcast %569 : vector<16x1xf32> to vector<16x16xf32>
    %571 = arith.subf %567, %570 : vector<16x16xf32>
    %572 = math.exp %571 : vector<16x16xf32>
    %cst_231 = arith.constant dense<0.000000e+00> : vector<16xf32>
    %573 = vector.multi_reduction <add>, %572, %cst_231 [1] : vector<16x16xf32> to vector<16xf32>
    %574 = vector.shape_cast %573 : vector<16xf32> to vector<16x1xf32>
    %575 = vector.broadcast %574 : vector<16x1xf32> to vector<16x16xf32>
    %576 = arith.divf %572, %575 : vector<16x16xf32>
    %577 = arith.truncf %576 : vector<16x16xf32> to vector<16x16xbf16>
    %578 = vector.extract_strided_slice %515 {offsets = [0, 12], sizes = [16, 4], strides = [1, 1]} : vector<16x32xbf16> to vector<16x4xbf16>
    %cst_232 = arith.constant dense<0.000000e+00> : vector<16x4xf32>
    %579 = tpu.matmul %577, %578, %cst_232 {dimension_numbers = #tpu.dot_dimension_numbers<[1], [0], [0], [1], [0, 0, 1, 1], [], []>} : vector<16x16xbf16>, vector<16x4xbf16>, vector<16x4xf32> -> vector<16x4xf32>
    %580 = vector.extract_strided_slice %513 {offsets = [0, 16], sizes = [16, 4], strides = [1, 1]} : vector<16x32xbf16> to vector<16x4xbf16>
    %581 = vector.extract_strided_slice %514 {offsets = [0, 16], sizes = [16, 4], strides = [1, 1]} : vector<16x32xbf16> to vector<16x4xbf16>
    %cst_233 = arith.constant dense<0.000000e+00> : vector<16x16xf32>
    %582 = tpu.matmul %580, %581, %cst_233 {dimension_numbers = #tpu.dot_dimension_numbers<[1], [1], [0], [0], [0, 0, 1, 0], [], []>} : vector<16x4xbf16>, vector<16x4xbf16>, vector<16x16xf32> -> vector<16x16xf32>
    %583 = arith.addf %582, %4 : vector<16x16xf32>
    %cst_234 = arith.constant dense<0xFF800000> : vector<16xf32>
    %584 = vector.multi_reduction <maximumf>, %583, %cst_234 [1] : vector<16x16xf32> to vector<16xf32>
    %585 = vector.shape_cast %584 : vector<16xf32> to vector<16x1xf32>
    %586 = vector.broadcast %585 : vector<16x1xf32> to vector<16x16xf32>
    %587 = arith.subf %583, %586 : vector<16x16xf32>
    %588 = math.exp %587 : vector<16x16xf32>
    %cst_235 = arith.constant dense<0.000000e+00> : vector<16xf32>
    %589 = vector.multi_reduction <add>, %588, %cst_235 [1] : vector<16x16xf32> to vector<16xf32>
    %590 = vector.shape_cast %589 : vector<16xf32> to vector<16x1xf32>
    %591 = vector.broadcast %590 : vector<16x1xf32> to vector<16x16xf32>
    %592 = arith.divf %588, %591 : vector<16x16xf32>
    %593 = arith.truncf %592 : vector<16x16xf32> to vector<16x16xbf16>
    %594 = vector.extract_strided_slice %515 {offsets = [0, 16], sizes = [16, 4], strides = [1, 1]} : vector<16x32xbf16> to vector<16x4xbf16>
    %cst_236 = arith.constant dense<0.000000e+00> : vector<16x4xf32>
    %595 = tpu.matmul %593, %594, %cst_236 {dimension_numbers = #tpu.dot_dimension_numbers<[1], [0], [0], [1], [0, 0, 1, 1], [], []>} : vector<16x16xbf16>, vector<16x4xbf16>, vector<16x4xf32> -> vector<16x4xf32>
    %596 = vector.extract_strided_slice %513 {offsets = [0, 20], sizes = [16, 4], strides = [1, 1]} : vector<16x32xbf16> to vector<16x4xbf16>
    %597 = vector.extract_strided_slice %514 {offsets = [0, 20], sizes = [16, 4], strides = [1, 1]} : vector<16x32xbf16> to vector<16x4xbf16>
    %cst_237 = arith.constant dense<0.000000e+00> : vector<16x16xf32>
    %598 = tpu.matmul %596, %597, %cst_237 {dimension_numbers = #tpu.dot_dimension_numbers<[1], [1], [0], [0], [0, 0, 1, 0], [], []>} : vector<16x4xbf16>, vector<16x4xbf16>, vector<16x16xf32> -> vector<16x16xf32>
    %599 = arith.addf %598, %4 : vector<16x16xf32>
    %cst_238 = arith.constant dense<0xFF800000> : vector<16xf32>
    %600 = vector.multi_reduction <maximumf>, %599, %cst_238 [1] : vector<16x16xf32> to vector<16xf32>
    %601 = vector.shape_cast %600 : vector<16xf32> to vector<16x1xf32>
    %602 = vector.broadcast %601 : vector<16x1xf32> to vector<16x16xf32>
    %603 = arith.subf %599, %602 : vector<16x16xf32>
    %604 = math.exp %603 : vector<16x16xf32>
    %cst_239 = arith.constant dense<0.000000e+00> : vector<16xf32>
    %605 = vector.multi_reduction <add>, %604, %cst_239 [1] : vector<16x16xf32> to vector<16xf32>
    %606 = vector.shape_cast %605 : vector<16xf32> to vector<16x1xf32>
    %607 = vector.broadcast %606 : vector<16x1xf32> to vector<16x16xf32>
    %608 = arith.divf %604, %607 : vector<16x16xf32>
    %609 = arith.truncf %608 : vector<16x16xf32> to vector<16x16xbf16>
    %610 = vector.extract_strided_slice %515 {offsets = [0, 20], sizes = [16, 4], strides = [1, 1]} : vector<16x32xbf16> to vector<16x4xbf16>
    %cst_240 = arith.constant dense<0.000000e+00> : vector<16x4xf32>
    %611 = tpu.matmul %609, %610, %cst_240 {dimension_numbers = #tpu.dot_dimension_numbers<[1], [0], [0], [1], [0, 0, 1, 1], [], []>} : vector<16x16xbf16>, vector<16x4xbf16>, vector<16x4xf32> -> vector<16x4xf32>
    %612 = vector.extract_strided_slice %513 {offsets = [0, 24], sizes = [16, 4], strides = [1, 1]} : vector<16x32xbf16> to vector<16x4xbf16>
    %613 = vector.extract_strided_slice %514 {offsets = [0, 24], sizes = [16, 4], strides = [1, 1]} : vector<16x32xbf16> to vector<16x4xbf16>
    %cst_241 = arith.constant dense<0.000000e+00> : vector<16x16xf32>
    %614 = tpu.matmul %612, %613, %cst_241 {dimension_numbers = #tpu.dot_dimension_numbers<[1], [1], [0], [0], [0, 0, 1, 0], [], []>} : vector<16x4xbf16>, vector<16x4xbf16>, vector<16x16xf32> -> vector<16x16xf32>
    %615 = arith.addf %614, %4 : vector<16x16xf32>
    %cst_242 = arith.constant dense<0xFF800000> : vector<16xf32>
    %616 = vector.multi_reduction <maximumf>, %615, %cst_242 [1] : vector<16x16xf32> to vector<16xf32>
    %617 = vector.shape_cast %616 : vector<16xf32> to vector<16x1xf32>
    %618 = vector.broadcast %617 : vector<16x1xf32> to vector<16x16xf32>
    %619 = arith.subf %615, %618 : vector<16x16xf32>
    %620 = math.exp %619 : vector<16x16xf32>
    %cst_243 = arith.constant dense<0.000000e+00> : vector<16xf32>
    %621 = vector.multi_reduction <add>, %620, %cst_243 [1] : vector<16x16xf32> to vector<16xf32>
    %622 = vector.shape_cast %621 : vector<16xf32> to vector<16x1xf32>
    %623 = vector.broadcast %622 : vector<16x1xf32> to vector<16x16xf32>
    %624 = arith.divf %620, %623 : vector<16x16xf32>
    %625 = arith.truncf %624 : vector<16x16xf32> to vector<16x16xbf16>
    %626 = vector.extract_strided_slice %515 {offsets = [0, 24], sizes = [16, 4], strides = [1, 1]} : vector<16x32xbf16> to vector<16x4xbf16>
    %cst_244 = arith.constant dense<0.000000e+00> : vector<16x4xf32>
    %627 = tpu.matmul %625, %626, %cst_244 {dimension_numbers = #tpu.dot_dimension_numbers<[1], [0], [0], [1], [0, 0, 1, 1], [], []>} : vector<16x16xbf16>, vector<16x4xbf16>, vector<16x4xf32> -> vector<16x4xf32>
    %628 = vector.extract_strided_slice %513 {offsets = [0, 28], sizes = [16, 4], strides = [1, 1]} : vector<16x32xbf16> to vector<16x4xbf16>
    %629 = vector.extract_strided_slice %514 {offsets = [0, 28], sizes = [16, 4], strides = [1, 1]} : vector<16x32xbf16> to vector<16x4xbf16>
    %cst_245 = arith.constant dense<0.000000e+00> : vector<16x16xf32>
    %630 = tpu.matmul %628, %629, %cst_245 {dimension_numbers = #tpu.dot_dimension_numbers<[1], [1], [0], [0], [0, 0, 1, 0], [], []>} : vector<16x4xbf16>, vector<16x4xbf16>, vector<16x16xf32> -> vector<16x16xf32>
    %631 = arith.addf %630, %4 : vector<16x16xf32>
    %cst_246 = arith.constant dense<0xFF800000> : vector<16xf32>
    %632 = vector.multi_reduction <maximumf>, %631, %cst_246 [1] : vector<16x16xf32> to vector<16xf32>
    %633 = vector.shape_cast %632 : vector<16xf32> to vector<16x1xf32>
    %634 = vector.broadcast %633 : vector<16x1xf32> to vector<16x16xf32>
    %635 = arith.subf %631, %634 : vector<16x16xf32>
    %636 = math.exp %635 : vector<16x16xf32>
    %cst_247 = arith.constant dense<0.000000e+00> : vector<16xf32>
    %637 = vector.multi_reduction <add>, %636, %cst_247 [1] : vector<16x16xf32> to vector<16xf32>
    %638 = vector.shape_cast %637 : vector<16xf32> to vector<16x1xf32>
    %639 = vector.broadcast %638 : vector<16x1xf32> to vector<16x16xf32>
    %640 = arith.divf %636, %639 : vector<16x16xf32>
    %641 = arith.truncf %640 : vector<16x16xf32> to vector<16x16xbf16>
    %642 = vector.extract_strided_slice %515 {offsets = [0, 28], sizes = [16, 4], strides = [1, 1]} : vector<16x32xbf16> to vector<16x4xbf16>
    %cst_248 = arith.constant dense<0.000000e+00> : vector<16x4xf32>
    %643 = tpu.matmul %641, %642, %cst_248 {dimension_numbers = #tpu.dot_dimension_numbers<[1], [0], [0], [1], [0, 0, 1, 1], [], []>} : vector<16x16xbf16>, vector<16x4xbf16>, vector<16x4xf32> -> vector<16x4xf32>
    %644 = tpu.concatenate %531, %547, %563, %579, %595, %611, %627, %643 in 1 : vector<16x4xf32>, vector<16x4xf32>, vector<16x4xf32>, vector<16x4xf32>, vector<16x4xf32>, vector<16x4xf32>, vector<16x4xf32>, vector<16x4xf32> -> vector<16x32xf32>
    %645 = arith.truncf %644 : vector<16x32xf32> to vector<16x32xbf16>
    %cst_249 = arith.constant dense<0.000000e+00> : vector<16x32xf32>
    %646 = tpu.matmul %645, %496, %cst_249 {dimension_numbers = #tpu.dot_dimension_numbers<[1], [0], [0], [1], [0, 0, 1, 1], [], []>} : vector<16x32xbf16>, vector<32x32xbf16>, vector<16x32xf32> -> vector<16x32xf32>
    %647 = vector.broadcast %498 : vector<1x32xf32> to vector<16x32xf32>
    %648 = arith.addf %646, %647 : vector<16x32xf32>
    %649 = arith.addf %466, %648 : vector<16x32xf32>
    %c1_250 = arith.constant 1 : index
    %c0_251 = arith.constant 0 : index
    %c0_252 = arith.constant 0 : index
    %c0_253 = arith.constant 0 : index
    %650 = vector.load %arg18[%c1_250, %c0_251, %c0_252, %c0_253] : memref<2x3x1x32xf32, #tpu.memory_space<vmem>>, vector<1x1x1x32xf32>
    %651 = vector.shape_cast %650 : vector<1x1x1x32xf32> to vector<1x32xf32>
    %c1_254 = arith.constant 1 : index
    %c0_255 = arith.constant 0 : index
    %c0_256 = arith.constant 0 : index
    %c0_257 = arith.constant 0 : index
    %652 = vector.load %arg19[%c1_254, %c0_255, %c0_256, %c0_257] : memref<2x3x1x32xf32, #tpu.memory_space<vmem>>, vector<1x1x1x32xf32>
    %653 = vector.shape_cast %652 : vector<1x1x1x32xf32> to vector<1x32xf32>
    %cst_258 = arith.constant dense<0.000000e+00> : vector<16xf32>
    %654 = vector.multi_reduction <add>, %649, %cst_258 [1] : vector<16x32xf32> to vector<16xf32>
    %655 = vector.shape_cast %654 : vector<16xf32> to vector<16x1xf32>
    %cst_259 = arith.constant 3.200000e+01 : f32
    %656 = vector.broadcast %cst_259 : f32 to vector<16x1xf32>
    %657 = arith.divf %655, %656 : vector<16x1xf32>
    %658 = vector.broadcast %657 : vector<16x1xf32> to vector<16x32xf32>
    %659 = arith.subf %649, %658 : vector<16x32xf32>
    %660 = arith.mulf %659, %659 : vector<16x32xf32>
    %cst_260 = arith.constant dense<0.000000e+00> : vector<16xf32>
    %661 = vector.multi_reduction <add>, %660, %cst_260 [1] : vector<16x32xf32> to vector<16xf32>
    %662 = vector.shape_cast %661 : vector<16xf32> to vector<16x1xf32>
    %cst_261 = arith.constant 3.200000e+01 : f32
    %663 = vector.broadcast %cst_261 : f32 to vector<16x1xf32>
    %664 = arith.divf %662, %663 : vector<16x1xf32>
    %cst_262 = arith.constant 9.99999974E-6 : f32
    %665 = vector.broadcast %cst_262 : f32 to vector<16x1xf32>
    %666 = arith.addf %664, %665 : vector<16x1xf32>
    %667 = math.rsqrt %666 : vector<16x1xf32>
    %668 = vector.broadcast %667 : vector<16x1xf32> to vector<16x32xf32>
    %669 = arith.mulf %659, %668 : vector<16x32xf32>
    %670 = vector.broadcast %651 : vector<1x32xf32> to vector<16x32xf32>
    %671 = arith.mulf %669, %670 : vector<16x32xf32>
    %672 = vector.broadcast %653 : vector<1x32xf32> to vector<16x32xf32>
    %673 = arith.addf %671, %672 : vector<16x32xf32>
    %674 = arith.addf %673, %1 : vector<16x32xf32>
    %c1_263 = arith.constant 1 : index
    %c0_264 = arith.constant 0 : index
    %c0_265 = arith.constant 0 : index
    %675 = vector.load %arg10[%c1_263, %c0_264, %c0_265] : memref<2x32x96xbf16, #tpu.memory_space<vmem>>, vector<1x32x96xbf16>
    %676 = vector.shape_cast %675 : vector<1x32x96xbf16> to vector<32x96xbf16>
    %c1_266 = arith.constant 1 : index
    %c0_267 = arith.constant 0 : index
    %c0_268 = arith.constant 0 : index
    %677 = vector.load %arg11[%c1_266, %c0_267, %c0_268] : memref<2x1x96xf32, #tpu.memory_space<vmem>>, vector<1x1x96xf32>
    %678 = vector.shape_cast %677 : vector<1x1x96xf32> to vector<1x96xf32>
    %c1_269 = arith.constant 1 : index
    %c0_270 = arith.constant 0 : index
    %c0_271 = arith.constant 0 : index
    %679 = vector.load %arg12[%c1_269, %c0_270, %c0_271] : memref<2x32x32xbf16, #tpu.memory_space<vmem>>, vector<1x32x32xbf16>
    %680 = vector.shape_cast %679 : vector<1x32x32xbf16> to vector<32x32xbf16>
    %c1_272 = arith.constant 1 : index
    %c0_273 = arith.constant 0 : index
    %c0_274 = arith.constant 0 : index
    %681 = vector.load %arg13[%c1_272, %c0_273, %c0_274] : memref<2x1x32xf32, #tpu.memory_space<vmem>>, vector<1x1x32xf32>
    %682 = vector.shape_cast %681 : vector<1x1x32xf32> to vector<1x32xf32>
    %683 = arith.truncf %674 : vector<16x32xf32> to vector<16x32xbf16>
    %684 = vector.extract_strided_slice %676 {offsets = [0, 0], sizes = [32, 32], strides = [1, 1]} : vector<32x96xbf16> to vector<32x32xbf16>
    %cst_275 = arith.constant dense<0.000000e+00> : vector<16x32xf32>
    %685 = tpu.matmul %683, %684, %cst_275 {dimension_numbers = #tpu.dot_dimension_numbers<[1], [0], [0], [1], [0, 0, 1, 1], [], []>} : vector<16x32xbf16>, vector<32x32xbf16>, vector<16x32xf32> -> vector<16x32xf32>
    %686 = vector.extract_strided_slice %678 {offsets = [0, 0], sizes = [1, 32], strides = [1, 1]} : vector<1x96xf32> to vector<1x32xf32>
    %687 = vector.broadcast %686 : vector<1x32xf32> to vector<16x32xf32>
    %688 = arith.addf %685, %687 : vector<16x32xf32>
    %689 = arith.truncf %3 : vector<32x32xf32> to vector<32x32xbf16>
    %690 = vector.extract_strided_slice %676 {offsets = [0, 32], sizes = [32, 32], strides = [1, 1]} : vector<32x96xbf16> to vector<32x32xbf16>
    %cst_276 = arith.constant dense<0.000000e+00> : vector<32x32xf32>
    %691 = tpu.matmul %689, %690, %cst_276 {dimension_numbers = #tpu.dot_dimension_numbers<[1], [0], [0], [1], [0, 0, 1, 1], [], []>} : vector<32x32xbf16>, vector<32x32xbf16>, vector<32x32xf32> -> vector<32x32xf32>
    %692 = vector.extract_strided_slice %678 {offsets = [0, 32], sizes = [1, 32], strides = [1, 1]} : vector<1x96xf32> to vector<1x32xf32>
    %693 = vector.broadcast %692 : vector<1x32xf32> to vector<32x32xf32>
    %694 = arith.addf %691, %693 : vector<32x32xf32>
    %695 = arith.truncf %2 : vector<32x32xf32> to vector<32x32xbf16>
    %696 = vector.extract_strided_slice %676 {offsets = [0, 64], sizes = [32, 32], strides = [1, 1]} : vector<32x96xbf16> to vector<32x32xbf16>
    %cst_277 = arith.constant dense<0.000000e+00> : vector<32x32xf32>
    %697 = tpu.matmul %695, %696, %cst_277 {dimension_numbers = #tpu.dot_dimension_numbers<[1], [0], [0], [1], [0, 0, 1, 1], [], []>} : vector<32x32xbf16>, vector<32x32xbf16>, vector<32x32xf32> -> vector<32x32xf32>
    %698 = vector.extract_strided_slice %678 {offsets = [0, 64], sizes = [1, 32], strides = [1, 1]} : vector<1x96xf32> to vector<1x32xf32>
    %699 = vector.broadcast %698 : vector<1x32xf32> to vector<32x32xf32>
    %700 = arith.addf %697, %699 : vector<32x32xf32>
    %701 = arith.truncf %688 : vector<16x32xf32> to vector<16x32xbf16>
    %702 = arith.truncf %694 : vector<32x32xf32> to vector<32x32xbf16>
    %703 = arith.truncf %700 : vector<32x32xf32> to vector<32x32xbf16>
    %704 = vector.extract_strided_slice %701 {offsets = [0, 0], sizes = [16, 4], strides = [1, 1]} : vector<16x32xbf16> to vector<16x4xbf16>
    %705 = vector.extract_strided_slice %702 {offsets = [0, 0], sizes = [32, 4], strides = [1, 1]} : vector<32x32xbf16> to vector<32x4xbf16>
    %cst_278 = arith.constant dense<0.000000e+00> : vector<16x32xf32>
    %706 = tpu.matmul %704, %705, %cst_278 {dimension_numbers = #tpu.dot_dimension_numbers<[1], [1], [0], [0], [0, 0, 1, 0], [], []>} : vector<16x4xbf16>, vector<32x4xbf16>, vector<16x32xf32> -> vector<16x32xf32>
    %707 = arith.addf %706, %5 : vector<16x32xf32>
    %cst_279 = arith.constant dense<0xFF800000> : vector<16xf32>
    %708 = vector.multi_reduction <maximumf>, %707, %cst_279 [1] : vector<16x32xf32> to vector<16xf32>
    %709 = vector.shape_cast %708 : vector<16xf32> to vector<16x1xf32>
    %710 = vector.broadcast %709 : vector<16x1xf32> to vector<16x32xf32>
    %711 = arith.subf %707, %710 : vector<16x32xf32>
    %712 = math.exp %711 : vector<16x32xf32>
    %cst_280 = arith.constant dense<0.000000e+00> : vector<16xf32>
    %713 = vector.multi_reduction <add>, %712, %cst_280 [1] : vector<16x32xf32> to vector<16xf32>
    %714 = vector.shape_cast %713 : vector<16xf32> to vector<16x1xf32>
    %715 = vector.broadcast %714 : vector<16x1xf32> to vector<16x32xf32>
    %716 = arith.divf %712, %715 : vector<16x32xf32>
    %717 = arith.truncf %716 : vector<16x32xf32> to vector<16x32xbf16>
    %718 = vector.extract_strided_slice %703 {offsets = [0, 0], sizes = [32, 4], strides = [1, 1]} : vector<32x32xbf16> to vector<32x4xbf16>
    %cst_281 = arith.constant dense<0.000000e+00> : vector<16x4xf32>
    %719 = tpu.matmul %717, %718, %cst_281 {dimension_numbers = #tpu.dot_dimension_numbers<[1], [0], [0], [1], [0, 0, 1, 1], [], []>} : vector<16x32xbf16>, vector<32x4xbf16>, vector<16x4xf32> -> vector<16x4xf32>
    %720 = vector.extract_strided_slice %701 {offsets = [0, 4], sizes = [16, 4], strides = [1, 1]} : vector<16x32xbf16> to vector<16x4xbf16>
    %721 = vector.extract_strided_slice %702 {offsets = [0, 4], sizes = [32, 4], strides = [1, 1]} : vector<32x32xbf16> to vector<32x4xbf16>
    %cst_282 = arith.constant dense<0.000000e+00> : vector<16x32xf32>
    %722 = tpu.matmul %720, %721, %cst_282 {dimension_numbers = #tpu.dot_dimension_numbers<[1], [1], [0], [0], [0, 0, 1, 0], [], []>} : vector<16x4xbf16>, vector<32x4xbf16>, vector<16x32xf32> -> vector<16x32xf32>
    %723 = arith.addf %722, %5 : vector<16x32xf32>
    %cst_283 = arith.constant dense<0xFF800000> : vector<16xf32>
    %724 = vector.multi_reduction <maximumf>, %723, %cst_283 [1] : vector<16x32xf32> to vector<16xf32>
    %725 = vector.shape_cast %724 : vector<16xf32> to vector<16x1xf32>
    %726 = vector.broadcast %725 : vector<16x1xf32> to vector<16x32xf32>
    %727 = arith.subf %723, %726 : vector<16x32xf32>
    %728 = math.exp %727 : vector<16x32xf32>
    %cst_284 = arith.constant dense<0.000000e+00> : vector<16xf32>
    %729 = vector.multi_reduction <add>, %728, %cst_284 [1] : vector<16x32xf32> to vector<16xf32>
    %730 = vector.shape_cast %729 : vector<16xf32> to vector<16x1xf32>
    %731 = vector.broadcast %730 : vector<16x1xf32> to vector<16x32xf32>
    %732 = arith.divf %728, %731 : vector<16x32xf32>
    %733 = arith.truncf %732 : vector<16x32xf32> to vector<16x32xbf16>
    %734 = vector.extract_strided_slice %703 {offsets = [0, 4], sizes = [32, 4], strides = [1, 1]} : vector<32x32xbf16> to vector<32x4xbf16>
    %cst_285 = arith.constant dense<0.000000e+00> : vector<16x4xf32>
    %735 = tpu.matmul %733, %734, %cst_285 {dimension_numbers = #tpu.dot_dimension_numbers<[1], [0], [0], [1], [0, 0, 1, 1], [], []>} : vector<16x32xbf16>, vector<32x4xbf16>, vector<16x4xf32> -> vector<16x4xf32>
    %736 = vector.extract_strided_slice %701 {offsets = [0, 8], sizes = [16, 4], strides = [1, 1]} : vector<16x32xbf16> to vector<16x4xbf16>
    %737 = vector.extract_strided_slice %702 {offsets = [0, 8], sizes = [32, 4], strides = [1, 1]} : vector<32x32xbf16> to vector<32x4xbf16>
    %cst_286 = arith.constant dense<0.000000e+00> : vector<16x32xf32>
    %738 = tpu.matmul %736, %737, %cst_286 {dimension_numbers = #tpu.dot_dimension_numbers<[1], [1], [0], [0], [0, 0, 1, 0], [], []>} : vector<16x4xbf16>, vector<32x4xbf16>, vector<16x32xf32> -> vector<16x32xf32>
    %739 = arith.addf %738, %5 : vector<16x32xf32>
    %cst_287 = arith.constant dense<0xFF800000> : vector<16xf32>
    %740 = vector.multi_reduction <maximumf>, %739, %cst_287 [1] : vector<16x32xf32> to vector<16xf32>
    %741 = vector.shape_cast %740 : vector<16xf32> to vector<16x1xf32>
    %742 = vector.broadcast %741 : vector<16x1xf32> to vector<16x32xf32>
    %743 = arith.subf %739, %742 : vector<16x32xf32>
    %744 = math.exp %743 : vector<16x32xf32>
    %cst_288 = arith.constant dense<0.000000e+00> : vector<16xf32>
    %745 = vector.multi_reduction <add>, %744, %cst_288 [1] : vector<16x32xf32> to vector<16xf32>
    %746 = vector.shape_cast %745 : vector<16xf32> to vector<16x1xf32>
    %747 = vector.broadcast %746 : vector<16x1xf32> to vector<16x32xf32>
    %748 = arith.divf %744, %747 : vector<16x32xf32>
    %749 = arith.truncf %748 : vector<16x32xf32> to vector<16x32xbf16>
    %750 = vector.extract_strided_slice %703 {offsets = [0, 8], sizes = [32, 4], strides = [1, 1]} : vector<32x32xbf16> to vector<32x4xbf16>
    %cst_289 = arith.constant dense<0.000000e+00> : vector<16x4xf32>
    %751 = tpu.matmul %749, %750, %cst_289 {dimension_numbers = #tpu.dot_dimension_numbers<[1], [0], [0], [1], [0, 0, 1, 1], [], []>} : vector<16x32xbf16>, vector<32x4xbf16>, vector<16x4xf32> -> vector<16x4xf32>
    %752 = vector.extract_strided_slice %701 {offsets = [0, 12], sizes = [16, 4], strides = [1, 1]} : vector<16x32xbf16> to vector<16x4xbf16>
    %753 = vector.extract_strided_slice %702 {offsets = [0, 12], sizes = [32, 4], strides = [1, 1]} : vector<32x32xbf16> to vector<32x4xbf16>
    %cst_290 = arith.constant dense<0.000000e+00> : vector<16x32xf32>
    %754 = tpu.matmul %752, %753, %cst_290 {dimension_numbers = #tpu.dot_dimension_numbers<[1], [1], [0], [0], [0, 0, 1, 0], [], []>} : vector<16x4xbf16>, vector<32x4xbf16>, vector<16x32xf32> -> vector<16x32xf32>
    %755 = arith.addf %754, %5 : vector<16x32xf32>
    %cst_291 = arith.constant dense<0xFF800000> : vector<16xf32>
    %756 = vector.multi_reduction <maximumf>, %755, %cst_291 [1] : vector<16x32xf32> to vector<16xf32>
    %757 = vector.shape_cast %756 : vector<16xf32> to vector<16x1xf32>
    %758 = vector.broadcast %757 : vector<16x1xf32> to vector<16x32xf32>
    %759 = arith.subf %755, %758 : vector<16x32xf32>
    %760 = math.exp %759 : vector<16x32xf32>
    %cst_292 = arith.constant dense<0.000000e+00> : vector<16xf32>
    %761 = vector.multi_reduction <add>, %760, %cst_292 [1] : vector<16x32xf32> to vector<16xf32>
    %762 = vector.shape_cast %761 : vector<16xf32> to vector<16x1xf32>
    %763 = vector.broadcast %762 : vector<16x1xf32> to vector<16x32xf32>
    %764 = arith.divf %760, %763 : vector<16x32xf32>
    %765 = arith.truncf %764 : vector<16x32xf32> to vector<16x32xbf16>
    %766 = vector.extract_strided_slice %703 {offsets = [0, 12], sizes = [32, 4], strides = [1, 1]} : vector<32x32xbf16> to vector<32x4xbf16>
    %cst_293 = arith.constant dense<0.000000e+00> : vector<16x4xf32>
    %767 = tpu.matmul %765, %766, %cst_293 {dimension_numbers = #tpu.dot_dimension_numbers<[1], [0], [0], [1], [0, 0, 1, 1], [], []>} : vector<16x32xbf16>, vector<32x4xbf16>, vector<16x4xf32> -> vector<16x4xf32>
    %768 = vector.extract_strided_slice %701 {offsets = [0, 16], sizes = [16, 4], strides = [1, 1]} : vector<16x32xbf16> to vector<16x4xbf16>
    %769 = vector.extract_strided_slice %702 {offsets = [0, 16], sizes = [32, 4], strides = [1, 1]} : vector<32x32xbf16> to vector<32x4xbf16>
    %cst_294 = arith.constant dense<0.000000e+00> : vector<16x32xf32>
    %770 = tpu.matmul %768, %769, %cst_294 {dimension_numbers = #tpu.dot_dimension_numbers<[1], [1], [0], [0], [0, 0, 1, 0], [], []>} : vector<16x4xbf16>, vector<32x4xbf16>, vector<16x32xf32> -> vector<16x32xf32>
    %771 = arith.addf %770, %5 : vector<16x32xf32>
    %cst_295 = arith.constant dense<0xFF800000> : vector<16xf32>
    %772 = vector.multi_reduction <maximumf>, %771, %cst_295 [1] : vector<16x32xf32> to vector<16xf32>
    %773 = vector.shape_cast %772 : vector<16xf32> to vector<16x1xf32>
    %774 = vector.broadcast %773 : vector<16x1xf32> to vector<16x32xf32>
    %775 = arith.subf %771, %774 : vector<16x32xf32>
    %776 = math.exp %775 : vector<16x32xf32>
    %cst_296 = arith.constant dense<0.000000e+00> : vector<16xf32>
    %777 = vector.multi_reduction <add>, %776, %cst_296 [1] : vector<16x32xf32> to vector<16xf32>
    %778 = vector.shape_cast %777 : vector<16xf32> to vector<16x1xf32>
    %779 = vector.broadcast %778 : vector<16x1xf32> to vector<16x32xf32>
    %780 = arith.divf %776, %779 : vector<16x32xf32>
    %781 = arith.truncf %780 : vector<16x32xf32> to vector<16x32xbf16>
    %782 = vector.extract_strided_slice %703 {offsets = [0, 16], sizes = [32, 4], strides = [1, 1]} : vector<32x32xbf16> to vector<32x4xbf16>
    %cst_297 = arith.constant dense<0.000000e+00> : vector<16x4xf32>
    %783 = tpu.matmul %781, %782, %cst_297 {dimension_numbers = #tpu.dot_dimension_numbers<[1], [0], [0], [1], [0, 0, 1, 1], [], []>} : vector<16x32xbf16>, vector<32x4xbf16>, vector<16x4xf32> -> vector<16x4xf32>
    %784 = vector.extract_strided_slice %701 {offsets = [0, 20], sizes = [16, 4], strides = [1, 1]} : vector<16x32xbf16> to vector<16x4xbf16>
    %785 = vector.extract_strided_slice %702 {offsets = [0, 20], sizes = [32, 4], strides = [1, 1]} : vector<32x32xbf16> to vector<32x4xbf16>
    %cst_298 = arith.constant dense<0.000000e+00> : vector<16x32xf32>
    %786 = tpu.matmul %784, %785, %cst_298 {dimension_numbers = #tpu.dot_dimension_numbers<[1], [1], [0], [0], [0, 0, 1, 0], [], []>} : vector<16x4xbf16>, vector<32x4xbf16>, vector<16x32xf32> -> vector<16x32xf32>
    %787 = arith.addf %786, %5 : vector<16x32xf32>
    %cst_299 = arith.constant dense<0xFF800000> : vector<16xf32>
    %788 = vector.multi_reduction <maximumf>, %787, %cst_299 [1] : vector<16x32xf32> to vector<16xf32>
    %789 = vector.shape_cast %788 : vector<16xf32> to vector<16x1xf32>
    %790 = vector.broadcast %789 : vector<16x1xf32> to vector<16x32xf32>
    %791 = arith.subf %787, %790 : vector<16x32xf32>
    %792 = math.exp %791 : vector<16x32xf32>
    %cst_300 = arith.constant dense<0.000000e+00> : vector<16xf32>
    %793 = vector.multi_reduction <add>, %792, %cst_300 [1] : vector<16x32xf32> to vector<16xf32>
    %794 = vector.shape_cast %793 : vector<16xf32> to vector<16x1xf32>
    %795 = vector.broadcast %794 : vector<16x1xf32> to vector<16x32xf32>
    %796 = arith.divf %792, %795 : vector<16x32xf32>
    %797 = arith.truncf %796 : vector<16x32xf32> to vector<16x32xbf16>
    %798 = vector.extract_strided_slice %703 {offsets = [0, 20], sizes = [32, 4], strides = [1, 1]} : vector<32x32xbf16> to vector<32x4xbf16>
    %cst_301 = arith.constant dense<0.000000e+00> : vector<16x4xf32>
    %799 = tpu.matmul %797, %798, %cst_301 {dimension_numbers = #tpu.dot_dimension_numbers<[1], [0], [0], [1], [0, 0, 1, 1], [], []>} : vector<16x32xbf16>, vector<32x4xbf16>, vector<16x4xf32> -> vector<16x4xf32>
    %800 = vector.extract_strided_slice %701 {offsets = [0, 24], sizes = [16, 4], strides = [1, 1]} : vector<16x32xbf16> to vector<16x4xbf16>
    %801 = vector.extract_strided_slice %702 {offsets = [0, 24], sizes = [32, 4], strides = [1, 1]} : vector<32x32xbf16> to vector<32x4xbf16>
    %cst_302 = arith.constant dense<0.000000e+00> : vector<16x32xf32>
    %802 = tpu.matmul %800, %801, %cst_302 {dimension_numbers = #tpu.dot_dimension_numbers<[1], [1], [0], [0], [0, 0, 1, 0], [], []>} : vector<16x4xbf16>, vector<32x4xbf16>, vector<16x32xf32> -> vector<16x32xf32>
    %803 = arith.addf %802, %5 : vector<16x32xf32>
    %cst_303 = arith.constant dense<0xFF800000> : vector<16xf32>
    %804 = vector.multi_reduction <maximumf>, %803, %cst_303 [1] : vector<16x32xf32> to vector<16xf32>
    %805 = vector.shape_cast %804 : vector<16xf32> to vector<16x1xf32>
    %806 = vector.broadcast %805 : vector<16x1xf32> to vector<16x32xf32>
    %807 = arith.subf %803, %806 : vector<16x32xf32>
    %808 = math.exp %807 : vector<16x32xf32>
    %cst_304 = arith.constant dense<0.000000e+00> : vector<16xf32>
    %809 = vector.multi_reduction <add>, %808, %cst_304 [1] : vector<16x32xf32> to vector<16xf32>
    %810 = vector.shape_cast %809 : vector<16xf32> to vector<16x1xf32>
    %811 = vector.broadcast %810 : vector<16x1xf32> to vector<16x32xf32>
    %812 = arith.divf %808, %811 : vector<16x32xf32>
    %813 = arith.truncf %812 : vector<16x32xf32> to vector<16x32xbf16>
    %814 = vector.extract_strided_slice %703 {offsets = [0, 24], sizes = [32, 4], strides = [1, 1]} : vector<32x32xbf16> to vector<32x4xbf16>
    %cst_305 = arith.constant dense<0.000000e+00> : vector<16x4xf32>
    %815 = tpu.matmul %813, %814, %cst_305 {dimension_numbers = #tpu.dot_dimension_numbers<[1], [0], [0], [1], [0, 0, 1, 1], [], []>} : vector<16x32xbf16>, vector<32x4xbf16>, vector<16x4xf32> -> vector<16x4xf32>
    %816 = vector.extract_strided_slice %701 {offsets = [0, 28], sizes = [16, 4], strides = [1, 1]} : vector<16x32xbf16> to vector<16x4xbf16>
    %817 = vector.extract_strided_slice %702 {offsets = [0, 28], sizes = [32, 4], strides = [1, 1]} : vector<32x32xbf16> to vector<32x4xbf16>
    %cst_306 = arith.constant dense<0.000000e+00> : vector<16x32xf32>
    %818 = tpu.matmul %816, %817, %cst_306 {dimension_numbers = #tpu.dot_dimension_numbers<[1], [1], [0], [0], [0, 0, 1, 0], [], []>} : vector<16x4xbf16>, vector<32x4xbf16>, vector<16x32xf32> -> vector<16x32xf32>
    %819 = arith.addf %818, %5 : vector<16x32xf32>
    %cst_307 = arith.constant dense<0xFF800000> : vector<16xf32>
    %820 = vector.multi_reduction <maximumf>, %819, %cst_307 [1] : vector<16x32xf32> to vector<16xf32>
    %821 = vector.shape_cast %820 : vector<16xf32> to vector<16x1xf32>
    %822 = vector.broadcast %821 : vector<16x1xf32> to vector<16x32xf32>
    %823 = arith.subf %819, %822 : vector<16x32xf32>
    %824 = math.exp %823 : vector<16x32xf32>
    %cst_308 = arith.constant dense<0.000000e+00> : vector<16xf32>
    %825 = vector.multi_reduction <add>, %824, %cst_308 [1] : vector<16x32xf32> to vector<16xf32>
    %826 = vector.shape_cast %825 : vector<16xf32> to vector<16x1xf32>
    %827 = vector.broadcast %826 : vector<16x1xf32> to vector<16x32xf32>
    %828 = arith.divf %824, %827 : vector<16x32xf32>
    %829 = arith.truncf %828 : vector<16x32xf32> to vector<16x32xbf16>
    %830 = vector.extract_strided_slice %703 {offsets = [0, 28], sizes = [32, 4], strides = [1, 1]} : vector<32x32xbf16> to vector<32x4xbf16>
    %cst_309 = arith.constant dense<0.000000e+00> : vector<16x4xf32>
    %831 = tpu.matmul %829, %830, %cst_309 {dimension_numbers = #tpu.dot_dimension_numbers<[1], [0], [0], [1], [0, 0, 1, 1], [], []>} : vector<16x32xbf16>, vector<32x4xbf16>, vector<16x4xf32> -> vector<16x4xf32>
    %832 = tpu.concatenate %719, %735, %751, %767, %783, %799, %815, %831 in 1 : vector<16x4xf32>, vector<16x4xf32>, vector<16x4xf32>, vector<16x4xf32>, vector<16x4xf32>, vector<16x4xf32>, vector<16x4xf32>, vector<16x4xf32> -> vector<16x32xf32>
    %833 = arith.truncf %832 : vector<16x32xf32> to vector<16x32xbf16>
    %cst_310 = arith.constant dense<0.000000e+00> : vector<16x32xf32>
    %834 = tpu.matmul %833, %680, %cst_310 {dimension_numbers = #tpu.dot_dimension_numbers<[1], [0], [0], [1], [0, 0, 1, 1], [], []>} : vector<16x32xbf16>, vector<32x32xbf16>, vector<16x32xf32> -> vector<16x32xf32>
    %835 = vector.broadcast %682 : vector<1x32xf32> to vector<16x32xf32>
    %836 = arith.addf %834, %835 : vector<16x32xf32>
    %837 = arith.addf %673, %836 : vector<16x32xf32>
    %c1_311 = arith.constant 1 : index
    %c1_312 = arith.constant 1 : index
    %c0_313 = arith.constant 0 : index
    %c0_314 = arith.constant 0 : index
    %838 = vector.load %arg18[%c1_311, %c1_312, %c0_313, %c0_314] : memref<2x3x1x32xf32, #tpu.memory_space<vmem>>, vector<1x1x1x32xf32>
    %839 = vector.shape_cast %838 : vector<1x1x1x32xf32> to vector<1x32xf32>
    %c1_315 = arith.constant 1 : index
    %c1_316 = arith.constant 1 : index
    %c0_317 = arith.constant 0 : index
    %c0_318 = arith.constant 0 : index
    %840 = vector.load %arg19[%c1_315, %c1_316, %c0_317, %c0_318] : memref<2x3x1x32xf32, #tpu.memory_space<vmem>>, vector<1x1x1x32xf32>
    %841 = vector.shape_cast %840 : vector<1x1x1x32xf32> to vector<1x32xf32>
    %cst_319 = arith.constant dense<0.000000e+00> : vector<16xf32>
    %842 = vector.multi_reduction <add>, %837, %cst_319 [1] : vector<16x32xf32> to vector<16xf32>
    %843 = vector.shape_cast %842 : vector<16xf32> to vector<16x1xf32>
    %cst_320 = arith.constant 3.200000e+01 : f32
    %844 = vector.broadcast %cst_320 : f32 to vector<16x1xf32>
    %845 = arith.divf %843, %844 : vector<16x1xf32>
    %846 = vector.broadcast %845 : vector<16x1xf32> to vector<16x32xf32>
    %847 = arith.subf %837, %846 : vector<16x32xf32>
    %848 = arith.mulf %847, %847 : vector<16x32xf32>
    %cst_321 = arith.constant dense<0.000000e+00> : vector<16xf32>
    %849 = vector.multi_reduction <add>, %848, %cst_321 [1] : vector<16x32xf32> to vector<16xf32>
    %850 = vector.shape_cast %849 : vector<16xf32> to vector<16x1xf32>
    %cst_322 = arith.constant 3.200000e+01 : f32
    %851 = vector.broadcast %cst_322 : f32 to vector<16x1xf32>
    %852 = arith.divf %850, %851 : vector<16x1xf32>
    %cst_323 = arith.constant 9.99999974E-6 : f32
    %853 = vector.broadcast %cst_323 : f32 to vector<16x1xf32>
    %854 = arith.addf %852, %853 : vector<16x1xf32>
    %855 = math.rsqrt %854 : vector<16x1xf32>
    %856 = vector.broadcast %855 : vector<16x1xf32> to vector<16x32xf32>
    %857 = arith.mulf %847, %856 : vector<16x32xf32>
    %858 = vector.broadcast %839 : vector<1x32xf32> to vector<16x32xf32>
    %859 = arith.mulf %857, %858 : vector<16x32xf32>
    %860 = vector.broadcast %841 : vector<1x32xf32> to vector<16x32xf32>
    %861 = arith.addf %859, %860 : vector<16x32xf32>
    %862 = arith.truncf %861 : vector<16x32xf32> to vector<16x32xbf16>
    %cst_324 = arith.constant 0.000000e+00 : f32
    %863 = vector.broadcast %cst_324 : f32 to vector<16x32xf32>
    %c1_325 = arith.constant 1 : index
    %c0_326 = arith.constant 0 : index
    %c0_327 = arith.constant 0 : index
    %864 = vector.load %arg14[%c1_325, %c0_326, %c0_327] : memref<2x32x2048xbf16, #tpu.memory_space<vmem>>, vector<1x32x512xbf16>
    %865 = vector.shape_cast %864 : vector<1x32x512xbf16> to vector<32x512xbf16>
    %c1_328 = arith.constant 1 : index
    %c0_329 = arith.constant 0 : index
    %c0_330 = arith.constant 0 : index
    %866 = vector.load %arg15[%c1_328, %c0_329, %c0_330] : memref<2x1x2048xf32, #tpu.memory_space<vmem>>, vector<1x1x512xf32>
    %867 = vector.shape_cast %866 : vector<1x1x512xf32> to vector<1x512xf32>
    %c1_331 = arith.constant 1 : index
    %c0_332 = arith.constant 0 : index
    %c0_333 = arith.constant 0 : index
    %868 = vector.load %arg16[%c1_331, %c0_332, %c0_333] : memref<2x32x2048xbf16, #tpu.memory_space<vmem>>, vector<1x32x512xbf16>
    %869 = vector.shape_cast %868 : vector<1x32x512xbf16> to vector<32x512xbf16>
    %cst_334 = arith.constant dense<0.000000e+00> : vector<16x512xf32>
    %870 = tpu.matmul %862, %865, %cst_334 {dimension_numbers = #tpu.dot_dimension_numbers<[1], [0], [0], [1], [0, 0, 1, 1], [], []>} : vector<16x32xbf16>, vector<32x512xbf16>, vector<16x512xf32> -> vector<16x512xf32>
    %871 = vector.broadcast %867 : vector<1x512xf32> to vector<16x512xf32>
    %872 = arith.addf %870, %871 : vector<16x512xf32>
    %cst_335 = arith.constant 0.000000e+00 : f32
    %873 = vector.broadcast %cst_335 : f32 to vector<16x512xf32>
    %874 = arith.maximumf %872, %873 : vector<16x512xf32>
    %875 = arith.truncf %874 : vector<16x512xf32> to vector<16x512xbf16>
    %cst_336 = arith.constant dense<0.000000e+00> : vector<16x32xf32>
    %876 = tpu.matmul %875, %869, %cst_336 {dimension_numbers = #tpu.dot_dimension_numbers<[1], [1], [0], [0], [0, 0, 1, 0], [], []>} : vector<16x512xbf16>, vector<32x512xbf16>, vector<16x32xf32> -> vector<16x32xf32>
    %877 = arith.addf %863, %876 : vector<16x32xf32>
    %c1_337 = arith.constant 1 : index
    %c0_338 = arith.constant 0 : index
    %c512_339 = arith.constant 512 : index
    %878 = vector.load %arg14[%c1_337, %c0_338, %c512_339] : memref<2x32x2048xbf16, #tpu.memory_space<vmem>>, vector<1x32x512xbf16>
    %879 = vector.shape_cast %878 : vector<1x32x512xbf16> to vector<32x512xbf16>
    %c1_340 = arith.constant 1 : index
    %c0_341 = arith.constant 0 : index
    %c512_342 = arith.constant 512 : index
    %880 = vector.load %arg15[%c1_340, %c0_341, %c512_342] : memref<2x1x2048xf32, #tpu.memory_space<vmem>>, vector<1x1x512xf32>
    %881 = vector.shape_cast %880 : vector<1x1x512xf32> to vector<1x512xf32>
    %c1_343 = arith.constant 1 : index
    %c0_344 = arith.constant 0 : index
    %c512_345 = arith.constant 512 : index
    %882 = vector.load %arg16[%c1_343, %c0_344, %c512_345] : memref<2x32x2048xbf16, #tpu.memory_space<vmem>>, vector<1x32x512xbf16>
    %883 = vector.shape_cast %882 : vector<1x32x512xbf16> to vector<32x512xbf16>
    %cst_346 = arith.constant dense<0.000000e+00> : vector<16x512xf32>
    %884 = tpu.matmul %862, %879, %cst_346 {dimension_numbers = #tpu.dot_dimension_numbers<[1], [0], [0], [1], [0, 0, 1, 1], [], []>} : vector<16x32xbf16>, vector<32x512xbf16>, vector<16x512xf32> -> vector<16x512xf32>
    %885 = vector.broadcast %881 : vector<1x512xf32> to vector<16x512xf32>
    %886 = arith.addf %884, %885 : vector<16x512xf32>
    %cst_347 = arith.constant 0.000000e+00 : f32
    %887 = vector.broadcast %cst_347 : f32 to vector<16x512xf32>
    %888 = arith.maximumf %886, %887 : vector<16x512xf32>
    %889 = arith.truncf %888 : vector<16x512xf32> to vector<16x512xbf16>
    %cst_348 = arith.constant dense<0.000000e+00> : vector<16x32xf32>
    %890 = tpu.matmul %889, %883, %cst_348 {dimension_numbers = #tpu.dot_dimension_numbers<[1], [1], [0], [0], [0, 0, 1, 0], [], []>} : vector<16x512xbf16>, vector<32x512xbf16>, vector<16x32xf32> -> vector<16x32xf32>
    %891 = arith.addf %877, %890 : vector<16x32xf32>
    %c1_349 = arith.constant 1 : index
    %c0_350 = arith.constant 0 : index
    %c1024_351 = arith.constant 1024 : index
    %892 = vector.load %arg14[%c1_349, %c0_350, %c1024_351] : memref<2x32x2048xbf16, #tpu.memory_space<vmem>>, vector<1x32x512xbf16>
    %893 = vector.shape_cast %892 : vector<1x32x512xbf16> to vector<32x512xbf16>
    %c1_352 = arith.constant 1 : index
    %c0_353 = arith.constant 0 : index
    %c1024_354 = arith.constant 1024 : index
    %894 = vector.load %arg15[%c1_352, %c0_353, %c1024_354] : memref<2x1x2048xf32, #tpu.memory_space<vmem>>, vector<1x1x512xf32>
    %895 = vector.shape_cast %894 : vector<1x1x512xf32> to vector<1x512xf32>
    %c1_355 = arith.constant 1 : index
    %c0_356 = arith.constant 0 : index
    %c1024_357 = arith.constant 1024 : index
    %896 = vector.load %arg16[%c1_355, %c0_356, %c1024_357] : memref<2x32x2048xbf16, #tpu.memory_space<vmem>>, vector<1x32x512xbf16>
    %897 = vector.shape_cast %896 : vector<1x32x512xbf16> to vector<32x512xbf16>
    %cst_358 = arith.constant dense<0.000000e+00> : vector<16x512xf32>
    %898 = tpu.matmul %862, %893, %cst_358 {dimension_numbers = #tpu.dot_dimension_numbers<[1], [0], [0], [1], [0, 0, 1, 1], [], []>} : vector<16x32xbf16>, vector<32x512xbf16>, vector<16x512xf32> -> vector<16x512xf32>
    %899 = vector.broadcast %895 : vector<1x512xf32> to vector<16x512xf32>
    %900 = arith.addf %898, %899 : vector<16x512xf32>
    %cst_359 = arith.constant 0.000000e+00 : f32
    %901 = vector.broadcast %cst_359 : f32 to vector<16x512xf32>
    %902 = arith.maximumf %900, %901 : vector<16x512xf32>
    %903 = arith.truncf %902 : vector<16x512xf32> to vector<16x512xbf16>
    %cst_360 = arith.constant dense<0.000000e+00> : vector<16x32xf32>
    %904 = tpu.matmul %903, %897, %cst_360 {dimension_numbers = #tpu.dot_dimension_numbers<[1], [1], [0], [0], [0, 0, 1, 0], [], []>} : vector<16x512xbf16>, vector<32x512xbf16>, vector<16x32xf32> -> vector<16x32xf32>
    %905 = arith.addf %891, %904 : vector<16x32xf32>
    %c1_361 = arith.constant 1 : index
    %c0_362 = arith.constant 0 : index
    %c1536_363 = arith.constant 1536 : index
    %906 = vector.load %arg14[%c1_361, %c0_362, %c1536_363] : memref<2x32x2048xbf16, #tpu.memory_space<vmem>>, vector<1x32x512xbf16>
    %907 = vector.shape_cast %906 : vector<1x32x512xbf16> to vector<32x512xbf16>
    %c1_364 = arith.constant 1 : index
    %c0_365 = arith.constant 0 : index
    %c1536_366 = arith.constant 1536 : index
    %908 = vector.load %arg15[%c1_364, %c0_365, %c1536_366] : memref<2x1x2048xf32, #tpu.memory_space<vmem>>, vector<1x1x512xf32>
    %909 = vector.shape_cast %908 : vector<1x1x512xf32> to vector<1x512xf32>
    %c1_367 = arith.constant 1 : index
    %c0_368 = arith.constant 0 : index
    %c1536_369 = arith.constant 1536 : index
    %910 = vector.load %arg16[%c1_367, %c0_368, %c1536_369] : memref<2x32x2048xbf16, #tpu.memory_space<vmem>>, vector<1x32x512xbf16>
    %911 = vector.shape_cast %910 : vector<1x32x512xbf16> to vector<32x512xbf16>
    %cst_370 = arith.constant dense<0.000000e+00> : vector<16x512xf32>
    %912 = tpu.matmul %862, %907, %cst_370 {dimension_numbers = #tpu.dot_dimension_numbers<[1], [0], [0], [1], [0, 0, 1, 1], [], []>} : vector<16x32xbf16>, vector<32x512xbf16>, vector<16x512xf32> -> vector<16x512xf32>
    %913 = vector.broadcast %909 : vector<1x512xf32> to vector<16x512xf32>
    %914 = arith.addf %912, %913 : vector<16x512xf32>
    %cst_371 = arith.constant 0.000000e+00 : f32
    %915 = vector.broadcast %cst_371 : f32 to vector<16x512xf32>
    %916 = arith.maximumf %914, %915 : vector<16x512xf32>
    %917 = arith.truncf %916 : vector<16x512xf32> to vector<16x512xbf16>
    %cst_372 = arith.constant dense<0.000000e+00> : vector<16x32xf32>
    %918 = tpu.matmul %917, %911, %cst_372 {dimension_numbers = #tpu.dot_dimension_numbers<[1], [1], [0], [0], [0, 0, 1, 0], [], []>} : vector<16x512xbf16>, vector<32x512xbf16>, vector<16x32xf32> -> vector<16x32xf32>
    %919 = arith.addf %905, %918 : vector<16x32xf32>
    %c1_373 = arith.constant 1 : index
    %c0_374 = arith.constant 0 : index
    %c0_375 = arith.constant 0 : index
    %920 = vector.load %arg17[%c1_373, %c0_374, %c0_375] : memref<2x1x32xf32, #tpu.memory_space<vmem>>, vector<1x1x32xf32>
    %921 = vector.shape_cast %920 : vector<1x1x32xf32> to vector<1x32xf32>
    %922 = vector.broadcast %921 : vector<1x32xf32> to vector<16x32xf32>
    %923 = arith.addf %919, %922 : vector<16x32xf32>
    %924 = arith.addf %861, %923 : vector<16x32xf32>
    %c1_376 = arith.constant 1 : index
    %c2_377 = arith.constant 2 : index
    %c0_378 = arith.constant 0 : index
    %c0_379 = arith.constant 0 : index
    %925 = vector.load %arg18[%c1_376, %c2_377, %c0_378, %c0_379] : memref<2x3x1x32xf32, #tpu.memory_space<vmem>>, vector<1x1x1x32xf32>
    %926 = vector.shape_cast %925 : vector<1x1x1x32xf32> to vector<1x32xf32>
    %c1_380 = arith.constant 1 : index
    %c2_381 = arith.constant 2 : index
    %c0_382 = arith.constant 0 : index
    %c0_383 = arith.constant 0 : index
    %927 = vector.load %arg19[%c1_380, %c2_381, %c0_382, %c0_383] : memref<2x3x1x32xf32, #tpu.memory_space<vmem>>, vector<1x1x1x32xf32>
    %928 = vector.shape_cast %927 : vector<1x1x1x32xf32> to vector<1x32xf32>
    %cst_384 = arith.constant dense<0.000000e+00> : vector<16xf32>
    %929 = vector.multi_reduction <add>, %924, %cst_384 [1] : vector<16x32xf32> to vector<16xf32>
    %930 = vector.shape_cast %929 : vector<16xf32> to vector<16x1xf32>
    %cst_385 = arith.constant 3.200000e+01 : f32
    %931 = vector.broadcast %cst_385 : f32 to vector<16x1xf32>
    %932 = arith.divf %930, %931 : vector<16x1xf32>
    %933 = vector.broadcast %932 : vector<16x1xf32> to vector<16x32xf32>
    %934 = arith.subf %924, %933 : vector<16x32xf32>
    %935 = arith.mulf %934, %934 : vector<16x32xf32>
    %cst_386 = arith.constant dense<0.000000e+00> : vector<16xf32>
    %936 = vector.multi_reduction <add>, %935, %cst_386 [1] : vector<16x32xf32> to vector<16xf32>
    %937 = vector.shape_cast %936 : vector<16xf32> to vector<16x1xf32>
    %cst_387 = arith.constant 3.200000e+01 : f32
    %938 = vector.broadcast %cst_387 : f32 to vector<16x1xf32>
    %939 = arith.divf %937, %938 : vector<16x1xf32>
    %cst_388 = arith.constant 9.99999974E-6 : f32
    %940 = vector.broadcast %cst_388 : f32 to vector<16x1xf32>
    %941 = arith.addf %939, %940 : vector<16x1xf32>
    %942 = math.rsqrt %941 : vector<16x1xf32>
    %943 = vector.broadcast %942 : vector<16x1xf32> to vector<16x32xf32>
    %944 = arith.mulf %934, %943 : vector<16x32xf32>
    %945 = vector.broadcast %926 : vector<1x32xf32> to vector<16x32xf32>
    %946 = arith.mulf %944, %945 : vector<16x32xf32>
    %947 = vector.broadcast %928 : vector<1x32xf32> to vector<16x32xf32>
    %948 = arith.addf %946, %947 : vector<16x32xf32>
    %cst_389 = arith.constant dense<0.000000e+00> : vector<16xf32>
    %949 = vector.multi_reduction <add>, %948, %cst_389 [1] : vector<16x32xf32> to vector<16xf32>
    %950 = vector.shape_cast %949 : vector<16xf32> to vector<16x1xf32>
    %cst_390 = arith.constant 3.200000e+01 : f32
    %951 = vector.broadcast %cst_390 : f32 to vector<16x1xf32>
    %952 = arith.divf %950, %951 : vector<16x1xf32>
    %953 = vector.broadcast %952 : vector<16x1xf32> to vector<16x32xf32>
    %954 = arith.subf %948, %953 : vector<16x32xf32>
    %955 = arith.mulf %954, %954 : vector<16x32xf32>
    %cst_391 = arith.constant dense<0.000000e+00> : vector<16xf32>
    %956 = vector.multi_reduction <add>, %955, %cst_391 [1] : vector<16x32xf32> to vector<16xf32>
    %957 = vector.shape_cast %956 : vector<16xf32> to vector<16x1xf32>
    %cst_392 = arith.constant 3.200000e+01 : f32
    %958 = vector.broadcast %cst_392 : f32 to vector<16x1xf32>
    %959 = arith.divf %957, %958 : vector<16x1xf32>
    %cst_393 = arith.constant 9.99999974E-6 : f32
    %960 = vector.broadcast %cst_393 : f32 to vector<16x1xf32>
    %961 = arith.addf %959, %960 : vector<16x1xf32>
    %962 = math.rsqrt %961 : vector<16x1xf32>
    %963 = vector.broadcast %962 : vector<16x1xf32> to vector<16x32xf32>
    %964 = arith.mulf %954, %963 : vector<16x32xf32>
    %965 = vector.broadcast %6 : vector<1x32xf32> to vector<16x32xf32>
    %966 = arith.mulf %964, %965 : vector<16x32xf32>
    %967 = vector.broadcast %7 : vector<1x32xf32> to vector<16x32xf32>
    %968 = arith.addf %966, %967 : vector<16x32xf32>
    %c1_394 = arith.constant 1 : index
    %c0_395 = arith.constant 0 : index
    %c0_396 = arith.constant 0 : index
    %969 = vector.load %arg22[%c1_394, %c0_395, %c0_396] : memref<2x16x32xf32, #tpu.memory_space<vmem>>, vector<1x16x32xf32>
    %970 = vector.shape_cast %969 : vector<1x16x32xf32> to vector<16x32xf32>
    %971 = vector.shape_cast %968 : vector<16x32xf32> to vector<1x16x32xf32>
    tpu.vector_store %arg22[%c1_394, %c0_395, %c0_396], %971 {strides = array<i32>} : memref<2x16x32xf32, #tpu.memory_space<vmem>>, vector<1x16x32xf32>,
    return
  }
}

</mosaic_0001>

<llo_original>
// kernel: eq.15
$region0: #{eq.15}
  %s0 = inlined_call_operand.vmem [shape: s32[2,8], index: 0, kind: input, shape index: {}]
  %s1 = inlined_call_operand.vmem [shape: s32[16], index: 1, kind: output, shape index: {}]
  $region1: #{eq.15} parent=0
    #allocation0 [shape = 'u8[4096]{0}', space=vmem, size = 0x1000, scoped, tag = 'scoped mem for output reshape']
    #allocation1 [shape = 'u8[4096]{0}', space=vmem, size = 0x1000, scoped, tag = 'scoped mem for input reshape']
    %s3 = sshllo.u32 0, 2
    %v4 = vld [vmem:[%s0] sm:%s3]
    %5 = vst [vmem:[#allocation1] sm:%s3] %v4
    %v6 = vld [vmem:[#allocation1] sm:$0x1]
    %vm7 = vcmask 64512
    %8 = vst.msk [vmem:[#allocation0] sm:$0x1] %vm7, %v6
    %s9 = scalar_lea.vmem [#allocation1], 1
    %v10 = vld [vmem:[%s9] sm:$0x1]
    %11 = vrot.lane.b32.xlu0 %v10, 8
    %v12 = vpop.permute.xlu0 %11
    %vm13 = vcmask 130112
    %14 = vst.msk [vmem:[#allocation0] sm:$0x1] %vm13, %v12
    %s16 = sshllo.u32 0, 1
    %v18 = vld [vmem:[#allocation0] sm:%s16]
    %s19 = sshllo.u32 0, 1
    %20 = vst [vmem:[%s1] sm:%s19] %v18

// kernel: eq.25
$region0: #{eq.25}
  %s0 = inlined_call_operand.vmem [shape: s32[2,16], index: 0, kind: input, shape index: {}]
  %s1 = inlined_call_operand.vmem [shape: s32[32], index: 1, kind: output, shape index: {}]
  $region1: #{eq.25} parent=0
    #allocation0 [shape = 'u8[4096]{0}', space=vmem, size = 0x1000, scoped, tag = 'scoped mem for output reshape']
    #allocation1 [shape = 'u8[4096]{0}', space=vmem, size = 0x1000, scoped, tag = 'scoped mem for input reshape']
    %s3 = sshllo.u32 0, 2
    %v4 = vld [vmem:[%s0] sm:%s3]
    %5 = vst [vmem:[#allocation1] sm:%s3] %v4
    %v6 = vld [vmem:[#allocation1] sm:$0x1]
    %vm7 = vcmask 130048
    %8 = vst.msk [vmem:[#allocation0] sm:$0x1] %vm7, %v6
    %s9 = scalar_lea.vmem [#allocation1], 1
    %v10 = vld [vmem:[%s9] sm:$0x1]
    %11 = vrot.lane.b32.xlu0 %v10, 16
    %v12 = vpop.permute.xlu0 %11
    %vm13 = vcmask 261248
    %14 = vst.msk [vmem:[#allocation0] sm:$0x1] %vm13, %v12
    %s16 = sshllo.u32 0, 1
    %v18 = vld [vmem:[#allocation0] sm:%s16]
    %s19 = sshllo.u32 0, 1
    %20 = vst [vmem:[%s1] sm:%s19] %v18

// kernel: decoder_forward.1
$region0: #{decoder_forward.1}
  #allocation0 [shape = 'u32[]', space=smem, size = 0x4, offset = 0x4, fixed_abs, tag = 'smem constant byte address 0x4 - core index']
  #allocation1 [shape = 'u32[144,128]{1,0:T(1,128)}', space=vmem, size = 0x12000, scoped, tag = 'internal scratch']
  %s0 = inlined_call_operand.vmem [shape: f32[16,32], index: 0, kind: input, shape index: {}]
  %s1 = inlined_call_operand.vmem [shape: f32[16,32], index: 1, kind: input, shape index: {}]
  %s2 = inlined_call_operand.vmem [shape: f32[32,32], index: 2, kind: input, shape index: {}]
  %s3 = inlined_call_operand.vmem [shape: f32[32,32], index: 3, kind: input, shape index: {}]
  %s4 = inlined_call_operand.vmem [shape: f32[16,16], index: 4, kind: input, shape index: {}]
  %s5 = inlined_call_operand.vmem [shape: f32[16,32], index: 5, kind: input, shape index: {}]
  %s6 = inlined_call_operand.vmem [shape: bf16[2,32,96], index: 6, kind: input, shape index: {}]
  %s7 = inlined_call_operand.vmem [shape: f32[2,1,96], index: 7, kind: input, shape index: {}]
  %s8 = inlined_call_operand.vmem [shape: bf16[2,32,32], index: 8, kind: input, shape index: {}]
  %s9 = inlined_call_operand.vmem [shape: f32[2,1,32], index: 9, kind: input, shape index: {}]
  %s10 = inlined_call_operand.vmem [shape: bf16[2,32,96], index: 10, kind: input, shape index: {}]
  %s11 = inlined_call_operand.vmem [shape: f32[2,1,96], index: 11, kind: input, shape index: {}]
  %s12 = inlined_call_operand.vmem [shape: bf16[2,32,32], index: 12, kind: input, shape index: {}]
  %s13 = inlined_call_operand.vmem [shape: f32[2,1,32], index: 13, kind: input, shape index: {}]
  %s14 = inlined_call_operand.hbm [shape: bf16[2,32,2048], index: 14, kind: input, shape index: {}]
  %s15 = inlined_call_operand.vmem [shape: f32[2,1,2048], index: 15, kind: input, shape index: {}]
  %s16 = inlined_call_operand.hbm [shape: bf16[2,32,2048], index: 16, kind: input, shape index: {}]
  %s17 = inlined_call_operand.vmem [shape: f32[2,1,32], index: 17, kind: input, shape index: {}]
  %s18 = inlined_call_operand.vmem [shape: f32[2,3,1,32], index: 18, kind: input, shape index: {}]
  %s19 = inlined_call_operand.vmem [shape: f32[2,3,1,32], index: 19, kind: input, shape index: {}]
  %s20 = inlined_call_operand.vmem [shape: f32[1,32], index: 20, kind: input, shape index: {}]
  %s21 = inlined_call_operand.vmem [shape: f32[1,32], index: 21, kind: input, shape index: {}]
  %s22 = inlined_call_operand.hbm [shape: f32[2,16,32], index: 22, kind: output, shape index: {}]
  %s23 = sld [smem:[#allocation0]]
  $region106: #{decoder_forward.1} parent=0
    _
  %s25 = ssub.s32 1, %s23
  %s26 = scalar_select 0, %s25, %s23
  $region1: #{decoder_forward.1} parent=0
    #allocation2 [shape = 'u8[262144]{0}', space=vmem, size = 0x40000, scoped, tag = 'input window, operand 14, single buffered']
    #allocation3 [shape = 's32[1]{0}', space=sflag, size = 0x4, scoped, tag = 'scoped memory for decoder_forward.1']
    #allocation4 [shape = 's32[1]{0}', space=sflag, size = 0x4, scoped, tag = 'scoped memory for decoder_forward.1']
    #allocation5 [shape = 'u8[262144]{0}', space=vmem, size = 0x40000, scoped, tag = 'input window, operand 16, single buffered']
    #allocation6 [shape = 's32[1]{0}', space=sflag, size = 0x4, scoped, tag = 'scoped memory for decoder_forward.1']
    #allocation7 [shape = 'u8[16384]{0}', space=vmem, size = 0x4000, scoped, tag = 'output window, operand 0, single buffered']
    %27 = vsyncpa [#allocation3], 0
    %28 = vsyncpa [#allocation6], 0
    %29 = vsyncpa [#allocation4], 0
    // Predicated region
    $region2: #{decoder_forward.1} parent=1 // pred_check
      _
    $region3: #{decoder_forward.1} parent=1 // pred_check_branch
      %31 = sbr.rel (0) target = $region5
    $region4: #{decoder_forward.1} parent=1 // pred_region
      _
    $region5: #{decoder_forward.1} parent=1 // pred_fallthru
      _
    // Predicated region
    $region6: #{decoder_forward.1} parent=1 // pred_check
      _
    $region7: #{decoder_forward.1} parent=1 // pred_check_branch
      %33 = sbr.rel (0) target = $region9
    $region8: #{decoder_forward.1} parent=1 // pred_region
      _
    $region9: #{decoder_forward.1} parent=1 // pred_fallthru
      _
    // Predicated region
    $region10: #{decoder_forward.1} parent=1 // pred_check
      _
    $region11: #{decoder_forward.1} parent=1 // pred_check_branch
      %35 = sbr.rel (0) target = $region13
    $region12: #{decoder_forward.1} parent=1 // pred_region
      _
    $region13: #{decoder_forward.1} parent=1 // pred_fallthru
      _
    // Predicated region
    $region14: #{decoder_forward.1} parent=1 // pred_check
      _
    $region15: #{decoder_forward.1} parent=1 // pred_check_branch
      %37 = sbr.rel (0) target = $region17
    $region16: #{decoder_forward.1} parent=1 // pred_region
      _
    $region17: #{decoder_forward.1} parent=1 // pred_fallthru
      _
    // Predicated region
    $region18: #{decoder_forward.1} parent=1 // pred_check
      _
    $region19: #{decoder_forward.1} parent=1 // pred_check_branch
      %39 = sbr.rel (0) target = $region21
    $region20: #{decoder_forward.1} parent=1 // pred_region
      _
    $region21: #{decoder_forward.1} parent=1 // pred_fallthru
      _
    // Predicated region
    $region22: #{decoder_forward.1} parent=1 // pred_check
      _
    $region23: #{decoder_forward.1} parent=1 // pred_check_branch
      %41 = sbr.rel (0) target = $region25
    $region24: #{decoder_forward.1} parent=1 // pred_region
      _
    $region25: #{decoder_forward.1} parent=1 // pred_fallthru
      _
    // Predicated region
    $region26: #{decoder_forward.1} parent=1 // pred_check
      _
    $region27: #{decoder_forward.1} parent=1 // pred_check_branch
      %43 = sbr.rel (0) target = $region29
    $region28: #{decoder_forward.1} parent=1 // pred_region
      _
    $region29: #{decoder_forward.1} parent=1 // pred_fallthru
      _
    // Predicated region
    $region30: #{decoder_forward.1} parent=1 // pred_check
      _
    $region31: #{decoder_forward.1} parent=1 // pred_check_branch
      %45 = sbr.rel (0) target = $region33
    $region32: #{decoder_forward.1} parent=1 // pred_region
      _
    $region33: #{decoder_forward.1} parent=1 // pred_fallthru
      _
    // Predicated region
    $region34: #{decoder_forward.1} parent=1 // pred_check
      _
    $region35: #{decoder_forward.1} parent=1 // pred_check_branch
      %47 = sbr.rel (0) target = $region37
    $region36: #{decoder_forward.1} parent=1 // pred_region
      _
    $region37: #{decoder_forward.1} parent=1 // pred_fallthru
      _
    // Predicated region
    $region38: #{decoder_forward.1} parent=1 // pred_check
      _
    $region39: #{decoder_forward.1} parent=1 // pred_check_branch
      %49 = sbr.rel (0) target = $region41
    $region40: #{decoder_forward.1} parent=1 // pred_region
      _
    $region41: #{decoder_forward.1} parent=1 // pred_fallthru
      _
    // Predicated region
    $region42: #{decoder_forward.1} parent=1 // pred_check
      _
    $region43: #{decoder_forward.1} parent=1 // pred_check_branch
      %51 = sbr.rel (0) target = $region45
    $region44: #{decoder_forward.1} parent=1 // pred_region
      _
    $region45: #{decoder_forward.1} parent=1 // pred_fallthru
      _
    // Predicated region
    $region46: #{decoder_forward.1} parent=1 // pred_check
      _
    $region47: #{decoder_forward.1} parent=1 // pred_check_branch
      %53 = sbr.rel (0) target = $region49
    $region48: #{decoder_forward.1} parent=1 // pred_region
      _
    $region49: #{decoder_forward.1} parent=1 // pred_fallthru
      _
    // Predicated region
    $region50: #{decoder_forward.1} parent=1 // pred_check
      _
    $region51: #{decoder_forward.1} parent=1 // pred_check_branch
      %55 = sbr.rel (0) target = $region53
    $region52: #{decoder_forward.1} parent=1 // pred_region
      _
    $region53: #{decoder_forward.1} parent=1 // pred_fallthru
      _
    // Predicated region
    $region54: #{decoder_forward.1} parent=1 // pred_check
      _
    $region55: #{decoder_forward.1} parent=1 // pred_check_branch
      %57 = sbr.rel (0) target = $region57
    $region56: #{decoder_forward.1} parent=1 // pred_region
      _
    $region57: #{decoder_forward.1} parent=1 // pred_fallthru
      _
    // Predicated region
    $region58: #{decoder_forward.1} parent=1 // pred_check
      _
    $region59: #{decoder_forward.1} parent=1 // pred_check_branch
      %59 = sbr.rel (0) target = $region61
    $region60: #{decoder_forward.1} parent=1 // pred_region
      %s61 = ssub.s32 8192, 8192
      %62 = vsyncadd [#allocation3], %s61
      %s63 = sshll.u32 [#allocation2], 4
      %s64 = int_to_ptr.vmem [resolvable:$true] %s63
      %69 = dma.hbm_to_vmem [thread:$0]  %s14, 8192, %s64, [#allocation3], 1024, 1024, 64
    $region61: #{decoder_forward.1} parent=1 // pred_fallthru
      _
    // Predicated region
    $region62: #{decoder_forward.1} parent=1 // pred_check
      _
    $region63: #{decoder_forward.1} parent=1 // pred_check_branch
      %71 = sbr.rel (0) target = $region65
    $region64: #{decoder_forward.1} parent=1 // pred_region
      _
    $region65: #{decoder_forward.1} parent=1 // pred_fallthru
      _
    // Predicated region
    $region66: #{decoder_forward.1} parent=1 // pred_check
      _
    $region67: #{decoder_forward.1} parent=1 // pred_check_branch
      %73 = sbr.rel (0) target = $region69
    $region68: #{decoder_forward.1} parent=1 // pred_region
      %s75 = ssub.s32 8192, 8192
      %76 = vsyncadd [#allocation6], %s75
      %s77 = sshll.u32 [#allocation5], 4
      %s78 = int_to_ptr.vmem [resolvable:$true] %s77
      %83 = dma.hbm_to_vmem [thread:$0]  %s16, 8192, %s78, [#allocation6], 1024, 1024, 64
    $region69: #{decoder_forward.1} parent=1 // pred_fallthru
      _
    // Predicated region
    $region70: #{decoder_forward.1} parent=1 // pred_check
      _
    $region71: #{decoder_forward.1} parent=1 // pred_check_branch
      %85 = sbr.rel (0) target = $region73
    $region72: #{decoder_forward.1} parent=1 // pred_region
      _
    $region73: #{decoder_forward.1} parent=1 // pred_fallthru
      _
    // Predicated region
    $region74: #{decoder_forward.1} parent=1 // pred_check
      _
    $region75: #{decoder_forward.1} parent=1 // pred_check_branch
      %87 = sbr.rel (0) target = $region77
    $region76: #{decoder_forward.1} parent=1 // pred_region
      _
    $region77: #{decoder_forward.1} parent=1 // pred_fallthru
      _
    // Predicated region
    $region78: #{decoder_forward.1} parent=1 // pred_check
      _
    $region79: #{decoder_forward.1} parent=1 // pred_check_branch
      %89 = sbr.rel (0) target = $region81
    $region80: #{decoder_forward.1} parent=1 // pred_region
      _
    $region81: #{decoder_forward.1} parent=1 // pred_fallthru
      _
    // Predicated region
    $region82: #{decoder_forward.1} parent=1 // pred_check
      _
    $region83: #{decoder_forward.1} parent=1 // pred_check_branch
      %91 = sbr.rel (0) target = $region85
    $region84: #{decoder_forward.1} parent=1 // pred_region
      _
    $region85: #{decoder_forward.1} parent=1 // pred_fallthru
      _
    // Predicated region
    $region86: #{decoder_forward.1} parent=1 // pred_check
      _
    $region87: #{decoder_forward.1} parent=1 // pred_check_branch
      %93 = sbr.rel (0) target = $region89
    $region88: #{decoder_forward.1} parent=1 // pred_region
      _
    $region89: #{decoder_forward.1} parent=1 // pred_fallthru
      _
    // Predicated region
    $region90: #{decoder_forward.1} parent=1 // pred_check
      _
    $region91: #{decoder_forward.1} parent=1 // pred_check_branch
      %95 = sbr.rel (0) target = $region93
    $region92: #{decoder_forward.1} parent=1 // pred_region
      %96 = dma.done [#allocation3], 8192
    $region93: #{decoder_forward.1} parent=1 // pred_fallthru
      _
    // Predicated region
    $region94: #{decoder_forward.1} parent=1 // pred_check
      _
    $region95: #{decoder_forward.1} parent=1 // pred_check_branch
      %98 = sbr.rel (0) target = $region97
    $region96: #{decoder_forward.1} parent=1 // pred_region
      %99 = dma.done [#allocation6], 8192
    $region97: #{decoder_forward.1} parent=1 // pred_fallthru
      _
    %v101 = vld [vmem:[%s0] sm:$0xff]
    %v102 = vld [vmem:[%s0 + $0x8] sm:$0xff]
    %v103 = vld [vmem:[%s1] sm:$0xff]
    %v104 = vld [vmem:[%s1 + $0x8] sm:$0xff]
    %v105 = vld [vmem:[%s2] sm:$0xff]
    %v106 = vld [vmem:[%s2 + $0x8] sm:$0xff]
    %v107 = vld [vmem:[%s2 + $0x10] sm:$0xff]
    %v108 = vld [vmem:[%s2 + $0x18] sm:$0xff]
    %v109 = vld [vmem:[%s3] sm:$0xff]
    %v110 = vld [vmem:[%s3 + $0x8] sm:$0xff]
    %v111 = vld [vmem:[%s3 + $0x10] sm:$0xff]
    %v112 = vld [vmem:[%s3 + $0x18] sm:$0xff]
    %v113 = vld [vmem:[%s4] sm:$0xff]
    %v114 = vld [vmem:[%s4 + $0x8] sm:$0xff]
    %v115 = vld [vmem:[%s5] sm:$0xff]
    %v116 = vld [vmem:[%s5 + $0x8] sm:$0xff]
    %v117 = vld [vmem:[%s20] sm:$0x1]
    %v118 = vld [vmem:[%s21] sm:$0x1]
    %v119 = vadd.f32 %v101, %v103
    %v120 = vadd.f32 %v102, %v104
    %v121 = vld [vmem:[%s6] sm:$0xf]
    %v122 = vld [vmem:[%s6 + $0x4] sm:$0xf]
    %v123 = vld [vmem:[%s6 + $0x8] sm:$0xf]
    %v124 = vld [vmem:[%s6 + $0xc] sm:$0xf]
    %v125 = vld [vmem:[%s7] sm:$0x1]
    %v126 = vld [vmem:[%s8] sm:$0xf]
    %v127 = vld [vmem:[%s8 + $0x4] sm:$0xf]
    %v128 = vld [vmem:[%s8 + $0x8] sm:$0xf]
    %v129 = vld [vmem:[%s8 + $0xc] sm:$0xf]
    %v130 = vld [vmem:[%s9] sm:$0x1]
    %v131 = vpack.c.bf16 %v120, %v119
    %v133 = vlaneseq
    %v134 = vshrl.u32 %v133, 7
    %v135 = vsub.s32 0, %v134
    %v136 = vrot.slane %v125, %v135
    %v142 = vunpack.c.l.b16 %v121
    %v143 = vunpack.c.l.b16 %v122
    %v144 = vunpack.c.l.b16 %v123
    %v145 = vunpack.c.l.b16 %v124
    %v146 = vpack.c.b16 %v143, %v142
    %v147 = vpack.c.b16 %v145, %v144
    %vm150 = vcmask 261120
    %v152 = vsel %vm150, %v131, 0
    %154 = vmatprep.subr.bf16.mxu0 0
    %155 = vmatpush1.bf16.msra.mxu0 %v146
    %156 = vmatprep.subr.bf16.mxu0 0
    %157 = vmatpush1.bf16.msra.mxu0 %v147
    %158 = vmatprep.subr.bf16.mxu0 0
    %159 = vmatpush1.bf16.msra.mxu0 0
    %160 = vmatprep.subr.bf16.mxu0 0
    %161 = vmatpush1.bf16.msra.mxu0 0
    %162 = vmatprep.subr.bf16.mxu0 0
    %163 = vmatpush1.bf16.msra.mxu0 0
    %164 = vmatprep.subr.bf16.mxu0 0
    %165 = vmatpush1.bf16.msra.mxu0 0
    %166 = vmatprep.subr.bf16.mxu0 0
    %167 = vmatpush1.bf16.msra.mxu0 0
    %168 = vmatprep.subr.bf16.mxu0 0
    %169 = vmatpush1.bf16.msra.mxu0 0
    %170 = vmatprep.subr.bf16.mxu0 0
    %171 = vmatpush1.bf16.msra.mxu0 0
    %172 = vmatprep.subr.bf16.mxu0 0
    %173 = vmatpush1.bf16.msra.mxu0 0
    %174 = vmatprep.subr.bf16.mxu0 0
    %175 = vmatpush1.bf16.msra.mxu0 0
    %176 = vmatprep.subr.bf16.mxu0 0
    %177 = vmatpush1.bf16.msra.mxu0 0
    %178 = vmatprep.subr.bf16.mxu0 0
    %179 = vmatpush1.bf16.msra.mxu0 0
    %180 = vmatprep.subr.bf16.mxu0 0
    %181 = vmatpush1.bf16.msra.mxu0 0
    %182 = vmatprep.subr.bf16.mxu0 0
    %183 = vmatpush1.bf16.msra.mxu0 0
    %184 = vmatprep.subr.bf16.mxu0 0
    %185 = vmatpush1.bf16.msra.mxu0 0
    %186 = vmatprep.mubr.bf16.mxu0 0
    %187 = vmatmul.mubr.bf16.gmra.mrb[0].mxu0 %v152
    %v188 = vpop.f32.mrb[0].mxu0
    %v189 = vadd.f32 %v136, %v188
    %v190 = vpop.f32.mrb[0].mxu0
    %v191 = vpop.f32.mrb[0].mxu0
    %v192 = vadd.f32 %v136, %v191
    %v193 = vpop.f32.mrb[0].mxu0
    %194 = vdwg.mxu0
    %v195 = vpack.c.bf16 %v102, %v101
    %196 = vrot.lane.b32.xlu0 %v146, 64
    %v197 = vpop.permute.xlu0 %196
    %198 = vrot.lane.b32.xlu0 %v147, 64
    %v199 = vpop.permute.xlu0 %198
    %202 = vrot.lane.b32.xlu0 %v136, 64
    %v203 = vpop.permute.xlu0 %202
    %v206 = vsel %vm150, %v195, 0
    %208 = vmatprep.subr.bf16.mxu0 0
    %209 = vmatpush1.bf16.msra.mxu0 %v197
    %210 = vmatprep.subr.bf16.mxu0 0
    %211 = vmatpush1.bf16.msra.mxu0 %v199
    %212 = vmatprep.subr.bf16.mxu0 0
    %213 = vmatpush1.bf16.msra.mxu0 0
    %214 = vmatprep.subr.bf16.mxu0 0
    %215 = vmatpush1.bf16.msra.mxu0 0
    %216 = vmatprep.subr.bf16.mxu0 0
    %217 = vmatpush1.bf16.msra.mxu0 0
    %218 = vmatprep.subr.bf16.mxu0 0
    %219 = vmatpush1.bf16.msra.mxu0 0
    %220 = vmatprep.subr.bf16.mxu0 0
    %221 = vmatpush1.bf16.msra.mxu0 0
    %222 = vmatprep.subr.bf16.mxu0 0
    %223 = vmatpush1.bf16.msra.mxu0 0
    %224 = vmatprep.subr.bf16.mxu0 0
    %225 = vmatpush1.bf16.msra.mxu0 0
    %226 = vmatprep.subr.bf16.mxu0 0
    %227 = vmatpush1.bf16.msra.mxu0 0
    %228 = vmatprep.subr.bf16.mxu0 0
    %229 = vmatpush1.bf16.msra.mxu0 0
    %230 = vmatprep.subr.bf16.mxu0 0
    %231 = vmatpush1.bf16.msra.mxu0 0
    %232 = vmatprep.subr.bf16.mxu0 0
    %233 = vmatpush1.bf16.msra.mxu0 0
    %234 = vmatprep.subr.bf16.mxu0 0
    %235 = vmatpush1.bf16.msra.mxu0 0
    %236 = vmatprep.subr.bf16.mxu0 0
    %237 = vmatpush1.bf16.msra.mxu0 0
    %238 = vmatprep.subr.bf16.mxu0 0
    %239 = vmatpush1.bf16.msra.mxu0 0
    %240 = vmatprep.mubr.bf16.mxu0 0
    %241 = vmatmul.mubr.bf16.gmra.mrb[0].mxu0 %v206
    %v242 = vpop.f32.mrb[0].mxu0
    %v243 = vadd.f32 %v203, %v242
    %v244 = vpop.f32.mrb[0].mxu0
    %v245 = vpop.f32.mrb[0].mxu0
    %v246 = vadd.f32 %v203, %v245
    %v247 = vpop.f32.mrb[0].mxu0
    %248 = vdwg.mxu0
    %v249 = vpack.c.bf16 %v192, %v189
    %v250 = vpack.c.bf16 %v246, %v243
    %252 = vrot.lane.b32.xlu0 %v249, 96
    %v253 = vpop.permute.xlu0 %252
    %vm254 = vcmask 31744
    %v256 = vsel %vm254, %v249, 0
    %v259 = vsel %vm254, %v253, 0
    %261 = vmatprep.subr.bf16.mxu0 0
    %262 = vmatpush1.bf16.xpose.msra.mxu0 %v259
    %263 = vmatprep.subr.bf16.mxu0 0
    %264 = vmatpush1.bf16.xpose.msra.mxu0 0
    %265 = vmatprep.subr.bf16.mxu0 0
    %266 = vmatpush1.bf16.xpose.msra.mxu0 0
    %267 = vmatprep.subr.bf16.mxu0 0
    %268 = vmatpush1.bf16.xpose.msra.mxu0 0
    %269 = vmatprep.subr.bf16.mxu0 0
    %270 = vmatpush1.bf16.xpose.msra.mxu0 0
    %271 = vmatprep.subr.bf16.mxu0 0
    %272 = vmatpush1.bf16.xpose.msra.mxu0 0
    %273 = vmatprep.subr.bf16.mxu0 0
    %274 = vmatpush1.bf16.xpose.msra.mxu0 0
    %275 = vmatprep.subr.bf16.mxu0 0
    %276 = vmatpush1.bf16.xpose.msra.mxu0 0
    %277 = vmatprep.subr.bf16.mxu0 0
    %278 = vmatpush1.bf16.xpose.msra.mxu0 0
    %279 = vmatprep.subr.bf16.mxu0 0
    %280 = vmatpush1.bf16.xpose.msra.mxu0 0
    %281 = vmatprep.subr.bf16.mxu0 0
    %282 = vmatpush1.bf16.xpose.msra.mxu0 0
    %283 = vmatprep.subr.bf16.mxu0 0
    %284 = vmatpush1.bf16.xpose.msra.mxu0 0
    %285 = vmatprep.subr.bf16.mxu0 0
    %286 = vmatpush1.bf16.xpose.msra.mxu0 0
    %287 = vmatprep.subr.bf16.mxu0 0
    %288 = vmatpush1.bf16.xpose.msra.mxu0 0
    %289 = vmatprep.subr.bf16.mxu0 0
    %290 = vmatpush1.bf16.xpose.msra.mxu0 0
    %291 = vmatprep.subr.bf16.mxu0 0
    %292 = vmatpush1.bf16.xpose.msra.mxu0 0
    %293 = vmatprep.mubr.bf16.mxu0 0
    %294 = vmatmul.mubr.bf16.gmra.mrb[0].mxu0 %v256
    %v295 = vpop.f32.mrb[0].mxu0
    %v296 = vadd.f32 %v113, %v295
    %v297 = vpop.f32.mrb[0].mxu0
    %v298 = vpop.f32.mrb[0].mxu0
    %v299 = vadd.f32 %v114, %v298
    %v300 = vpop.f32.mrb[0].mxu0
    %301 = vdwg.mxu0
    %vm302 = vcmask 130048
    %v303 = vsel %vm302, %v296, -inf
    %304 = vmax.xlane.f32.xlu0 %v303
    %v305 = vpop.xlane.xlu0 %304
    %v306 = vsel %vm302, %v299, -inf
    %307 = vmax.xlane.f32.xlu0 %v306
    %v308 = vpop.xlane.xlu0 %307
    %v309 = vsub.f32 %v296, %v305
    %v310 = vsub.f32 %v299, %v308
    %v311 = vmul.f32 %v309, 1.442695
    %v312 = vpow.pop %v311
    %v313 = vmul.f32 %v310, 1.442695
    %v314 = vpow.pop %v313
    %v315 = vsel %vm302, %v312, 0.0
    %316 = vadd.xlane.f32.xlu0 %v315
    %v317 = vpop.xlane.xlu0 %316
    %v318 = vsel %vm302, %v314, 0.0
    %319 = vadd.xlane.f32.xlu0 %v318
    %v320 = vpop.xlane.xlu0 %319
    %v321 = vrcp.pop %v317
    %v322 = vmul.f32 %v312, %v321
    %v323 = vrcp.pop %v320
    %v324 = vmul.f32 %v314, %v323
    %v325 = vpack.c.bf16 %v324, %v322
    %v327 = vsel %vm302, %v325, 0
    %329 = vmatprep.subr.bf16.mxu0 0
    %330 = vmatpush1.bf16.msra.mxu0 %v250
    %331 = vmatprep.subr.bf16.mxu0 0
    %332 = vmatpush1.bf16.msra.mxu0 0
    %333 = vmatprep.subr.bf16.mxu0 0
    %334 = vmatpush1.bf16.msra.mxu0 0
    %335 = vmatprep.subr.bf16.mxu0 0
    %336 = vmatpush1.bf16.msra.mxu0 0
    %337 = vmatprep.subr.bf16.mxu0 0
    %338 = vmatpush1.bf16.msra.mxu0 0
    %339 = vmatprep.subr.bf16.mxu0 0
    %340 = vmatpush1.bf16.msra.mxu0 0
    %341 = vmatprep.subr.bf16.mxu0 0
    %342 = vmatpush1.bf16.msra.mxu0 0
    %343 = vmatprep.subr.bf16.mxu0 0
    %344 = vmatpush1.bf16.msra.mxu0 0
    %345 = vmatprep.subr.bf16.mxu0 0
    %346 = vmatpush1.bf16.msra.mxu0 0
    %347 = vmatprep.subr.bf16.mxu0 0
    %348 = vmatpush1.bf16.msra.mxu0 0
    %349 = vmatprep.subr.bf16.mxu0 0
    %350 = vmatpush1.bf16.msra.mxu0 0
    %351 = vmatprep.subr.bf16.mxu0 0
    %352 = vmatpush1.bf16.msra.mxu0 0
    %353 = vmatprep.subr.bf16.mxu0 0
    %354 = vmatpush1.bf16.msra.mxu0 0
    %355 = vmatprep.subr.bf16.mxu0 0
    %356 = vmatpush1.bf16.msra.mxu0 0
    %357 = vmatprep.subr.bf16.mxu0 0
    %358 = vmatpush1.bf16.msra.mxu0 0
    %359 = vmatprep.subr.bf16.mxu0 0
    %360 = vmatpush1.bf16.msra.mxu0 0
    %361 = vmatprep.mubr.bf16.mxu0 0
    %362 = vmatmul.mubr.bf16.gmra.mrb[0].mxu0 %v327
    %v363 = vpop.f32.mrb[0].mxu0
    %v364 = vadd.f32 0.0, %v363
    %v365 = vpop.f32.mrb[0].mxu0
    %v366 = vpop.f32.mrb[0].mxu0
    %v367 = vadd.f32 0.0, %v366
    %v368 = vpop.f32.mrb[0].mxu0
    %369 = vdwg.mxu0
    %370 = vrot.lane.b32.xlu0 %v249, 124
    %v371 = vpop.permute.xlu0 %370
    %372 = vrot.lane.b32.xlu0 %v249, 92
    %v373 = vpop.permute.xlu0 %372
    %v375 = vsel %vm254, %v371, 0
    %v378 = vsel %vm254, %v373, 0
    %380 = vmatprep.subr.bf16.mxu0 0
    %381 = vmatpush1.bf16.xpose.msra.mxu0 %v378
    %382 = vmatprep.subr.bf16.mxu0 0
    %383 = vmatpush1.bf16.xpose.msra.mxu0 0
    %384 = vmatprep.subr.bf16.mxu0 0
    %385 = vmatpush1.bf16.xpose.msra.mxu0 0
    %386 = vmatprep.subr.bf16.mxu0 0
    %387 = vmatpush1.bf16.xpose.msra.mxu0 0
    %388 = vmatprep.subr.bf16.mxu0 0
    %389 = vmatpush1.bf16.xpose.msra.mxu0 0
    %390 = vmatprep.subr.bf16.mxu0 0
    %391 = vmatpush1.bf16.xpose.msra.mxu0 0
    %392 = vmatprep.subr.bf16.mxu0 0
    %393 = vmatpush1.bf16.xpose.msra.mxu0 0
    %394 = vmatprep.subr.bf16.mxu0 0
    %395 = vmatpush1.bf16.xpose.msra.mxu0 0
    %396 = vmatprep.subr.bf16.mxu0 0
    %397 = vmatpush1.bf16.xpose.msra.mxu0 0
    %398 = vmatprep.subr.bf16.mxu0 0
    %399 = vmatpush1.bf16.xpose.msra.mxu0 0
    %400 = vmatprep.subr.bf16.mxu0 0
    %401 = vmatpush1.bf16.xpose.msra.mxu0 0
    %402 = vmatprep.subr.bf16.mxu0 0
    %403 = vmatpush1.bf16.xpose.msra.mxu0 0
    %404 = vmatprep.subr.bf16.mxu0 0
    %405 = vmatpush1.bf16.xpose.msra.mxu0 0
    %406 = vmatprep.subr.bf16.mxu0 0
    %407 = vmatpush1.bf16.xpose.msra.mxu0 0
    %408 = vmatprep.subr.bf16.mxu0 0
    %409 = vmatpush1.bf16.xpose.msra.mxu0 0
    %410 = vmatprep.subr.bf16.mxu0 0
    %411 = vmatpush1.bf16.xpose.msra.mxu0 0
    %412 = vmatprep.mubr.bf16.mxu0 0
    %413 = vmatmul.mubr.bf16.gmra.mrb[0].mxu0 %v375
    %v414 = vpop.f32.mrb[0].mxu0
    %v415 = vadd.f32 %v113, %v414
    %v416 = vpop.f32.mrb[0].mxu0
    %v417 = vpop.f32.mrb[0].mxu0
    %v418 = vadd.f32 %v114, %v417
    %v419 = vpop.f32.mrb[0].mxu0
    %420 = vdwg.mxu0
    %v421 = vsel %vm302, %v415, -inf
    %422 = vmax.xlane.f32.xlu0 %v421
    %v423 = vpop.xlane.xlu0 %422
    %v424 = vsel %vm302, %v418, -inf
    %425 = vmax.xlane.f32.xlu0 %v424
    %v426 = vpop.xlane.xlu0 %425
    %v427 = vsub.f32 %v415, %v423
    %v428 = vsub.f32 %v418, %v426
    %v429 = vmul.f32 %v427, 1.442695
    %v430 = vpow.pop %v429
    %v431 = vmul.f32 %v428, 1.442695
    %v432 = vpow.pop %v431
    %v433 = vsel %vm302, %v430, 0.0
    %434 = vadd.xlane.f32.xlu0 %v433
    %v435 = vpop.xlane.xlu0 %434
    %v436 = vsel %vm302, %v432, 0.0
    %437 = vadd.xlane.f32.xlu0 %v436
    %v438 = vpop.xlane.xlu0 %437
    %v439 = vrcp.pop %v435
    %v440 = vmul.f32 %v430, %v439
    %v441 = vrcp.pop %v438
    %v442 = vmul.f32 %v432, %v441
    %v443 = vpack.c.bf16 %v442, %v440
    %445 = vrot.lane.b32.xlu0 %v250, 124
    %v446 = vpop.permute.xlu0 %445
    %v449 = vsel %vm302, %v443, 0
    %451 = vmatprep.subr.bf16.mxu0 0
    %452 = vmatpush1.bf16.msra.mxu0 %v446
    %453 = vmatprep.subr.bf16.mxu0 0
    %454 = vmatpush1.bf16.msra.mxu0 0
    %455 = vmatprep.subr.bf16.mxu0 0
    %456 = vmatpush1.bf16.msra.mxu0 0
    %457 = vmatprep.subr.bf16.mxu0 0
    %458 = vmatpush1.bf16.msra.mxu0 0
    %459 = vmatprep.subr.bf16.mxu0 0
    %460 = vmatpush1.bf16.msra.mxu0 0
    %461 = vmatprep.subr.bf16.mxu0 0
    %462 = vmatpush1.bf16.msra.mxu0 0
    %463 = vmatprep.subr.bf16.mxu0 0
    %464 = vmatpush1.bf16.msra.mxu0 0
    %465 = vmatprep.subr.bf16.mxu0 0
    %466 = vmatpush1.bf16.msra.mxu0 0
    %467 = vmatprep.subr.bf16.mxu0 0
    %468 = vmatpush1.bf16.msra.mxu0 0
    %469 = vmatprep.subr.bf16.mxu0 0
    %470 = vmatpush1.bf16.msra.mxu0 0
    %471 = vmatprep.subr.bf16.mxu0 0
    %472 = vmatpush1.bf16.msra.mxu0 0
    %473 = vmatprep.subr.bf16.mxu0 0
    %474 = vmatpush1.bf16.msra.mxu0 0
    %475 = vmatprep.subr.bf16.mxu0 0
    %476 = vmatpush1.bf16.msra.mxu0 0
    %477 = vmatprep.subr.bf16.mxu0 0
    %478 = vmatpush1.bf16.msra.mxu0 0
    %479 = vmatprep.subr.bf16.mxu0 0
    %480 = vmatpush1.bf16.msra.mxu0 0
    %481 = vmatprep.subr.bf16.mxu0 0
    %482 = vmatpush1.bf16.msra.mxu0 0
    %483 = vmatprep.mubr.bf16.mxu0 0
    %484 = vmatmul.mubr.bf16.gmra.mrb[0].mxu0 %v449
    %v485 = vpop.f32.mrb[0].mxu0
    %v486 = vadd.f32 0.0, %v485
    %v487 = vpop.f32.mrb[0].mxu0
    %v488 = vpop.f32.mrb[0].mxu0
    %v489 = vadd.f32 0.0, %v488
    %v490 = vpop.f32.mrb[0].mxu0
    %491 = vdwg.mxu0
    %492 = vrot.lane.b32.xlu0 %v249, 120
    %v493 = vpop.permute.xlu0 %492
    %494 = vrot.lane.b32.xlu0 %v249, 88
    %v495 = vpop.permute.xlu0 %494
    %v497 = vsel %vm254, %v493, 0
    %v500 = vsel %vm254, %v495, 0
    %502 = vmatprep.subr.bf16.mxu0 0
    %503 = vmatpush1.bf16.xpose.msra.mxu0 %v500
    %504 = vmatprep.subr.bf16.mxu0 0
    %505 = vmatpush1.bf16.xpose.msra.mxu0 0
    %506 = vmatprep.subr.bf16.mxu0 0
    %507 = vmatpush1.bf16.xpose.msra.mxu0 0
    %508 = vmatprep.subr.bf16.mxu0 0
    %509 = vmatpush1.bf16.xpose.msra.mxu0 0
    %510 = vmatprep.subr.bf16.mxu0 0
    %511 = vmatpush1.bf16.xpose.msra.mxu0 0
    %512 = vmatprep.subr.bf16.mxu0 0
    %513 = vmatpush1.bf16.xpose.msra.mxu0 0
    %514 = vmatprep.subr.bf16.mxu0 0
    %515 = vmatpush1.bf16.xpose.msra.mxu0 0
    %516 = vmatprep.subr.bf16.mxu0 0
    %517 = vmatpush1.bf16.xpose.msra.mxu0 0
    %518 = vmatprep.subr.bf16.mxu0 0
    %519 = vmatpush1.bf16.xpose.msra.mxu0 0
    %520 = vmatprep.subr.bf16.mxu0 0
    %521 = vmatpush1.bf16.xpose.msra.mxu0 0
    %522 = vmatprep.subr.bf16.mxu0 0
    %523 = vmatpush1.bf16.xpose.msra.mxu0 0
    %524 = vmatprep.subr.bf16.mxu0 0
    %525 = vmatpush1.bf16.xpose.msra.mxu0 0
    %526 = vmatprep.subr.bf16.mxu0 0
    %527 = vmatpush1.bf16.xpose.msra.mxu0 0
    %528 = vmatprep.subr.bf16.mxu0 0
    %529 = vmatpush1.bf16.xpose.msra.mxu0 0
    %530 = vmatprep.subr.bf16.mxu0 0
    %531 = vmatpush1.bf16.xpose.msra.mxu0 0
    %532 = vmatprep.subr.bf16.mxu0 0
    %533 = vmatpush1.bf16.xpose.msra.mxu0 0
    %534 = vmatprep.mubr.bf16.mxu0 0
    %535 = vmatmul.mubr.bf16.gmra.mrb[0].mxu0 %v497
    %v536 = vpop.f32.mrb[0].mxu0
    %v537 = vadd.f32 %v113, %v536
    %v538 = vpop.f32.mrb[0].mxu0
    %v539 = vpop.f32.mrb[0].mxu0
    %v540 = vadd.f32 %v114, %v539
    %v541 = vpop.f32.mrb[0].mxu0
    %542 = vdwg.mxu0
    %v543 = vsel %vm302, %v537, -inf
    %544 = vmax.xlane.f32.xlu0 %v543
    %v545 = vpop.xlane.xlu0 %544
    %v546 = vsel %vm302, %v540, -inf
    %547 = vmax.xlane.f32.xlu0 %v546
    %v548 = vpop.xlane.xlu0 %547
    %v549 = vsub.f32 %v537, %v545
    %v550 = vsub.f32 %v540, %v548
    %v551 = vmul.f32 %v549, 1.442695
    %v552 = vpow.pop %v551
    %v553 = vmul.f32 %v550, 1.442695
    %v554 = vpow.pop %v553
    %v555 = vsel %vm302, %v552, 0.0
    %556 = vadd.xlane.f32.xlu0 %v555
    %v557 = vpop.xlane.xlu0 %556
    %v558 = vsel %vm302, %v554, 0.0
    %559 = vadd.xlane.f32.xlu0 %v558
    %v560 = vpop.xlane.xlu0 %559
    %v561 = vrcp.pop %v557
    %v562 = vmul.f32 %v552, %v561
    %v563 = vrcp.pop %v560
    %v564 = vmul.f32 %v554, %v563
    %v565 = vpack.c.bf16 %v564, %v562
    %566 = vrot.lane.b32.xlu0 %v250, 120
    %v567 = vpop.permute.xlu0 %566
    %v570 = vsel %vm302, %v565, 0
    %572 = vmatprep.subr.bf16.mxu0 0
    %573 = vmatpush1.bf16.msra.mxu0 %v567
    %574 = vmatprep.subr.bf16.mxu0 0
    %575 = vmatpush1.bf16.msra.mxu0 0
    %576 = vmatprep.subr.bf16.mxu0 0
    %577 = vmatpush1.bf16.msra.mxu0 0
    %578 = vmatprep.subr.bf16.mxu0 0
    %579 = vmatpush1.bf16.msra.mxu0 0
    %580 = vmatprep.subr.bf16.mxu0 0
    %581 = vmatpush1.bf16.msra.mxu0 0
    %582 = vmatprep.subr.bf16.mxu0 0
    %583 = vmatpush1.bf16.msra.mxu0 0
    %584 = vmatprep.subr.bf16.mxu0 0
    %585 = vmatpush1.bf16.msra.mxu0 0
    %586 = vmatprep.subr.bf16.mxu0 0
    %587 = vmatpush1.bf16.msra.mxu0 0
    %588 = vmatprep.subr.bf16.mxu0 0
    %589 = vmatpush1.bf16.msra.mxu0 0
    %590 = vmatprep.subr.bf16.mxu0 0
    %591 = vmatpush1.bf16.msra.mxu0 0
    %592 = vmatprep.subr.bf16.mxu0 0
    %593 = vmatpush1.bf16.msra.mxu0 0
    %594 = vmatprep.subr.bf16.mxu0 0
    %595 = vmatpush1.bf16.msra.mxu0 0
    %596 = vmatprep.subr.bf16.mxu0 0
    %597 = vmatpush1.bf16.msra.mxu0 0
    %598 = vmatprep.subr.bf16.mxu0 0
    %599 = vmatpush1.bf16.msra.mxu0 0
    %600 = vmatprep.subr.bf16.mxu0 0
    %601 = vmatpush1.bf16.msra.mxu0 0
    %602 = vmatprep.subr.bf16.mxu0 0
    %603 = vmatpush1.bf16.msra.mxu0 0
    %604 = vmatprep.mubr.bf16.mxu0 0
    %605 = vmatmul.mubr.bf16.gmra.mrb[0].mxu0 %v570
    %v606 = vpop.f32.mrb[0].mxu0
    %v607 = vadd.f32 0.0, %v606
    %v608 = vpop.f32.mrb[0].mxu0
    %v609 = vpop.f32.mrb[0].mxu0
    %v610 = vadd.f32 0.0, %v609
    %v611 = vpop.f32.mrb[0].mxu0
    %612 = vdwg.mxu0
    %613 = vrot.lane.b32.xlu0 %v249, 116
    %v614 = vpop.permute.xlu0 %613
    %615 = vrot.lane.b32.xlu0 %v249, 84
    %v616 = vpop.permute.xlu0 %615
    %v618 = vsel %vm254, %v614, 0
    %v621 = vsel %vm254, %v616, 0
    %623 = vmatprep.subr.bf16.mxu0 0
    %624 = vmatpush1.bf16.xpose.msra.mxu0 %v621
    %625 = vmatprep.subr.bf16.mxu0 0
    %626 = vmatpush1.bf16.xpose.msra.mxu0 0
    %627 = vmatprep.subr.bf16.mxu0 0
    %628 = vmatpush1.bf16.xpose.msra.mxu0 0
    %629 = vmatprep.subr.bf16.mxu0 0
    %630 = vmatpush1.bf16.xpose.msra.mxu0 0
    %631 = vmatprep.subr.bf16.mxu0 0
    %632 = vmatpush1.bf16.xpose.msra.mxu0 0
    %633 = vmatprep.subr.bf16.mxu0 0
    %634 = vmatpush1.bf16.xpose.msra.mxu0 0
    %635 = vmatprep.subr.bf16.mxu0 0
    %636 = vmatpush1.bf16.xpose.msra.mxu0 0
    %637 = vmatprep.subr.bf16.mxu0 0
    %638 = vmatpush1.bf16.xpose.msra.mxu0 0
    %639 = vmatprep.subr.bf16.mxu0 0
    %640 = vmatpush1.bf16.xpose.msra.mxu0 0
    %641 = vmatprep.subr.bf16.mxu0 0
    %642 = vmatpush1.bf16.xpose.msra.mxu0 0
    %643 = vmatprep.subr.bf16.mxu0 0
    %644 = vmatpush1.bf16.xpose.msra.mxu0 0
    %645 = vmatprep.subr.bf16.mxu0 0
    %646 = vmatpush1.bf16.xpose.msra.mxu0 0
    %647 = vmatprep.subr.bf16.mxu0 0
    %648 = vmatpush1.bf16.xpose.msra.mxu0 0
    %649 = vmatprep.subr.bf16.mxu0 0
    %650 = vmatpush1.bf16.xpose.msra.mxu0 0
    %651 = vmatprep.subr.bf16.mxu0 0
    %652 = vmatpush1.bf16.xpose.msra.mxu0 0
    %653 = vmatprep.subr.bf16.mxu0 0
    %654 = vmatpush1.bf16.xpose.msra.mxu0 0
    %655 = vmatprep.mubr.bf16.mxu0 0
    %656 = vmatmul.mubr.bf16.gmra.mrb[0].mxu0 %v618
    %v657 = vpop.f32.mrb[0].mxu0
    %v658 = vadd.f32 %v113, %v657
    %v659 = vpop.f32.mrb[0].mxu0
    %v660 = vpop.f32.mrb[0].mxu0
    %v661 = vadd.f32 %v114, %v660
    %v662 = vpop.f32.mrb[0].mxu0
    %663 = vdwg.mxu0
    %v664 = vsel %vm302, %v658, -inf
    %665 = vmax.xlane.f32.xlu0 %v664
    %v666 = vpop.xlane.xlu0 %665
    %v667 = vsel %vm302, %v661, -inf
    %668 = vmax.xlane.f32.xlu0 %v667
    %v669 = vpop.xlane.xlu0 %668
    %v670 = vsub.f32 %v658, %v666
    %v671 = vsub.f32 %v661, %v669
    %v672 = vmul.f32 %v670, 1.442695
    %v673 = vpow.pop %v672
    %v674 = vmul.f32 %v671, 1.442695
    %v675 = vpow.pop %v674
    %v676 = vsel %vm302, %v673, 0.0
    %677 = vadd.xlane.f32.xlu0 %v676
    %v678 = vpop.xlane.xlu0 %677
    %v679 = vsel %vm302, %v675, 0.0
    %680 = vadd.xlane.f32.xlu0 %v679
    %v681 = vpop.xlane.xlu0 %680
    %v682 = vrcp.pop %v678
    %v683 = vmul.f32 %v673, %v682
    %v684 = vrcp.pop %v681
    %v685 = vmul.f32 %v675, %v684
    %v686 = vpack.c.bf16 %v685, %v683
    %687 = vrot.lane.b32.xlu0 %v250, 116
    %v688 = vpop.permute.xlu0 %687
    %v691 = vsel %vm302, %v686, 0
    %693 = vmatprep.subr.bf16.mxu0 0
    %694 = vmatpush1.bf16.msra.mxu0 %v688
    %695 = vmatprep.subr.bf16.mxu0 0
    %696 = vmatpush1.bf16.msra.mxu0 0
    %697 = vmatprep.subr.bf16.mxu0 0
    %698 = vmatpush1.bf16.msra.mxu0 0
    %699 = vmatprep.subr.bf16.mxu0 0
    %700 = vmatpush1.bf16.msra.mxu0 0
    %701 = vmatprep.subr.bf16.mxu0 0
    %702 = vmatpush1.bf16.msra.mxu0 0
    %703 = vmatprep.subr.bf16.mxu0 0
    %704 = vmatpush1.bf16.msra.mxu0 0
    %705 = vmatprep.subr.bf16.mxu0 0
    %706 = vmatpush1.bf16.msra.mxu0 0
    %707 = vmatprep.subr.bf16.mxu0 0
    %708 = vmatpush1.bf16.msra.mxu0 0
    %709 = vmatprep.subr.bf16.mxu0 0
    %710 = vmatpush1.bf16.msra.mxu0 0
    %711 = vmatprep.subr.bf16.mxu0 0
    %712 = vmatpush1.bf16.msra.mxu0 0
    %713 = vmatprep.subr.bf16.mxu0 0
    %714 = vmatpush1.bf16.msra.mxu0 0
    %715 = vmatprep.subr.bf16.mxu0 0
    %716 = vmatpush1.bf16.msra.mxu0 0
    %717 = vmatprep.subr.bf16.mxu0 0
    %718 = vmatpush1.bf16.msra.mxu0 0
    %719 = vmatprep.subr.bf16.mxu0 0
    %720 = vmatpush1.bf16.msra.mxu0 0
    %721 = vmatprep.subr.bf16.mxu0 0
    %722 = vmatpush1.bf16.msra.mxu0 0
    %723 = vmatprep.subr.bf16.mxu0 0
    %724 = vmatpush1.bf16.msra.mxu0 0
    %725 = vmatprep.mubr.bf16.mxu0 0
    %726 = vmatmul.mubr.bf16.gmra.mrb[0].mxu0 %v691
    %v727 = vpop.f32.mrb[0].mxu0
    %v728 = vadd.f32 0.0, %v727
    %v729 = vpop.f32.mrb[0].mxu0
    %v730 = vpop.f32.mrb[0].mxu0
    %v731 = vadd.f32 0.0, %v730
    %v732 = vpop.f32.mrb[0].mxu0
    %733 = vdwg.mxu0
    %734 = vrot.lane.b32.xlu0 %v249, 112
    %v735 = vpop.permute.xlu0 %734
    %736 = vrot.lane.b32.xlu0 %v249, 80
    %v737 = vpop.permute.xlu0 %736
    %v739 = vsel %vm254, %v735, 0
    %v742 = vsel %vm254, %v737, 0
    %744 = vmatprep.subr.bf16.mxu0 0
    %745 = vmatpush1.bf16.xpose.msra.mxu0 %v742
    %746 = vmatprep.subr.bf16.mxu0 0
    %747 = vmatpush1.bf16.xpose.msra.mxu0 0
    %748 = vmatprep.subr.bf16.mxu0 0
    %749 = vmatpush1.bf16.xpose.msra.mxu0 0
    %750 = vmatprep.subr.bf16.mxu0 0
    %751 = vmatpush1.bf16.xpose.msra.mxu0 0
    %752 = vmatprep.subr.bf16.mxu0 0
    %753 = vmatpush1.bf16.xpose.msra.mxu0 0
    %754 = vmatprep.subr.bf16.mxu0 0
    %755 = vmatpush1.bf16.xpose.msra.mxu0 0
    %756 = vmatprep.subr.bf16.mxu0 0
    %757 = vmatpush1.bf16.xpose.msra.mxu0 0
    %758 = vmatprep.subr.bf16.mxu0 0
    %759 = vmatpush1.bf16.xpose.msra.mxu0 0
    %760 = vmatprep.subr.bf16.mxu0 0
    %761 = vmatpush1.bf16.xpose.msra.mxu0 0
    %762 = vmatprep.subr.bf16.mxu0 0
    %763 = vmatpush1.bf16.xpose.msra.mxu0 0
    %764 = vmatprep.subr.bf16.mxu0 0
    %765 = vmatpush1.bf16.xpose.msra.mxu0 0
    %766 = vmatprep.subr.bf16.mxu0 0
    %767 = vmatpush1.bf16.xpose.msra.mxu0 0
    %768 = vmatprep.subr.bf16.mxu0 0
    %769 = vmatpush1.bf16.xpose.msra.mxu0 0
    %770 = vmatprep.subr.bf16.mxu0 0
    %771 = vmatpush1.bf16.xpose.msra.mxu0 0
    %772 = vmatprep.subr.bf16.mxu0 0
    %773 = vmatpush1.bf16.xpose.msra.mxu0 0
    %774 = vmatprep.subr.bf16.mxu0 0
    %775 = vmatpush1.bf16.xpose.msra.mxu0 0
    %776 = vmatprep.mubr.bf16.mxu0 0
    %777 = vmatmul.mubr.bf16.gmra.mrb[0].mxu0 %v739
    %v778 = vpop.f32.mrb[0].mxu0
    %v779 = vadd.f32 %v113, %v778
    %v780 = vpop.f32.mrb[0].mxu0
    %v781 = vpop.f32.mrb[0].mxu0
    %v782 = vadd.f32 %v114, %v781
    %v783 = vpop.f32.mrb[0].mxu0
    %784 = vdwg.mxu0
    %v785 = vsel %vm302, %v779, -inf
    %786 = vmax.xlane.f32.xlu0 %v785
    %v787 = vpop.xlane.xlu0 %786
    %v788 = vsel %vm302, %v782, -inf
    %789 = vmax.xlane.f32.xlu0 %v788
    %v790 = vpop.xlane.xlu0 %789
    %v791 = vsub.f32 %v779, %v787
    %v792 = vsub.f32 %v782, %v790
    %v793 = vmul.f32 %v791, 1.442695
    %v794 = vpow.pop %v793
    %v795 = vmul.f32 %v792, 1.442695
    %v796 = vpow.pop %v795
    %v797 = vsel %vm302, %v794, 0.0
    %798 = vadd.xlane.f32.xlu0 %v797
    %v799 = vpop.xlane.xlu0 %798
    %v800 = vsel %vm302, %v796, 0.0
    %801 = vadd.xlane.f32.xlu0 %v800
    %v802 = vpop.xlane.xlu0 %801
    %v803 = vrcp.pop %v799
    %v804 = vmul.f32 %v794, %v803
    %v805 = vrcp.pop %v802
    %v806 = vmul.f32 %v796, %v805
    %v807 = vpack.c.bf16 %v806, %v804
    %808 = vrot.lane.b32.xlu0 %v250, 112
    %v809 = vpop.permute.xlu0 %808
    %v812 = vsel %vm302, %v807, 0
    %814 = vmatprep.subr.bf16.mxu0 0
    %815 = vmatpush1.bf16.msra.mxu0 %v809
    %816 = vmatprep.subr.bf16.mxu0 0
    %817 = vmatpush1.bf16.msra.mxu0 0
    %818 = vmatprep.subr.bf16.mxu0 0
    %819 = vmatpush1.bf16.msra.mxu0 0
    %820 = vmatprep.subr.bf16.mxu0 0
    %821 = vmatpush1.bf16.msra.mxu0 0
    %822 = vmatprep.subr.bf16.mxu0 0
    %823 = vmatpush1.bf16.msra.mxu0 0
    %824 = vmatprep.subr.bf16.mxu0 0
    %825 = vmatpush1.bf16.msra.mxu0 0
    %826 = vmatprep.subr.bf16.mxu0 0
    %827 = vmatpush1.bf16.msra.mxu0 0
    %828 = vmatprep.subr.bf16.mxu0 0
    %829 = vmatpush1.bf16.msra.mxu0 0
    %830 = vmatprep.subr.bf16.mxu0 0
    %831 = vmatpush1.bf16.msra.mxu0 0
    %832 = vmatprep.subr.bf16.mxu0 0
    %833 = vmatpush1.bf16.msra.mxu0 0
    %834 = vmatprep.subr.bf16.mxu0 0
    %835 = vmatpush1.bf16.msra.mxu0 0
    %836 = vmatprep.subr.bf16.mxu0 0
    %837 = vmatpush1.bf16.msra.mxu0 0
    %838 = vmatprep.subr.bf16.mxu0 0
    %839 = vmatpush1.bf16.msra.mxu0 0
    %840 = vmatprep.subr.bf16.mxu0 0
    %841 = vmatpush1.bf16.msra.mxu0 0
    %842 = vmatprep.subr.bf16.mxu0 0
    %843 = vmatpush1.bf16.msra.mxu0 0
    %844 = vmatprep.subr.bf16.mxu0 0
    %845 = vmatpush1.bf16.msra.mxu0 0
    %846 = vmatprep.mubr.bf16.mxu0 0
    %847 = vmatmul.mubr.bf16.gmra.mrb[0].mxu0 %v812
    %v848 = vpop.f32.mrb[0].mxu0
    %v849 = vadd.f32 0.0, %v848
    %v850 = vpop.f32.mrb[0].mxu0
    %v851 = vpop.f32.mrb[0].mxu0
    %v852 = vadd.f32 0.0, %v851
    %v853 = vpop.f32.mrb[0].mxu0
    %854 = vdwg.mxu0
    %855 = vrot.lane.b32.xlu0 %v249, 108
    %v856 = vpop.permute.xlu0 %855
    %857 = vrot.lane.b32.xlu0 %v249, 76
    %v858 = vpop.permute.xlu0 %857
    %v860 = vsel %vm254, %v856, 0
    %v863 = vsel %vm254, %v858, 0
    %865 = vmatprep.subr.bf16.mxu0 0
    %866 = vmatpush1.bf16.xpose.msra.mxu0 %v863
    %867 = vmatprep.subr.bf16.mxu0 0
    %868 = vmatpush1.bf16.xpose.msra.mxu0 0
    %869 = vmatprep.subr.bf16.mxu0 0
    %870 = vmatpush1.bf16.xpose.msra.mxu0 0
    %871 = vmatprep.subr.bf16.mxu0 0
    %872 = vmatpush1.bf16.xpose.msra.mxu0 0
    %873 = vmatprep.subr.bf16.mxu0 0
    %874 = vmatpush1.bf16.xpose.msra.mxu0 0
    %875 = vmatprep.subr.bf16.mxu0 0
    %876 = vmatpush1.bf16.xpose.msra.mxu0 0
    %877 = vmatprep.subr.bf16.mxu0 0
    %878 = vmatpush1.bf16.xpose.msra.mxu0 0
    %879 = vmatprep.subr.bf16.mxu0 0
    %880 = vmatpush1.bf16.xpose.msra.mxu0 0
    %881 = vmatprep.subr.bf16.mxu0 0
    %882 = vmatpush1.bf16.xpose.msra.mxu0 0
    %883 = vmatprep.subr.bf16.mxu0 0
    %884 = vmatpush1.bf16.xpose.msra.mxu0 0
    %885 = vmatprep.subr.bf16.mxu0 0
    %886 = vmatpush1.bf16.xpose.msra.mxu0 0
    %887 = vmatprep.subr.bf16.mxu0 0
    %888 = vmatpush1.bf16.xpose.msra.mxu0 0
    %889 = vmatprep.subr.bf16.mxu0 0
    %890 = vmatpush1.bf16.xpose.msra.mxu0 0
    %891 = vmatprep.subr.bf16.mxu0 0
    %892 = vmatpush1.bf16.xpose.msra.mxu0 0
    %893 = vmatprep.subr.bf16.mxu0 0
    %894 = vmatpush1.bf16.xpose.msra.mxu0 0
    %895 = vmatprep.subr.bf16.mxu0 0
    %896 = vmatpush1.bf16.xpose.msra.mxu0 0
    %897 = vmatprep.mubr.bf16.mxu0 0
    %898 = vmatmul.mubr.bf16.gmra.mrb[0].mxu0 %v860
    %v899 = vpop.f32.mrb[0].mxu0
    %v900 = vadd.f32 %v113, %v899
    %v901 = vpop.f32.mrb[0].mxu0
    %v902 = vpop.f32.mrb[0].mxu0
    %v903 = vadd.f32 %v114, %v902
    %v904 = vpop.f32.mrb[0].mxu0
    %905 = vdwg.mxu0
    %v906 = vsel %vm302, %v900, -inf
    %907 = vmax.xlane.f32.xlu0 %v906
    %v908 = vpop.xlane.xlu0 %907
    %v909 = vsel %vm302, %v903, -inf
    %910 = vmax.xlane.f32.xlu0 %v909
    %v911 = vpop.xlane.xlu0 %910
    %v912 = vsub.f32 %v900, %v908
    %v913 = vsub.f32 %v903, %v911
    %v914 = vmul.f32 %v912, 1.442695
    %v915 = vpow.pop %v914
    %v916 = vmul.f32 %v913, 1.442695
    %v917 = vpow.pop %v916
    %v918 = vsel %vm302, %v915, 0.0
    %919 = vadd.xlane.f32.xlu0 %v918
    %v920 = vpop.xlane.xlu0 %919
    %v921 = vsel %vm302, %v917, 0.0
    %922 = vadd.xlane.f32.xlu0 %v921
    %v923 = vpop.xlane.xlu0 %922
    %v924 = vrcp.pop %v920
    %v925 = vmul.f32 %v915, %v924
    %v926 = vrcp.pop %v923
    %v927 = vmul.f32 %v917, %v926
    %v928 = vpack.c.bf16 %v927, %v925
    %929 = vrot.lane.b32.xlu0 %v250, 108
    %v930 = vpop.permute.xlu0 %929
    %v933 = vsel %vm302, %v928, 0
    %935 = vmatprep.subr.bf16.mxu0 0
    %936 = vmatpush1.bf16.msra.mxu0 %v930
    %937 = vmatprep.subr.bf16.mxu0 0
    %938 = vmatpush1.bf16.msra.mxu0 0
    %939 = vmatprep.subr.bf16.mxu0 0
    %940 = vmatpush1.bf16.msra.mxu0 0
    %941 = vmatprep.subr.bf16.mxu0 0
    %942 = vmatpush1.bf16.msra.mxu0 0
    %943 = vmatprep.subr.bf16.mxu0 0
    %944 = vmatpush1.bf16.msra.mxu0 0
    %945 = vmatprep.subr.bf16.mxu0 0
    %946 = vmatpush1.bf16.msra.mxu0 0
    %947 = vmatprep.subr.bf16.mxu0 0
    %948 = vmatpush1.bf16.msra.mxu0 0
    %949 = vmatprep.subr.bf16.mxu0 0
    %950 = vmatpush1.bf16.msra.mxu0 0
    %951 = vmatprep.subr.bf16.mxu0 0
    %952 = vmatpush1.bf16.msra.mxu0 0
    %953 = vmatprep.subr.bf16.mxu0 0
    %954 = vmatpush1.bf16.msra.mxu0 0
    %955 = vmatprep.subr.bf16.mxu0 0
    %956 = vmatpush1.bf16.msra.mxu0 0
    %957 = vmatprep.subr.bf16.mxu0 0
    %958 = vmatpush1.bf16.msra.mxu0 0
    %959 = vmatprep.subr.bf16.mxu0 0
    %960 = vmatpush1.bf16.msra.mxu0 0
    %961 = vmatprep.subr.bf16.mxu0 0
    %962 = vmatpush1.bf16.msra.mxu0 0
    %963 = vmatprep.subr.bf16.mxu0 0
    %964 = vmatpush1.bf16.msra.mxu0 0
    %965 = vmatprep.subr.bf16.mxu0 0
    %966 = vmatpush1.bf16.msra.mxu0 0
    %967 = vmatprep.mubr.bf16.mxu0 0
    %968 = vmatmul.mubr.bf16.gmra.mrb[0].mxu0 %v933
    %v969 = vpop.f32.mrb[0].mxu0
    %v970 = vadd.f32 0.0, %v969
    %v971 = vpop.f32.mrb[0].mxu0
    %v972 = vpop.f32.mrb[0].mxu0
    %v973 = vadd.f32 0.0, %v972
    %v974 = vpop.f32.mrb[0].mxu0
    %975 = vdwg.mxu0
    %976 = vrot.lane.b32.xlu0 %v249, 104
    %v977 = vpop.permute.xlu0 %976
    %978 = vrot.lane.b32.xlu0 %v249, 72
    %v979 = vpop.permute.xlu0 %978
    %v981 = vsel %vm254, %v977, 0
    %v984 = vsel %vm254, %v979, 0
    %986 = vmatprep.subr.bf16.mxu0 0
    %987 = vmatpush1.bf16.xpose.msra.mxu0 %v984
    %988 = vmatprep.subr.bf16.mxu0 0
    %989 = vmatpush1.bf16.xpose.msra.mxu0 0
    %990 = vmatprep.subr.bf16.mxu0 0
    %991 = vmatpush1.bf16.xpose.msra.mxu0 0
    %992 = vmatprep.subr.bf16.mxu0 0
    %993 = vmatpush1.bf16.xpose.msra.mxu0 0
    %994 = vmatprep.subr.bf16.mxu0 0
    %995 = vmatpush1.bf16.xpose.msra.mxu0 0
    %996 = vmatprep.subr.bf16.mxu0 0
    %997 = vmatpush1.bf16.xpose.msra.mxu0 0
    %998 = vmatprep.subr.bf16.mxu0 0
    %999 = vmatpush1.bf16.xpose.msra.mxu0 0
    %1000 = vmatprep.subr.bf16.mxu0 0
    %1001 = vmatpush1.bf16.xpose.msra.mxu0 0
    %1002 = vmatprep.subr.bf16.mxu0 0
    %1003 = vmatpush1.bf16.xpose.msra.mxu0 0
    %1004 = vmatprep.subr.bf16.mxu0 0
    %1005 = vmatpush1.bf16.xpose.msra.mxu0 0
    %1006 = vmatprep.subr.bf16.mxu0 0
    %1007 = vmatpush1.bf16.xpose.msra.mxu0 0
    %1008 = vmatprep.subr.bf16.mxu0 0
    %1009 = vmatpush1.bf16.xpose.msra.mxu0 0
    %1010 = vmatprep.subr.bf16.mxu0 0
    %1011 = vmatpush1.bf16.xpose.msra.mxu0 0
    %1012 = vmatprep.subr.bf16.mxu0 0
    %1013 = vmatpush1.bf16.xpose.msra.mxu0 0
    %1014 = vmatprep.subr.bf16.mxu0 0
    %1015 = vmatpush1.bf16.xpose.msra.mxu0 0
    %1016 = vmatprep.subr.bf16.mxu0 0
    %1017 = vmatpush1.bf16.xpose.msra.mxu0 0
    %1018 = vmatprep.mubr.bf16.mxu0 0
    %1019 = vmatmul.mubr.bf16.gmra.mrb[0].mxu0 %v981
    %v1020 = vpop.f32.mrb[0].mxu0
    %v1021 = vadd.f32 %v113, %v1020
    %v1022 = vpop.f32.mrb[0].mxu0
    %v1023 = vpop.f32.mrb[0].mxu0
    %v1024 = vadd.f32 %v114, %v1023
    %v1025 = vpop.f32.mrb[0].mxu0
    %1026 = vdwg.mxu0
    %v1027 = vsel %vm302, %v1021, -inf
    %1028 = vmax.xlane.f32.xlu0 %v1027
    %v1029 = vpop.xlane.xlu0 %1028
    %v1030 = vsel %vm302, %v1024, -inf
    %1031 = vmax.xlane.f32.xlu0 %v1030
    %v1032 = vpop.xlane.xlu0 %1031
    %v1033 = vsub.f32 %v1021, %v1029
    %v1034 = vsub.f32 %v1024, %v1032
    %v1035 = vmul.f32 %v1033, 1.442695
    %v1036 = vpow.pop %v1035
    %v1037 = vmul.f32 %v1034, 1.442695
    %v1038 = vpow.pop %v1037
    %v1039 = vsel %vm302, %v1036, 0.0
    %1040 = vadd.xlane.f32.xlu0 %v1039
    %v1041 = vpop.xlane.xlu0 %1040
    %v1042 = vsel %vm302, %v1038, 0.0
    %1043 = vadd.xlane.f32.xlu0 %v1042
    %v1044 = vpop.xlane.xlu0 %1043
    %v1045 = vrcp.pop %v1041
    %v1046 = vmul.f32 %v1036, %v1045
    %v1047 = vrcp.pop %v1044
    %v1048 = vmul.f32 %v1038, %v1047
    %v1049 = vpack.c.bf16 %v1048, %v1046
    %1050 = vrot.lane.b32.xlu0 %v250, 104
    %v1051 = vpop.permute.xlu0 %1050
    %v1054 = vsel %vm302, %v1049, 0
    %1056 = vmatprep.subr.bf16.mxu0 0
    %1057 = vmatpush1.bf16.msra.mxu0 %v1051
    %1058 = vmatprep.subr.bf16.mxu0 0
    %1059 = vmatpush1.bf16.msra.mxu0 0
    %1060 = vmatprep.subr.bf16.mxu0 0
    %1061 = vmatpush1.bf16.msra.mxu0 0
    %1062 = vmatprep.subr.bf16.mxu0 0
    %1063 = vmatpush1.bf16.msra.mxu0 0
    %1064 = vmatprep.subr.bf16.mxu0 0
    %1065 = vmatpush1.bf16.msra.mxu0 0
    %1066 = vmatprep.subr.bf16.mxu0 0
    %1067 = vmatpush1.bf16.msra.mxu0 0
    %1068 = vmatprep.subr.bf16.mxu0 0
    %1069 = vmatpush1.bf16.msra.mxu0 0
    %1070 = vmatprep.subr.bf16.mxu0 0
    %1071 = vmatpush1.bf16.msra.mxu0 0
    %1072 = vmatprep.subr.bf16.mxu0 0
    %1073 = vmatpush1.bf16.msra.mxu0 0
    %1074 = vmatprep.subr.bf16.mxu0 0
    %1075 = vmatpush1.bf16.msra.mxu0 0
    %1076 = vmatprep.subr.bf16.mxu0 0
    %1077 = vmatpush1.bf16.msra.mxu0 0
    %1078 = vmatprep.subr.bf16.mxu0 0
    %1079 = vmatpush1.bf16.msra.mxu0 0
    %1080 = vmatprep.subr.bf16.mxu0 0
    %1081 = vmatpush1.bf16.msra.mxu0 0
    %1082 = vmatprep.subr.bf16.mxu0 0
    %1083 = vmatpush1.bf16.msra.mxu0 0
    %1084 = vmatprep.subr.bf16.mxu0 0
    %1085 = vmatpush1.bf16.msra.mxu0 0
    %1086 = vmatprep.subr.bf16.mxu0 0
    %1087 = vmatpush1.bf16.msra.mxu0 0
    %1088 = vmatprep.mubr.bf16.mxu0 0
    %1089 = vmatmul.mubr.bf16.gmra.mrb[0].mxu0 %v1054
    %v1090 = vpop.f32.mrb[0].mxu0
    %v1091 = vadd.f32 0.0, %v1090
    %v1092 = vpop.f32.mrb[0].mxu0
    %v1093 = vpop.f32.mrb[0].mxu0
    %v1094 = vadd.f32 0.0, %v1093
    %v1095 = vpop.f32.mrb[0].mxu0
    %1096 = vdwg.mxu0
    %1097 = vrot.lane.b32.xlu0 %v249, 100
    %v1098 = vpop.permute.xlu0 %1097
    %1099 = vrot.lane.b32.xlu0 %v249, 68
    %v1100 = vpop.permute.xlu0 %1099
    %v1102 = vsel %vm254, %v1098, 0
    %v1105 = vsel %vm254, %v1100, 0
    %1107 = vmatprep.subr.bf16.mxu0 0
    %1108 = vmatpush1.bf16.xpose.msra.mxu0 %v1105
    %1109 = vmatprep.subr.bf16.mxu0 0
    %1110 = vmatpush1.bf16.xpose.msra.mxu0 0
    %1111 = vmatprep.subr.bf16.mxu0 0
    %1112 = vmatpush1.bf16.xpose.msra.mxu0 0
    %1113 = vmatprep.subr.bf16.mxu0 0
    %1114 = vmatpush1.bf16.xpose.msra.mxu0 0
    %1115 = vmatprep.subr.bf16.mxu0 0
    %1116 = vmatpush1.bf16.xpose.msra.mxu0 0
    %1117 = vmatprep.subr.bf16.mxu0 0
    %1118 = vmatpush1.bf16.xpose.msra.mxu0 0
    %1119 = vmatprep.subr.bf16.mxu0 0
    %1120 = vmatpush1.bf16.xpose.msra.mxu0 0
    %1121 = vmatprep.subr.bf16.mxu0 0
    %1122 = vmatpush1.bf16.xpose.msra.mxu0 0
    %1123 = vmatprep.subr.bf16.mxu0 0
    %1124 = vmatpush1.bf16.xpose.msra.mxu0 0
    %1125 = vmatprep.subr.bf16.mxu0 0
    %1126 = vmatpush1.bf16.xpose.msra.mxu0 0
    %1127 = vmatprep.subr.bf16.mxu0 0
    %1128 = vmatpush1.bf16.xpose.msra.mxu0 0
    %1129 = vmatprep.subr.bf16.mxu0 0
    %1130 = vmatpush1.bf16.xpose.msra.mxu0 0
    %1131 = vmatprep.subr.bf16.mxu0 0
    %1132 = vmatpush1.bf16.xpose.msra.mxu0 0
    %1133 = vmatprep.subr.bf16.mxu0 0
    %1134 = vmatpush1.bf16.xpose.msra.mxu0 0
    %1135 = vmatprep.subr.bf16.mxu0 0
    %1136 = vmatpush1.bf16.xpose.msra.mxu0 0
    %1137 = vmatprep.subr.bf16.mxu0 0
    %1138 = vmatpush1.bf16.xpose.msra.mxu0 0
    %1139 = vmatprep.mubr.bf16.mxu0 0
    %1140 = vmatmul.mubr.bf16.gmra.mrb[0].mxu0 %v1102
    %v1141 = vpop.f32.mrb[0].mxu0
    %v1142 = vadd.f32 %v113, %v1141
    %v1143 = vpop.f32.mrb[0].mxu0
    %v1144 = vpop.f32.mrb[0].mxu0
    %v1145 = vadd.f32 %v114, %v1144
    %v1146 = vpop.f32.mrb[0].mxu0
    %1147 = vdwg.mxu0
    %v1148 = vsel %vm302, %v1142, -inf
    %1149 = vmax.xlane.f32.xlu0 %v1148
    %v1150 = vpop.xlane.xlu0 %1149
    %v1151 = vsel %vm302, %v1145, -inf
    %1152 = vmax.xlane.f32.xlu0 %v1151
    %v1153 = vpop.xlane.xlu0 %1152
    %v1154 = vsub.f32 %v1142, %v1150
    %v1155 = vsub.f32 %v1145, %v1153
    %v1156 = vmul.f32 %v1154, 1.442695
    %v1157 = vpow.pop %v1156
    %v1158 = vmul.f32 %v1155, 1.442695
    %v1159 = vpow.pop %v1158
    %v1160 = vsel %vm302, %v1157, 0.0
    %1161 = vadd.xlane.f32.xlu0 %v1160
    %v1162 = vpop.xlane.xlu0 %1161
    %v1163 = vsel %vm302, %v1159, 0.0
    %1164 = vadd.xlane.f32.xlu0 %v1163
    %v1165 = vpop.xlane.xlu0 %1164
    %v1166 = vrcp.pop %v1162
    %v1167 = vmul.f32 %v1157, %v1166
    %v1168 = vrcp.pop %v1165
    %v1169 = vmul.f32 %v1159, %v1168
    %v1170 = vpack.c.bf16 %v1169, %v1167
    %1171 = vrot.lane.b32.xlu0 %v250, 100
    %v1172 = vpop.permute.xlu0 %1171
    %v1175 = vsel %vm302, %v1170, 0
    %1177 = vmatprep.subr.bf16.mxu0 0
    %1178 = vmatpush1.bf16.msra.mxu0 %v1172
    %1179 = vmatprep.subr.bf16.mxu0 0
    %1180 = vmatpush1.bf16.msra.mxu0 0
    %1181 = vmatprep.subr.bf16.mxu0 0
    %1182 = vmatpush1.bf16.msra.mxu0 0
    %1183 = vmatprep.subr.bf16.mxu0 0
    %1184 = vmatpush1.bf16.msra.mxu0 0
    %1185 = vmatprep.subr.bf16.mxu0 0
    %1186 = vmatpush1.bf16.msra.mxu0 0
    %1187 = vmatprep.subr.bf16.mxu0 0
    %1188 = vmatpush1.bf16.msra.mxu0 0
    %1189 = vmatprep.subr.bf16.mxu0 0
    %1190 = vmatpush1.bf16.msra.mxu0 0
    %1191 = vmatprep.subr.bf16.mxu0 0
    %1192 = vmatpush1.bf16.msra.mxu0 0
    %1193 = vmatprep.subr.bf16.mxu0 0
    %1194 = vmatpush1.bf16.msra.mxu0 0
    %1195 = vmatprep.subr.bf16.mxu0 0
    %1196 = vmatpush1.bf16.msra.mxu0 0
    %1197 = vmatprep.subr.bf16.mxu0 0
    %1198 = vmatpush1.bf16.msra.mxu0 0
    %1199 = vmatprep.subr.bf16.mxu0 0
    %1200 = vmatpush1.bf16.msra.mxu0 0
    %1201 = vmatprep.subr.bf16.mxu0 0
    %1202 = vmatpush1.bf16.msra.mxu0 0
    %1203 = vmatprep.subr.bf16.mxu0 0
    %1204 = vmatpush1.bf16.msra.mxu0 0
    %1205 = vmatprep.subr.bf16.mxu0 0
    %1206 = vmatpush1.bf16.msra.mxu0 0
    %1207 = vmatprep.subr.bf16.mxu0 0
    %1208 = vmatpush1.bf16.msra.mxu0 0
    %1209 = vmatprep.mubr.bf16.mxu0 0
    %1210 = vmatmul.mubr.bf16.gmra.mrb[0].mxu0 %v1175
    %v1211 = vpop.f32.mrb[0].mxu0
    %v1212 = vadd.f32 0.0, %v1211
    %v1213 = vpop.f32.mrb[0].mxu0
    %v1214 = vpop.f32.mrb[0].mxu0
    %v1215 = vadd.f32 0.0, %v1214
    %v1216 = vpop.f32.mrb[0].mxu0
    %1217 = vdwg.mxu0
    %1220 = vrot.lane.b32.xlu0 %v486, 4
    %v1221 = vpop.permute.xlu0 %1220
    %1222 = vrot.lane.b32.xlu0 %v489, 4
    %v1223 = vpop.permute.xlu0 %1222
    %1228 = vrot.lane.b32.xlu0 %v607, 8
    %v1229 = vpop.permute.xlu0 %1228
    %1230 = vrot.lane.b32.xlu0 %v610, 8
    %v1231 = vpop.permute.xlu0 %1230
    %1236 = vrot.lane.b32.xlu0 %v728, 12
    %v1237 = vpop.permute.xlu0 %1236
    %1238 = vrot.lane.b32.xlu0 %v731, 12
    %v1239 = vpop.permute.xlu0 %1238
    %1244 = vrot.lane.b32.xlu0 %v849, 16
    %v1245 = vpop.permute.xlu0 %1244
    %1246 = vrot.lane.b32.xlu0 %v852, 16
    %v1247 = vpop.permute.xlu0 %1246
    %1252 = vrot.lane.b32.xlu0 %v970, 20
    %v1253 = vpop.permute.xlu0 %1252
    %1254 = vrot.lane.b32.xlu0 %v973, 20
    %v1255 = vpop.permute.xlu0 %1254
    %1260 = vrot.lane.b32.xlu0 %v1091, 24
    %v1261 = vpop.permute.xlu0 %1260
    %1262 = vrot.lane.b32.xlu0 %v1094, 24
    %v1263 = vpop.permute.xlu0 %1262
    %1268 = vrot.lane.b32.xlu0 %v1212, 28
    %v1269 = vpop.permute.xlu0 %1268
    %1270 = vrot.lane.b32.xlu0 %v1215, 28
    %v1271 = vpop.permute.xlu0 %1270
    %v1274 = vsel %vm254, %v364, %v1221
    %v1275 = vsel %vm254, %v367, %v1223
    %vm1276 = vcmask 64512
    %v1277 = vsel %vm1276, %v1274, %v1229
    %v1278 = vsel %vm1276, %v1275, %v1231
    %vm1279 = vcmask 97280
    %v1280 = vsel %vm1279, %v1277, %v1237
    %v1281 = vsel %vm1279, %v1278, %v1239
    %v1282 = vsel %vm302, %v1280, %v1245
    %v1283 = vsel %vm302, %v1281, %v1247
    %vm1284 = vcmask 162816
    %v1285 = vsel %vm1284, %v1282, %v1253
    %v1286 = vsel %vm1284, %v1283, %v1255
    %vm1287 = vcmask 195584
    %v1288 = vsel %vm1287, %v1285, %v1261
    %v1289 = vsel %vm1287, %v1286, %v1263
    %vm1290 = vcmask 228352
    %v1291 = vsel %vm1290, %v1288, %v1269
    %v1292 = vsel %vm1290, %v1289, %v1271
    %v1293 = vpack.c.bf16 %v1292, %v1291
    %v1295 = vlaneseq
    %v1296 = vshrl.u32 %v1295, 7
    %v1297 = vsub.s32 0, %v1296
    %v1298 = vrot.slane %v130, %v1297
    %v1304 = vunpack.c.l.b16 %v126
    %v1305 = vunpack.c.l.b16 %v127
    %v1306 = vunpack.c.l.b16 %v128
    %v1307 = vunpack.c.l.b16 %v129
    %v1308 = vpack.c.b16 %v1305, %v1304
    %v1309 = vpack.c.b16 %v1307, %v1306
    %v1313 = vsel %vm150, %v1293, 0
    %1315 = vmatprep.subr.bf16.mxu0 0
    %1316 = vmatpush1.bf16.msra.mxu0 %v1308
    %1317 = vmatprep.subr.bf16.mxu0 0
    %1318 = vmatpush1.bf16.msra.mxu0 %v1309
    %1319 = vmatprep.subr.bf16.mxu0 0
    %1320 = vmatpush1.bf16.msra.mxu0 0
    %1321 = vmatprep.subr.bf16.mxu0 0
    %1322 = vmatpush1.bf16.msra.mxu0 0
    %1323 = vmatprep.subr.bf16.mxu0 0
    %1324 = vmatpush1.bf16.msra.mxu0 0
    %1325 = vmatprep.subr.bf16.mxu0 0
    %1326 = vmatpush1.bf16.msra.mxu0 0
    %1327 = vmatprep.subr.bf16.mxu0 0
    %1328 = vmatpush1.bf16.msra.mxu0 0
    %1329 = vmatprep.subr.bf16.mxu0 0
    %1330 = vmatpush1.bf16.msra.mxu0 0
    %1331 = vmatprep.subr.bf16.mxu0 0
    %1332 = vmatpush1.bf16.msra.mxu0 0
    %1333 = vmatprep.subr.bf16.mxu0 0
    %1334 = vmatpush1.bf16.msra.mxu0 0
    %1335 = vmatprep.subr.bf16.mxu0 0
    %1336 = vmatpush1.bf16.msra.mxu0 0
    %1337 = vmatprep.subr.bf16.mxu0 0
    %1338 = vmatpush1.bf16.msra.mxu0 0
    %1339 = vmatprep.subr.bf16.mxu0 0
    %1340 = vmatpush1.bf16.msra.mxu0 0
    %1341 = vmatprep.subr.bf16.mxu0 0
    %1342 = vmatpush1.bf16.msra.mxu0 0
    %1343 = vmatprep.subr.bf16.mxu0 0
    %1344 = vmatpush1.bf16.msra.mxu0 0
    %1345 = vmatprep.subr.bf16.mxu0 0
    %1346 = vmatpush1.bf16.msra.mxu0 0
    %1347 = vmatprep.mubr.bf16.mxu0 0
    %1348 = vmatmul.mubr.bf16.gmra.mrb[0].mxu0 %v1313
    %v1349 = vpop.f32.mrb[0].mxu0
    %v1350 = vadd.f32 %v1298, %v1349
    %v1351 = vpop.f32.mrb[0].mxu0
    %v1352 = vpop.f32.mrb[0].mxu0
    %v1353 = vadd.f32 %v1298, %v1352
    %v1354 = vpop.f32.mrb[0].mxu0
    %1355 = vdwg.mxu0
    %v1356 = vadd.f32 %v101, %v1350
    %v1357 = vadd.f32 %v102, %v1353
    %v1358 = vld [vmem:[%s18] sm:$0x1]
    %v1359 = vld [vmem:[%s19] sm:$0x1]
    %v1360 = vsel %vm150, %v1356, 0.0
    %1361 = vadd.xlane.f32.xlu0 %v1360
    %v1362 = vpop.xlane.xlu0 %1361
    %v1363 = vsel %vm150, %v1357, 0.0
    %1364 = vadd.xlane.f32.xlu0 %v1363
    %v1365 = vpop.xlane.xlu0 %1364
    %v1366 = vrcp.pop 32.0
    %v1367 = vmul.f32 %v1362, %v1366
    %v1368 = vmul.f32 %v1365, %v1366
    %v1369 = vsub.f32 %v1356, %v1367
    %v1370 = vsub.f32 %v1357, %v1368
    %v1371 = vmul.f32 %v1369, %v1369
    %v1372 = vmul.f32 %v1370, %v1370
    %v1373 = vsel %vm150, %v1371, 0.0
    %1374 = vadd.xlane.f32.xlu0 %v1373
    %v1375 = vpop.xlane.xlu0 %1374
    %v1376 = vsel %vm150, %v1372, 0.0
    %1377 = vadd.xlane.f32.xlu0 %v1376
    %v1378 = vpop.xlane.xlu0 %1377
    %v1379 = vmul.f32 %v1375, %v1366
    %v1380 = vmul.f32 %v1378, %v1366
    %v1381 = vadd.f32 %v1379, 1e-05
    %v1382 = vadd.f32 %v1380, 1e-05
    %v1383 = vrsqrt.pop %v1381
    %v1384 = vrsqrt.pop %v1382
    %v1385 = vmul.f32 %v1369, %v1383
    %v1386 = vmul.f32 %v1370, %v1384
    %v1388 = vlaneseq
    %v1389 = vshrl.u32 %v1388, 7
    %v1390 = vsub.s32 0, %v1389
    %v1391 = vrot.slane %v1358, %v1390
    %v1393 = vmul.f32 %v1385, %v1391
    %v1394 = vmul.f32 %v1386, %v1391
    %v1396 = vlaneseq
    %v1397 = vshrl.u32 %v1396, 7
    %v1398 = vsub.s32 0, %v1397
    %v1399 = vrot.slane %v1359, %v1398
    %v1401 = vadd.f32 %v1393, %v1399
    %v1402 = vadd.f32 %v1394, %v1399
    %v1403 = vadd.f32 %v1401, %v103
    %v1404 = vadd.f32 %v1402, %v104
    %v1405 = vld [vmem:[%s10] sm:$0xf]
    %v1406 = vld [vmem:[%s10 + $0x4] sm:$0xf]
    %v1407 = vld [vmem:[%s10 + $0x8] sm:$0xf]
    %v1408 = vld [vmem:[%s10 + $0xc] sm:$0xf]
    %v1409 = vld [vmem:[%s11] sm:$0x1]
    %v1410 = vld [vmem:[%s12] sm:$0xf]
    %v1411 = vld [vmem:[%s12 + $0x4] sm:$0xf]
    %v1412 = vld [vmem:[%s12 + $0x8] sm:$0xf]
    %v1413 = vld [vmem:[%s12 + $0xc] sm:$0xf]
    %v1414 = vld [vmem:[%s13] sm:$0x1]
    %v1415 = vpack.c.bf16 %v1404, %v1403
    %v1417 = vlaneseq
    %v1418 = vshrl.u32 %v1417, 7
    %v1419 = vsub.s32 0, %v1418
    %v1420 = vrot.slane %v1409, %v1419
    %v1426 = vunpack.c.l.b16 %v1405
    %v1427 = vunpack.c.l.b16 %v1406
    %v1428 = vunpack.c.l.b16 %v1407
    %v1429 = vunpack.c.l.b16 %v1408
    %v1430 = vpack.c.b16 %v1427, %v1426
    %v1431 = vpack.c.b16 %v1429, %v1428
    %v1435 = vsel %vm150, %v1415, 0
    %1437 = vmatprep.subr.bf16.mxu0 0
    %1438 = vmatpush1.bf16.msra.mxu0 %v1430
    %1439 = vmatprep.subr.bf16.mxu0 0
    %1440 = vmatpush1.bf16.msra.mxu0 %v1431
    %1441 = vmatprep.subr.bf16.mxu0 0
    %1442 = vmatpush1.bf16.msra.mxu0 0
    %1443 = vmatprep.subr.bf16.mxu0 0
    %1444 = vmatpush1.bf16.msra.mxu0 0
    %1445 = vmatprep.subr.bf16.mxu0 0
    %1446 = vmatpush1.bf16.msra.mxu0 0
    %1447 = vmatprep.subr.bf16.mxu0 0
    %1448 = vmatpush1.bf16.msra.mxu0 0
    %1449 = vmatprep.subr.bf16.mxu0 0
    %1450 = vmatpush1.bf16.msra.mxu0 0
    %1451 = vmatprep.subr.bf16.mxu0 0
    %1452 = vmatpush1.bf16.msra.mxu0 0
    %1453 = vmatprep.subr.bf16.mxu0 0
    %1454 = vmatpush1.bf16.msra.mxu0 0
    %1455 = vmatprep.subr.bf16.mxu0 0
    %1456 = vmatpush1.bf16.msra.mxu0 0
    %1457 = vmatprep.subr.bf16.mxu0 0
    %1458 = vmatpush1.bf16.msra.mxu0 0
    %1459 = vmatprep.subr.bf16.mxu0 0
    %1460 = vmatpush1.bf16.msra.mxu0 0
    %1461 = vmatprep.subr.bf16.mxu0 0
    %1462 = vmatpush1.bf16.msra.mxu0 0
    %1463 = vmatprep.subr.bf16.mxu0 0
    %1464 = vmatpush1.bf16.msra.mxu0 0
    %1465 = vmatprep.subr.bf16.mxu0 0
    %1466 = vmatpush1.bf16.msra.mxu0 0
    %1467 = vmatprep.subr.bf16.mxu0 0
    %1468 = vmatpush1.bf16.msra.mxu0 0
    %1469 = vmatprep.mubr.bf16.mxu0 0
    %1470 = vmatmul.mubr.bf16.gmra.mrb[0].mxu0 %v1435
    %v1471 = vpop.f32.mrb[0].mxu0
    %v1472 = vadd.f32 %v1420, %v1471
    %v1473 = vpop.f32.mrb[0].mxu0
    %v1474 = vpop.f32.mrb[0].mxu0
    %v1475 = vadd.f32 %v1420, %v1474
    %v1476 = vpop.f32.mrb[0].mxu0
    %1477 = vdwg.mxu0
    %v1478 = vpack.c.bf16 %v110, %v109
    %v1479 = vpack.c.bf16 %v112, %v111
    %1480 = vrot.lane.b32.xlu0 %v1430, 96
    %v1481 = vpop.permute.xlu0 %1480
    %1482 = vrot.lane.b32.xlu0 %v1431, 96
    %v1483 = vpop.permute.xlu0 %1482
    %1486 = vrot.lane.b32.xlu0 %v1420, 96
    %v1487 = vpop.permute.xlu0 %1486
    %v1490 = vsel %vm150, %v1478, 0
    %v1493 = vsel %vm150, %v1479, 0
    %1495 = vmatprep.subr.bf16.mxu0 0
    %1496 = vmatpush1.bf16.msra.mxu0 %v1481
    %1497 = vmatprep.subr.bf16.mxu0 0
    %1498 = vmatpush1.bf16.msra.mxu0 %v1483
    %1499 = vmatprep.subr.bf16.mxu0 0
    %1500 = vmatpush1.bf16.msra.mxu0 0
    %1501 = vmatprep.subr.bf16.mxu0 0
    %1502 = vmatpush1.bf16.msra.mxu0 0
    %1503 = vmatprep.subr.bf16.mxu0 0
    %1504 = vmatpush1.bf16.msra.mxu0 0
    %1505 = vmatprep.subr.bf16.mxu0 0
    %1506 = vmatpush1.bf16.msra.mxu0 0
    %1507 = vmatprep.subr.bf16.mxu0 0
    %1508 = vmatpush1.bf16.msra.mxu0 0
    %1509 = vmatprep.subr.bf16.mxu0 0
    %1510 = vmatpush1.bf16.msra.mxu0 0
    %1511 = vmatprep.subr.bf16.mxu0 0
    %1512 = vmatpush1.bf16.msra.mxu0 0
    %1513 = vmatprep.subr.bf16.mxu0 0
    %1514 = vmatpush1.bf16.msra.mxu0 0
    %1515 = vmatprep.subr.bf16.mxu0 0
    %1516 = vmatpush1.bf16.msra.mxu0 0
    %1517 = vmatprep.subr.bf16.mxu0 0
    %1518 = vmatpush1.bf16.msra.mxu0 0
    %1519 = vmatprep.subr.bf16.mxu0 0
    %1520 = vmatpush1.bf16.msra.mxu0 0
    %1521 = vmatprep.subr.bf16.mxu0 0
    %1522 = vmatpush1.bf16.msra.mxu0 0
    %1523 = vmatprep.subr.bf16.mxu0 0
    %1524 = vmatpush1.bf16.msra.mxu0 0
    %1525 = vmatprep.subr.bf16.mxu0 0
    %1526 = vmatpush1.bf16.msra.mxu0 0
    %1527 = vmatprep.mubr.bf16.mxu0 0
    %1528 = vmatmul.mubr.bf16.gmra.mrb[0].mxu0 %v1490
    %v1529 = vpop.f32.mrb[0].mxu0
    %v1530 = vadd.f32 %v1487, %v1529
    %v1531 = vpop.f32.mrb[0].mxu0
    %v1532 = vpop.f32.mrb[0].mxu0
    %v1533 = vadd.f32 %v1487, %v1532
    %v1534 = vpop.f32.mrb[0].mxu0
    %1535 = vmatprep.mubr.bf16.mxu0 0
    %1536 = vmatmul.mubr.bf16.gmra.mrb[0].mxu0 %v1493
    %v1537 = vpop.f32.mrb[0].mxu0
    %v1538 = vadd.f32 %v1487, %v1537
    %v1539 = vpop.f32.mrb[0].mxu0
    %v1540 = vpop.f32.mrb[0].mxu0
    %v1541 = vadd.f32 %v1487, %v1540
    %v1542 = vpop.f32.mrb[0].mxu0
    %1543 = vdwg.mxu0
    %v1544 = vpack.c.bf16 %v106, %v105
    %v1545 = vpack.c.bf16 %v108, %v107
    %1546 = vrot.lane.b32.xlu0 %v1430, 64
    %v1547 = vpop.permute.xlu0 %1546
    %1548 = vrot.lane.b32.xlu0 %v1431, 64
    %v1549 = vpop.permute.xlu0 %1548
    %1552 = vrot.lane.b32.xlu0 %v1420, 64
    %v1553 = vpop.permute.xlu0 %1552
    %v1556 = vsel %vm150, %v1544, 0
    %v1559 = vsel %vm150, %v1545, 0
    %1561 = vmatprep.subr.bf16.mxu0 0
    %1562 = vmatpush1.bf16.msra.mxu0 %v1547
    %1563 = vmatprep.subr.bf16.mxu0 0
    %1564 = vmatpush1.bf16.msra.mxu0 %v1549
    %1565 = vmatprep.subr.bf16.mxu0 0
    %1566 = vmatpush1.bf16.msra.mxu0 0
    %1567 = vmatprep.subr.bf16.mxu0 0
    %1568 = vmatpush1.bf16.msra.mxu0 0
    %1569 = vmatprep.subr.bf16.mxu0 0
    %1570 = vmatpush1.bf16.msra.mxu0 0
    %1571 = vmatprep.subr.bf16.mxu0 0
    %1572 = vmatpush1.bf16.msra.mxu0 0
    %1573 = vmatprep.subr.bf16.mxu0 0
    %1574 = vmatpush1.bf16.msra.mxu0 0
    %1575 = vmatprep.subr.bf16.mxu0 0
    %1576 = vmatpush1.bf16.msra.mxu0 0
    %1577 = vmatprep.subr.bf16.mxu0 0
    %1578 = vmatpush1.bf16.msra.mxu0 0
    %1579 = vmatprep.subr.bf16.mxu0 0
    %1580 = vmatpush1.bf16.msra.mxu0 0
    %1581 = vmatprep.subr.bf16.mxu0 0
    %1582 = vmatpush1.bf16.msra.mxu0 0
    %1583 = vmatprep.subr.bf16.mxu0 0
    %1584 = vmatpush1.bf16.msra.mxu0 0
    %1585 = vmatprep.subr.bf16.mxu0 0
    %1586 = vmatpush1.bf16.msra.mxu0 0
    %1587 = vmatprep.subr.bf16.mxu0 0
    %1588 = vmatpush1.bf16.msra.mxu0 0
    %1589 = vmatprep.subr.bf16.mxu0 0
    %1590 = vmatpush1.bf16.msra.mxu0 0
    %1591 = vmatprep.subr.bf16.mxu0 0
    %1592 = vmatpush1.bf16.msra.mxu0 0
    %1593 = vmatprep.mubr.bf16.mxu0 0
    %1594 = vmatmul.mubr.bf16.gmra.mrb[0].mxu0 %v1556
    %v1595 = vpop.f32.mrb[0].mxu0
    %v1596 = vadd.f32 %v1553, %v1595
    %v1597 = vpop.f32.mrb[0].mxu0
    %v1598 = vpop.f32.mrb[0].mxu0
    %v1599 = vadd.f32 %v1553, %v1598
    %v1600 = vpop.f32.mrb[0].mxu0
    %1601 = vmatprep.mubr.bf16.mxu0 0
    %1602 = vmatmul.mubr.bf16.gmra.mrb[0].mxu0 %v1559
    %v1603 = vpop.f32.mrb[0].mxu0
    %v1604 = vadd.f32 %v1553, %v1603
    %v1605 = vpop.f32.mrb[0].mxu0
    %v1606 = vpop.f32.mrb[0].mxu0
    %v1607 = vadd.f32 %v1553, %v1606
    %v1608 = vpop.f32.mrb[0].mxu0
    %1609 = vdwg.mxu0
    %v1610 = vpack.c.bf16 %v1475, %v1472
    %v1611 = vpack.c.bf16 %v1533, %v1530
    %v1612 = vpack.c.bf16 %v1541, %v1538
    %v1613 = vpack.c.bf16 %v1599, %v1596
    %v1614 = vpack.c.bf16 %v1607, %v1604
    %v1616 = vsel %vm254, %v1610, 0
    %v1619 = vsel %vm254, %v1611, 0
    %v1622 = vsel %vm254, %v1612, 0
    %1624 = vmatprep.subr.bf16.mxu0 0
    %1625 = vmatpush1.bf16.xpose.msra.mxu0 %v1619
    %1626 = vmatprep.subr.bf16.mxu0 0
    %1627 = vmatpush1.bf16.xpose.msra.mxu0 %v1622
    %1628 = vmatprep.subr.bf16.mxu0 0
    %1629 = vmatpush1.bf16.xpose.msra.mxu0 0
    %1630 = vmatprep.subr.bf16.mxu0 0
    %1631 = vmatpush1.bf16.xpose.msra.mxu0 0
    %1632 = vmatprep.subr.bf16.mxu0 0
    %1633 = vmatpush1.bf16.xpose.msra.mxu0 0
    %1634 = vmatprep.subr.bf16.mxu0 0
    %1635 = vmatpush1.bf16.xpose.msra.mxu0 0
    %1636 = vmatprep.subr.bf16.mxu0 0
    %1637 = vmatpush1.bf16.xpose.msra.mxu0 0
    %1638 = vmatprep.subr.bf16.mxu0 0
    %1639 = vmatpush1.bf16.xpose.msra.mxu0 0
    %1640 = vmatprep.subr.bf16.mxu0 0
    %1641 = vmatpush1.bf16.xpose.msra.mxu0 0
    %1642 = vmatprep.subr.bf16.mxu0 0
    %1643 = vmatpush1.bf16.xpose.msra.mxu0 0
    %1644 = vmatprep.subr.bf16.mxu0 0
    %1645 = vmatpush1.bf16.xpose.msra.mxu0 0
    %1646 = vmatprep.subr.bf16.mxu0 0
    %1647 = vmatpush1.bf16.xpose.msra.mxu0 0
    %1648 = vmatprep.subr.bf16.mxu0 0
    %1649 = vmatpush1.bf16.xpose.msra.mxu0 0
    %1650 = vmatprep.subr.bf16.mxu0 0
    %1651 = vmatpush1.bf16.xpose.msra.mxu0 0
    %1652 = vmatprep.subr.bf16.mxu0 0
    %1653 = vmatpush1.bf16.xpose.msra.mxu0 0
    %1654 = vmatprep.subr.bf16.mxu0 0
    %1655 = vmatpush1.bf16.xpose.msra.mxu0 0
    %1656 = vmatprep.mubr.bf16.mxu0 0
    %1657 = vmatmul.mubr.bf16.gmra.mrb[0].mxu0 %v1616
    %v1658 = vpop.f32.mrb[0].mxu0
    %v1659 = vadd.f32 %v115, %v1658
    %v1660 = vpop.f32.mrb[0].mxu0
    %v1661 = vpop.f32.mrb[0].mxu0
    %v1662 = vadd.f32 %v116, %v1661
    %v1663 = vpop.f32.mrb[0].mxu0
    %1664 = vdwg.mxu0
    %v1665 = vsel %vm150, %v1659, -inf
    %1666 = vmax.xlane.f32.xlu0 %v1665
    %v1667 = vpop.xlane.xlu0 %1666
    %v1668 = vsel %vm150, %v1662, -inf
    %1669 = vmax.xlane.f32.xlu0 %v1668
    %v1670 = vpop.xlane.xlu0 %1669
    %v1671 = vsub.f32 %v1659, %v1667
    %v1672 = vsub.f32 %v1662, %v1670
    %v1673 = vmul.f32 %v1671, 1.442695
    %v1674 = vpow.pop %v1673
    %v1675 = vmul.f32 %v1672, 1.442695
    %v1676 = vpow.pop %v1675
    %v1677 = vsel %vm150, %v1674, 0.0
    %1678 = vadd.xlane.f32.xlu0 %v1677
    %v1679 = vpop.xlane.xlu0 %1678
    %v1680 = vsel %vm150, %v1676, 0.0
    %1681 = vadd.xlane.f32.xlu0 %v1680
    %v1682 = vpop.xlane.xlu0 %1681
    %v1683 = vrcp.pop %v1679
    %v1684 = vmul.f32 %v1674, %v1683
    %v1685 = vrcp.pop %v1682
    %v1686 = vmul.f32 %v1676, %v1685
    %v1687 = vpack.c.bf16 %v1686, %v1684
    %v1689 = vsel %vm150, %v1687, 0
    %1691 = vmatprep.subr.bf16.mxu0 0
    %1692 = vmatpush1.bf16.msra.mxu0 %v1613
    %1693 = vmatprep.subr.bf16.mxu0 0
    %1694 = vmatpush1.bf16.msra.mxu0 %v1614
    %1695 = vmatprep.subr.bf16.mxu0 0
    %1696 = vmatpush1.bf16.msra.mxu0 0
    %1697 = vmatprep.subr.bf16.mxu0 0
    %1698 = vmatpush1.bf16.msra.mxu0 0
    %1699 = vmatprep.subr.bf16.mxu0 0
    %1700 = vmatpush1.bf16.msra.mxu0 0
    %1701 = vmatprep.subr.bf16.mxu0 0
    %1702 = vmatpush1.bf16.msra.mxu0 0
    %1703 = vmatprep.subr.bf16.mxu0 0
    %1704 = vmatpush1.bf16.msra.mxu0 0
    %1705 = vmatprep.subr.bf16.mxu0 0
    %1706 = vmatpush1.bf16.msra.mxu0 0
    %1707 = vmatprep.subr.bf16.mxu0 0
    %1708 = vmatpush1.bf16.msra.mxu0 0
    %1709 = vmatprep.subr.bf16.mxu0 0
    %1710 = vmatpush1.bf16.msra.mxu0 0
    %1711 = vmatprep.subr.bf16.mxu0 0
    %1712 = vmatpush1.bf16.msra.mxu0 0
    %1713 = vmatprep.subr.bf16.mxu0 0
    %1714 = vmatpush1.bf16.msra.mxu0 0
    %1715 = vmatprep.subr.bf16.mxu0 0
    %1716 = vmatpush1.bf16.msra.mxu0 0
    %1717 = vmatprep.subr.bf16.mxu0 0
    %1718 = vmatpush1.bf16.msra.mxu0 0
    %1719 = vmatprep.subr.bf16.mxu0 0
    %1720 = vmatpush1.bf16.msra.mxu0 0
    %1721 = vmatprep.subr.bf16.mxu0 0
    %1722 = vmatpush1.bf16.msra.mxu0 0
    %1723 = vmatprep.mubr.bf16.mxu0 0
    %1724 = vmatmul.mubr.bf16.gmra.mrb[0].mxu0 %v1689
    %v1725 = vpop.f32.mrb[0].mxu0
    %v1726 = vadd.f32 0.0, %v1725
    %v1727 = vpop.f32.mrb[0].mxu0
    %v1728 = vpop.f32.mrb[0].mxu0
    %v1729 = vadd.f32 0.0, %v1728
    %v1730 = vpop.f32.mrb[0].mxu0
    %1731 = vdwg.mxu0
    %1733 = vrot.lane.b32.xlu0 %v1610, 124
    %v1734 = vpop.permute.xlu0 %1733
    %1737 = vrot.lane.b32.xlu0 %v1611, 124
    %v1738 = vpop.permute.xlu0 %1737
    %1739 = vrot.lane.b32.xlu0 %v1612, 124
    %v1740 = vpop.permute.xlu0 %1739
    %v1742 = vsel %vm254, %v1734, 0
    %v1745 = vsel %vm254, %v1738, 0
    %v1748 = vsel %vm254, %v1740, 0
    %1750 = vmatprep.subr.bf16.mxu0 0
    %1751 = vmatpush1.bf16.xpose.msra.mxu0 %v1745
    %1752 = vmatprep.subr.bf16.mxu0 0
    %1753 = vmatpush1.bf16.xpose.msra.mxu0 %v1748
    %1754 = vmatprep.subr.bf16.mxu0 0
    %1755 = vmatpush1.bf16.xpose.msra.mxu0 0
    %1756 = vmatprep.subr.bf16.mxu0 0
    %1757 = vmatpush1.bf16.xpose.msra.mxu0 0
    %1758 = vmatprep.subr.bf16.mxu0 0
    %1759 = vmatpush1.bf16.xpose.msra.mxu0 0
    %1760 = vmatprep.subr.bf16.mxu0 0
    %1761 = vmatpush1.bf16.xpose.msra.mxu0 0
    %1762 = vmatprep.subr.bf16.mxu0 0
    %1763 = vmatpush1.bf16.xpose.msra.mxu0 0
    %1764 = vmatprep.subr.bf16.mxu0 0
    %1765 = vmatpush1.bf16.xpose.msra.mxu0 0
    %1766 = vmatprep.subr.bf16.mxu0 0
    %1767 = vmatpush1.bf16.xpose.msra.mxu0 0
    %1768 = vmatprep.subr.bf16.mxu0 0
    %1769 = vmatpush1.bf16.xpose.msra.mxu0 0
    %1770 = vmatprep.subr.bf16.mxu0 0
    %1771 = vmatpush1.bf16.xpose.msra.mxu0 0
    %1772 = vmatprep.subr.bf16.mxu0 0
    %1773 = vmatpush1.bf16.xpose.msra.mxu0 0
    %1774 = vmatprep.subr.bf16.mxu0 0
    %1775 = vmatpush1.bf16.xpose.msra.mxu0 0
    %1776 = vmatprep.subr.bf16.mxu0 0
    %1777 = vmatpush1.bf16.xpose.msra.mxu0 0
    %1778 = vmatprep.subr.bf16.mxu0 0
    %1779 = vmatpush1.bf16.xpose.msra.mxu0 0
    %1780 = vmatprep.subr.bf16.mxu0 0
    %1781 = vmatpush1.bf16.xpose.msra.mxu0 0
    %1782 = vmatprep.mubr.bf16.mxu0 0
    %1783 = vmatmul.mubr.bf16.gmra.mrb[0].mxu0 %v1742
    %v1784 = vpop.f32.mrb[0].mxu0
    %v1785 = vadd.f32 %v115, %v1784
    %v1786 = vpop.f32.mrb[0].mxu0
    %v1787 = vpop.f32.mrb[0].mxu0
    %v1788 = vadd.f32 %v116, %v1787
    %v1789 = vpop.f32.mrb[0].mxu0
    %1790 = vdwg.mxu0
    %v1791 = vsel %vm150, %v1785, -inf
    %1792 = vmax.xlane.f32.xlu0 %v1791
    %v1793 = vpop.xlane.xlu0 %1792
    %v1794 = vsel %vm150, %v1788, -inf
    %1795 = vmax.xlane.f32.xlu0 %v1794
    %v1796 = vpop.xlane.xlu0 %1795
    %v1797 = vsub.f32 %v1785, %v1793
    %v1798 = vsub.f32 %v1788, %v1796
    %v1799 = vmul.f32 %v1797, 1.442695
    %v1800 = vpow.pop %v1799
    %v1801 = vmul.f32 %v1798, 1.442695
    %v1802 = vpow.pop %v1801
    %v1803 = vsel %vm150, %v1800, 0.0
    %1804 = vadd.xlane.f32.xlu0 %v1803
    %v1805 = vpop.xlane.xlu0 %1804
    %v1806 = vsel %vm150, %v1802, 0.0
    %1807 = vadd.xlane.f32.xlu0 %v1806
    %v1808 = vpop.xlane.xlu0 %1807
    %v1809 = vrcp.pop %v1805
    %v1810 = vmul.f32 %v1800, %v1809
    %v1811 = vrcp.pop %v1808
    %v1812 = vmul.f32 %v1802, %v1811
    %v1813 = vpack.c.bf16 %v1812, %v1810
    %1816 = vrot.lane.b32.xlu0 %v1613, 124
    %v1817 = vpop.permute.xlu0 %1816
    %1818 = vrot.lane.b32.xlu0 %v1614, 124
    %v1819 = vpop.permute.xlu0 %1818
    %v1823 = vsel %vm150, %v1813, 0
    %1825 = vmatprep.subr.bf16.mxu0 0
    %1826 = vmatpush1.bf16.msra.mxu0 %v1817
    %1827 = vmatprep.subr.bf16.mxu0 0
    %1828 = vmatpush1.bf16.msra.mxu0 %v1819
    %1829 = vmatprep.subr.bf16.mxu0 0
    %1830 = vmatpush1.bf16.msra.mxu0 0
    %1831 = vmatprep.subr.bf16.mxu0 0
    %1832 = vmatpush1.bf16.msra.mxu0 0
    %1833 = vmatprep.subr.bf16.mxu0 0
    %1834 = vmatpush1.bf16.msra.mxu0 0
    %1835 = vmatprep.subr.bf16.mxu0 0
    %1836 = vmatpush1.bf16.msra.mxu0 0
    %1837 = vmatprep.subr.bf16.mxu0 0
    %1838 = vmatpush1.bf16.msra.mxu0 0
    %1839 = vmatprep.subr.bf16.mxu0 0
    %1840 = vmatpush1.bf16.msra.mxu0 0
    %1841 = vmatprep.subr.bf16.mxu0 0
    %1842 = vmatpush1.bf16.msra.mxu0 0
    %1843 = vmatprep.subr.bf16.mxu0 0
    %1844 = vmatpush1.bf16.msra.mxu0 0
    %1845 = vmatprep.subr.bf16.mxu0 0
    %1846 = vmatpush1.bf16.msra.mxu0 0
    %1847 = vmatprep.subr.bf16.mxu0 0
    %1848 = vmatpush1.bf16.msra.mxu0 0
    %1849 = vmatprep.subr.bf16.mxu0 0
    %1850 = vmatpush1.bf16.msra.mxu0 0
    %1851 = vmatprep.subr.bf16.mxu0 0
    %1852 = vmatpush1.bf16.msra.mxu0 0
    %1853 = vmatprep.subr.bf16.mxu0 0
    %1854 = vmatpush1.bf16.msra.mxu0 0
    %1855 = vmatprep.subr.bf16.mxu0 0
    %1856 = vmatpush1.bf16.msra.mxu0 0
    %1857 = vmatprep.mubr.bf16.mxu0 0
    %1858 = vmatmul.mubr.bf16.gmra.mrb[0].mxu0 %v1823
    %v1859 = vpop.f32.mrb[0].mxu0
    %v1860 = vadd.f32 0.0, %v1859
    %v1861 = vpop.f32.mrb[0].mxu0
    %v1862 = vpop.f32.mrb[0].mxu0
    %v1863 = vadd.f32 0.0, %v1862
    %v1864 = vpop.f32.mrb[0].mxu0
    %1865 = vdwg.mxu0
    %1866 = vrot.lane.b32.xlu0 %v1610, 120
    %v1867 = vpop.permute.xlu0 %1866
    %1868 = vrot.lane.b32.xlu0 %v1611, 120
    %v1869 = vpop.permute.xlu0 %1868
    %1870 = vrot.lane.b32.xlu0 %v1612, 120
    %v1871 = vpop.permute.xlu0 %1870
    %v1873 = vsel %vm254, %v1867, 0
    %v1876 = vsel %vm254, %v1869, 0
    %v1879 = vsel %vm254, %v1871, 0
    %1881 = vmatprep.subr.bf16.mxu0 0
    %1882 = vmatpush1.bf16.xpose.msra.mxu0 %v1876
    %1883 = vmatprep.subr.bf16.mxu0 0
    %1884 = vmatpush1.bf16.xpose.msra.mxu0 %v1879
    %1885 = vmatprep.subr.bf16.mxu0 0
    %1886 = vmatpush1.bf16.xpose.msra.mxu0 0
    %1887 = vmatprep.subr.bf16.mxu0 0
    %1888 = vmatpush1.bf16.xpose.msra.mxu0 0
    %1889 = vmatprep.subr.bf16.mxu0 0
    %1890 = vmatpush1.bf16.xpose.msra.mxu0 0
    %1891 = vmatprep.subr.bf16.mxu0 0
    %1892 = vmatpush1.bf16.xpose.msra.mxu0 0
    %1893 = vmatprep.subr.bf16.mxu0 0
    %1894 = vmatpush1.bf16.xpose.msra.mxu0 0
    %1895 = vmatprep.subr.bf16.mxu0 0
    %1896 = vmatpush1.bf16.xpose.msra.mxu0 0
    %1897 = vmatprep.subr.bf16.mxu0 0
    %1898 = vmatpush1.bf16.xpose.msra.mxu0 0
    %1899 = vmatprep.subr.bf16.mxu0 0
    %1900 = vmatpush1.bf16.xpose.msra.mxu0 0
    %1901 = vmatprep.subr.bf16.mxu0 0
    %1902 = vmatpush1.bf16.xpose.msra.mxu0 0
    %1903 = vmatprep.subr.bf16.mxu0 0
    %1904 = vmatpush1.bf16.xpose.msra.mxu0 0
    %1905 = vmatprep.subr.bf16.mxu0 0
    %1906 = vmatpush1.bf16.xpose.msra.mxu0 0
    %1907 = vmatprep.subr.bf16.mxu0 0
    %1908 = vmatpush1.bf16.xpose.msra.mxu0 0
    %1909 = vmatprep.subr.bf16.mxu0 0
    %1910 = vmatpush1.bf16.xpose.msra.mxu0 0
    %1911 = vmatprep.subr.bf16.mxu0 0
    %1912 = vmatpush1.bf16.xpose.msra.mxu0 0
    %1913 = vmatprep.mubr.bf16.mxu0 0
    %1914 = vmatmul.mubr.bf16.gmra.mrb[0].mxu0 %v1873
    %v1915 = vpop.f32.mrb[0].mxu0
    %v1916 = vadd.f32 %v115, %v1915
    %v1917 = vpop.f32.mrb[0].mxu0
    %v1918 = vpop.f32.mrb[0].mxu0
    %v1919 = vadd.f32 %v116, %v1918
    %v1920 = vpop.f32.mrb[0].mxu0
    %1921 = vdwg.mxu0
    %v1922 = vsel %vm150, %v1916, -inf
    %1923 = vmax.xlane.f32.xlu0 %v1922
    %v1924 = vpop.xlane.xlu0 %1923
    %v1925 = vsel %vm150, %v1919, -inf
    %1926 = vmax.xlane.f32.xlu0 %v1925
    %v1927 = vpop.xlane.xlu0 %1926
    %v1928 = vsub.f32 %v1916, %v1924
    %v1929 = vsub.f32 %v1919, %v1927
    %v1930 = vmul.f32 %v1928, 1.442695
    %v1931 = vpow.pop %v1930
    %v1932 = vmul.f32 %v1929, 1.442695
    %v1933 = vpow.pop %v1932
    %v1934 = vsel %vm150, %v1931, 0.0
    %1935 = vadd.xlane.f32.xlu0 %v1934
    %v1936 = vpop.xlane.xlu0 %1935
    %v1937 = vsel %vm150, %v1933, 0.0
    %1938 = vadd.xlane.f32.xlu0 %v1937
    %v1939 = vpop.xlane.xlu0 %1938
    %v1940 = vrcp.pop %v1936
    %v1941 = vmul.f32 %v1931, %v1940
    %v1942 = vrcp.pop %v1939
    %v1943 = vmul.f32 %v1933, %v1942
    %v1944 = vpack.c.bf16 %v1943, %v1941
    %1945 = vrot.lane.b32.xlu0 %v1613, 120
    %v1946 = vpop.permute.xlu0 %1945
    %1947 = vrot.lane.b32.xlu0 %v1614, 120
    %v1948 = vpop.permute.xlu0 %1947
    %v1952 = vsel %vm150, %v1944, 0
    %1954 = vmatprep.subr.bf16.mxu0 0
    %1955 = vmatpush1.bf16.msra.mxu0 %v1946
    %1956 = vmatprep.subr.bf16.mxu0 0
    %1957 = vmatpush1.bf16.msra.mxu0 %v1948
    %1958 = vmatprep.subr.bf16.mxu0 0
    %1959 = vmatpush1.bf16.msra.mxu0 0
    %1960 = vmatprep.subr.bf16.mxu0 0
    %1961 = vmatpush1.bf16.msra.mxu0 0
    %1962 = vmatprep.subr.bf16.mxu0 0
    %1963 = vmatpush1.bf16.msra.mxu0 0
    %1964 = vmatprep.subr.bf16.mxu0 0
    %1965 = vmatpush1.bf16.msra.mxu0 0
    %1966 = vmatprep.subr.bf16.mxu0 0
    %1967 = vmatpush1.bf16.msra.mxu0 0
    %1968 = vmatprep.subr.bf16.mxu0 0
    %1969 = vmatpush1.bf16.msra.mxu0 0
    %1970 = vmatprep.subr.bf16.mxu0 0
    %1971 = vmatpush1.bf16.msra.mxu0 0
    %1972 = vmatprep.subr.bf16.mxu0 0
    %1973 = vmatpush1.bf16.msra.mxu0 0
    %1974 = vmatprep.subr.bf16.mxu0 0
    %1975 = vmatpush1.bf16.msra.mxu0 0
    %1976 = vmatprep.subr.bf16.mxu0 0
    %1977 = vmatpush1.bf16.msra.mxu0 0
    %1978 = vmatprep.subr.bf16.mxu0 0
    %1979 = vmatpush1.bf16.msra.mxu0 0
    %1980 = vmatprep.subr.bf16.mxu0 0
    %1981 = vmatpush1.bf16.msra.mxu0 0
    %1982 = vmatprep.subr.bf16.mxu0 0
    %1983 = vmatpush1.bf16.msra.mxu0 0
    %1984 = vmatprep.subr.bf16.mxu0 0
    %1985 = vmatpush1.bf16.msra.mxu0 0
    %1986 = vmatprep.mubr.bf16.mxu0 0
    %1987 = vmatmul.mubr.bf16.gmra.mrb[0].mxu0 %v1952
    %v1988 = vpop.f32.mrb[0].mxu0
    %v1989 = vadd.f32 0.0, %v1988
    %v1990 = vpop.f32.mrb[0].mxu0
    %v1991 = vpop.f32.mrb[0].mxu0
    %v1992 = vadd.f32 0.0, %v1991
    %v1993 = vpop.f32.mrb[0].mxu0
    %1994 = vdwg.mxu0
    %1995 = vrot.lane.b32.xlu0 %v1610, 116
    %v1996 = vpop.permute.xlu0 %1995
    %1997 = vrot.lane.b32.xlu0 %v1611, 116
    %v1998 = vpop.permute.xlu0 %1997
    %1999 = vrot.lane.b32.xlu0 %v1612, 116
    %v2000 = vpop.permute.xlu0 %1999
    %v2002 = vsel %vm254, %v1996, 0
    %v2005 = vsel %vm254, %v1998, 0
    %v2008 = vsel %vm254, %v2000, 0
    %2010 = vmatprep.subr.bf16.mxu0 0
    %2011 = vmatpush1.bf16.xpose.msra.mxu0 %v2005
    %2012 = vmatprep.subr.bf16.mxu0 0
    %2013 = vmatpush1.bf16.xpose.msra.mxu0 %v2008
    %2014 = vmatprep.subr.bf16.mxu0 0
    %2015 = vmatpush1.bf16.xpose.msra.mxu0 0
    %2016 = vmatprep.subr.bf16.mxu0 0
    %2017 = vmatpush1.bf16.xpose.msra.mxu0 0
    %2018 = vmatprep.subr.bf16.mxu0 0
    %2019 = vmatpush1.bf16.xpose.msra.mxu0 0
    %2020 = vmatprep.subr.bf16.mxu0 0
    %2021 = vmatpush1.bf16.xpose.msra.mxu0 0
    %2022 = vmatprep.subr.bf16.mxu0 0
    %2023 = vmatpush1.bf16.xpose.msra.mxu0 0
    %2024 = vmatprep.subr.bf16.mxu0 0
    %2025 = vmatpush1.bf16.xpose.msra.mxu0 0
    %2026 = vmatprep.subr.bf16.mxu0 0
    %2027 = vmatpush1.bf16.xpose.msra.mxu0 0
    %2028 = vmatprep.subr.bf16.mxu0 0
    %2029 = vmatpush1.bf16.xpose.msra.mxu0 0
    %2030 = vmatprep.subr.bf16.mxu0 0
    %2031 = vmatpush1.bf16.xpose.msra.mxu0 0
    %2032 = vmatprep.subr.bf16.mxu0 0
    %2033 = vmatpush1.bf16.xpose.msra.mxu0 0
    %2034 = vmatprep.subr.bf16.mxu0 0
    %2035 = vmatpush1.bf16.xpose.msra.mxu0 0
    %2036 = vmatprep.subr.bf16.mxu0 0
    %2037 = vmatpush1.bf16.xpose.msra.mxu0 0
    %2038 = vmatprep.subr.bf16.mxu0 0
    %2039 = vmatpush1.bf16.xpose.msra.mxu0 0
    %2040 = vmatprep.subr.bf16.mxu0 0
    %2041 = vmatpush1.bf16.xpose.msra.mxu0 0
    %2042 = vmatprep.mubr.bf16.mxu0 0
    %2043 = vmatmul.mubr.bf16.gmra.mrb[0].mxu0 %v2002
    %v2044 = vpop.f32.mrb[0].mxu0
    %v2045 = vadd.f32 %v115, %v2044
    %v2046 = vpop.f32.mrb[0].mxu0
    %v2047 = vpop.f32.mrb[0].mxu0
    %v2048 = vadd.f32 %v116, %v2047
    %v2049 = vpop.f32.mrb[0].mxu0
    %2050 = vdwg.mxu0
    %v2051 = vsel %vm150, %v2045, -inf
    %2052 = vmax.xlane.f32.xlu0 %v2051
    %v2053 = vpop.xlane.xlu0 %2052
    %v2054 = vsel %vm150, %v2048, -inf
    %2055 = vmax.xlane.f32.xlu0 %v2054
    %v2056 = vpop.xlane.xlu0 %2055
    %v2057 = vsub.f32 %v2045, %v2053
    %v2058 = vsub.f32 %v2048, %v2056
    %v2059 = vmul.f32 %v2057, 1.442695
    %v2060 = vpow.pop %v2059
    %v2061 = vmul.f32 %v2058, 1.442695
    %v2062 = vpow.pop %v2061
    %v2063 = vsel %vm150, %v2060, 0.0
    %2064 = vadd.xlane.f32.xlu0 %v2063
    %v2065 = vpop.xlane.xlu0 %2064
    %v2066 = vsel %vm150, %v2062, 0.0
    %2067 = vadd.xlane.f32.xlu0 %v2066
    %v2068 = vpop.xlane.xlu0 %2067
    %v2069 = vrcp.pop %v2065
    %v2070 = vmul.f32 %v2060, %v2069
    %v2071 = vrcp.pop %v2068
    %v2072 = vmul.f32 %v2062, %v2071
    %v2073 = vpack.c.bf16 %v2072, %v2070
    %2074 = vrot.lane.b32.xlu0 %v1613, 116
    %v2075 = vpop.permute.xlu0 %2074
    %2076 = vrot.lane.b32.xlu0 %v1614, 116
    %v2077 = vpop.permute.xlu0 %2076
    %v2081 = vsel %vm150, %v2073, 0
    %2083 = vmatprep.subr.bf16.mxu0 0
    %2084 = vmatpush1.bf16.msra.mxu0 %v2075
    %2085 = vmatprep.subr.bf16.mxu0 0
    %2086 = vmatpush1.bf16.msra.mxu0 %v2077
    %2087 = vmatprep.subr.bf16.mxu0 0
    %2088 = vmatpush1.bf16.msra.mxu0 0
    %2089 = vmatprep.subr.bf16.mxu0 0
    %2090 = vmatpush1.bf16.msra.mxu0 0
    %2091 = vmatprep.subr.bf16.mxu0 0
    %2092 = vmatpush1.bf16.msra.mxu0 0
    %2093 = vmatprep.subr.bf16.mxu0 0
    %2094 = vmatpush1.bf16.msra.mxu0 0
    %2095 = vmatprep.subr.bf16.mxu0 0
    %2096 = vmatpush1.bf16.msra.mxu0 0
    %2097 = vmatprep.subr.bf16.mxu0 0
    %2098 = vmatpush1.bf16.msra.mxu0 0
    %2099 = vmatprep.subr.bf16.mxu0 0
    %2100 = vmatpush1.bf16.msra.mxu0 0
    %2101 = vmatprep.subr.bf16.mxu0 0
    %2102 = vmatpush1.bf16.msra.mxu0 0
    %2103 = vmatprep.subr.bf16.mxu0 0
    %2104 = vmatpush1.bf16.msra.mxu0 0
    %2105 = vmatprep.subr.bf16.mxu0 0
    %2106 = vmatpush1.bf16.msra.mxu0 0
    %2107 = vmatprep.subr.bf16.mxu0 0
    %2108 = vmatpush1.bf16.msra.mxu0 0
    %2109 = vmatprep.subr.bf16.mxu0 0
    %2110 = vmatpush1.bf16.msra.mxu0 0
    %2111 = vmatprep.subr.bf16.mxu0 0
    %2112 = vmatpush1.bf16.msra.mxu0 0
    %2113 = vmatprep.subr.bf16.mxu0 0
    %2114 = vmatpush1.bf16.msra.mxu0 0
    %2115 = vmatprep.mubr.bf16.mxu0 0
    %2116 = vmatmul.mubr.bf16.gmra.mrb[0].mxu0 %v2081
    %v2117 = vpop.f32.mrb[0].mxu0
    %v2118 = vadd.f32 0.0, %v2117
    %v2119 = vpop.f32.mrb[0].mxu0
    %v2120 = vpop.f32.mrb[0].mxu0
    %v2121 = vadd.f32 0.0, %v2120
    %v2122 = vpop.f32.mrb[0].mxu0
    %2123 = vdwg.mxu0
    %2124 = vrot.lane.b32.xlu0 %v1610, 112
    %v2125 = vpop.permute.xlu0 %2124
    %2126 = vrot.lane.b32.xlu0 %v1611, 112
    %v2127 = vpop.permute.xlu0 %2126
    %2128 = vrot.lane.b32.xlu0 %v1612, 112
    %v2129 = vpop.permute.xlu0 %2128
    %v2131 = vsel %vm254, %v2125, 0
    %v2134 = vsel %vm254, %v2127, 0
    %v2137 = vsel %vm254, %v2129, 0
    %2139 = vmatprep.subr.bf16.mxu0 0
    %2140 = vmatpush1.bf16.xpose.msra.mxu0 %v2134
    %2141 = vmatprep.subr.bf16.mxu0 0
    %2142 = vmatpush1.bf16.xpose.msra.mxu0 %v2137
    %2143 = vmatprep.subr.bf16.mxu0 0
    %2144 = vmatpush1.bf16.xpose.msra.mxu0 0
    %2145 = vmatprep.subr.bf16.mxu0 0
    %2146 = vmatpush1.bf16.xpose.msra.mxu0 0
    %2147 = vmatprep.subr.bf16.mxu0 0
    %2148 = vmatpush1.bf16.xpose.msra.mxu0 0
    %2149 = vmatprep.subr.bf16.mxu0 0
    %2150 = vmatpush1.bf16.xpose.msra.mxu0 0
    %2151 = vmatprep.subr.bf16.mxu0 0
    %2152 = vmatpush1.bf16.xpose.msra.mxu0 0
    %2153 = vmatprep.subr.bf16.mxu0 0
    %2154 = vmatpush1.bf16.xpose.msra.mxu0 0
    %2155 = vmatprep.subr.bf16.mxu0 0
    %2156 = vmatpush1.bf16.xpose.msra.mxu0 0
    %2157 = vmatprep.subr.bf16.mxu0 0
    %2158 = vmatpush1.bf16.xpose.msra.mxu0 0
    %2159 = vmatprep.subr.bf16.mxu0 0
    %2160 = vmatpush1.bf16.xpose.msra.mxu0 0
    %2161 = vmatprep.subr.bf16.mxu0 0
    %2162 = vmatpush1.bf16.xpose.msra.mxu0 0
    %2163 = vmatprep.subr.bf16.mxu0 0
    %2164 = vmatpush1.bf16.xpose.msra.mxu0 0
    %2165 = vmatprep.subr.bf16.mxu0 0
    %2166 = vmatpush1.bf16.xpose.msra.mxu0 0
    %2167 = vmatprep.subr.bf16.mxu0 0
    %2168 = vmatpush1.bf16.xpose.msra.mxu0 0
    %2169 = vmatprep.subr.bf16.mxu0 0
    %2170 = vmatpush1.bf16.xpose.msra.mxu0 0
    %2171 = vmatprep.mubr.bf16.mxu0 0
    %2172 = vmatmul.mubr.bf16.gmra.mrb[0].mxu0 %v2131
    %v2173 = vpop.f32.mrb[0].mxu0
    %v2174 = vadd.f32 %v115, %v2173
    %v2175 = vpop.f32.mrb[0].mxu0
    %v2176 = vpop.f32.mrb[0].mxu0
    %v2177 = vadd.f32 %v116, %v2176
    %v2178 = vpop.f32.mrb[0].mxu0
    %2179 = vdwg.mxu0
    %v2180 = vsel %vm150, %v2174, -inf
    %2181 = vmax.xlane.f32.xlu0 %v2180
    %v2182 = vpop.xlane.xlu0 %2181
    %v2183 = vsel %vm150, %v2177, -inf
    %2184 = vmax.xlane.f32.xlu0 %v2183
    %v2185 = vpop.xlane.xlu0 %2184
    %v2186 = vsub.f32 %v2174, %v2182
    %v2187 = vsub.f32 %v2177, %v2185
    %v2188 = vmul.f32 %v2186, 1.442695
    %v2189 = vpow.pop %v2188
    %v2190 = vmul.f32 %v2187, 1.442695
    %v2191 = vpow.pop %v2190
    %v2192 = vsel %vm150, %v2189, 0.0
    %2193 = vadd.xlane.f32.xlu0 %v2192
    %v2194 = vpop.xlane.xlu0 %2193
    %v2195 = vsel %vm150, %v2191, 0.0
    %2196 = vadd.xlane.f32.xlu0 %v2195
    %v2197 = vpop.xlane.xlu0 %2196
    %v2198 = vrcp.pop %v2194
    %v2199 = vmul.f32 %v2189, %v2198
    %v2200 = vrcp.pop %v2197
    %v2201 = vmul.f32 %v2191, %v2200
    %v2202 = vpack.c.bf16 %v2201, %v2199
    %2203 = vrot.lane.b32.xlu0 %v1613, 112
    %v2204 = vpop.permute.xlu0 %2203
    %2205 = vrot.lane.b32.xlu0 %v1614, 112
    %v2206 = vpop.permute.xlu0 %2205
    %v2210 = vsel %vm150, %v2202, 0
    %2212 = vmatprep.subr.bf16.mxu0 0
    %2213 = vmatpush1.bf16.msra.mxu0 %v2204
    %2214 = vmatprep.subr.bf16.mxu0 0
    %2215 = vmatpush1.bf16.msra.mxu0 %v2206
    %2216 = vmatprep.subr.bf16.mxu0 0
    %2217 = vmatpush1.bf16.msra.mxu0 0
    %2218 = vmatprep.subr.bf16.mxu0 0
    %2219 = vmatpush1.bf16.msra.mxu0 0
    %2220 = vmatprep.subr.bf16.mxu0 0
    %2221 = vmatpush1.bf16.msra.mxu0 0
    %2222 = vmatprep.subr.bf16.mxu0 0
    %2223 = vmatpush1.bf16.msra.mxu0 0
    %2224 = vmatprep.subr.bf16.mxu0 0
    %2225 = vmatpush1.bf16.msra.mxu0 0
    %2226 = vmatprep.subr.bf16.mxu0 0
    %2227 = vmatpush1.bf16.msra.mxu0 0
    %2228 = vmatprep.subr.bf16.mxu0 0
    %2229 = vmatpush1.bf16.msra.mxu0 0
    %2230 = vmatprep.subr.bf16.mxu0 0
    %2231 = vmatpush1.bf16.msra.mxu0 0
    %2232 = vmatprep.subr.bf16.mxu0 0
    %2233 = vmatpush1.bf16.msra.mxu0 0
    %2234 = vmatprep.subr.bf16.mxu0 0
    %2235 = vmatpush1.bf16.msra.mxu0 0
    %2236 = vmatprep.subr.bf16.mxu0 0
    %2237 = vmatpush1.bf16.msra.mxu0 0
    %2238 = vmatprep.subr.bf16.mxu0 0
    %2239 = vmatpush1.bf16.msra.mxu0 0
    %2240 = vmatprep.subr.bf16.mxu0 0
    %2241 = vmatpush1.bf16.msra.mxu0 0
    %2242 = vmatprep.subr.bf16.mxu0 0
    %2243 = vmatpush1.bf16.msra.mxu0 0
    %2244 = vmatprep.mubr.bf16.mxu0 0
    %2245 = vmatmul.mubr.bf16.gmra.mrb[0].mxu0 %v2210
    %v2246 = vpop.f32.mrb[0].mxu0
    %v2247 = vadd.f32 0.0, %v2246
    %v2248 = vpop.f32.mrb[0].mxu0
    %v2249 = vpop.f32.mrb[0].mxu0
    %v2250 = vadd.f32 0.0, %v2249
    %v2251 = vpop.f32.mrb[0].mxu0
    %2252 = vdwg.mxu0
    %2253 = vrot.lane.b32.xlu0 %v1610, 108
    %v2254 = vpop.permute.xlu0 %2253
    %2255 = vrot.lane.b32.xlu0 %v1611, 108
    %v2256 = vpop.permute.xlu0 %2255
    %2257 = vrot.lane.b32.xlu0 %v1612, 108
    %v2258 = vpop.permute.xlu0 %2257
    %v2260 = vsel %vm254, %v2254, 0
    %v2263 = vsel %vm254, %v2256, 0
    %v2266 = vsel %vm254, %v2258, 0
    %2268 = vmatprep.subr.bf16.mxu0 0
    %2269 = vmatpush1.bf16.xpose.msra.mxu0 %v2263
    %2270 = vmatprep.subr.bf16.mxu0 0
    %2271 = vmatpush1.bf16.xpose.msra.mxu0 %v2266
    %2272 = vmatprep.subr.bf16.mxu0 0
    %2273 = vmatpush1.bf16.xpose.msra.mxu0 0
    %2274 = vmatprep.subr.bf16.mxu0 0
    %2275 = vmatpush1.bf16.xpose.msra.mxu0 0
    %2276 = vmatprep.subr.bf16.mxu0 0
    %2277 = vmatpush1.bf16.xpose.msra.mxu0 0
    %2278 = vmatprep.subr.bf16.mxu0 0
    %2279 = vmatpush1.bf16.xpose.msra.mxu0 0
    %2280 = vmatprep.subr.bf16.mxu0 0
    %2281 = vmatpush1.bf16.xpose.msra.mxu0 0
    %2282 = vmatprep.subr.bf16.mxu0 0
    %2283 = vmatpush1.bf16.xpose.msra.mxu0 0
    %2284 = vmatprep.subr.bf16.mxu0 0
    %2285 = vmatpush1.bf16.xpose.msra.mxu0 0
    %2286 = vmatprep.subr.bf16.mxu0 0
    %2287 = vmatpush1.bf16.xpose.msra.mxu0 0
    %2288 = vmatprep.subr.bf16.mxu0 0
    %2289 = vmatpush1.bf16.xpose.msra.mxu0 0
    %2290 = vmatprep.subr.bf16.mxu0 0
    %2291 = vmatpush1.bf16.xpose.msra.mxu0 0
    %2292 = vmatprep.subr.bf16.mxu0 0
    %2293 = vmatpush1.bf16.xpose.msra.mxu0 0
    %2294 = vmatprep.subr.bf16.mxu0 0
    %2295 = vmatpush1.bf16.xpose.msra.mxu0 0
    %2296 = vmatprep.subr.bf16.mxu0 0
    %2297 = vmatpush1.bf16.xpose.msra.mxu0 0
    %2298 = vmatprep.subr.bf16.mxu0 0
    %2299 = vmatpush1.bf16.xpose.msra.mxu0 0
    %2300 = vmatprep.mubr.bf16.mxu0 0
    %2301 = vmatmul.mubr.bf16.gmra.mrb[0].mxu0 %v2260
    %v2302 = vpop.f32.mrb[0].mxu0
    %v2303 = vadd.f32 %v115, %v2302
    %v2304 = vpop.f32.mrb[0].mxu0
    %v2305 = vpop.f32.mrb[0].mxu0
    %v2306 = vadd.f32 %v116, %v2305
    %v2307 = vpop.f32.mrb[0].mxu0
    %2308 = vdwg.mxu0
    %v2309 = vsel %vm150, %v2303, -inf
    %2310 = vmax.xlane.f32.xlu0 %v2309
    %v2311 = vpop.xlane.xlu0 %2310
    %v2312 = vsel %vm150, %v2306, -inf
    %2313 = vmax.xlane.f32.xlu0 %v2312
    %v2314 = vpop.xlane.xlu0 %2313
    %v2315 = vsub.f32 %v2303, %v2311
    %v2316 = vsub.f32 %v2306, %v2314
    %v2317 = vmul.f32 %v2315, 1.442695
    %v2318 = vpow.pop %v2317
    %v2319 = vmul.f32 %v2316, 1.442695
    %v2320 = vpow.pop %v2319
    %v2321 = vsel %vm150, %v2318, 0.0
    %2322 = vadd.xlane.f32.xlu0 %v2321
    %v2323 = vpop.xlane.xlu0 %2322
    %v2324 = vsel %vm150, %v2320, 0.0
    %2325 = vadd.xlane.f32.xlu0 %v2324
    %v2326 = vpop.xlane.xlu0 %2325
    %v2327 = vrcp.pop %v2323
    %v2328 = vmul.f32 %v2318, %v2327
    %v2329 = vrcp.pop %v2326
    %v2330 = vmul.f32 %v2320, %v2329
    %v2331 = vpack.c.bf16 %v2330, %v2328
    %2332 = vrot.lane.b32.xlu0 %v1613, 108
    %v2333 = vpop.permute.xlu0 %2332
    %2334 = vrot.lane.b32.xlu0 %v1614, 108
    %v2335 = vpop.permute.xlu0 %2334
    %v2339 = vsel %vm150, %v2331, 0
    %2341 = vmatprep.subr.bf16.mxu0 0
    %2342 = vmatpush1.bf16.msra.mxu0 %v2333
    %2343 = vmatprep.subr.bf16.mxu0 0
    %2344 = vmatpush1.bf16.msra.mxu0 %v2335
    %2345 = vmatprep.subr.bf16.mxu0 0
    %2346 = vmatpush1.bf16.msra.mxu0 0
    %2347 = vmatprep.subr.bf16.mxu0 0
    %2348 = vmatpush1.bf16.msra.mxu0 0
    %2349 = vmatprep.subr.bf16.mxu0 0
    %2350 = vmatpush1.bf16.msra.mxu0 0
    %2351 = vmatprep.subr.bf16.mxu0 0
    %2352 = vmatpush1.bf16.msra.mxu0 0
    %2353 = vmatprep.subr.bf16.mxu0 0
    %2354 = vmatpush1.bf16.msra.mxu0 0
    %2355 = vmatprep.subr.bf16.mxu0 0
    %2356 = vmatpush1.bf16.msra.mxu0 0
    %2357 = vmatprep.subr.bf16.mxu0 0
    %2358 = vmatpush1.bf16.msra.mxu0 0
    %2359 = vmatprep.subr.bf16.mxu0 0
    %2360 = vmatpush1.bf16.msra.mxu0 0
    %2361 = vmatprep.subr.bf16.mxu0 0
    %2362 = vmatpush1.bf16.msra.mxu0 0
    %2363 = vmatprep.subr.bf16.mxu0 0
    %2364 = vmatpush1.bf16.msra.mxu0 0
    %2365 = vmatprep.subr.bf16.mxu0 0
    %2366 = vmatpush1.bf16.msra.mxu0 0
    %2367 = vmatprep.subr.bf16.mxu0 0
    %2368 = vmatpush1.bf16.msra.mxu0 0
    %2369 = vmatprep.subr.bf16.mxu0 0
    %2370 = vmatpush1.bf16.msra.mxu0 0
    %2371 = vmatprep.subr.bf16.mxu0 0
    %2372 = vmatpush1.bf16.msra.mxu0 0
    %2373 = vmatprep.mubr.bf16.mxu0 0
    %2374 = vmatmul.mubr.bf16.gmra.mrb[0].mxu0 %v2339
    %v2375 = vpop.f32.mrb[0].mxu0
    %v2376 = vadd.f32 0.0, %v2375
    %v2377 = vpop.f32.mrb[0].mxu0
    %v2378 = vpop.f32.mrb[0].mxu0
    %v2379 = vadd.f32 0.0, %v2378
    %v2380 = vpop.f32.mrb[0].mxu0
    %2381 = vdwg.mxu0
    %2382 = vrot.lane.b32.xlu0 %v1610, 104
    %v2383 = vpop.permute.xlu0 %2382
    %2384 = vrot.lane.b32.xlu0 %v1611, 104
    %v2385 = vpop.permute.xlu0 %2384
    %2386 = vrot.lane.b32.xlu0 %v1612, 104
    %v2387 = vpop.permute.xlu0 %2386
    %v2389 = vsel %vm254, %v2383, 0
    %v2392 = vsel %vm254, %v2385, 0
    %v2395 = vsel %vm254, %v2387, 0
    %2397 = vmatprep.subr.bf16.mxu0 0
    %2398 = vmatpush1.bf16.xpose.msra.mxu0 %v2392
    %2399 = vmatprep.subr.bf16.mxu0 0
    %2400 = vmatpush1.bf16.xpose.msra.mxu0 %v2395
    %2401 = vmatprep.subr.bf16.mxu0 0
    %2402 = vmatpush1.bf16.xpose.msra.mxu0 0
    %2403 = vmatprep.subr.bf16.mxu0 0
    %2404 = vmatpush1.bf16.xpose.msra.mxu0 0
    %2405 = vmatprep.subr.bf16.mxu0 0
    %2406 = vmatpush1.bf16.xpose.msra.mxu0 0
    %2407 = vmatprep.subr.bf16.mxu0 0
    %2408 = vmatpush1.bf16.xpose.msra.mxu0 0
    %2409 = vmatprep.subr.bf16.mxu0 0
    %2410 = vmatpush1.bf16.xpose.msra.mxu0 0
    %2411 = vmatprep.subr.bf16.mxu0 0
    %2412 = vmatpush1.bf16.xpose.msra.mxu0 0
    %2413 = vmatprep.subr.bf16.mxu0 0
    %2414 = vmatpush1.bf16.xpose.msra.mxu0 0
    %2415 = vmatprep.subr.bf16.mxu0 0
    %2416 = vmatpush1.bf16.xpose.msra.mxu0 0
    %2417 = vmatprep.subr.bf16.mxu0 0
    %2418 = vmatpush1.bf16.xpose.msra.mxu0 0
    %2419 = vmatprep.subr.bf16.mxu0 0
    %2420 = vmatpush1.bf16.xpose.msra.mxu0 0
    %2421 = vmatprep.subr.bf16.mxu0 0
    %2422 = vmatpush1.bf16.xpose.msra.mxu0 0
    %2423 = vmatprep.subr.bf16.mxu0 0
    %2424 = vmatpush1.bf16.xpose.msra.mxu0 0
    %2425 = vmatprep.subr.bf16.mxu0 0
    %2426 = vmatpush1.bf16.xpose.msra.mxu0 0
    %2427 = vmatprep.subr.bf16.mxu0 0
    %2428 = vmatpush1.bf16.xpose.msra.mxu0 0
    %2429 = vmatprep.mubr.bf16.mxu0 0
    %2430 = vmatmul.mubr.bf16.gmra.mrb[0].mxu0 %v2389
    %v2431 = vpop.f32.mrb[0].mxu0
    %v2432 = vadd.f32 %v115, %v2431
    %v2433 = vpop.f32.mrb[0].mxu0
    %v2434 = vpop.f32.mrb[0].mxu0
    %v2435 = vadd.f32 %v116, %v2434
    %v2436 = vpop.f32.mrb[0].mxu0
    %2437 = vdwg.mxu0
    %v2438 = vsel %vm150, %v2432, -inf
    %2439 = vmax.xlane.f32.xlu0 %v2438
    %v2440 = vpop.xlane.xlu0 %2439
    %v2441 = vsel %vm150, %v2435, -inf
    %2442 = vmax.xlane.f32.xlu0 %v2441
    %v2443 = vpop.xlane.xlu0 %2442
    %v2444 = vsub.f32 %v2432, %v2440
    %v2445 = vsub.f32 %v2435, %v2443
    %v2446 = vmul.f32 %v2444, 1.442695
    %v2447 = vpow.pop %v2446
    %v2448 = vmul.f32 %v2445, 1.442695
    %v2449 = vpow.pop %v2448
    %v2450 = vsel %vm150, %v2447, 0.0
    %2451 = vadd.xlane.f32.xlu0 %v2450
    %v2452 = vpop.xlane.xlu0 %2451
    %v2453 = vsel %vm150, %v2449, 0.0
    %2454 = vadd.xlane.f32.xlu0 %v2453
    %v2455 = vpop.xlane.xlu0 %2454
    %v2456 = vrcp.pop %v2452
    %v2457 = vmul.f32 %v2447, %v2456
    %v2458 = vrcp.pop %v2455
    %v2459 = vmul.f32 %v2449, %v2458
    %v2460 = vpack.c.bf16 %v2459, %v2457
    %2461 = vrot.lane.b32.xlu0 %v1613, 104
    %v2462 = vpop.permute.xlu0 %2461
    %2463 = vrot.lane.b32.xlu0 %v1614, 104
    %v2464 = vpop.permute.xlu0 %2463
    %v2468 = vsel %vm150, %v2460, 0
    %2470 = vmatprep.subr.bf16.mxu0 0
    %2471 = vmatpush1.bf16.msra.mxu0 %v2462
    %2472 = vmatprep.subr.bf16.mxu0 0
    %2473 = vmatpush1.bf16.msra.mxu0 %v2464
    %2474 = vmatprep.subr.bf16.mxu0 0
    %2475 = vmatpush1.bf16.msra.mxu0 0
    %2476 = vmatprep.subr.bf16.mxu0 0
    %2477 = vmatpush1.bf16.msra.mxu0 0
    %2478 = vmatprep.subr.bf16.mxu0 0
    %2479 = vmatpush1.bf16.msra.mxu0 0
    %2480 = vmatprep.subr.bf16.mxu0 0
    %2481 = vmatpush1.bf16.msra.mxu0 0
    %2482 = vmatprep.subr.bf16.mxu0 0
    %2483 = vmatpush1.bf16.msra.mxu0 0
    %2484 = vmatprep.subr.bf16.mxu0 0
    %2485 = vmatpush1.bf16.msra.mxu0 0
    %2486 = vmatprep.subr.bf16.mxu0 0
    %2487 = vmatpush1.bf16.msra.mxu0 0
    %2488 = vmatprep.subr.bf16.mxu0 0
    %2489 = vmatpush1.bf16.msra.mxu0 0
    %2490 = vmatprep.subr.bf16.mxu0 0
    %2491 = vmatpush1.bf16.msra.mxu0 0
    %2492 = vmatprep.subr.bf16.mxu0 0
    %2493 = vmatpush1.bf16.msra.mxu0 0
    %2494 = vmatprep.subr.bf16.mxu0 0
    %2495 = vmatpush1.bf16.msra.mxu0 0
    %2496 = vmatprep.subr.bf16.mxu0 0
    %2497 = vmatpush1.bf16.msra.mxu0 0
    %2498 = vmatprep.subr.bf16.mxu0 0
    %2499 = vmatpush1.bf16.msra.mxu0 0
    %2500 = vmatprep.subr.bf16.mxu0 0
    %2501 = vmatpush1.bf16.msra.mxu0 0
    %2502 = vmatprep.mubr.bf16.mxu0 0
    %2503 = vmatmul.mubr.bf16.gmra.mrb[0].mxu0 %v2468
    %v2504 = vpop.f32.mrb[0].mxu0
    %v2505 = vadd.f32 0.0, %v2504
    %v2506 = vpop.f32.mrb[0].mxu0
    %v2507 = vpop.f32.mrb[0].mxu0
    %v2508 = vadd.f32 0.0, %v2507
    %v2509 = vpop.f32.mrb[0].mxu0
    %2510 = vdwg.mxu0
    %2511 = vrot.lane.b32.xlu0 %v1610, 100
    %v2512 = vpop.permute.xlu0 %2511
    %2513 = vrot.lane.b32.xlu0 %v1611, 100
    %v2514 = vpop.permute.xlu0 %2513
    %2515 = vrot.lane.b32.xlu0 %v1612, 100
    %v2516 = vpop.permute.xlu0 %2515
    %v2518 = vsel %vm254, %v2512, 0
    %v2521 = vsel %vm254, %v2514, 0
    %v2524 = vsel %vm254, %v2516, 0
    %2526 = vmatprep.subr.bf16.mxu0 0
    %2527 = vmatpush1.bf16.xpose.msra.mxu0 %v2521
    %2528 = vmatprep.subr.bf16.mxu0 0
    %2529 = vmatpush1.bf16.xpose.msra.mxu0 %v2524
    %2530 = vmatprep.subr.bf16.mxu0 0
    %2531 = vmatpush1.bf16.xpose.msra.mxu0 0
    %2532 = vmatprep.subr.bf16.mxu0 0
    %2533 = vmatpush1.bf16.xpose.msra.mxu0 0
    %2534 = vmatprep.subr.bf16.mxu0 0
    %2535 = vmatpush1.bf16.xpose.msra.mxu0 0
    %2536 = vmatprep.subr.bf16.mxu0 0
    %2537 = vmatpush1.bf16.xpose.msra.mxu0 0
    %2538 = vmatprep.subr.bf16.mxu0 0
    %2539 = vmatpush1.bf16.xpose.msra.mxu0 0
    %2540 = vmatprep.subr.bf16.mxu0 0
    %2541 = vmatpush1.bf16.xpose.msra.mxu0 0
    %2542 = vmatprep.subr.bf16.mxu0 0
    %2543 = vmatpush1.bf16.xpose.msra.mxu0 0
    %2544 = vmatprep.subr.bf16.mxu0 0
    %2545 = vmatpush1.bf16.xpose.msra.mxu0 0
    %2546 = vmatprep.subr.bf16.mxu0 0
    %2547 = vmatpush1.bf16.xpose.msra.mxu0 0
    %2548 = vmatprep.subr.bf16.mxu0 0
    %2549 = vmatpush1.bf16.xpose.msra.mxu0 0
    %2550 = vmatprep.subr.bf16.mxu0 0
    %2551 = vmatpush1.bf16.xpose.msra.mxu0 0
    %2552 = vmatprep.subr.bf16.mxu0 0
    %2553 = vmatpush1.bf16.xpose.msra.mxu0 0
    %2554 = vmatprep.subr.bf16.mxu0 0
    %2555 = vmatpush1.bf16.xpose.msra.mxu0 0
    %2556 = vmatprep.subr.bf16.mxu0 0
    %2557 = vmatpush1.bf16.xpose.msra.mxu0 0
    %2558 = vmatprep.mubr.bf16.mxu0 0
    %2559 = vmatmul.mubr.bf16.gmra.mrb[0].mxu0 %v2518
    %v2560 = vpop.f32.mrb[0].mxu0
    %v2561 = vadd.f32 %v115, %v2560
    %v2562 = vpop.f32.mrb[0].mxu0
    %v2563 = vpop.f32.mrb[0].mxu0
    %v2564 = vadd.f32 %v116, %v2563
    %v2565 = vpop.f32.mrb[0].mxu0
    %2566 = vdwg.mxu0
    %v2567 = vsel %vm150, %v2561, -inf
    %2568 = vmax.xlane.f32.xlu0 %v2567
    %v2569 = vpop.xlane.xlu0 %2568
    %v2570 = vsel %vm150, %v2564, -inf
    %2571 = vmax.xlane.f32.xlu0 %v2570
    %v2572 = vpop.xlane.xlu0 %2571
    %v2573 = vsub.f32 %v2561, %v2569
    %v2574 = vsub.f32 %v2564, %v2572
    %v2575 = vmul.f32 %v2573, 1.442695
    %v2576 = vpow.pop %v2575
    %v2577 = vmul.f32 %v2574, 1.442695
    %v2578 = vpow.pop %v2577
    %v2579 = vsel %vm150, %v2576, 0.0
    %2580 = vadd.xlane.f32.xlu0 %v2579
    %v2581 = vpop.xlane.xlu0 %2580
    %v2582 = vsel %vm150, %v2578, 0.0
    %2583 = vadd.xlane.f32.xlu0 %v2582
    %v2584 = vpop.xlane.xlu0 %2583
    %v2585 = vrcp.pop %v2581
    %v2586 = vmul.f32 %v2576, %v2585
    %v2587 = vrcp.pop %v2584
    %v2588 = vmul.f32 %v2578, %v2587
    %v2589 = vpack.c.bf16 %v2588, %v2586
    %2590 = vrot.lane.b32.xlu0 %v1613, 100
    %v2591 = vpop.permute.xlu0 %2590
    %2592 = vrot.lane.b32.xlu0 %v1614, 100
    %v2593 = vpop.permute.xlu0 %2592
    %v2597 = vsel %vm150, %v2589, 0
    %2599 = vmatprep.subr.bf16.mxu0 0
    %2600 = vmatpush1.bf16.msra.mxu0 %v2591
    %2601 = vmatprep.subr.bf16.mxu0 0
    %2602 = vmatpush1.bf16.msra.mxu0 %v2593
    %2603 = vmatprep.subr.bf16.mxu0 0
    %2604 = vmatpush1.bf16.msra.mxu0 0
    %2605 = vmatprep.subr.bf16.mxu0 0
    %2606 = vmatpush1.bf16.msra.mxu0 0
    %2607 = vmatprep.subr.bf16.mxu0 0
    %2608 = vmatpush1.bf16.msra.mxu0 0
    %2609 = vmatprep.subr.bf16.mxu0 0
    %2610 = vmatpush1.bf16.msra.mxu0 0
    %2611 = vmatprep.subr.bf16.mxu0 0
    %2612 = vmatpush1.bf16.msra.mxu0 0
    %2613 = vmatprep.subr.bf16.mxu0 0
    %2614 = vmatpush1.bf16.msra.mxu0 0
    %2615 = vmatprep.subr.bf16.mxu0 0
    %2616 = vmatpush1.bf16.msra.mxu0 0
    %2617 = vmatprep.subr.bf16.mxu0 0
    %2618 = vmatpush1.bf16.msra.mxu0 0
    %2619 = vmatprep.subr.bf16.mxu0 0
    %2620 = vmatpush1.bf16.msra.mxu0 0
    %2621 = vmatprep.subr.bf16.mxu0 0
    %2622 = vmatpush1.bf16.msra.mxu0 0
    %2623 = vmatprep.subr.bf16.mxu0 0
    %2624 = vmatpush1.bf16.msra.mxu0 0
    %2625 = vmatprep.subr.bf16.mxu0 0
    %2626 = vmatpush1.bf16.msra.mxu0 0
    %2627 = vmatprep.subr.bf16.mxu0 0
    %2628 = vmatpush1.bf16.msra.mxu0 0
    %2629 = vmatprep.subr.bf16.mxu0 0
    %2630 = vmatpush1.bf16.msra.mxu0 0
    %2631 = vmatprep.mubr.bf16.mxu0 0
    %2632 = vmatmul.mubr.bf16.gmra.mrb[0].mxu0 %v2597
    %v2633 = vpop.f32.mrb[0].mxu0
    %v2634 = vadd.f32 0.0, %v2633
    %v2635 = vpop.f32.mrb[0].mxu0
    %v2636 = vpop.f32.mrb[0].mxu0
    %v2637 = vadd.f32 0.0, %v2636
    %v2638 = vpop.f32.mrb[0].mxu0
    %2639 = vdwg.mxu0
    %2642 = vrot.lane.b32.xlu0 %v1860, 4
    %v2643 = vpop.permute.xlu0 %2642
    %2644 = vrot.lane.b32.xlu0 %v1863, 4
    %v2645 = vpop.permute.xlu0 %2644
    %2650 = vrot.lane.b32.xlu0 %v1989, 8
    %v2651 = vpop.permute.xlu0 %2650
    %2652 = vrot.lane.b32.xlu0 %v1992, 8
    %v2653 = vpop.permute.xlu0 %2652
    %2658 = vrot.lane.b32.xlu0 %v2118, 12
    %v2659 = vpop.permute.xlu0 %2658
    %2660 = vrot.lane.b32.xlu0 %v2121, 12
    %v2661 = vpop.permute.xlu0 %2660
    %2666 = vrot.lane.b32.xlu0 %v2247, 16
    %v2667 = vpop.permute.xlu0 %2666
    %2668 = vrot.lane.b32.xlu0 %v2250, 16
    %v2669 = vpop.permute.xlu0 %2668
    %2674 = vrot.lane.b32.xlu0 %v2376, 20
    %v2675 = vpop.permute.xlu0 %2674
    %2676 = vrot.lane.b32.xlu0 %v2379, 20
    %v2677 = vpop.permute.xlu0 %2676
    %2682 = vrot.lane.b32.xlu0 %v2505, 24
    %v2683 = vpop.permute.xlu0 %2682
    %2684 = vrot.lane.b32.xlu0 %v2508, 24
    %v2685 = vpop.permute.xlu0 %2684
    %2690 = vrot.lane.b32.xlu0 %v2634, 28
    %v2691 = vpop.permute.xlu0 %2690
    %2692 = vrot.lane.b32.xlu0 %v2637, 28
    %v2693 = vpop.permute.xlu0 %2692
    %v2696 = vsel %vm254, %v1726, %v2643
    %v2697 = vsel %vm254, %v1729, %v2645
    %v2698 = vsel %vm1276, %v2696, %v2651
    %v2699 = vsel %vm1276, %v2697, %v2653
    %v2700 = vsel %vm1279, %v2698, %v2659
    %v2701 = vsel %vm1279, %v2699, %v2661
    %v2702 = vsel %vm302, %v2700, %v2667
    %v2703 = vsel %vm302, %v2701, %v2669
    %v2704 = vsel %vm1284, %v2702, %v2675
    %v2705 = vsel %vm1284, %v2703, %v2677
    %v2706 = vsel %vm1287, %v2704, %v2683
    %v2707 = vsel %vm1287, %v2705, %v2685
    %v2708 = vsel %vm1290, %v2706, %v2691
    %v2709 = vsel %vm1290, %v2707, %v2693
    %v2710 = vpack.c.bf16 %v2709, %v2708
    %v2712 = vlaneseq
    %v2713 = vshrl.u32 %v2712, 7
    %v2714 = vsub.s32 0, %v2713
    %v2715 = vrot.slane %v1414, %v2714
    %v2721 = vunpack.c.l.b16 %v1410
    %v2722 = vunpack.c.l.b16 %v1411
    %v2723 = vunpack.c.l.b16 %v1412
    %v2724 = vunpack.c.l.b16 %v1413
    %v2725 = vpack.c.b16 %v2722, %v2721
    %v2726 = vpack.c.b16 %v2724, %v2723
    %v2730 = vsel %vm150, %v2710, 0
    %2732 = vmatprep.subr.bf16.mxu0 0
    %2733 = vmatpush1.bf16.msra.mxu0 %v2725
    %2734 = vmatprep.subr.bf16.mxu0 0
    %2735 = vmatpush1.bf16.msra.mxu0 %v2726
    %2736 = vmatprep.subr.bf16.mxu0 0
    %2737 = vmatpush1.bf16.msra.mxu0 0
    %2738 = vmatprep.subr.bf16.mxu0 0
    %2739 = vmatpush1.bf16.msra.mxu0 0
    %2740 = vmatprep.subr.bf16.mxu0 0
    %2741 = vmatpush1.bf16.msra.mxu0 0
    %2742 = vmatprep.subr.bf16.mxu0 0
    %2743 = vmatpush1.bf16.msra.mxu0 0
    %2744 = vmatprep.subr.bf16.mxu0 0
    %2745 = vmatpush1.bf16.msra.mxu0 0
    %2746 = vmatprep.subr.bf16.mxu0 0
    %2747 = vmatpush1.bf16.msra.mxu0 0
    %2748 = vmatprep.subr.bf16.mxu0 0
    %2749 = vmatpush1.bf16.msra.mxu0 0
    %2750 = vmatprep.subr.bf16.mxu0 0
    %2751 = vmatpush1.bf16.msra.mxu0 0
    %2752 = vmatprep.subr.bf16.mxu0 0
    %2753 = vmatpush1.bf16.msra.mxu0 0
    %2754 = vmatprep.subr.bf16.mxu0 0
    %2755 = vmatpush1.bf16.msra.mxu0 0
    %2756 = vmatprep.subr.bf16.mxu0 0
    %2757 = vmatpush1.bf16.msra.mxu0 0
    %2758 = vmatprep.subr.bf16.mxu0 0
    %2759 = vmatpush1.bf16.msra.mxu0 0
    %2760 = vmatprep.subr.bf16.mxu0 0
    %2761 = vmatpush1.bf16.msra.mxu0 0
    %2762 = vmatprep.subr.bf16.mxu0 0
    %2763 = vmatpush1.bf16.msra.mxu0 0
    %2764 = vmatprep.mubr.bf16.mxu0 0
    %2765 = vmatmul.mubr.bf16.gmra.mrb[0].mxu0 %v2730
    %v2766 = vpop.f32.mrb[0].mxu0
    %v2767 = vadd.f32 %v2715, %v2766
    %v2768 = vpop.f32.mrb[0].mxu0
    %v2769 = vpop.f32.mrb[0].mxu0
    %v2770 = vadd.f32 %v2715, %v2769
    %v2771 = vpop.f32.mrb[0].mxu0
    %2772 = vdwg.mxu0
    %v2773 = vadd.f32 %v1401, %v2767
    %v2774 = vadd.f32 %v1402, %v2770
    %s2775 = scalar_lea.vmem %s18, 1
    %v2776 = vld [vmem:[%s2775] sm:$0x1]
    %s2777 = scalar_lea.vmem %s19, 1
    %v2778 = vld [vmem:[%s2777] sm:$0x1]
    %v2779 = vsel %vm150, %v2773, 0.0
    %2780 = vadd.xlane.f32.xlu0 %v2779
    %v2781 = vpop.xlane.xlu0 %2780
    %v2782 = vsel %vm150, %v2774, 0.0
    %2783 = vadd.xlane.f32.xlu0 %v2782
    %v2784 = vpop.xlane.xlu0 %2783
    %v2785 = vmul.f32 %v2781, %v1366
    %v2786 = vmul.f32 %v2784, %v1366
    %v2787 = vsub.f32 %v2773, %v2785
    %v2788 = vsub.f32 %v2774, %v2786
    %v2789 = vmul.f32 %v2787, %v2787
    %v2790 = vmul.f32 %v2788, %v2788
    %v2791 = vsel %vm150, %v2789, 0.0
    %2792 = vadd.xlane.f32.xlu0 %v2791
    %v2793 = vpop.xlane.xlu0 %2792
    %v2794 = vsel %vm150, %v2790, 0.0
    %2795 = vadd.xlane.f32.xlu0 %v2794
    %v2796 = vpop.xlane.xlu0 %2795
    %v2797 = vmul.f32 %v2793, %v1366
    %v2798 = vmul.f32 %v2796, %v1366
    %v2799 = vadd.f32 %v2797, 1e-05
    %v2800 = vadd.f32 %v2798, 1e-05
    %v2801 = vrsqrt.pop %v2799
    %v2802 = vrsqrt.pop %v2800
    %v2803 = vmul.f32 %v2787, %v2801
    %v2804 = vmul.f32 %v2788, %v2802
    %v2806 = vlaneseq
    %v2807 = vshrl.u32 %v2806, 7
    %v2808 = vsub.s32 0, %v2807
    %v2809 = vrot.slane %v2776, %v2808
    %v2811 = vmul.f32 %v2803, %v2809
    %v2812 = vmul.f32 %v2804, %v2809
    %v2814 = vlaneseq
    %v2815 = vshrl.u32 %v2814, 7
    %v2816 = vsub.s32 0, %v2815
    %v2817 = vrot.slane %v2778, %v2816
    %v2819 = vadd.f32 %v2811, %v2817
    %v2820 = vadd.f32 %v2812, %v2817
    %v2821 = vpack.c.bf16 %v2820, %v2819
    %v2822 = vld [vmem:[#allocation2] sm:$0xff]
    %v2823 = vld [vmem:[#allocation2 + $0x8] sm:$0xff]
    %v2824 = vld [vmem:[#allocation2 + $0x40] sm:$0xff]
    %v2825 = vld [vmem:[#allocation2 + $0x48] sm:$0xff]
    %v2826 = vld [vmem:[#allocation2 + $0x80] sm:$0xff]
    %v2827 = vld [vmem:[#allocation2 + $0x88] sm:$0xff]
    %v2828 = vld [vmem:[#allocation2 + $0xc0] sm:$0xff]
    %v2829 = vld [vmem:[#allocation2 + $0xc8] sm:$0xff]
    %v2830 = vld [vmem:[%s15] sm:$0xf]
    %v2831 = vld [vmem:[#allocation5] sm:$0xff]
    %v2832 = vld [vmem:[#allocation5 + $0x8] sm:$0xff]
    %v2833 = vld [vmem:[#allocation5 + $0x40] sm:$0xff]
    %v2834 = vld [vmem:[#allocation5 + $0x48] sm:$0xff]
    %v2835 = vld [vmem:[#allocation5 + $0x80] sm:$0xff]
    %v2836 = vld [vmem:[#allocation5 + $0x88] sm:$0xff]
    %v2837 = vld [vmem:[#allocation5 + $0xc0] sm:$0xff]
    %v2838 = vld [vmem:[#allocation5 + $0xc8] sm:$0xff]
    %v2840 = vlaneseq
    %v2841 = vshrl.u32 %v2840, 7
    %v2842 = vsub.s32 0, %v2841
    %v2843 = vrot.slane %v2830, %v2842
    %v2844 = vlaneseq
    %v2845 = vshrl.u32 %v2844, 7
    %v2846 = vsub.s32 1, %v2845
    %v2847 = vrot.slane %v2830, %v2846
    %v2848 = vlaneseq
    %v2849 = vshrl.u32 %v2848, 7
    %v2850 = vsub.s32 2, %v2849
    %v2851 = vrot.slane %v2830, %v2850
    %v2852 = vlaneseq
    %v2853 = vshrl.u32 %v2852, 7
    %v2854 = vsub.s32 3, %v2853
    %v2855 = vrot.slane %v2830, %v2854
    %v2868 = vunpack.c.l.b16 %v2822
    %v2869 = vunpack.c.h.b16 %v2822
    %v2870 = vunpack.c.l.b16 %v2823
    %v2871 = vunpack.c.h.b16 %v2823
    %v2872 = vunpack.c.l.b16 %v2824
    %v2873 = vunpack.c.h.b16 %v2824
    %v2874 = vunpack.c.l.b16 %v2825
    %v2875 = vunpack.c.h.b16 %v2825
    %v2876 = vunpack.c.l.b16 %v2826
    %v2877 = vunpack.c.h.b16 %v2826
    %v2878 = vunpack.c.l.b16 %v2827
    %v2879 = vunpack.c.h.b16 %v2827
    %v2880 = vunpack.c.l.b16 %v2828
    %v2881 = vunpack.c.h.b16 %v2828
    %v2882 = vunpack.c.l.b16 %v2829
    %v2883 = vunpack.c.h.b16 %v2829
    %v2884 = vpack.c.b16 %v2872, %v2868
    %v2885 = vpack.c.b16 %v2873, %v2869
    %v2886 = vpack.c.b16 %v2874, %v2870
    %v2887 = vpack.c.b16 %v2875, %v2871
    %v2888 = vpack.c.b16 %v2880, %v2876
    %v2889 = vpack.c.b16 %v2881, %v2877
    %v2890 = vpack.c.b16 %v2882, %v2878
    %v2891 = vpack.c.b16 %v2883, %v2879
    %v2901 = vsel %vm150, %v2821, 0
    %2903 = vmatprep.subr.bf16.mxu0 %v2885
    %2904 = vmatpush1.bf16.msra.mxu0 %v2884
    %2905 = vmatprep.subr.bf16.mxu0 %v2889
    %2906 = vmatpush1.bf16.msra.mxu0 %v2888
    %2907 = vmatprep.subr.bf16.mxu0 0
    %2908 = vmatpush1.bf16.msra.mxu0 0
    %2909 = vmatprep.subr.bf16.mxu0 0
    %2910 = vmatpush1.bf16.msra.mxu0 0
    %2911 = vmatprep.subr.bf16.mxu0 0
    %2912 = vmatpush1.bf16.msra.mxu0 0
    %2913 = vmatprep.subr.bf16.mxu0 0
    %2914 = vmatpush1.bf16.msra.mxu0 0
    %2915 = vmatprep.subr.bf16.mxu0 0
    %2916 = vmatpush1.bf16.msra.mxu0 0
    %2917 = vmatprep.subr.bf16.mxu0 0
    %2918 = vmatpush1.bf16.msra.mxu0 0
    %2919 = vmatprep.subr.bf16.mxu0 0
    %2920 = vmatpush1.bf16.msra.mxu0 0
    %2921 = vmatprep.subr.bf16.mxu0 0
    %2922 = vmatpush1.bf16.msra.mxu0 0
    %2923 = vmatprep.subr.bf16.mxu0 0
    %2924 = vmatpush1.bf16.msra.mxu0 0
    %2925 = vmatprep.subr.bf16.mxu0 0
    %2926 = vmatpush1.bf16.msra.mxu0 0
    %2927 = vmatprep.subr.bf16.mxu0 0
    %2928 = vmatpush1.bf16.msra.mxu0 0
    %2929 = vmatprep.subr.bf16.mxu0 0
    %2930 = vmatpush1.bf16.msra.mxu0 0
    %2931 = vmatprep.subr.bf16.mxu0 0
    %2932 = vmatpush1.bf16.msra.mxu0 0
    %2933 = vmatprep.subr.bf16.mxu0 0
    %2934 = vmatpush1.bf16.msra.mxu0 0
    %2935 = vmatprep.mubr.bf16.mxu0 0
    %2936 = vmatmul.mubr.bf16.gmra.mrb[0].mxu0 %v2901
    %v2937 = vpop.f32.mrb[0].mxu0
    %v2938 = vadd.f32 %v2843, %v2937
    %v2939 = vpop.f32.mrb[0].mxu0
    %v2940 = vadd.f32 %v2847, %v2939
    %v2941 = vpop.f32.mrb[0].mxu0
    %v2942 = vadd.f32 %v2843, %v2941
    %v2943 = vpop.f32.mrb[0].mxu0
    %v2944 = vadd.f32 %v2847, %v2943
    %2945 = vdwg.mxu0
    %2946 = vmatprep.subr.bf16.mxu0 %v2887
    %2947 = vmatpush1.bf16.msra.mxu0 %v2886
    %2948 = vmatprep.subr.bf16.mxu0 %v2891
    %2949 = vmatpush1.bf16.msra.mxu0 %v2890
    %2950 = vmatprep.subr.bf16.mxu0 0
    %2951 = vmatpush1.bf16.msra.mxu0 0
    %2952 = vmatprep.subr.bf16.mxu0 0
    %2953 = vmatpush1.bf16.msra.mxu0 0
    %2954 = vmatprep.subr.bf16.mxu0 0
    %2955 = vmatpush1.bf16.msra.mxu0 0
    %2956 = vmatprep.subr.bf16.mxu0 0
    %2957 = vmatpush1.bf16.msra.mxu0 0
    %2958 = vmatprep.subr.bf16.mxu0 0
    %2959 = vmatpush1.bf16.msra.mxu0 0
    %2960 = vmatprep.subr.bf16.mxu0 0
    %2961 = vmatpush1.bf16.msra.mxu0 0
    %2962 = vmatprep.subr.bf16.mxu0 0
    %2963 = vmatpush1.bf16.msra.mxu0 0
    %2964 = vmatprep.subr.bf16.mxu0 0
    %2965 = vmatpush1.bf16.msra.mxu0 0
    %2966 = vmatprep.subr.bf16.mxu0 0
    %2967 = vmatpush1.bf16.msra.mxu0 0
    %2968 = vmatprep.subr.bf16.mxu0 0
    %2969 = vmatpush1.bf16.msra.mxu0 0
    %2970 = vmatprep.subr.bf16.mxu0 0
    %2971 = vmatpush1.bf16.msra.mxu0 0
    %2972 = vmatprep.subr.bf16.mxu0 0
    %2973 = vmatpush1.bf16.msra.mxu0 0
    %2974 = vmatprep.subr.bf16.mxu0 0
    %2975 = vmatpush1.bf16.msra.mxu0 0
    %2976 = vmatprep.subr.bf16.mxu0 0
    %2977 = vmatpush1.bf16.msra.mxu0 0
    %2978 = vmatprep.mubr.bf16.mxu0 0
    %2979 = vmatmul.mubr.bf16.gmra.mrb[0].mxu0 %v2901
    %v2980 = vpop.f32.mrb[0].mxu0
    %v2981 = vadd.f32 %v2851, %v2980
    %v2982 = vpop.f32.mrb[0].mxu0
    %v2983 = vadd.f32 %v2855, %v2982
    %v2984 = vpop.f32.mrb[0].mxu0
    %v2985 = vadd.f32 %v2851, %v2984
    %v2986 = vpop.f32.mrb[0].mxu0
    %v2987 = vadd.f32 %v2855, %v2986
    %2988 = vdwg.mxu0
    %v2989 = vmax.f32 %v2938, 0.0
    %v2990 = vmax.f32 %v2940, 0.0
    %v2991 = vmax.f32 %v2981, 0.0
    %v2992 = vmax.f32 %v2983, 0.0
    %v2993 = vmax.f32 %v2942, 0.0
    %v2994 = vmax.f32 %v2944, 0.0
    %v2995 = vmax.f32 %v2985, 0.0
    %v2996 = vmax.f32 %v2987, 0.0
    %v2997 = vpack.c.bf16 %v2993, %v2989
    %v2998 = vpack.c.bf16 %v2994, %v2990
    %v2999 = vpack.c.bf16 %v2995, %v2991
    %v3000 = vpack.c.bf16 %v2996, %v2992
    %v3001 = vld [vmem:[#allocation2 + $0x10] sm:$0xff]
    %v3002 = vld [vmem:[#allocation2 + $0x18] sm:$0xff]
    %v3003 = vld [vmem:[#allocation2 + $0x50] sm:$0xff]
    %v3004 = vld [vmem:[#allocation2 + $0x58] sm:$0xff]
    %v3005 = vld [vmem:[#allocation2 + $0x90] sm:$0xff]
    %v3006 = vld [vmem:[#allocation2 + $0x98] sm:$0xff]
    %v3007 = vld [vmem:[#allocation2 + $0xd0] sm:$0xff]
    %v3008 = vld [vmem:[#allocation2 + $0xd8] sm:$0xff]
    %v3009 = vld [vmem:[%s15 + $0x4] sm:$0xf]
    %v3010 = vld [vmem:[#allocation5 + $0x10] sm:$0xff]
    %v3011 = vld [vmem:[#allocation5 + $0x18] sm:$0xff]
    %v3012 = vld [vmem:[#allocation5 + $0x50] sm:$0xff]
    %v3013 = vld [vmem:[#allocation5 + $0x58] sm:$0xff]
    %v3014 = vld [vmem:[#allocation5 + $0x90] sm:$0xff]
    %v3015 = vld [vmem:[#allocation5 + $0x98] sm:$0xff]
    %v3016 = vld [vmem:[#allocation5 + $0xd0] sm:$0xff]
    %v3017 = vld [vmem:[#allocation5 + $0xd8] sm:$0xff]
    %v3019 = vlaneseq
    %v3020 = vshrl.u32 %v3019, 7
    %v3021 = vsub.s32 0, %v3020
    %v3022 = vrot.slane %v3009, %v3021
    %v3023 = vlaneseq
    %v3024 = vshrl.u32 %v3023, 7
    %v3025 = vsub.s32 1, %v3024
    %v3026 = vrot.slane %v3009, %v3025
    %v3027 = vlaneseq
    %v3028 = vshrl.u32 %v3027, 7
    %v3029 = vsub.s32 2, %v3028
    %v3030 = vrot.slane %v3009, %v3029
    %v3031 = vlaneseq
    %v3032 = vshrl.u32 %v3031, 7
    %v3033 = vsub.s32 3, %v3032
    %v3034 = vrot.slane %v3009, %v3033
    %v3047 = vunpack.c.l.b16 %v3001
    %v3048 = vunpack.c.h.b16 %v3001
    %v3049 = vunpack.c.l.b16 %v3002
    %v3050 = vunpack.c.h.b16 %v3002
    %v3051 = vunpack.c.l.b16 %v3003
    %v3052 = vunpack.c.h.b16 %v3003
    %v3053 = vunpack.c.l.b16 %v3004
    %v3054 = vunpack.c.h.b16 %v3004
    %v3055 = vunpack.c.l.b16 %v3005
    %v3056 = vunpack.c.h.b16 %v3005
    %v3057 = vunpack.c.l.b16 %v3006
    %v3058 = vunpack.c.h.b16 %v3006
    %v3059 = vunpack.c.l.b16 %v3007
    %v3060 = vunpack.c.h.b16 %v3007
    %v3061 = vunpack.c.l.b16 %v3008
    %v3062 = vunpack.c.h.b16 %v3008
    %v3063 = vpack.c.b16 %v3051, %v3047
    %v3064 = vpack.c.b16 %v3052, %v3048
    %v3065 = vpack.c.b16 %v3053, %v3049
    %v3066 = vpack.c.b16 %v3054, %v3050
    %v3067 = vpack.c.b16 %v3059, %v3055
    %v3068 = vpack.c.b16 %v3060, %v3056
    %v3069 = vpack.c.b16 %v3061, %v3057
    %v3070 = vpack.c.b16 %v3062, %v3058
    %3079 = vmatprep.subr.bf16.mxu0 %v3064
    %3080 = vmatpush1.bf16.msra.mxu0 %v3063
    %3081 = vmatprep.subr.bf16.mxu0 %v3068
    %3082 = vmatpush1.bf16.msra.mxu0 %v3067
    %3083 = vmatprep.subr.bf16.mxu0 0
    %3084 = vmatpush1.bf16.msra.mxu0 0
    %3085 = vmatprep.subr.bf16.mxu0 0
    %3086 = vmatpush1.bf16.msra.mxu0 0
    %3087 = vmatprep.subr.bf16.mxu0 0
    %3088 = vmatpush1.bf16.msra.mxu0 0
    %3089 = vmatprep.subr.bf16.mxu0 0
    %3090 = vmatpush1.bf16.msra.mxu0 0
    %3091 = vmatprep.subr.bf16.mxu0 0
    %3092 = vmatpush1.bf16.msra.mxu0 0
    %3093 = vmatprep.subr.bf16.mxu0 0
    %3094 = vmatpush1.bf16.msra.mxu0 0
    %3095 = vmatprep.subr.bf16.mxu0 0
    %3096 = vmatpush1.bf16.msra.mxu0 0
    %3097 = vmatprep.subr.bf16.mxu0 0
    %3098 = vmatpush1.bf16.msra.mxu0 0
    %3099 = vmatprep.subr.bf16.mxu0 0
    %3100 = vmatpush1.bf16.msra.mxu0 0
    %3101 = vmatprep.subr.bf16.mxu0 0
    %3102 = vmatpush1.bf16.msra.mxu0 0
    %3103 = vmatprep.subr.bf16.mxu0 0
    %3104 = vmatpush1.bf16.msra.mxu0 0
    %3105 = vmatprep.subr.bf16.mxu0 0
    %3106 = vmatpush1.bf16.msra.mxu0 0
    %3107 = vmatprep.subr.bf16.mxu0 0
    %3108 = vmatpush1.bf16.msra.mxu0 0
    %3109 = vmatprep.subr.bf16.mxu0 0
    %3110 = vmatpush1.bf16.msra.mxu0 0
    %3111 = vmatprep.mubr.bf16.mxu0 0
    %3112 = vmatmul.mubr.bf16.gmra.mrb[0].mxu0 %v2901
    %v3113 = vpop.f32.mrb[0].mxu0
    %v3114 = vadd.f32 %v3022, %v3113
    %v3115 = vpop.f32.mrb[0].mxu0
    %v3116 = vadd.f32 %v3026, %v3115
    %v3117 = vpop.f32.mrb[0].mxu0
    %v3118 = vadd.f32 %v3022, %v3117
    %v3119 = vpop.f32.mrb[0].mxu0
    %v3120 = vadd.f32 %v3026, %v3119
    %3121 = vdwg.mxu0
    %3122 = vmatprep.subr.bf16.mxu0 %v3066
    %3123 = vmatpush1.bf16.msra.mxu0 %v3065
    %3124 = vmatprep.subr.bf16.mxu0 %v3070
    %3125 = vmatpush1.bf16.msra.mxu0 %v3069
    %3126 = vmatprep.subr.bf16.mxu0 0
    %3127 = vmatpush1.bf16.msra.mxu0 0
    %3128 = vmatprep.subr.bf16.mxu0 0
    %3129 = vmatpush1.bf16.msra.mxu0 0
    %3130 = vmatprep.subr.bf16.mxu0 0
    %3131 = vmatpush1.bf16.msra.mxu0 0
    %3132 = vmatprep.subr.bf16.mxu0 0
    %3133 = vmatpush1.bf16.msra.mxu0 0
    %3134 = vmatprep.subr.bf16.mxu0 0
    %3135 = vmatpush1.bf16.msra.mxu0 0
    %3136 = vmatprep.subr.bf16.mxu0 0
    %3137 = vmatpush1.bf16.msra.mxu0 0
    %3138 = vmatprep.subr.bf16.mxu0 0
    %3139 = vmatpush1.bf16.msra.mxu0 0
    %3140 = vmatprep.subr.bf16.mxu0 0
    %3141 = vmatpush1.bf16.msra.mxu0 0
    %3142 = vmatprep.subr.bf16.mxu0 0
    %3143 = vmatpush1.bf16.msra.mxu0 0
    %3144 = vmatprep.subr.bf16.mxu0 0
    %3145 = vmatpush1.bf16.msra.mxu0 0
    %3146 = vmatprep.subr.bf16.mxu0 0
    %3147 = vmatpush1.bf16.msra.mxu0 0
    %3148 = vmatprep.subr.bf16.mxu0 0
    %3149 = vmatpush1.bf16.msra.mxu0 0
    %3150 = vmatprep.subr.bf16.mxu0 0
    %3151 = vmatpush1.bf16.msra.mxu0 0
    %3152 = vmatprep.subr.bf16.mxu0 0
    %3153 = vmatpush1.bf16.msra.mxu0 0
    %3154 = vmatprep.mubr.bf16.mxu0 0
    %3155 = vmatmul.mubr.bf16.gmra.mrb[0].mxu0 %v2901
    %v3156 = vpop.f32.mrb[0].mxu0
    %v3157 = vadd.f32 %v3030, %v3156
    %v3158 = vpop.f32.mrb[0].mxu0
    %v3159 = vadd.f32 %v3034, %v3158
    %v3160 = vpop.f32.mrb[0].mxu0
    %v3161 = vadd.f32 %v3030, %v3160
    %v3162 = vpop.f32.mrb[0].mxu0
    %v3163 = vadd.f32 %v3034, %v3162
    %3164 = vdwg.mxu0
    %v3165 = vmax.f32 %v3114, 0.0
    %v3166 = vmax.f32 %v3116, 0.0
    %v3167 = vmax.f32 %v3157, 0.0
    %v3168 = vmax.f32 %v3159, 0.0
    %v3169 = vmax.f32 %v3118, 0.0
    %v3170 = vmax.f32 %v3120, 0.0
    %v3171 = vmax.f32 %v3161, 0.0
    %v3172 = vmax.f32 %v3163, 0.0
    %v3173 = vpack.c.bf16 %v3169, %v3165
    %v3174 = vpack.c.bf16 %v3170, %v3166
    %v3175 = vpack.c.bf16 %v3171, %v3167
    %v3176 = vpack.c.bf16 %v3172, %v3168
    %v3185 = vunpack.c.l.b16 %v3010
    %v3186 = vunpack.c.h.b16 %v3010
    %v3187 = vunpack.c.l.b16 %v3011
    %v3188 = vunpack.c.h.b16 %v3011
    %v3189 = vunpack.c.l.b16 %v3012
    %v3190 = vunpack.c.h.b16 %v3012
    %v3191 = vunpack.c.l.b16 %v3013
    %v3192 = vunpack.c.h.b16 %v3013
    %v3193 = vunpack.c.l.b16 %v3014
    %v3194 = vunpack.c.h.b16 %v3014
    %v3195 = vunpack.c.l.b16 %v3015
    %v3196 = vunpack.c.h.b16 %v3015
    %v3197 = vunpack.c.l.b16 %v3016
    %v3198 = vunpack.c.h.b16 %v3016
    %v3199 = vunpack.c.l.b16 %v3017
    %v3200 = vunpack.c.h.b16 %v3017
    %v3201 = vpack.c.b16 %v3189, %v3185
    %v3202 = vpack.c.b16 %v3190, %v3186
    %v3203 = vpack.c.b16 %v3191, %v3187
    %v3204 = vpack.c.b16 %v3192, %v3188
    %v3205 = vpack.c.b16 %v3197, %v3193
    %v3206 = vpack.c.b16 %v3198, %v3194
    %v3207 = vpack.c.b16 %v3199, %v3195
    %v3208 = vpack.c.b16 %v3200, %v3196
    %3217 = vmatprep.subr.bf16.mxu0 %v3202
    %3218 = vmatpush1.bf16.xpose.msra.mxu0 %v3201
    %3219 = vmatprep.subr.bf16.mxu0 %v3206
    %3220 = vmatpush1.bf16.xpose.msra.mxu0 %v3205
    %3221 = vmatprep.subr.bf16.mxu0 0
    %3222 = vmatpush1.bf16.xpose.msra.mxu0 0
    %3223 = vmatprep.subr.bf16.mxu0 0
    %3224 = vmatpush1.bf16.xpose.msra.mxu0 0
    %3225 = vmatprep.subr.bf16.mxu0 0
    %3226 = vmatpush1.bf16.xpose.msra.mxu0 0
    %3227 = vmatprep.subr.bf16.mxu0 0
    %3228 = vmatpush1.bf16.xpose.msra.mxu0 0
    %3229 = vmatprep.subr.bf16.mxu0 0
    %3230 = vmatpush1.bf16.xpose.msra.mxu0 0
    %3231 = vmatprep.subr.bf16.mxu0 0
    %3232 = vmatpush1.bf16.xpose.msra.mxu0 0
    %3233 = vmatprep.subr.bf16.mxu0 0
    %3234 = vmatpush1.bf16.xpose.msra.mxu0 0
    %3235 = vmatprep.subr.bf16.mxu0 0
    %3236 = vmatpush1.bf16.xpose.msra.mxu0 0
    %3237 = vmatprep.subr.bf16.mxu0 0
    %3238 = vmatpush1.bf16.xpose.msra.mxu0 0
    %3239 = vmatprep.subr.bf16.mxu0 0
    %3240 = vmatpush1.bf16.xpose.msra.mxu0 0
    %3241 = vmatprep.subr.bf16.mxu0 0
    %3242 = vmatpush1.bf16.xpose.msra.mxu0 0
    %3243 = vmatprep.subr.bf16.mxu0 0
    %3244 = vmatpush1.bf16.xpose.msra.mxu0 0
    %3245 = vmatprep.subr.bf16.mxu0 0
    %3246 = vmatpush1.bf16.xpose.msra.mxu0 0
    %3247 = vmatprep.subr.bf16.mxu0 0
    %3248 = vmatpush1.bf16.xpose.msra.mxu0 0
    %3249 = vmatprep.mubr.bf16.mxu0 %v3174
    %3250 = vmatmul.mubr.bf16.gmra.mrb[0].mxu0 %v3173
    %v3251 = vpop.f32.mrb[0].mxu0
    %v3252 = vadd.f32 0.0, %v3251
    %v3253 = vpop.f32.mrb[0].mxu0
    %v3254 = vpop.f32.mrb[0].mxu0
    %v3255 = vadd.f32 0.0, %v3254
    %v3256 = vpop.f32.mrb[0].mxu0
    %3257 = vdwg.mxu0
    %3258 = vmatprep.subr.bf16.mxu0 %v3204
    %3259 = vmatpush1.bf16.xpose.msra.mxu0 %v3203
    %3260 = vmatprep.subr.bf16.mxu0 %v3208
    %3261 = vmatpush1.bf16.xpose.msra.mxu0 %v3207
    %3262 = vmatprep.subr.bf16.mxu0 0
    %3263 = vmatpush1.bf16.xpose.msra.mxu0 0
    %3264 = vmatprep.subr.bf16.mxu0 0
    %3265 = vmatpush1.bf16.xpose.msra.mxu0 0
    %3266 = vmatprep.subr.bf16.mxu0 0
    %3267 = vmatpush1.bf16.xpose.msra.mxu0 0
    %3268 = vmatprep.subr.bf16.mxu0 0
    %3269 = vmatpush1.bf16.xpose.msra.mxu0 0
    %3270 = vmatprep.subr.bf16.mxu0 0
    %3271 = vmatpush1.bf16.xpose.msra.mxu0 0
    %3272 = vmatprep.subr.bf16.mxu0 0
    %3273 = vmatpush1.bf16.xpose.msra.mxu0 0
    %3274 = vmatprep.subr.bf16.mxu0 0
    %3275 = vmatpush1.bf16.xpose.msra.mxu0 0
    %3276 = vmatprep.subr.bf16.mxu0 0
    %3277 = vmatpush1.bf16.xpose.msra.mxu0 0
    %3278 = vmatprep.subr.bf16.mxu0 0
    %3279 = vmatpush1.bf16.xpose.msra.mxu0 0
    %3280 = vmatprep.subr.bf16.mxu0 0
    %3281 = vmatpush1.bf16.xpose.msra.mxu0 0
    %3282 = vmatprep.subr.bf16.mxu0 0
    %3283 = vmatpush1.bf16.xpose.msra.mxu0 0
    %3284 = vmatprep.subr.bf16.mxu0 0
    %3285 = vmatpush1.bf16.xpose.msra.mxu0 0
    %3286 = vmatprep.subr.bf16.mxu0 0
    %3287 = vmatpush1.bf16.xpose.msra.mxu0 0
    %3288 = vmatprep.subr.bf16.mxu0 0
    %3289 = vmatpush1.bf16.xpose.msra.mxu0 0
    %3290 = vmatprep.mubr.bf16.mxu0 %v3176
    %3291 = vmatmul.mubr.bf16.gmra.mrb[0].mxu0 %v3175
    %v3292 = vpop.f32.mrb[0].mxu0
    %v3293 = vadd.f32 %v3252, %v3292
    %v3294 = vpop.f32.mrb[0].mxu0
    %v3295 = vpop.f32.mrb[0].mxu0
    %v3296 = vadd.f32 %v3255, %v3295
    %v3297 = vpop.f32.mrb[0].mxu0
    %3298 = vdwg.mxu0
    %v3307 = vunpack.c.l.b16 %v2831
    %v3308 = vunpack.c.h.b16 %v2831
    %v3309 = vunpack.c.l.b16 %v2832
    %v3310 = vunpack.c.h.b16 %v2832
    %v3311 = vunpack.c.l.b16 %v2833
    %v3312 = vunpack.c.h.b16 %v2833
    %v3313 = vunpack.c.l.b16 %v2834
    %v3314 = vunpack.c.h.b16 %v2834
    %v3315 = vunpack.c.l.b16 %v2835
    %v3316 = vunpack.c.h.b16 %v2835
    %v3317 = vunpack.c.l.b16 %v2836
    %v3318 = vunpack.c.h.b16 %v2836
    %v3319 = vunpack.c.l.b16 %v2837
    %v3320 = vunpack.c.h.b16 %v2837
    %v3321 = vunpack.c.l.b16 %v2838
    %v3322 = vunpack.c.h.b16 %v2838
    %v3323 = vpack.c.b16 %v3311, %v3307
    %v3324 = vpack.c.b16 %v3312, %v3308
    %v3325 = vpack.c.b16 %v3313, %v3309
    %v3326 = vpack.c.b16 %v3314, %v3310
    %v3327 = vpack.c.b16 %v3319, %v3315
    %v3328 = vpack.c.b16 %v3320, %v3316
    %v3329 = vpack.c.b16 %v3321, %v3317
    %v3330 = vpack.c.b16 %v3322, %v3318
    %3339 = vmatprep.subr.bf16.mxu0 %v3324
    %3340 = vmatpush1.bf16.xpose.msra.mxu0 %v3323
    %3341 = vmatprep.subr.bf16.mxu0 %v3328
    %3342 = vmatpush1.bf16.xpose.msra.mxu0 %v3327
    %3343 = vmatprep.subr.bf16.mxu0 0
    %3344 = vmatpush1.bf16.xpose.msra.mxu0 0
    %3345 = vmatprep.subr.bf16.mxu0 0
    %3346 = vmatpush1.bf16.xpose.msra.mxu0 0
    %3347 = vmatprep.subr.bf16.mxu0 0
    %3348 = vmatpush1.bf16.xpose.msra.mxu0 0
    %3349 = vmatprep.subr.bf16.mxu0 0
    %3350 = vmatpush1.bf16.xpose.msra.mxu0 0
    %3351 = vmatprep.subr.bf16.mxu0 0
    %3352 = vmatpush1.bf16.xpose.msra.mxu0 0
    %3353 = vmatprep.subr.bf16.mxu0 0
    %3354 = vmatpush1.bf16.xpose.msra.mxu0 0
    %3355 = vmatprep.subr.bf16.mxu0 0
    %3356 = vmatpush1.bf16.xpose.msra.mxu0 0
    %3357 = vmatprep.subr.bf16.mxu0 0
    %3358 = vmatpush1.bf16.xpose.msra.mxu0 0
    %3359 = vmatprep.subr.bf16.mxu0 0
    %3360 = vmatpush1.bf16.xpose.msra.mxu0 0
    %3361 = vmatprep.subr.bf16.mxu0 0
    %3362 = vmatpush1.bf16.xpose.msra.mxu0 0
    %3363 = vmatprep.subr.bf16.mxu0 0
    %3364 = vmatpush1.bf16.xpose.msra.mxu0 0
    %3365 = vmatprep.subr.bf16.mxu0 0
    %3366 = vmatpush1.bf16.xpose.msra.mxu0 0
    %3367 = vmatprep.subr.bf16.mxu0 0
    %3368 = vmatpush1.bf16.xpose.msra.mxu0 0
    %3369 = vmatprep.subr.bf16.mxu0 0
    %3370 = vmatpush1.bf16.xpose.msra.mxu0 0
    %3371 = vmatprep.mubr.bf16.mxu0 %v2998
    %3372 = vmatmul.mubr.bf16.gmra.mrb[0].mxu0 %v2997
    %v3373 = vpop.f32.mrb[0].mxu0
    %v3374 = vadd.f32 %v3293, %v3373
    %v3375 = vpop.f32.mrb[0].mxu0
    %v3376 = vpop.f32.mrb[0].mxu0
    %v3377 = vadd.f32 %v3296, %v3376
    %v3378 = vpop.f32.mrb[0].mxu0
    %3379 = vdwg.mxu0
    %3380 = vmatprep.subr.bf16.mxu0 %v3326
    %3381 = vmatpush1.bf16.xpose.msra.mxu0 %v3325
    %3382 = vmatprep.subr.bf16.mxu0 %v3330
    %3383 = vmatpush1.bf16.xpose.msra.mxu0 %v3329
    %3384 = vmatprep.subr.bf16.mxu0 0
    %3385 = vmatpush1.bf16.xpose.msra.mxu0 0
    %3386 = vmatprep.subr.bf16.mxu0 0
    %3387 = vmatpush1.bf16.xpose.msra.mxu0 0
    %3388 = vmatprep.subr.bf16.mxu0 0
    %3389 = vmatpush1.bf16.xpose.msra.mxu0 0
    %3390 = vmatprep.subr.bf16.mxu0 0
    %3391 = vmatpush1.bf16.xpose.msra.mxu0 0
    %3392 = vmatprep.subr.bf16.mxu0 0
    %3393 = vmatpush1.bf16.xpose.msra.mxu0 0
    %3394 = vmatprep.subr.bf16.mxu0 0
    %3395 = vmatpush1.bf16.xpose.msra.mxu0 0
    %3396 = vmatprep.subr.bf16.mxu0 0
    %3397 = vmatpush1.bf16.xpose.msra.mxu0 0
    %3398 = vmatprep.subr.bf16.mxu0 0
    %3399 = vmatpush1.bf16.xpose.msra.mxu0 0
    %3400 = vmatprep.subr.bf16.mxu0 0
    %3401 = vmatpush1.bf16.xpose.msra.mxu0 0
    %3402 = vmatprep.subr.bf16.mxu0 0
    %3403 = vmatpush1.bf16.xpose.msra.mxu0 0
    %3404 = vmatprep.subr.bf16.mxu0 0
    %3405 = vmatpush1.bf16.xpose.msra.mxu0 0
    %3406 = vmatprep.subr.bf16.mxu0 0
    %3407 = vmatpush1.bf16.xpose.msra.mxu0 0
    %3408 = vmatprep.subr.bf16.mxu0 0
    %3409 = vmatpush1.bf16.xpose.msra.mxu0 0
    %3410 = vmatprep.subr.bf16.mxu0 0
    %3411 = vmatpush1.bf16.xpose.msra.mxu0 0
    %3412 = vmatprep.mubr.bf16.mxu0 %v3000
    %3413 = vmatmul.mubr.bf16.gmra.mrb[0].mxu0 %v2999
    %v3414 = vpop.f32.mrb[0].mxu0
    %v3415 = vadd.f32 %v3374, %v3414
    %v3416 = vpop.f32.mrb[0].mxu0
    %v3417 = vpop.f32.mrb[0].mxu0
    %v3418 = vadd.f32 %v3377, %v3417
    %v3419 = vpop.f32.mrb[0].mxu0
    %3420 = vdwg.mxu0
    %v3421 = vld [vmem:[#allocation2 + $0x20] sm:$0xff]
    %v3422 = vld [vmem:[#allocation2 + $0x28] sm:$0xff]
    %v3423 = vld [vmem:[#allocation2 + $0x60] sm:$0xff]
    %v3424 = vld [vmem:[#allocation2 + $0x68] sm:$0xff]
    %v3425 = vld [vmem:[#allocation2 + $0xa0] sm:$0xff]
    %v3426 = vld [vmem:[#allocation2 + $0xa8] sm:$0xff]
    %v3427 = vld [vmem:[#allocation2 + $0xe0] sm:$0xff]
    %v3428 = vld [vmem:[#allocation2 + $0xe8] sm:$0xff]
    %v3429 = vld [vmem:[%s15 + $0x8] sm:$0xf]
    %v3430 = vld [vmem:[#allocation5 + $0x20] sm:$0xff]
    %v3431 = vld [vmem:[#allocation5 + $0x28] sm:$0xff]
    %v3432 = vld [vmem:[#allocation5 + $0x60] sm:$0xff]
    %v3433 = vld [vmem:[#allocation5 + $0x68] sm:$0xff]
    %v3434 = vld [vmem:[#allocation5 + $0xa0] sm:$0xff]
    %v3435 = vld [vmem:[#allocation5 + $0xa8] sm:$0xff]
    %v3436 = vld [vmem:[#allocation5 + $0xe0] sm:$0xff]
    %v3437 = vld [vmem:[#allocation5 + $0xe8] sm:$0xff]
    %v3439 = vlaneseq
    %v3440 = vshrl.u32 %v3439, 7
    %v3441 = vsub.s32 0, %v3440
    %v3442 = vrot.slane %v3429, %v3441
    %v3443 = vlaneseq
    %v3444 = vshrl.u32 %v3443, 7
    %v3445 = vsub.s32 1, %v3444
    %v3446 = vrot.slane %v3429, %v3445
    %v3447 = vlaneseq
    %v3448 = vshrl.u32 %v3447, 7
    %v3449 = vsub.s32 2, %v3448
    %v3450 = vrot.slane %v3429, %v3449
    %v3451 = vlaneseq
    %v3452 = vshrl.u32 %v3451, 7
    %v3453 = vsub.s32 3, %v3452
    %v3454 = vrot.slane %v3429, %v3453
    %v3467 = vunpack.c.l.b16 %v3421
    %v3468 = vunpack.c.h.b16 %v3421
    %v3469 = vunpack.c.l.b16 %v3422
    %v3470 = vunpack.c.h.b16 %v3422
    %v3471 = vunpack.c.l.b16 %v3423
    %v3472 = vunpack.c.h.b16 %v3423
    %v3473 = vunpack.c.l.b16 %v3424
    %v3474 = vunpack.c.h.b16 %v3424
    %v3475 = vunpack.c.l.b16 %v3425
    %v3476 = vunpack.c.h.b16 %v3425
    %v3477 = vunpack.c.l.b16 %v3426
    %v3478 = vunpack.c.h.b16 %v3426
    %v3479 = vunpack.c.l.b16 %v3427
    %v3480 = vunpack.c.h.b16 %v3427
    %v3481 = vunpack.c.l.b16 %v3428
    %v3482 = vunpack.c.h.b16 %v3428
    %v3483 = vpack.c.b16 %v3471, %v3467
    %v3484 = vpack.c.b16 %v3472, %v3468
    %v3485 = vpack.c.b16 %v3473, %v3469
    %v3486 = vpack.c.b16 %v3474, %v3470
    %v3487 = vpack.c.b16 %v3479, %v3475
    %v3488 = vpack.c.b16 %v3480, %v3476
    %v3489 = vpack.c.b16 %v3481, %v3477
    %v3490 = vpack.c.b16 %v3482, %v3478
    %3499 = vmatprep.subr.bf16.mxu0 %v3484
    %3500 = vmatpush1.bf16.msra.mxu0 %v3483
    %3501 = vmatprep.subr.bf16.mxu0 %v3488
    %3502 = vmatpush1.bf16.msra.mxu0 %v3487
    %3503 = vmatprep.subr.bf16.mxu0 0
    %3504 = vmatpush1.bf16.msra.mxu0 0
    %3505 = vmatprep.subr.bf16.mxu0 0
    %3506 = vmatpush1.bf16.msra.mxu0 0
    %3507 = vmatprep.subr.bf16.mxu0 0
    %3508 = vmatpush1.bf16.msra.mxu0 0
    %3509 = vmatprep.subr.bf16.mxu0 0
    %3510 = vmatpush1.bf16.msra.mxu0 0
    %3511 = vmatprep.subr.bf16.mxu0 0
    %3512 = vmatpush1.bf16.msra.mxu0 0
    %3513 = vmatprep.subr.bf16.mxu0 0
    %3514 = vmatpush1.bf16.msra.mxu0 0
    %3515 = vmatprep.subr.bf16.mxu0 0
    %3516 = vmatpush1.bf16.msra.mxu0 0
    %3517 = vmatprep.subr.bf16.mxu0 0
    %3518 = vmatpush1.bf16.msra.mxu0 0
    %3519 = vmatprep.subr.bf16.mxu0 0
    %3520 = vmatpush1.bf16.msra.mxu0 0
    %3521 = vmatprep.subr.bf16.mxu0 0
    %3522 = vmatpush1.bf16.msra.mxu0 0
    %3523 = vmatprep.subr.bf16.mxu0 0
    %3524 = vmatpush1.bf16.msra.mxu0 0
    %3525 = vmatprep.subr.bf16.mxu0 0
    %3526 = vmatpush1.bf16.msra.mxu0 0
    %3527 = vmatprep.subr.bf16.mxu0 0
    %3528 = vmatpush1.bf16.msra.mxu0 0
    %3529 = vmatprep.subr.bf16.mxu0 0
    %3530 = vmatpush1.bf16.msra.mxu0 0
    %3531 = vmatprep.mubr.bf16.mxu0 0
    %3532 = vmatmul.mubr.bf16.gmra.mrb[0].mxu0 %v2901
    %v3533 = vpop.f32.mrb[0].mxu0
    %v3534 = vadd.f32 %v3442, %v3533
    %v3535 = vpop.f32.mrb[0].mxu0
    %v3536 = vadd.f32 %v3446, %v3535
    %v3537 = vpop.f32.mrb[0].mxu0
    %v3538 = vadd.f32 %v3442, %v3537
    %v3539 = vpop.f32.mrb[0].mxu0
    %v3540 = vadd.f32 %v3446, %v3539
    %3541 = vdwg.mxu0
    %3542 = vmatprep.subr.bf16.mxu0 %v3486
    %3543 = vmatpush1.bf16.msra.mxu0 %v3485
    %3544 = vmatprep.subr.bf16.mxu0 %v3490
    %3545 = vmatpush1.bf16.msra.mxu0 %v3489
    %3546 = vmatprep.subr.bf16.mxu0 0
    %3547 = vmatpush1.bf16.msra.mxu0 0
    %3548 = vmatprep.subr.bf16.mxu0 0
    %3549 = vmatpush1.bf16.msra.mxu0 0
    %3550 = vmatprep.subr.bf16.mxu0 0
    %3551 = vmatpush1.bf16.msra.mxu0 0
    %3552 = vmatprep.subr.bf16.mxu0 0
    %3553 = vmatpush1.bf16.msra.mxu0 0
    %3554 = vmatprep.subr.bf16.mxu0 0
    %3555 = vmatpush1.bf16.msra.mxu0 0
    %3556 = vmatprep.subr.bf16.mxu0 0
    %3557 = vmatpush1.bf16.msra.mxu0 0
    %3558 = vmatprep.subr.bf16.mxu0 0
    %3559 = vmatpush1.bf16.msra.mxu0 0
    %3560 = vmatprep.subr.bf16.mxu0 0
    %3561 = vmatpush1.bf16.msra.mxu0 0
    %3562 = vmatprep.subr.bf16.mxu0 0
    %3563 = vmatpush1.bf16.msra.mxu0 0
    %3564 = vmatprep.subr.bf16.mxu0 0
    %3565 = vmatpush1.bf16.msra.mxu0 0
    %3566 = vmatprep.subr.bf16.mxu0 0
    %3567 = vmatpush1.bf16.msra.mxu0 0
    %3568 = vmatprep.subr.bf16.mxu0 0
    %3569 = vmatpush1.bf16.msra.mxu0 0
    %3570 = vmatprep.subr.bf16.mxu0 0
    %3571 = vmatpush1.bf16.msra.mxu0 0
    %3572 = vmatprep.subr.bf16.mxu0 0
    %3573 = vmatpush1.bf16.msra.mxu0 0
    %3574 = vmatprep.mubr.bf16.mxu0 0
    %3575 = vmatmul.mubr.bf16.gmra.mrb[0].mxu0 %v2901
    %v3576 = vpop.f32.mrb[0].mxu0
    %v3577 = vadd.f32 %v3450, %v3576
    %v3578 = vpop.f32.mrb[0].mxu0
    %v3579 = vadd.f32 %v3454, %v3578
    %v3580 = vpop.f32.mrb[0].mxu0
    %v3581 = vadd.f32 %v3450, %v3580
    %v3582 = vpop.f32.mrb[0].mxu0
    %v3583 = vadd.f32 %v3454, %v3582
    %3584 = vdwg.mxu0
    %v3585 = vmax.f32 %v3534, 0.0
    %v3586 = vmax.f32 %v3536, 0.0
    %v3587 = vmax.f32 %v3577, 0.0
    %v3588 = vmax.f32 %v3579, 0.0
    %v3589 = vmax.f32 %v3538, 0.0
    %v3590 = vmax.f32 %v3540, 0.0
    %v3591 = vmax.f32 %v3581, 0.0
    %v3592 = vmax.f32 %v3583, 0.0
    %v3593 = vpack.c.bf16 %v3589, %v3585
    %v3594 = vpack.c.bf16 %v3590, %v3586
    %v3595 = vpack.c.bf16 %v3591, %v3587
    %v3596 = vpack.c.bf16 %v3592, %v3588
    %v3605 = vunpack.c.l.b16 %v3430
    %v3606 = vunpack.c.h.b16 %v3430
    %v3607 = vunpack.c.l.b16 %v3431
    %v3608 = vunpack.c.h.b16 %v3431
    %v3609 = vunpack.c.l.b16 %v3432
    %v3610 = vunpack.c.h.b16 %v3432
    %v3611 = vunpack.c.l.b16 %v3433
    %v3612 = vunpack.c.h.b16 %v3433
    %v3613 = vunpack.c.l.b16 %v3434
    %v3614 = vunpack.c.h.b16 %v3434
    %v3615 = vunpack.c.l.b16 %v3435
    %v3616 = vunpack.c.h.b16 %v3435
    %v3617 = vunpack.c.l.b16 %v3436
    %v3618 = vunpack.c.h.b16 %v3436
    %v3619 = vunpack.c.l.b16 %v3437
    %v3620 = vunpack.c.h.b16 %v3437
    %v3621 = vpack.c.b16 %v3609, %v3605
    %v3622 = vpack.c.b16 %v3610, %v3606
    %v3623 = vpack.c.b16 %v3611, %v3607
    %v3624 = vpack.c.b16 %v3612, %v3608
    %v3625 = vpack.c.b16 %v3617, %v3613
    %v3626 = vpack.c.b16 %v3618, %v3614
    %v3627 = vpack.c.b16 %v3619, %v3615
    %v3628 = vpack.c.b16 %v3620, %v3616
    %3637 = vmatprep.subr.bf16.mxu0 %v3622
    %3638 = vmatpush1.bf16.xpose.msra.mxu0 %v3621
    %3639 = vmatprep.subr.bf16.mxu0 %v3626
    %3640 = vmatpush1.bf16.xpose.msra.mxu0 %v3625
    %3641 = vmatprep.subr.bf16.mxu0 0
    %3642 = vmatpush1.bf16.xpose.msra.mxu0 0
    %3643 = vmatprep.subr.bf16.mxu0 0
    %3644 = vmatpush1.bf16.xpose.msra.mxu0 0
    %3645 = vmatprep.subr.bf16.mxu0 0
    %3646 = vmatpush1.bf16.xpose.msra.mxu0 0
    %3647 = vmatprep.subr.bf16.mxu0 0
    %3648 = vmatpush1.bf16.xpose.msra.mxu0 0
    %3649 = vmatprep.subr.bf16.mxu0 0
    %3650 = vmatpush1.bf16.xpose.msra.mxu0 0
    %3651 = vmatprep.subr.bf16.mxu0 0
    %3652 = vmatpush1.bf16.xpose.msra.mxu0 0
    %3653 = vmatprep.subr.bf16.mxu0 0
    %3654 = vmatpush1.bf16.xpose.msra.mxu0 0
    %3655 = vmatprep.subr.bf16.mxu0 0
    %3656 = vmatpush1.bf16.xpose.msra.mxu0 0
    %3657 = vmatprep.subr.bf16.mxu0 0
    %3658 = vmatpush1.bf16.xpose.msra.mxu0 0
    %3659 = vmatprep.subr.bf16.mxu0 0
    %3660 = vmatpush1.bf16.xpose.msra.mxu0 0
    %3661 = vmatprep.subr.bf16.mxu0 0
    %3662 = vmatpush1.bf16.xpose.msra.mxu0 0
    %3663 = vmatprep.subr.bf16.mxu0 0
    %3664 = vmatpush1.bf16.xpose.msra.mxu0 0
    %3665 = vmatprep.subr.bf16.mxu0 0
    %3666 = vmatpush1.bf16.xpose.msra.mxu0 0
    %3667 = vmatprep.subr.bf16.mxu0 0
    %3668 = vmatpush1.bf16.xpose.msra.mxu0 0
    %3669 = vmatprep.mubr.bf16.mxu0 %v3594
    %3670 = vmatmul.mubr.bf16.gmra.mrb[0].mxu0 %v3593
    %v3671 = vpop.f32.mrb[0].mxu0
    %v3672 = vadd.f32 0.0, %v3671
    %v3673 = vpop.f32.mrb[0].mxu0
    %v3674 = vpop.f32.mrb[0].mxu0
    %v3675 = vadd.f32 0.0, %v3674
    %v3676 = vpop.f32.mrb[0].mxu0
    %3677 = vdwg.mxu0
    %3678 = vmatprep.subr.bf16.mxu0 %v3624
    %3679 = vmatpush1.bf16.xpose.msra.mxu0 %v3623
    %3680 = vmatprep.subr.bf16.mxu0 %v3628
    %3681 = vmatpush1.bf16.xpose.msra.mxu0 %v3627
    %3682 = vmatprep.subr.bf16.mxu0 0
    %3683 = vmatpush1.bf16.xpose.msra.mxu0 0
    %3684 = vmatprep.subr.bf16.mxu0 0
    %3685 = vmatpush1.bf16.xpose.msra.mxu0 0
    %3686 = vmatprep.subr.bf16.mxu0 0
    %3687 = vmatpush1.bf16.xpose.msra.mxu0 0
    %3688 = vmatprep.subr.bf16.mxu0 0
    %3689 = vmatpush1.bf16.xpose.msra.mxu0 0
    %3690 = vmatprep.subr.bf16.mxu0 0
    %3691 = vmatpush1.bf16.xpose.msra.mxu0 0
    %3692 = vmatprep.subr.bf16.mxu0 0
    %3693 = vmatpush1.bf16.xpose.msra.mxu0 0
    %3694 = vmatprep.subr.bf16.mxu0 0
    %3695 = vmatpush1.bf16.xpose.msra.mxu0 0
    %3696 = vmatprep.subr.bf16.mxu0 0
    %3697 = vmatpush1.bf16.xpose.msra.mxu0 0
    %3698 = vmatprep.subr.bf16.mxu0 0
    %3699 = vmatpush1.bf16.xpose.msra.mxu0 0
    %3700 = vmatprep.subr.bf16.mxu0 0
    %3701 = vmatpush1.bf16.xpose.msra.mxu0 0
    %3702 = vmatprep.subr.bf16.mxu0 0
    %3703 = vmatpush1.bf16.xpose.msra.mxu0 0
    %3704 = vmatprep.subr.bf16.mxu0 0
    %3705 = vmatpush1.bf16.xpose.msra.mxu0 0
    %3706 = vmatprep.subr.bf16.mxu0 0
    %3707 = vmatpush1.bf16.xpose.msra.mxu0 0
    %3708 = vmatprep.subr.bf16.mxu0 0
    %3709 = vmatpush1.bf16.xpose.msra.mxu0 0
    %3710 = vmatprep.mubr.bf16.mxu0 %v3596
    %3711 = vmatmul.mubr.bf16.gmra.mrb[0].mxu0 %v3595
    %v3712 = vpop.f32.mrb[0].mxu0
    %v3713 = vadd.f32 %v3672, %v3712
    %v3714 = vpop.f32.mrb[0].mxu0
    %v3715 = vpop.f32.mrb[0].mxu0
    %v3716 = vadd.f32 %v3675, %v3715
    %v3717 = vpop.f32.mrb[0].mxu0
    %3718 = vdwg.mxu0
    %v3719 = vadd.f32 %v3415, %v3713
    %v3720 = vadd.f32 %v3418, %v3716
    %v3721 = vld [vmem:[#allocation2 + $0x30] sm:$0xff]
    %v3722 = vld [vmem:[#allocation2 + $0x38] sm:$0xff]
    %v3723 = vld [vmem:[#allocation2 + $0x70] sm:$0xff]
    %v3724 = vld [vmem:[#allocation2 + $0x78] sm:$0xff]
    %v3725 = vld [vmem:[#allocation2 + $0xb0] sm:$0xff]
    %v3726 = vld [vmem:[#allocation2 + $0xb8] sm:$0xff]
    %v3727 = vld [vmem:[#allocation2 + $0xf0] sm:$0xff]
    %v3728 = vld [vmem:[#allocation2 + $0xf8] sm:$0xff]
    %v3729 = vld [vmem:[%s15 + $0xc] sm:$0xf]
    %v3730 = vld [vmem:[#allocation5 + $0x30] sm:$0xff]
    %v3731 = vld [vmem:[#allocation5 + $0x38] sm:$0xff]
    %v3732 = vld [vmem:[#allocation5 + $0x70] sm:$0xff]
    %v3733 = vld [vmem:[#allocation5 + $0x78] sm:$0xff]
    %v3734 = vld [vmem:[#allocation5 + $0xb0] sm:$0xff]
    %v3735 = vld [vmem:[#allocation5 + $0xb8] sm:$0xff]
    %v3736 = vld [vmem:[#allocation5 + $0xf0] sm:$0xff]
    %v3737 = vld [vmem:[#allocation5 + $0xf8] sm:$0xff]
    %v3739 = vlaneseq
    %v3740 = vshrl.u32 %v3739, 7
    %v3741 = vsub.s32 0, %v3740
    %v3742 = vrot.slane %v3729, %v3741
    %v3743 = vlaneseq
    %v3744 = vshrl.u32 %v3743, 7
    %v3745 = vsub.s32 1, %v3744
    %v3746 = vrot.slane %v3729, %v3745
    %v3747 = vlaneseq
    %v3748 = vshrl.u32 %v3747, 7
    %v3749 = vsub.s32 2, %v3748
    %v3750 = vrot.slane %v3729, %v3749
    %v3751 = vlaneseq
    %v3752 = vshrl.u32 %v3751, 7
    %v3753 = vsub.s32 3, %v3752
    %v3754 = vrot.slane %v3729, %v3753
    %v3767 = vunpack.c.l.b16 %v3721
    %v3768 = vunpack.c.h.b16 %v3721
    %v3769 = vunpack.c.l.b16 %v3722
    %v3770 = vunpack.c.h.b16 %v3722
    %v3771 = vunpack.c.l.b16 %v3723
    %v3772 = vunpack.c.h.b16 %v3723
    %v3773 = vunpack.c.l.b16 %v3724
    %v3774 = vunpack.c.h.b16 %v3724
    %v3775 = vunpack.c.l.b16 %v3725
    %v3776 = vunpack.c.h.b16 %v3725
    %v3777 = vunpack.c.l.b16 %v3726
    %v3778 = vunpack.c.h.b16 %v3726
    %v3779 = vunpack.c.l.b16 %v3727
    %v3780 = vunpack.c.h.b16 %v3727
    %v3781 = vunpack.c.l.b16 %v3728
    %v3782 = vunpack.c.h.b16 %v3728
    %v3783 = vpack.c.b16 %v3771, %v3767
    %v3784 = vpack.c.b16 %v3772, %v3768
    %v3785 = vpack.c.b16 %v3773, %v3769
    %v3786 = vpack.c.b16 %v3774, %v3770
    %v3787 = vpack.c.b16 %v3779, %v3775
    %v3788 = vpack.c.b16 %v3780, %v3776
    %v3789 = vpack.c.b16 %v3781, %v3777
    %v3790 = vpack.c.b16 %v3782, %v3778
    %3799 = vmatprep.subr.bf16.mxu0 %v3784
    %3800 = vmatpush1.bf16.msra.mxu0 %v3783
    %3801 = vmatprep.subr.bf16.mxu0 %v3788
    %3802 = vmatpush1.bf16.msra.mxu0 %v3787
    %3803 = vmatprep.subr.bf16.mxu0 0
    %3804 = vmatpush1.bf16.msra.mxu0 0
    %3805 = vmatprep.subr.bf16.mxu0 0
    %3806 = vmatpush1.bf16.msra.mxu0 0
    %3807 = vmatprep.subr.bf16.mxu0 0
    %3808 = vmatpush1.bf16.msra.mxu0 0
    %3809 = vmatprep.subr.bf16.mxu0 0
    %3810 = vmatpush1.bf16.msra.mxu0 0
    %3811 = vmatprep.subr.bf16.mxu0 0
    %3812 = vmatpush1.bf16.msra.mxu0 0
    %3813 = vmatprep.subr.bf16.mxu0 0
    %3814 = vmatpush1.bf16.msra.mxu0 0
    %3815 = vmatprep.subr.bf16.mxu0 0
    %3816 = vmatpush1.bf16.msra.mxu0 0
    %3817 = vmatprep.subr.bf16.mxu0 0
    %3818 = vmatpush1.bf16.msra.mxu0 0
    %3819 = vmatprep.subr.bf16.mxu0 0
    %3820 = vmatpush1.bf16.msra.mxu0 0
    %3821 = vmatprep.subr.bf16.mxu0 0
    %3822 = vmatpush1.bf16.msra.mxu0 0
    %3823 = vmatprep.subr.bf16.mxu0 0
    %3824 = vmatpush1.bf16.msra.mxu0 0
    %3825 = vmatprep.subr.bf16.mxu0 0
    %3826 = vmatpush1.bf16.msra.mxu0 0
    %3827 = vmatprep.subr.bf16.mxu0 0
    %3828 = vmatpush1.bf16.msra.mxu0 0
    %3829 = vmatprep.subr.bf16.mxu0 0
    %3830 = vmatpush1.bf16.msra.mxu0 0
    %3831 = vmatprep.mubr.bf16.mxu0 0
    %3832 = vmatmul.mubr.bf16.gmra.mrb[0].mxu0 %v2901
    %v3833 = vpop.f32.mrb[0].mxu0
    %v3834 = vadd.f32 %v3742, %v3833
    %v3835 = vpop.f32.mrb[0].mxu0
    %v3836 = vadd.f32 %v3746, %v3835
    %v3837 = vpop.f32.mrb[0].mxu0
    %v3838 = vadd.f32 %v3742, %v3837
    %v3839 = vpop.f32.mrb[0].mxu0
    %v3840 = vadd.f32 %v3746, %v3839
    %3841 = vdwg.mxu0
    %3842 = vmatprep.subr.bf16.mxu0 %v3786
    %3843 = vmatpush1.bf16.msra.mxu0 %v3785
    %3844 = vmatprep.subr.bf16.mxu0 %v3790
    %3845 = vmatpush1.bf16.msra.mxu0 %v3789
    %3846 = vmatprep.subr.bf16.mxu0 0
    %3847 = vmatpush1.bf16.msra.mxu0 0
    %3848 = vmatprep.subr.bf16.mxu0 0
    %3849 = vmatpush1.bf16.msra.mxu0 0
    %3850 = vmatprep.subr.bf16.mxu0 0
    %3851 = vmatpush1.bf16.msra.mxu0 0
    %3852 = vmatprep.subr.bf16.mxu0 0
    %3853 = vmatpush1.bf16.msra.mxu0 0
    %3854 = vmatprep.subr.bf16.mxu0 0
    %3855 = vmatpush1.bf16.msra.mxu0 0
    %3856 = vmatprep.subr.bf16.mxu0 0
    %3857 = vmatpush1.bf16.msra.mxu0 0
    %3858 = vmatprep.subr.bf16.mxu0 0
    %3859 = vmatpush1.bf16.msra.mxu0 0
    %3860 = vmatprep.subr.bf16.mxu0 0
    %3861 = vmatpush1.bf16.msra.mxu0 0
    %3862 = vmatprep.subr.bf16.mxu0 0
    %3863 = vmatpush1.bf16.msra.mxu0 0
    %3864 = vmatprep.subr.bf16.mxu0 0
    %3865 = vmatpush1.bf16.msra.mxu0 0
    %3866 = vmatprep.subr.bf16.mxu0 0
    %3867 = vmatpush1.bf16.msra.mxu0 0
    %3868 = vmatprep.subr.bf16.mxu0 0
    %3869 = vmatpush1.bf16.msra.mxu0 0
    %3870 = vmatprep.subr.bf16.mxu0 0
    %3871 = vmatpush1.bf16.msra.mxu0 0
    %3872 = vmatprep.subr.bf16.mxu0 0
    %3873 = vmatpush1.bf16.msra.mxu0 0
    %3874 = vmatprep.mubr.bf16.mxu0 0
    %3875 = vmatmul.mubr.bf16.gmra.mrb[0].mxu0 %v2901
    %v3876 = vpop.f32.mrb[0].mxu0
    %v3877 = vadd.f32 %v3750, %v3876
    %v3878 = vpop.f32.mrb[0].mxu0
    %v3879 = vadd.f32 %v3754, %v3878
    %v3880 = vpop.f32.mrb[0].mxu0
    %v3881 = vadd.f32 %v3750, %v3880
    %v3882 = vpop.f32.mrb[0].mxu0
    %v3883 = vadd.f32 %v3754, %v3882
    %3884 = vdwg.mxu0
    %v3885 = vmax.f32 %v3834, 0.0
    %v3886 = vmax.f32 %v3836, 0.0
    %v3887 = vmax.f32 %v3877, 0.0
    %v3888 = vmax.f32 %v3879, 0.0
    %v3889 = vmax.f32 %v3838, 0.0
    %v3890 = vmax.f32 %v3840, 0.0
    %v3891 = vmax.f32 %v3881, 0.0
    %v3892 = vmax.f32 %v3883, 0.0
    %v3893 = vpack.c.bf16 %v3889, %v3885
    %v3894 = vpack.c.bf16 %v3890, %v3886
    %v3895 = vpack.c.bf16 %v3891, %v3887
    %v3896 = vpack.c.bf16 %v3892, %v3888
    %v3905 = vunpack.c.l.b16 %v3730
    %v3906 = vunpack.c.h.b16 %v3730
    %v3907 = vunpack.c.l.b16 %v3731
    %v3908 = vunpack.c.h.b16 %v3731
    %v3909 = vunpack.c.l.b16 %v3732
    %v3910 = vunpack.c.h.b16 %v3732
    %v3911 = vunpack.c.l.b16 %v3733
    %v3912 = vunpack.c.h.b16 %v3733
    %v3913 = vunpack.c.l.b16 %v3734
    %v3914 = vunpack.c.h.b16 %v3734
    %v3915 = vunpack.c.l.b16 %v3735
    %v3916 = vunpack.c.h.b16 %v3735
    %v3917 = vunpack.c.l.b16 %v3736
    %v3918 = vunpack.c.h.b16 %v3736
    %v3919 = vunpack.c.l.b16 %v3737
    %v3920 = vunpack.c.h.b16 %v3737
    %v3921 = vpack.c.b16 %v3909, %v3905
    %v3922 = vpack.c.b16 %v3910, %v3906
    %v3923 = vpack.c.b16 %v3911, %v3907
    %v3924 = vpack.c.b16 %v3912, %v3908
    %v3925 = vpack.c.b16 %v3917, %v3913
    %v3926 = vpack.c.b16 %v3918, %v3914
    %v3927 = vpack.c.b16 %v3919, %v3915
    %v3928 = vpack.c.b16 %v3920, %v3916
    %3937 = vmatprep.subr.bf16.mxu0 %v3922
    %3938 = vmatpush1.bf16.xpose.msra.mxu0 %v3921
    %3939 = vmatprep.subr.bf16.mxu0 %v3926
    %3940 = vmatpush1.bf16.xpose.msra.mxu0 %v3925
    %3941 = vmatprep.subr.bf16.mxu0 0
    %3942 = vmatpush1.bf16.xpose.msra.mxu0 0
    %3943 = vmatprep.subr.bf16.mxu0 0
    %3944 = vmatpush1.bf16.xpose.msra.mxu0 0
    %3945 = vmatprep.subr.bf16.mxu0 0
    %3946 = vmatpush1.bf16.xpose.msra.mxu0 0
    %3947 = vmatprep.subr.bf16.mxu0 0
    %3948 = vmatpush1.bf16.xpose.msra.mxu0 0
    %3949 = vmatprep.subr.bf16.mxu0 0
    %3950 = vmatpush1.bf16.xpose.msra.mxu0 0
    %3951 = vmatprep.subr.bf16.mxu0 0
    %3952 = vmatpush1.bf16.xpose.msra.mxu0 0
    %3953 = vmatprep.subr.bf16.mxu0 0
    %3954 = vmatpush1.bf16.xpose.msra.mxu0 0
    %3955 = vmatprep.subr.bf16.mxu0 0
    %3956 = vmatpush1.bf16.xpose.msra.mxu0 0
    %3957 = vmatprep.subr.bf16.mxu0 0
    %3958 = vmatpush1.bf16.xpose.msra.mxu0 0
    %3959 = vmatprep.subr.bf16.mxu0 0
    %3960 = vmatpush1.bf16.xpose.msra.mxu0 0
    %3961 = vmatprep.subr.bf16.mxu0 0
    %3962 = vmatpush1.bf16.xpose.msra.mxu0 0
    %3963 = vmatprep.subr.bf16.mxu0 0
    %3964 = vmatpush1.bf16.xpose.msra.mxu0 0
    %3965 = vmatprep.subr.bf16.mxu0 0
    %3966 = vmatpush1.bf16.xpose.msra.mxu0 0
    %3967 = vmatprep.subr.bf16.mxu0 0
    %3968 = vmatpush1.bf16.xpose.msra.mxu0 0
    %3969 = vmatprep.mubr.bf16.mxu0 %v3894
    %3970 = vmatmul.mubr.bf16.gmra.mrb[0].mxu0 %v3893
    %v3971 = vpop.f32.mrb[0].mxu0
    %v3972 = vadd.f32 0.0, %v3971
    %v3973 = vpop.f32.mrb[0].mxu0
    %v3974 = vpop.f32.mrb[0].mxu0
    %v3975 = vadd.f32 0.0, %v3974
    %v3976 = vpop.f32.mrb[0].mxu0
    %3977 = vdwg.mxu0
    %3978 = vmatprep.subr.bf16.mxu0 %v3924
    %3979 = vmatpush1.bf16.xpose.msra.mxu0 %v3923
    %3980 = vmatprep.subr.bf16.mxu0 %v3928
    %3981 = vmatpush1.bf16.xpose.msra.mxu0 %v3927
    %3982 = vmatprep.subr.bf16.mxu0 0
    %3983 = vmatpush1.bf16.xpose.msra.mxu0 0
    %3984 = vmatprep.subr.bf16.mxu0 0
    %3985 = vmatpush1.bf16.xpose.msra.mxu0 0
    %3986 = vmatprep.subr.bf16.mxu0 0
    %3987 = vmatpush1.bf16.xpose.msra.mxu0 0
    %3988 = vmatprep.subr.bf16.mxu0 0
    %3989 = vmatpush1.bf16.xpose.msra.mxu0 0
    %3990 = vmatprep.subr.bf16.mxu0 0
    %3991 = vmatpush1.bf16.xpose.msra.mxu0 0
    %3992 = vmatprep.subr.bf16.mxu0 0
    %3993 = vmatpush1.bf16.xpose.msra.mxu0 0
    %3994 = vmatprep.subr.bf16.mxu0 0
    %3995 = vmatpush1.bf16.xpose.msra.mxu0 0
    %3996 = vmatprep.subr.bf16.mxu0 0
    %3997 = vmatpush1.bf16.xpose.msra.mxu0 0
    %3998 = vmatprep.subr.bf16.mxu0 0
    %3999 = vmatpush1.bf16.xpose.msra.mxu0 0
    %4000 = vmatprep.subr.bf16.mxu0 0
    %4001 = vmatpush1.bf16.xpose.msra.mxu0 0
    %4002 = vmatprep.subr.bf16.mxu0 0
    %4003 = vmatpush1.bf16.xpose.msra.mxu0 0
    %4004 = vmatprep.subr.bf16.mxu0 0
    %4005 = vmatpush1.bf16.xpose.msra.mxu0 0
    %4006 = vmatprep.subr.bf16.mxu0 0
    %4007 = vmatpush1.bf16.xpose.msra.mxu0 0
    %4008 = vmatprep.subr.bf16.mxu0 0
    %4009 = vmatpush1.bf16.xpose.msra.mxu0 0
    %4010 = vmatprep.mubr.bf16.mxu0 %v3896
    %4011 = vmatmul.mubr.bf16.gmra.mrb[0].mxu0 %v3895
    %v4012 = vpop.f32.mrb[0].mxu0
    %v4013 = vadd.f32 %v3972, %v4012
    %v4014 = vpop.f32.mrb[0].mxu0
    %v4015 = vpop.f32.mrb[0].mxu0
    %v4016 = vadd.f32 %v3975, %v4015
    %v4017 = vpop.f32.mrb[0].mxu0
    %4018 = vdwg.mxu0
    %v4019 = vadd.f32 %v3719, %v4013
    %v4020 = vadd.f32 %v3720, %v4016
    %v4021 = vld [vmem:[%s17] sm:$0x1]
    %v4023 = vlaneseq
    %v4024 = vshrl.u32 %v4023, 7
    %v4025 = vsub.s32 0, %v4024
    %v4026 = vrot.slane %v4021, %v4025
    %v4028 = vadd.f32 %v4019, %v4026
    %v4029 = vadd.f32 %v4020, %v4026
    %v4030 = vadd.f32 %v2819, %v4028
    %v4031 = vadd.f32 %v2820, %v4029
    %s4032 = scalar_lea.vmem %s18, 2
    %v4033 = vld [vmem:[%s4032] sm:$0x1]
    %s4034 = scalar_lea.vmem %s19, 2
    %v4035 = vld [vmem:[%s4034] sm:$0x1]
    %v4036 = vsel %vm150, %v4030, 0.0
    %4037 = vadd.xlane.f32.xlu0 %v4036
    %v4038 = vpop.xlane.xlu0 %4037
    %v4039 = vsel %vm150, %v4031, 0.0
    %4040 = vadd.xlane.f32.xlu0 %v4039
    %v4041 = vpop.xlane.xlu0 %4040
    %v4042 = vmul.f32 %v4038, %v1366
    %v4043 = vmul.f32 %v4041, %v1366
    %v4044 = vsub.f32 %v4030, %v4042
    %v4045 = vsub.f32 %v4031, %v4043
    %v4046 = vmul.f32 %v4044, %v4044
    %v4047 = vmul.f32 %v4045, %v4045
    %v4048 = vsel %vm150, %v4046, 0.0
    %4049 = vadd.xlane.f32.xlu0 %v4048
    %v4050 = vpop.xlane.xlu0 %4049
    %v4051 = vsel %vm150, %v4047, 0.0
    %4052 = vadd.xlane.f32.xlu0 %v4051
    %v4053 = vpop.xlane.xlu0 %4052
    %v4054 = vmul.f32 %v4050, %v1366
    %v4055 = vmul.f32 %v4053, %v1366
    %v4056 = vadd.f32 %v4054, 1e-05
    %v4057 = vadd.f32 %v4055, 1e-05
    %v4058 = vrsqrt.pop %v4056
    %v4059 = vrsqrt.pop %v4057
    %v4060 = vmul.f32 %v4044, %v4058
    %v4061 = vmul.f32 %v4045, %v4059
    %v4063 = vlaneseq
    %v4064 = vshrl.u32 %v4063, 7
    %v4065 = vsub.s32 0, %v4064
    %v4066 = vrot.slane %v4033, %v4065
    %v4068 = vmul.f32 %v4060, %v4066
    %v4069 = vmul.f32 %v4061, %v4066
    %v4071 = vlaneseq
    %v4072 = vshrl.u32 %v4071, 7
    %v4073 = vsub.s32 0, %v4072
    %v4074 = vrot.slane %v4035, %v4073
    %v4076 = vadd.f32 %v4068, %v4074
    %v4077 = vadd.f32 %v4069, %v4074
    %v4078 = vsel %vm150, %v4076, 0.0
    %4079 = vadd.xlane.f32.xlu0 %v4078
    %v4080 = vpop.xlane.xlu0 %4079
    %v4081 = vsel %vm150, %v4077, 0.0
    %4082 = vadd.xlane.f32.xlu0 %v4081
    %v4083 = vpop.xlane.xlu0 %4082
    %v4084 = vmul.f32 %v4080, %v1366
    %v4085 = vmul.f32 %v4083, %v1366
    %v4086 = vsub.f32 %v4076, %v4084
    %v4087 = vsub.f32 %v4077, %v4085
    %v4088 = vmul.f32 %v4086, %v4086
    %v4089 = vmul.f32 %v4087, %v4087
    %v4090 = vsel %vm150, %v4088, 0.0
    %4091 = vadd.xlane.f32.xlu0 %v4090
    %v4092 = vpop.xlane.xlu0 %4091
    %v4093 = vsel %vm150, %v4089, 0.0
    %4094 = vadd.xlane.f32.xlu0 %v4093
    %v4095 = vpop.xlane.xlu0 %4094
    %v4096 = vmul.f32 %v4092, %v1366
    %v4097 = vmul.f32 %v4095, %v1366
    %v4098 = vadd.f32 %v4096, 1e-05
    %v4099 = vadd.f32 %v4097, 1e-05
    %v4100 = vrsqrt.pop %v4098
    %v4101 = vrsqrt.pop %v4099
    %v4102 = vmul.f32 %v4086, %v4100
    %v4103 = vmul.f32 %v4087, %v4101
    %v4105 = vlaneseq
    %v4106 = vshrl.u32 %v4105, 7
    %v4107 = vsub.s32 0, %v4106
    %v4108 = vrot.slane %v117, %v4107
    %v4110 = vmul.f32 %v4102, %v4108
    %v4111 = vmul.f32 %v4103, %v4108
    %v4113 = vlaneseq
    %v4114 = vshrl.u32 %v4113, 7
    %v4115 = vsub.s32 0, %v4114
    %v4116 = vrot.slane %v118, %v4115
    %v4118 = vadd.f32 %v4110, %v4116
    %v4119 = vadd.f32 %v4111, %v4116
    %4120 = vst.msk [vmem:[#allocation7] sm:$0xff] %vm150, %v4118
    %4121 = vst.msk [vmem:[#allocation7 + $0x8] sm:$0xff] %vm150, %v4119
    %v4122 = vadd.f32 %v4076, %v103
    %v4123 = vadd.f32 %v4077, %v104
    %s4124 = scalar_lea.vmem %s6, 16
    %v4125 = vld [vmem:[%s4124] sm:$0xf]
    %v4126 = vld [vmem:[%s4124 + $0x4] sm:$0xf]
    %v4127 = vld [vmem:[%s4124 + $0x8] sm:$0xf]
    %v4128 = vld [vmem:[%s4124 + $0xc] sm:$0xf]
    %s4129 = scalar_lea.vmem %s7, 1
    %v4130 = vld [vmem:[%s4129] sm:$0x1]
    %s4131 = scalar_lea.vmem %s8, 16
    %v4132 = vld [vmem:[%s4131] sm:$0xf]
    %v4133 = vld [vmem:[%s4131 + $0x4] sm:$0xf]
    %v4134 = vld [vmem:[%s4131 + $0x8] sm:$0xf]
    %v4135 = vld [vmem:[%s4131 + $0xc] sm:$0xf]
    %s4136 = scalar_lea.vmem %s9, 1
    %v4137 = vld [vmem:[%s4136] sm:$0x1]
    %v4138 = vpack.c.bf16 %v4123, %v4122
    %v4140 = vlaneseq
    %v4141 = vshrl.u32 %v4140, 7
    %v4142 = vsub.s32 0, %v4141
    %v4143 = vrot.slane %v4130, %v4142
    %v4149 = vunpack.c.l.b16 %v4125
    %v4150 = vunpack.c.l.b16 %v4126
    %v4151 = vunpack.c.l.b16 %v4127
    %v4152 = vunpack.c.l.b16 %v4128
    %v4153 = vpack.c.b16 %v4150, %v4149
    %v4154 = vpack.c.b16 %v4152, %v4151
    %v4158 = vsel %vm150, %v4138, 0
    %4160 = vmatprep.subr.bf16.mxu0 0
    %4161 = vmatpush1.bf16.msra.mxu0 %v4153
    %4162 = vmatprep.subr.bf16.mxu0 0
    %4163 = vmatpush1.bf16.msra.mxu0 %v4154
    %4164 = vmatprep.subr.bf16.mxu0 0
    %4165 = vmatpush1.bf16.msra.mxu0 0
    %4166 = vmatprep.subr.bf16.mxu0 0
    %4167 = vmatpush1.bf16.msra.mxu0 0
    %4168 = vmatprep.subr.bf16.mxu0 0
    %4169 = vmatpush1.bf16.msra.mxu0 0
    %4170 = vmatprep.subr.bf16.mxu0 0
    %4171 = vmatpush1.bf16.msra.mxu0 0
    %4172 = vmatprep.subr.bf16.mxu0 0
    %4173 = vmatpush1.bf16.msra.mxu0 0
    %4174 = vmatprep.subr.bf16.mxu0 0
    %4175 = vmatpush1.bf16.msra.mxu0 0
    %4176 = vmatprep.subr.bf16.mxu0 0
    %4177 = vmatpush1.bf16.msra.mxu0 0
    %4178 = vmatprep.subr.bf16.mxu0 0
    %4179 = vmatpush1.bf16.msra.mxu0 0
    %4180 = vmatprep.subr.bf16.mxu0 0
    %4181 = vmatpush1.bf16.msra.mxu0 0
    %4182 = vmatprep.subr.bf16.mxu0 0
    %4183 = vmatpush1.bf16.msra.mxu0 0
    %4184 = vmatprep.subr.bf16.mxu0 0
    %4185 = vmatpush1.bf16.msra.mxu0 0
    %4186 = vmatprep.subr.bf16.mxu0 0
    %4187 = vmatpush1.bf16.msra.mxu0 0
    %4188 = vmatprep.subr.bf16.mxu0 0
    %4189 = vmatpush1.bf16.msra.mxu0 0
    %4190 = vmatprep.subr.bf16.mxu0 0
    %4191 = vmatpush1.bf16.msra.mxu0 0
    %4192 = vmatprep.mubr.bf16.mxu0 0
    %4193 = vmatmul.mubr.bf16.gmra.mrb[0].mxu0 %v4158
    %v4194 = vpop.f32.mrb[0].mxu0
    %v4195 = vadd.f32 %v4143, %v4194
    %v4196 = vpop.f32.mrb[0].mxu0
    %v4197 = vpop.f32.mrb[0].mxu0
    %v4198 = vadd.f32 %v4143, %v4197
    %v4199 = vpop.f32.mrb[0].mxu0
    %4200 = vdwg.mxu0
    %v4201 = vpack.c.bf16 %v4077, %v4076
    %4202 = vrot.lane.b32.xlu0 %v4153, 64
    %v4203 = vpop.permute.xlu0 %4202
    %4204 = vrot.lane.b32.xlu0 %v4154, 64
    %v4205 = vpop.permute.xlu0 %4204
    %4208 = vrot.lane.b32.xlu0 %v4143, 64
    %v4209 = vpop.permute.xlu0 %4208
    %v4212 = vsel %vm150, %v4201, 0
    %4214 = vmatprep.subr.bf16.mxu0 0
    %4215 = vmatpush1.bf16.msra.mxu0 %v4203
    %4216 = vmatprep.subr.bf16.mxu0 0
    %4217 = vmatpush1.bf16.msra.mxu0 %v4205
    %4218 = vmatprep.subr.bf16.mxu0 0
    %4219 = vmatpush1.bf16.msra.mxu0 0
    %4220 = vmatprep.subr.bf16.mxu0 0
    %4221 = vmatpush1.bf16.msra.mxu0 0
    %4222 = vmatprep.subr.bf16.mxu0 0
    %4223 = vmatpush1.bf16.msra.mxu0 0
    %4224 = vmatprep.subr.bf16.mxu0 0
    %4225 = vmatpush1.bf16.msra.mxu0 0
    %4226 = vmatprep.subr.bf16.mxu0 0
    %4227 = vmatpush1.bf16.msra.mxu0 0
    %4228 = vmatprep.subr.bf16.mxu0 0
    %4229 = vmatpush1.bf16.msra.mxu0 0
    %4230 = vmatprep.subr.bf16.mxu0 0
    %4231 = vmatpush1.bf16.msra.mxu0 0
    %4232 = vmatprep.subr.bf16.mxu0 0
    %4233 = vmatpush1.bf16.msra.mxu0 0
    %4234 = vmatprep.subr.bf16.mxu0 0
    %4235 = vmatpush1.bf16.msra.mxu0 0
    %4236 = vmatprep.subr.bf16.mxu0 0
    %4237 = vmatpush1.bf16.msra.mxu0 0
    %4238 = vmatprep.subr.bf16.mxu0 0
    %4239 = vmatpush1.bf16.msra.mxu0 0
    %4240 = vmatprep.subr.bf16.mxu0 0
    %4241 = vmatpush1.bf16.msra.mxu0 0
    %4242 = vmatprep.subr.bf16.mxu0 0
    %4243 = vmatpush1.bf16.msra.mxu0 0
    %4244 = vmatprep.subr.bf16.mxu0 0
    %4245 = vmatpush1.bf16.msra.mxu0 0
    %4246 = vmatprep.mubr.bf16.mxu0 0
    %4247 = vmatmul.mubr.bf16.gmra.mrb[0].mxu0 %v4212
    %v4248 = vpop.f32.mrb[0].mxu0
    %v4249 = vadd.f32 %v4209, %v4248
    %v4250 = vpop.f32.mrb[0].mxu0
    %v4251 = vpop.f32.mrb[0].mxu0
    %v4252 = vadd.f32 %v4209, %v4251
    %v4253 = vpop.f32.mrb[0].mxu0
    %4254 = vdwg.mxu0
    %v4255 = vpack.c.bf16 %v4198, %v4195
    %v4256 = vpack.c.bf16 %v4252, %v4249
    %4258 = vrot.lane.b32.xlu0 %v4255, 96
    %v4259 = vpop.permute.xlu0 %4258
    %v4261 = vsel %vm254, %v4255, 0
    %v4264 = vsel %vm254, %v4259, 0
    %4266 = vmatprep.subr.bf16.mxu0 0
    %4267 = vmatpush1.bf16.xpose.msra.mxu0 %v4264
    %4268 = vmatprep.subr.bf16.mxu0 0
    %4269 = vmatpush1.bf16.xpose.msra.mxu0 0
    %4270 = vmatprep.subr.bf16.mxu0 0
    %4271 = vmatpush1.bf16.xpose.msra.mxu0 0
    %4272 = vmatprep.subr.bf16.mxu0 0
    %4273 = vmatpush1.bf16.xpose.msra.mxu0 0
    %4274 = vmatprep.subr.bf16.mxu0 0
    %4275 = vmatpush1.bf16.xpose.msra.mxu0 0
    %4276 = vmatprep.subr.bf16.mxu0 0
    %4277 = vmatpush1.bf16.xpose.msra.mxu0 0
    %4278 = vmatprep.subr.bf16.mxu0 0
    %4279 = vmatpush1.bf16.xpose.msra.mxu0 0
    %4280 = vmatprep.subr.bf16.mxu0 0
    %4281 = vmatpush1.bf16.xpose.msra.mxu0 0
    %4282 = vmatprep.subr.bf16.mxu0 0
    %4283 = vmatpush1.bf16.xpose.msra.mxu0 0
    %4284 = vmatprep.subr.bf16.mxu0 0
    %4285 = vmatpush1.bf16.xpose.msra.mxu0 0
    %4286 = vmatprep.subr.bf16.mxu0 0
    %4287 = vmatpush1.bf16.xpose.msra.mxu0 0
    %4288 = vmatprep.subr.bf16.mxu0 0
    %4289 = vmatpush1.bf16.xpose.msra.mxu0 0
    %4290 = vmatprep.subr.bf16.mxu0 0
    %4291 = vmatpush1.bf16.xpose.msra.mxu0 0
    %4292 = vmatprep.subr.bf16.mxu0 0
    %4293 = vmatpush1.bf16.xpose.msra.mxu0 0
    %4294 = vmatprep.subr.bf16.mxu0 0
    %4295 = vmatpush1.bf16.xpose.msra.mxu0 0
    %4296 = vmatprep.subr.bf16.mxu0 0
    %4297 = vmatpush1.bf16.xpose.msra.mxu0 0
    %4298 = vmatprep.mubr.bf16.mxu0 0
    %4299 = vmatmul.mubr.bf16.gmra.mrb[0].mxu0 %v4261
    %v4300 = vpop.f32.mrb[0].mxu0
    %v4301 = vadd.f32 %v113, %v4300
    %v4302 = vpop.f32.mrb[0].mxu0
    %v4303 = vpop.f32.mrb[0].mxu0
    %v4304 = vadd.f32 %v114, %v4303
    %v4305 = vpop.f32.mrb[0].mxu0
    %4306 = vdwg.mxu0
    %v4307 = vsel %vm302, %v4301, -inf
    %4308 = vmax.xlane.f32.xlu0 %v4307
    %v4309 = vpop.xlane.xlu0 %4308
    %v4310 = vsel %vm302, %v4304, -inf
    %4311 = vmax.xlane.f32.xlu0 %v4310
    %v4312 = vpop.xlane.xlu0 %4311
    %v4313 = vsub.f32 %v4301, %v4309
    %v4314 = vsub.f32 %v4304, %v4312
    %v4315 = vmul.f32 %v4313, 1.442695
    %v4316 = vpow.pop %v4315
    %v4317 = vmul.f32 %v4314, 1.442695
    %v4318 = vpow.pop %v4317
    %v4319 = vsel %vm302, %v4316, 0.0
    %4320 = vadd.xlane.f32.xlu0 %v4319
    %v4321 = vpop.xlane.xlu0 %4320
    %v4322 = vsel %vm302, %v4318, 0.0
    %4323 = vadd.xlane.f32.xlu0 %v4322
    %v4324 = vpop.xlane.xlu0 %4323
    %v4325 = vrcp.pop %v4321
    %v4326 = vmul.f32 %v4316, %v4325
    %v4327 = vrcp.pop %v4324
    %v4328 = vmul.f32 %v4318, %v4327
    %v4329 = vpack.c.bf16 %v4328, %v4326
    %v4331 = vsel %vm302, %v4329, 0
    %4333 = vmatprep.subr.bf16.mxu0 0
    %4334 = vmatpush1.bf16.msra.mxu0 %v4256
    %4335 = vmatprep.subr.bf16.mxu0 0
    %4336 = vmatpush1.bf16.msra.mxu0 0
    %4337 = vmatprep.subr.bf16.mxu0 0
    %4338 = vmatpush1.bf16.msra.mxu0 0
    %4339 = vmatprep.subr.bf16.mxu0 0
    %4340 = vmatpush1.bf16.msra.mxu0 0
    %4341 = vmatprep.subr.bf16.mxu0 0
    %4342 = vmatpush1.bf16.msra.mxu0 0
    %4343 = vmatprep.subr.bf16.mxu0 0
    %4344 = vmatpush1.bf16.msra.mxu0 0
    %4345 = vmatprep.subr.bf16.mxu0 0
    %4346 = vmatpush1.bf16.msra.mxu0 0
    %4347 = vmatprep.subr.bf16.mxu0 0
    %4348 = vmatpush1.bf16.msra.mxu0 0
    %4349 = vmatprep.subr.bf16.mxu0 0
    %4350 = vmatpush1.bf16.msra.mxu0 0
    %4351 = vmatprep.subr.bf16.mxu0 0
    %4352 = vmatpush1.bf16.msra.mxu0 0
    %4353 = vmatprep.subr.bf16.mxu0 0
    %4354 = vmatpush1.bf16.msra.mxu0 0
    %4355 = vmatprep.subr.bf16.mxu0 0
    %4356 = vmatpush1.bf16.msra.mxu0 0
    %4357 = vmatprep.subr.bf16.mxu0 0
    %4358 = vmatpush1.bf16.msra.mxu0 0
    %4359 = vmatprep.subr.bf16.mxu0 0
    %4360 = vmatpush1.bf16.msra.mxu0 0
    %4361 = vmatprep.subr.bf16.mxu0 0
    %4362 = vmatpush1.bf16.msra.mxu0 0
    %4363 = vmatprep.subr.bf16.mxu0 0
    %4364 = vmatpush1.bf16.msra.mxu0 0
    %4365 = vmatprep.mubr.bf16.mxu0 0
    %4366 = vmatmul.mubr.bf16.gmra.mrb[0].mxu0 %v4331
    %v4367 = vpop.f32.mrb[0].mxu0
    %v4368 = vadd.f32 0.0, %v4367
    %v4369 = vpop.f32.mrb[0].mxu0
    %v4370 = vpop.f32.mrb[0].mxu0
    %v4371 = vadd.f32 0.0, %v4370
    %v4372 = vpop.f32.mrb[0].mxu0
    %4373 = vdwg.mxu0
    %4374 = vrot.lane.b32.xlu0 %v4255, 124
    %v4375 = vpop.permute.xlu0 %4374
    %4376 = vrot.lane.b32.xlu0 %v4255, 92
    %v4377 = vpop.permute.xlu0 %4376
    %v4379 = vsel %vm254, %v4375, 0
    %v4382 = vsel %vm254, %v4377, 0
    %4384 = vmatprep.subr.bf16.mxu0 0
    %4385 = vmatpush1.bf16.xpose.msra.mxu0 %v4382
    %4386 = vmatprep.subr.bf16.mxu0 0
    %4387 = vmatpush1.bf16.xpose.msra.mxu0 0
    %4388 = vmatprep.subr.bf16.mxu0 0
    %4389 = vmatpush1.bf16.xpose.msra.mxu0 0
    %4390 = vmatprep.subr.bf16.mxu0 0
    %4391 = vmatpush1.bf16.xpose.msra.mxu0 0
    %4392 = vmatprep.subr.bf16.mxu0 0
    %4393 = vmatpush1.bf16.xpose.msra.mxu0 0
    %4394 = vmatprep.subr.bf16.mxu0 0
    %4395 = vmatpush1.bf16.xpose.msra.mxu0 0
    %4396 = vmatprep.subr.bf16.mxu0 0
    %4397 = vmatpush1.bf16.xpose.msra.mxu0 0
    %4398 = vmatprep.subr.bf16.mxu0 0
    %4399 = vmatpush1.bf16.xpose.msra.mxu0 0
    %4400 = vmatprep.subr.bf16.mxu0 0
    %4401 = vmatpush1.bf16.xpose.msra.mxu0 0
    %4402 = vmatprep.subr.bf16.mxu0 0
    %4403 = vmatpush1.bf16.xpose.msra.mxu0 0
    %4404 = vmatprep.subr.bf16.mxu0 0
    %4405 = vmatpush1.bf16.xpose.msra.mxu0 0
    %4406 = vmatprep.subr.bf16.mxu0 0
    %4407 = vmatpush1.bf16.xpose.msra.mxu0 0
    %4408 = vmatprep.subr.bf16.mxu0 0
    %4409 = vmatpush1.bf16.xpose.msra.mxu0 0
    %4410 = vmatprep.subr.bf16.mxu0 0
    %4411 = vmatpush1.bf16.xpose.msra.mxu0 0
    %4412 = vmatprep.subr.bf16.mxu0 0
    %4413 = vmatpush1.bf16.xpose.msra.mxu0 0
    %4414 = vmatprep.subr.bf16.mxu0 0
    %4415 = vmatpush1.bf16.xpose.msra.mxu0 0
    %4416 = vmatprep.mubr.bf16.mxu0 0
    %4417 = vmatmul.mubr.bf16.gmra.mrb[0].mxu0 %v4379
    %v4418 = vpop.f32.mrb[0].mxu0
    %v4419 = vadd.f32 %v113, %v4418
    %v4420 = vpop.f32.mrb[0].mxu0
    %v4421 = vpop.f32.mrb[0].mxu0
    %v4422 = vadd.f32 %v114, %v4421
    %v4423 = vpop.f32.mrb[0].mxu0
    %4424 = vdwg.mxu0
    %v4425 = vsel %vm302, %v4419, -inf
    %4426 = vmax.xlane.f32.xlu0 %v4425
    %v4427 = vpop.xlane.xlu0 %4426
    %v4428 = vsel %vm302, %v4422, -inf
    %4429 = vmax.xlane.f32.xlu0 %v4428
    %v4430 = vpop.xlane.xlu0 %4429
    %v4431 = vsub.f32 %v4419, %v4427
    %v4432 = vsub.f32 %v4422, %v4430
    %v4433 = vmul.f32 %v4431, 1.442695
    %v4434 = vpow.pop %v4433
    %v4435 = vmul.f32 %v4432, 1.442695
    %v4436 = vpow.pop %v4435
    %v4437 = vsel %vm302, %v4434, 0.0
    %4438 = vadd.xlane.f32.xlu0 %v4437
    %v4439 = vpop.xlane.xlu0 %4438
    %v4440 = vsel %vm302, %v4436, 0.0
    %4441 = vadd.xlane.f32.xlu0 %v4440
    %v4442 = vpop.xlane.xlu0 %4441
    %v4443 = vrcp.pop %v4439
    %v4444 = vmul.f32 %v4434, %v4443
    %v4445 = vrcp.pop %v4442
    %v4446 = vmul.f32 %v4436, %v4445
    %v4447 = vpack.c.bf16 %v4446, %v4444
    %4449 = vrot.lane.b32.xlu0 %v4256, 124
    %v4450 = vpop.permute.xlu0 %4449
    %v4453 = vsel %vm302, %v4447, 0
    %4455 = vmatprep.subr.bf16.mxu0 0
    %4456 = vmatpush1.bf16.msra.mxu0 %v4450
    %4457 = vmatprep.subr.bf16.mxu0 0
    %4458 = vmatpush1.bf16.msra.mxu0 0
    %4459 = vmatprep.subr.bf16.mxu0 0
    %4460 = vmatpush1.bf16.msra.mxu0 0
    %4461 = vmatprep.subr.bf16.mxu0 0
    %4462 = vmatpush1.bf16.msra.mxu0 0
    %4463 = vmatprep.subr.bf16.mxu0 0
    %4464 = vmatpush1.bf16.msra.mxu0 0
    %4465 = vmatprep.subr.bf16.mxu0 0
    %4466 = vmatpush1.bf16.msra.mxu0 0
    %4467 = vmatprep.subr.bf16.mxu0 0
    %4468 = vmatpush1.bf16.msra.mxu0 0
    %4469 = vmatprep.subr.bf16.mxu0 0
    %4470 = vmatpush1.bf16.msra.mxu0 0
    %4471 = vmatprep.subr.bf16.mxu0 0
    %4472 = vmatpush1.bf16.msra.mxu0 0
    %4473 = vmatprep.subr.bf16.mxu0 0
    %4474 = vmatpush1.bf16.msra.mxu0 0
    %4475 = vmatprep.subr.bf16.mxu0 0
    %4476 = vmatpush1.bf16.msra.mxu0 0
    %4477 = vmatprep.subr.bf16.mxu0 0
    %4478 = vmatpush1.bf16.msra.mxu0 0
    %4479 = vmatprep.subr.bf16.mxu0 0
    %4480 = vmatpush1.bf16.msra.mxu0 0
    %4481 = vmatprep.subr.bf16.mxu0 0
    %4482 = vmatpush1.bf16.msra.mxu0 0
    %4483 = vmatprep.subr.bf16.mxu0 0
    %4484 = vmatpush1.bf16.msra.mxu0 0
    %4485 = vmatprep.subr.bf16.mxu0 0
    %4486 = vmatpush1.bf16.msra.mxu0 0
    %4487 = vmatprep.mubr.bf16.mxu0 0
    %4488 = vmatmul.mubr.bf16.gmra.mrb[0].mxu0 %v4453
    %v4489 = vpop.f32.mrb[0].mxu0
    %v4490 = vadd.f32 0.0, %v4489
    %v4491 = vpop.f32.mrb[0].mxu0
    %v4492 = vpop.f32.mrb[0].mxu0
    %v4493 = vadd.f32 0.0, %v4492
    %v4494 = vpop.f32.mrb[0].mxu0
    %4495 = vdwg.mxu0
    %4496 = vrot.lane.b32.xlu0 %v4255, 120
    %v4497 = vpop.permute.xlu0 %4496
    %4498 = vrot.lane.b32.xlu0 %v4255, 88
    %v4499 = vpop.permute.xlu0 %4498
    %v4501 = vsel %vm254, %v4497, 0
    %v4504 = vsel %vm254, %v4499, 0
    %4506 = vmatprep.subr.bf16.mxu0 0
    %4507 = vmatpush1.bf16.xpose.msra.mxu0 %v4504
    %4508 = vmatprep.subr.bf16.mxu0 0
    %4509 = vmatpush1.bf16.xpose.msra.mxu0 0
    %4510 = vmatprep.subr.bf16.mxu0 0
    %4511 = vmatpush1.bf16.xpose.msra.mxu0 0
    %4512 = vmatprep.subr.bf16.mxu0 0
    %4513 = vmatpush1.bf16.xpose.msra.mxu0 0
    %4514 = vmatprep.subr.bf16.mxu0 0
    %4515 = vmatpush1.bf16.xpose.msra.mxu0 0
    %4516 = vmatprep.subr.bf16.mxu0 0
    %4517 = vmatpush1.bf16.xpose.msra.mxu0 0
    %4518 = vmatprep.subr.bf16.mxu0 0
    %4519 = vmatpush1.bf16.xpose.msra.mxu0 0
    %4520 = vmatprep.subr.bf16.mxu0 0
    %4521 = vmatpush1.bf16.xpose.msra.mxu0 0
    %4522 = vmatprep.subr.bf16.mxu0 0
    %4523 = vmatpush1.bf16.xpose.msra.mxu0 0
    %4524 = vmatprep.subr.bf16.mxu0 0
    %4525 = vmatpush1.bf16.xpose.msra.mxu0 0
    %4526 = vmatprep.subr.bf16.mxu0 0
    %4527 = vmatpush1.bf16.xpose.msra.mxu0 0
    %4528 = vmatprep.subr.bf16.mxu0 0
    %4529 = vmatpush1.bf16.xpose.msra.mxu0 0
    %4530 = vmatprep.subr.bf16.mxu0 0
    %4531 = vmatpush1.bf16.xpose.msra.mxu0 0
    %4532 = vmatprep.subr.bf16.mxu0 0
    %4533 = vmatpush1.bf16.xpose.msra.mxu0 0
    %4534 = vmatprep.subr.bf16.mxu0 0
    %4535 = vmatpush1.bf16.xpose.msra.mxu0 0
    %4536 = vmatprep.subr.bf16.mxu0 0
    %4537 = vmatpush1.bf16.xpose.msra.mxu0 0
    %4538 = vmatprep.mubr.bf16.mxu0 0
    %4539 = vmatmul.mubr.bf16.gmra.mrb[0].mxu0 %v4501
    %v4540 = vpop.f32.mrb[0].mxu0
    %v4541 = vadd.f32 %v113, %v4540
    %v4542 = vpop.f32.mrb[0].mxu0
    %v4543 = vpop.f32.mrb[0].mxu0
    %v4544 = vadd.f32 %v114, %v4543
    %v4545 = vpop.f32.mrb[0].mxu0
    %4546 = vdwg.mxu0
    %v4547 = vsel %vm302, %v4541, -inf
    %4548 = vmax.xlane.f32.xlu0 %v4547
    %v4549 = vpop.xlane.xlu0 %4548
    %v4550 = vsel %vm302, %v4544, -inf
    %4551 = vmax.xlane.f32.xlu0 %v4550
    %v4552 = vpop.xlane.xlu0 %4551
    %v4553 = vsub.f32 %v4541, %v4549
    %v4554 = vsub.f32 %v4544, %v4552
    %v4555 = vmul.f32 %v4553, 1.442695
    %v4556 = vpow.pop %v4555
    %v4557 = vmul.f32 %v4554, 1.442695
    %v4558 = vpow.pop %v4557
    %v4559 = vsel %vm302, %v4556, 0.0
    %4560 = vadd.xlane.f32.xlu0 %v4559
    %v4561 = vpop.xlane.xlu0 %4560
    %v4562 = vsel %vm302, %v4558, 0.0
    %4563 = vadd.xlane.f32.xlu0 %v4562
    %v4564 = vpop.xlane.xlu0 %4563
    %v4565 = vrcp.pop %v4561
    %v4566 = vmul.f32 %v4556, %v4565
    %v4567 = vrcp.pop %v4564
    %v4568 = vmul.f32 %v4558, %v4567
    %v4569 = vpack.c.bf16 %v4568, %v4566
    %4570 = vrot.lane.b32.xlu0 %v4256, 120
    %v4571 = vpop.permute.xlu0 %4570
    %v4574 = vsel %vm302, %v4569, 0
    %4576 = vmatprep.subr.bf16.mxu0 0
    %4577 = vmatpush1.bf16.msra.mxu0 %v4571
    %4578 = vmatprep.subr.bf16.mxu0 0
    %4579 = vmatpush1.bf16.msra.mxu0 0
    %4580 = vmatprep.subr.bf16.mxu0 0
    %4581 = vmatpush1.bf16.msra.mxu0 0
    %4582 = vmatprep.subr.bf16.mxu0 0
    %4583 = vmatpush1.bf16.msra.mxu0 0
    %4584 = vmatprep.subr.bf16.mxu0 0
    %4585 = vmatpush1.bf16.msra.mxu0 0
    %4586 = vmatprep.subr.bf16.mxu0 0
    %4587 = vmatpush1.bf16.msra.mxu0 0
    %4588 = vmatprep.subr.bf16.mxu0 0
    %4589 = vmatpush1.bf16.msra.mxu0 0
    %4590 = vmatprep.subr.bf16.mxu0 0
    %4591 = vmatpush1.bf16.msra.mxu0 0
    %4592 = vmatprep.subr.bf16.mxu0 0
    %4593 = vmatpush1.bf16.msra.mxu0 0
    %4594 = vmatprep.subr.bf16.mxu0 0
    %4595 = vmatpush1.bf16.msra.mxu0 0
    %4596 = vmatprep.subr.bf16.mxu0 0
    %4597 = vmatpush1.bf16.msra.mxu0 0
    %4598 = vmatprep.subr.bf16.mxu0 0
    %4599 = vmatpush1.bf16.msra.mxu0 0
    %4600 = vmatprep.subr.bf16.mxu0 0
    %4601 = vmatpush1.bf16.msra.mxu0 0
    %4602 = vmatprep.subr.bf16.mxu0 0
    %4603 = vmatpush1.bf16.msra.mxu0 0
    %4604 = vmatprep.subr.bf16.mxu0 0
    %4605 = vmatpush1.bf16.msra.mxu0 0
    %4606 = vmatprep.subr.bf16.mxu0 0
    %4607 = vmatpush1.bf16.msra.mxu0 0
    %4608 = vmatprep.mubr.bf16.mxu0 0
    %4609 = vmatmul.mubr.bf16.gmra.mrb[0].mxu0 %v4574
    %v4610 = vpop.f32.mrb[0].mxu0
    %v4611 = vadd.f32 0.0, %v4610
    %v4612 = vpop.f32.mrb[0].mxu0
    %v4613 = vpop.f32.mrb[0].mxu0
    %v4614 = vadd.f32 0.0, %v4613
    %v4615 = vpop.f32.mrb[0].mxu0
    %4616 = vdwg.mxu0
    %4617 = vrot.lane.b32.xlu0 %v4255, 116
    %v4618 = vpop.permute.xlu0 %4617
    %4619 = vrot.lane.b32.xlu0 %v4255, 84
    %v4620 = vpop.permute.xlu0 %4619
    %v4622 = vsel %vm254, %v4618, 0
    %v4625 = vsel %vm254, %v4620, 0
    %4627 = vmatprep.subr.bf16.mxu0 0
    %4628 = vmatpush1.bf16.xpose.msra.mxu0 %v4625
    %4629 = vmatprep.subr.bf16.mxu0 0
    %4630 = vmatpush1.bf16.xpose.msra.mxu0 0
    %4631 = vmatprep.subr.bf16.mxu0 0
    %4632 = vmatpush1.bf16.xpose.msra.mxu0 0
    %4633 = vmatprep.subr.bf16.mxu0 0
    %4634 = vmatpush1.bf16.xpose.msra.mxu0 0
    %4635 = vmatprep.subr.bf16.mxu0 0
    %4636 = vmatpush1.bf16.xpose.msra.mxu0 0
    %4637 = vmatprep.subr.bf16.mxu0 0
    %4638 = vmatpush1.bf16.xpose.msra.mxu0 0
    %4639 = vmatprep.subr.bf16.mxu0 0
    %4640 = vmatpush1.bf16.xpose.msra.mxu0 0
    %4641 = vmatprep.subr.bf16.mxu0 0
    %4642 = vmatpush1.bf16.xpose.msra.mxu0 0
    %4643 = vmatprep.subr.bf16.mxu0 0
    %4644 = vmatpush1.bf16.xpose.msra.mxu0 0
    %4645 = vmatprep.subr.bf16.mxu0 0
    %4646 = vmatpush1.bf16.xpose.msra.mxu0 0
    %4647 = vmatprep.subr.bf16.mxu0 0
    %4648 = vmatpush1.bf16.xpose.msra.mxu0 0
    %4649 = vmatprep.subr.bf16.mxu0 0
    %4650 = vmatpush1.bf16.xpose.msra.mxu0 0
    %4651 = vmatprep.subr.bf16.mxu0 0
    %4652 = vmatpush1.bf16.xpose.msra.mxu0 0
    %4653 = vmatprep.subr.bf16.mxu0 0
    %4654 = vmatpush1.bf16.xpose.msra.mxu0 0
    %4655 = vmatprep.subr.bf16.mxu0 0
    %4656 = vmatpush1.bf16.xpose.msra.mxu0 0
    %4657 = vmatprep.subr.bf16.mxu0 0
    %4658 = vmatpush1.bf16.xpose.msra.mxu0 0
    %4659 = vmatprep.mubr.bf16.mxu0 0
    %4660 = vmatmul.mubr.bf16.gmra.mrb[0].mxu0 %v4622
    %v4661 = vpop.f32.mrb[0].mxu0
    %v4662 = vadd.f32 %v113, %v4661
    %v4663 = vpop.f32.mrb[0].mxu0
    %v4664 = vpop.f32.mrb[0].mxu0
    %v4665 = vadd.f32 %v114, %v4664
    %v4666 = vpop.f32.mrb[0].mxu0
    %4667 = vdwg.mxu0
    %v4668 = vsel %vm302, %v4662, -inf
    %4669 = vmax.xlane.f32.xlu0 %v4668
    %v4670 = vpop.xlane.xlu0 %4669
    %v4671 = vsel %vm302, %v4665, -inf
    %4672 = vmax.xlane.f32.xlu0 %v4671
    %v4673 = vpop.xlane.xlu0 %4672
    %v4674 = vsub.f32 %v4662, %v4670
    %v4675 = vsub.f32 %v4665, %v4673
    %v4676 = vmul.f32 %v4674, 1.442695
    %v4677 = vpow.pop %v4676
    %v4678 = vmul.f32 %v4675, 1.442695
    %v4679 = vpow.pop %v4678
    %v4680 = vsel %vm302, %v4677, 0.0
    %4681 = vadd.xlane.f32.xlu0 %v4680
    %v4682 = vpop.xlane.xlu0 %4681
    %v4683 = vsel %vm302, %v4679, 0.0
    %4684 = vadd.xlane.f32.xlu0 %v4683
    %v4685 = vpop.xlane.xlu0 %4684
    %v4686 = vrcp.pop %v4682
    %v4687 = vmul.f32 %v4677, %v4686
    %v4688 = vrcp.pop %v4685
    %v4689 = vmul.f32 %v4679, %v4688
    %v4690 = vpack.c.bf16 %v4689, %v4687
    %4691 = vrot.lane.b32.xlu0 %v4256, 116
    %v4692 = vpop.permute.xlu0 %4691
    %v4695 = vsel %vm302, %v4690, 0
    %4697 = vmatprep.subr.bf16.mxu0 0
    %4698 = vmatpush1.bf16.msra.mxu0 %v4692
    %4699 = vmatprep.subr.bf16.mxu0 0
    %4700 = vmatpush1.bf16.msra.mxu0 0
    %4701 = vmatprep.subr.bf16.mxu0 0
    %4702 = vmatpush1.bf16.msra.mxu0 0
    %4703 = vmatprep.subr.bf16.mxu0 0
    %4704 = vmatpush1.bf16.msra.mxu0 0
    %4705 = vmatprep.subr.bf16.mxu0 0
    %4706 = vmatpush1.bf16.msra.mxu0 0
    %4707 = vmatprep.subr.bf16.mxu0 0
    %4708 = vmatpush1.bf16.msra.mxu0 0
    %4709 = vmatprep.subr.bf16.mxu0 0
    %4710 = vmatpush1.bf16.msra.mxu0 0
    %4711 = vmatprep.subr.bf16.mxu0 0
    %4712 = vmatpush1.bf16.msra.mxu0 0
    %4713 = vmatprep.subr.bf16.mxu0 0
    %4714 = vmatpush1.bf16.msra.mxu0 0
    %4715 = vmatprep.subr.bf16.mxu0 0
    %4716 = vmatpush1.bf16.msra.mxu0 0
    %4717 = vmatprep.subr.bf16.mxu0 0
    %4718 = vmatpush1.bf16.msra.mxu0 0
    %4719 = vmatprep.subr.bf16.mxu0 0
    %4720 = vmatpush1.bf16.msra.mxu0 0
    %4721 = vmatprep.subr.bf16.mxu0 0
    %4722 = vmatpush1.bf16.msra.mxu0 0
    %4723 = vmatprep.subr.bf16.mxu0 0
    %4724 = vmatpush1.bf16.msra.mxu0 0
    %4725 = vmatprep.subr.bf16.mxu0 0
    %4726 = vmatpush1.bf16.msra.mxu0 0
    %4727 = vmatprep.subr.bf16.mxu0 0
    %4728 = vmatpush1.bf16.msra.mxu0 0
    %4729 = vmatprep.mubr.bf16.mxu0 0
    %4730 = vmatmul.mubr.bf16.gmra.mrb[0].mxu0 %v4695
    %v4731 = vpop.f32.mrb[0].mxu0
    %v4732 = vadd.f32 0.0, %v4731
    %v4733 = vpop.f32.mrb[0].mxu0
    %v4734 = vpop.f32.mrb[0].mxu0
    %v4735 = vadd.f32 0.0, %v4734
    %v4736 = vpop.f32.mrb[0].mxu0
    %4737 = vdwg.mxu0
    %4738 = vrot.lane.b32.xlu0 %v4255, 112
    %v4739 = vpop.permute.xlu0 %4738
    %4740 = vrot.lane.b32.xlu0 %v4255, 80
    %v4741 = vpop.permute.xlu0 %4740
    %v4743 = vsel %vm254, %v4739, 0
    %v4746 = vsel %vm254, %v4741, 0
    %4748 = vmatprep.subr.bf16.mxu0 0
    %4749 = vmatpush1.bf16.xpose.msra.mxu0 %v4746
    %4750 = vmatprep.subr.bf16.mxu0 0
    %4751 = vmatpush1.bf16.xpose.msra.mxu0 0
    %4752 = vmatprep.subr.bf16.mxu0 0
    %4753 = vmatpush1.bf16.xpose.msra.mxu0 0
    %4754 = vmatprep.subr.bf16.mxu0 0
    %4755 = vmatpush1.bf16.xpose.msra.mxu0 0
    %4756 = vmatprep.subr.bf16.mxu0 0
    %4757 = vmatpush1.bf16.xpose.msra.mxu0 0
    %4758 = vmatprep.subr.bf16.mxu0 0
    %4759 = vmatpush1.bf16.xpose.msra.mxu0 0
    %4760 = vmatprep.subr.bf16.mxu0 0
    %4761 = vmatpush1.bf16.xpose.msra.mxu0 0
    %4762 = vmatprep.subr.bf16.mxu0 0
    %4763 = vmatpush1.bf16.xpose.msra.mxu0 0
    %4764 = vmatprep.subr.bf16.mxu0 0
    %4765 = vmatpush1.bf16.xpose.msra.mxu0 0
    %4766 = vmatprep.subr.bf16.mxu0 0
    %4767 = vmatpush1.bf16.xpose.msra.mxu0 0
    %4768 = vmatprep.subr.bf16.mxu0 0
    %4769 = vmatpush1.bf16.xpose.msra.mxu0 0
    %4770 = vmatprep.subr.bf16.mxu0 0
    %4771 = vmatpush1.bf16.xpose.msra.mxu0 0
    %4772 = vmatprep.subr.bf16.mxu0 0
    %4773 = vmatpush1.bf16.xpose.msra.mxu0 0
    %4774 = vmatprep.subr.bf16.mxu0 0
    %4775 = vmatpush1.bf16.xpose.msra.mxu0 0
    %4776 = vmatprep.subr.bf16.mxu0 0
    %4777 = vmatpush1.bf16.xpose.msra.mxu0 0
    %4778 = vmatprep.subr.bf16.mxu0 0
    %4779 = vmatpush1.bf16.xpose.msra.mxu0 0
    %4780 = vmatprep.mubr.bf16.mxu0 0
    %4781 = vmatmul.mubr.bf16.gmra.mrb[0].mxu0 %v4743
    %v4782 = vpop.f32.mrb[0].mxu0
    %v4783 = vadd.f32 %v113, %v4782
    %v4784 = vpop.f32.mrb[0].mxu0
    %v4785 = vpop.f32.mrb[0].mxu0
    %v4786 = vadd.f32 %v114, %v4785
    %v4787 = vpop.f32.mrb[0].mxu0
    %4788 = vdwg.mxu0
    %v4789 = vsel %vm302, %v4783, -inf
    %4790 = vmax.xlane.f32.xlu0 %v4789
    %v4791 = vpop.xlane.xlu0 %4790
    %v4792 = vsel %vm302, %v4786, -inf
    %4793 = vmax.xlane.f32.xlu0 %v4792
    %v4794 = vpop.xlane.xlu0 %4793
    %v4795 = vsub.f32 %v4783, %v4791
    %v4796 = vsub.f32 %v4786, %v4794
    %v4797 = vmul.f32 %v4795, 1.442695
    %v4798 = vpow.pop %v4797
    %v4799 = vmul.f32 %v4796, 1.442695
    %v4800 = vpow.pop %v4799
    %v4801 = vsel %vm302, %v4798, 0.0
    %4802 = vadd.xlane.f32.xlu0 %v4801
    %v4803 = vpop.xlane.xlu0 %4802
    %v4804 = vsel %vm302, %v4800, 0.0
    %4805 = vadd.xlane.f32.xlu0 %v4804
    %v4806 = vpop.xlane.xlu0 %4805
    %v4807 = vrcp.pop %v4803
    %v4808 = vmul.f32 %v4798, %v4807
    %v4809 = vrcp.pop %v4806
    %v4810 = vmul.f32 %v4800, %v4809
    %v4811 = vpack.c.bf16 %v4810, %v4808
    %4812 = vrot.lane.b32.xlu0 %v4256, 112
    %v4813 = vpop.permute.xlu0 %4812
    %v4816 = vsel %vm302, %v4811, 0
    %4818 = vmatprep.subr.bf16.mxu0 0
    %4819 = vmatpush1.bf16.msra.mxu0 %v4813
    %4820 = vmatprep.subr.bf16.mxu0 0
    %4821 = vmatpush1.bf16.msra.mxu0 0
    %4822 = vmatprep.subr.bf16.mxu0 0
    %4823 = vmatpush1.bf16.msra.mxu0 0
    %4824 = vmatprep.subr.bf16.mxu0 0
    %4825 = vmatpush1.bf16.msra.mxu0 0
    %4826 = vmatprep.subr.bf16.mxu0 0
    %4827 = vmatpush1.bf16.msra.mxu0 0
    %4828 = vmatprep.subr.bf16.mxu0 0
    %4829 = vmatpush1.bf16.msra.mxu0 0
    %4830 = vmatprep.subr.bf16.mxu0 0
    %4831 = vmatpush1.bf16.msra.mxu0 0
    %4832 = vmatprep.subr.bf16.mxu0 0
    %4833 = vmatpush1.bf16.msra.mxu0 0
    %4834 = vmatprep.subr.bf16.mxu0 0
    %4835 = vmatpush1.bf16.msra.mxu0 0
    %4836 = vmatprep.subr.bf16.mxu0 0
    %4837 = vmatpush1.bf16.msra.mxu0 0
    %4838 = vmatprep.subr.bf16.mxu0 0
    %4839 = vmatpush1.bf16.msra.mxu0 0
    %4840 = vmatprep.subr.bf16.mxu0 0
    %4841 = vmatpush1.bf16.msra.mxu0 0
    %4842 = vmatprep.subr.bf16.mxu0 0
    %4843 = vmatpush1.bf16.msra.mxu0 0
    %4844 = vmatprep.subr.bf16.mxu0 0
    %4845 = vmatpush1.bf16.msra.mxu0 0
    %4846 = vmatprep.subr.bf16.mxu0 0
    %4847 = vmatpush1.bf16.msra.mxu0 0
    %4848 = vmatprep.subr.bf16.mxu0 0
    %4849 = vmatpush1.bf16.msra.mxu0 0
    %4850 = vmatprep.mubr.bf16.mxu0 0
    %4851 = vmatmul.mubr.bf16.gmra.mrb[0].mxu0 %v4816
    %v4852 = vpop.f32.mrb[0].mxu0
    %v4853 = vadd.f32 0.0, %v4852
    %v4854 = vpop.f32.mrb[0].mxu0
    %v4855 = vpop.f32.mrb[0].mxu0
    %v4856 = vadd.f32 0.0, %v4855
    %v4857 = vpop.f32.mrb[0].mxu0
    %4858 = vdwg.mxu0
    %4859 = vrot.lane.b32.xlu0 %v4255, 108
    %v4860 = vpop.permute.xlu0 %4859
    %4861 = vrot.lane.b32.xlu0 %v4255, 76
    %v4862 = vpop.permute.xlu0 %4861
    %v4864 = vsel %vm254, %v4860, 0
    %v4867 = vsel %vm254, %v4862, 0
    %4869 = vmatprep.subr.bf16.mxu0 0
    %4870 = vmatpush1.bf16.xpose.msra.mxu0 %v4867
    %4871 = vmatprep.subr.bf16.mxu0 0
    %4872 = vmatpush1.bf16.xpose.msra.mxu0 0
    %4873 = vmatprep.subr.bf16.mxu0 0
    %4874 = vmatpush1.bf16.xpose.msra.mxu0 0
    %4875 = vmatprep.subr.bf16.mxu0 0
    %4876 = vmatpush1.bf16.xpose.msra.mxu0 0
    %4877 = vmatprep.subr.bf16.mxu0 0
    %4878 = vmatpush1.bf16.xpose.msra.mxu0 0
    %4879 = vmatprep.subr.bf16.mxu0 0
    %4880 = vmatpush1.bf16.xpose.msra.mxu0 0
    %4881 = vmatprep.subr.bf16.mxu0 0
    %4882 = vmatpush1.bf16.xpose.msra.mxu0 0
    %4883 = vmatprep.subr.bf16.mxu0 0
    %4884 = vmatpush1.bf16.xpose.msra.mxu0 0
    %4885 = vmatprep.subr.bf16.mxu0 0
    %4886 = vmatpush1.bf16.xpose.msra.mxu0 0
    %4887 = vmatprep.subr.bf16.mxu0 0
    %4888 = vmatpush1.bf16.xpose.msra.mxu0 0
    %4889 = vmatprep.subr.bf16.mxu0 0
    %4890 = vmatpush1.bf16.xpose.msra.mxu0 0
    %4891 = vmatprep.subr.bf16.mxu0 0
    %4892 = vmatpush1.bf16.xpose.msra.mxu0 0
    %4893 = vmatprep.subr.bf16.mxu0 0
    %4894 = vmatpush1.bf16.xpose.msra.mxu0 0
    %4895 = vmatprep.subr.bf16.mxu0 0
    %4896 = vmatpush1.bf16.xpose.msra.mxu0 0
    %4897 = vmatprep.subr.bf16.mxu0 0
    %4898 = vmatpush1.bf16.xpose.msra.mxu0 0
    %4899 = vmatprep.subr.bf16.mxu0 0
    %4900 = vmatpush1.bf16.xpose.msra.mxu0 0
    %4901 = vmatprep.mubr.bf16.mxu0 0
    %4902 = vmatmul.mubr.bf16.gmra.mrb[0].mxu0 %v4864
    %v4903 = vpop.f32.mrb[0].mxu0
    %v4904 = vadd.f32 %v113, %v4903
    %v4905 = vpop.f32.mrb[0].mxu0
    %v4906 = vpop.f32.mrb[0].mxu0
    %v4907 = vadd.f32 %v114, %v4906
    %v4908 = vpop.f32.mrb[0].mxu0
    %4909 = vdwg.mxu0
    %v4910 = vsel %vm302, %v4904, -inf
    %4911 = vmax.xlane.f32.xlu0 %v4910
    %v4912 = vpop.xlane.xlu0 %4911
    %v4913 = vsel %vm302, %v4907, -inf
    %4914 = vmax.xlane.f32.xlu0 %v4913
    %v4915 = vpop.xlane.xlu0 %4914
    %v4916 = vsub.f32 %v4904, %v4912
    %v4917 = vsub.f32 %v4907, %v4915
    %v4918 = vmul.f32 %v4916, 1.442695
    %v4919 = vpow.pop %v4918
    %v4920 = vmul.f32 %v4917, 1.442695
    %v4921 = vpow.pop %v4920
    %v4922 = vsel %vm302, %v4919, 0.0
    %4923 = vadd.xlane.f32.xlu0 %v4922
    %v4924 = vpop.xlane.xlu0 %4923
    %v4925 = vsel %vm302, %v4921, 0.0
    %4926 = vadd.xlane.f32.xlu0 %v4925
    %v4927 = vpop.xlane.xlu0 %4926
    %v4928 = vrcp.pop %v4924
    %v4929 = vmul.f32 %v4919, %v4928
    %v4930 = vrcp.pop %v4927
    %v4931 = vmul.f32 %v4921, %v4930
    %v4932 = vpack.c.bf16 %v4931, %v4929
    %4933 = vrot.lane.b32.xlu0 %v4256, 108
    %v4934 = vpop.permute.xlu0 %4933
    %v4937 = vsel %vm302, %v4932, 0
    %4939 = vmatprep.subr.bf16.mxu0 0
    %4940 = vmatpush1.bf16.msra.mxu0 %v4934
    %4941 = vmatprep.subr.bf16.mxu0 0
    %4942 = vmatpush1.bf16.msra.mxu0 0
    %4943 = vmatprep.subr.bf16.mxu0 0
    %4944 = vmatpush1.bf16.msra.mxu0 0
    %4945 = vmatprep.subr.bf16.mxu0 0
    %4946 = vmatpush1.bf16.msra.mxu0 0
    %4947 = vmatprep.subr.bf16.mxu0 0
    %4948 = vmatpush1.bf16.msra.mxu0 0
    %4949 = vmatprep.subr.bf16.mxu0 0
    %4950 = vmatpush1.bf16.msra.mxu0 0
    %4951 = vmatprep.subr.bf16.mxu0 0
    %4952 = vmatpush1.bf16.msra.mxu0 0
    %4953 = vmatprep.subr.bf16.mxu0 0
    %4954 = vmatpush1.bf16.msra.mxu0 0
    %4955 = vmatprep.subr.bf16.mxu0 0
    %4956 = vmatpush1.bf16.msra.mxu0 0
    %4957 = vmatprep.subr.bf16.mxu0 0
    %4958 = vmatpush1.bf16.msra.mxu0 0
    %4959 = vmatprep.subr.bf16.mxu0 0
    %4960 = vmatpush1.bf16.msra.mxu0 0
    %4961 = vmatprep.subr.bf16.mxu0 0
    %4962 = vmatpush1.bf16.msra.mxu0 0
    %4963 = vmatprep.subr.bf16.mxu0 0
    %4964 = vmatpush1.bf16.msra.mxu0 0
    %4965 = vmatprep.subr.bf16.mxu0 0
    %4966 = vmatpush1.bf16.msra.mxu0 0
    %4967 = vmatprep.subr.bf16.mxu0 0
    %4968 = vmatpush1.bf16.msra.mxu0 0
    %4969 = vmatprep.subr.bf16.mxu0 0
    %4970 = vmatpush1.bf16.msra.mxu0 0
    %4971 = vmatprep.mubr.bf16.mxu0 0
    %4972 = vmatmul.mubr.bf16.gmra.mrb[0].mxu0 %v4937
    %v4973 = vpop.f32.mrb[0].mxu0
    %v4974 = vadd.f32 0.0, %v4973
    %v4975 = vpop.f32.mrb[0].mxu0
    %v4976 = vpop.f32.mrb[0].mxu0
    %v4977 = vadd.f32 0.0, %v4976
    %v4978 = vpop.f32.mrb[0].mxu0
    %4979 = vdwg.mxu0
    %4980 = vrot.lane.b32.xlu0 %v4255, 104
    %v4981 = vpop.permute.xlu0 %4980
    %4982 = vrot.lane.b32.xlu0 %v4255, 72
    %v4983 = vpop.permute.xlu0 %4982
    %v4985 = vsel %vm254, %v4981, 0
    %v4988 = vsel %vm254, %v4983, 0
    %4990 = vmatprep.subr.bf16.mxu0 0
    %4991 = vmatpush1.bf16.xpose.msra.mxu0 %v4988
    %4992 = vmatprep.subr.bf16.mxu0 0
    %4993 = vmatpush1.bf16.xpose.msra.mxu0 0
    %4994 = vmatprep.subr.bf16.mxu0 0
    %4995 = vmatpush1.bf16.xpose.msra.mxu0 0
    %4996 = vmatprep.subr.bf16.mxu0 0
    %4997 = vmatpush1.bf16.xpose.msra.mxu0 0
    %4998 = vmatprep.subr.bf16.mxu0 0
    %4999 = vmatpush1.bf16.xpose.msra.mxu0 0
    %5000 = vmatprep.subr.bf16.mxu0 0
    %5001 = vmatpush1.bf16.xpose.msra.mxu0 0
    %5002 = vmatprep.subr.bf16.mxu0 0
    %5003 = vmatpush1.bf16.xpose.msra.mxu0 0
    %5004 = vmatprep.subr.bf16.mxu0 0
    %5005 = vmatpush1.bf16.xpose.msra.mxu0 0
    %5006 = vmatprep.subr.bf16.mxu0 0
    %5007 = vmatpush1.bf16.xpose.msra.mxu0 0
    %5008 = vmatprep.subr.bf16.mxu0 0
    %5009 = vmatpush1.bf16.xpose.msra.mxu0 0
    %5010 = vmatprep.subr.bf16.mxu0 0
    %5011 = vmatpush1.bf16.xpose.msra.mxu0 0
    %5012 = vmatprep.subr.bf16.mxu0 0
    %5013 = vmatpush1.bf16.xpose.msra.mxu0 0
    %5014 = vmatprep.subr.bf16.mxu0 0
    %5015 = vmatpush1.bf16.xpose.msra.mxu0 0
    %5016 = vmatprep.subr.bf16.mxu0 0
    %5017 = vmatpush1.bf16.xpose.msra.mxu0 0
    %5018 = vmatprep.subr.bf16.mxu0 0
    %5019 = vmatpush1.bf16.xpose.msra.mxu0 0
    %5020 = vmatprep.subr.bf16.mxu0 0
    %5021 = vmatpush1.bf16.xpose.msra.mxu0 0
    %5022 = vmatprep.mubr.bf16.mxu0 0
    %5023 = vmatmul.mubr.bf16.gmra.mrb[0].mxu0 %v4985
    %v5024 = vpop.f32.mrb[0].mxu0
    %v5025 = vadd.f32 %v113, %v5024
    %v5026 = vpop.f32.mrb[0].mxu0
    %v5027 = vpop.f32.mrb[0].mxu0
    %v5028 = vadd.f32 %v114, %v5027
    %v5029 = vpop.f32.mrb[0].mxu0
    %5030 = vdwg.mxu0
    %v5031 = vsel %vm302, %v5025, -inf
    %5032 = vmax.xlane.f32.xlu0 %v5031
    %v5033 = vpop.xlane.xlu0 %5032
    %v5034 = vsel %vm302, %v5028, -inf
    %5035 = vmax.xlane.f32.xlu0 %v5034
    %v5036 = vpop.xlane.xlu0 %5035
    %v5037 = vsub.f32 %v5025, %v5033
    %v5038 = vsub.f32 %v5028, %v5036
    %v5039 = vmul.f32 %v5037, 1.442695
    %v5040 = vpow.pop %v5039
    %v5041 = vmul.f32 %v5038, 1.442695
    %v5042 = vpow.pop %v5041
    %v5043 = vsel %vm302, %v5040, 0.0
    %5044 = vadd.xlane.f32.xlu0 %v5043
    %v5045 = vpop.xlane.xlu0 %5044
    %v5046 = vsel %vm302, %v5042, 0.0
    %5047 = vadd.xlane.f32.xlu0 %v5046
    %v5048 = vpop.xlane.xlu0 %5047
    %v5049 = vrcp.pop %v5045
    %v5050 = vmul.f32 %v5040, %v5049
    %v5051 = vrcp.pop %v5048
    %v5052 = vmul.f32 %v5042, %v5051
    %v5053 = vpack.c.bf16 %v5052, %v5050
    %5054 = vrot.lane.b32.xlu0 %v4256, 104
    %v5055 = vpop.permute.xlu0 %5054
    %v5058 = vsel %vm302, %v5053, 0
    %5060 = vmatprep.subr.bf16.mxu0 0
    %5061 = vmatpush1.bf16.msra.mxu0 %v5055
    %5062 = vmatprep.subr.bf16.mxu0 0
    %5063 = vmatpush1.bf16.msra.mxu0 0
    %5064 = vmatprep.subr.bf16.mxu0 0
    %5065 = vmatpush1.bf16.msra.mxu0 0
    %5066 = vmatprep.subr.bf16.mxu0 0
    %5067 = vmatpush1.bf16.msra.mxu0 0
    %5068 = vmatprep.subr.bf16.mxu0 0
    %5069 = vmatpush1.bf16.msra.mxu0 0
    %5070 = vmatprep.subr.bf16.mxu0 0
    %5071 = vmatpush1.bf16.msra.mxu0 0
    %5072 = vmatprep.subr.bf16.mxu0 0
    %5073 = vmatpush1.bf16.msra.mxu0 0
    %5074 = vmatprep.subr.bf16.mxu0 0
    %5075 = vmatpush1.bf16.msra.mxu0 0
    %5076 = vmatprep.subr.bf16.mxu0 0
    %5077 = vmatpush1.bf16.msra.mxu0 0
    %5078 = vmatprep.subr.bf16.mxu0 0
    %5079 = vmatpush1.bf16.msra.mxu0 0
    %5080 = vmatprep.subr.bf16.mxu0 0
    %5081 = vmatpush1.bf16.msra.mxu0 0
    %5082 = vmatprep.subr.bf16.mxu0 0
    %5083 = vmatpush1.bf16.msra.mxu0 0
    %5084 = vmatprep.subr.bf16.mxu0 0
    %5085 = vmatpush1.bf16.msra.mxu0 0
    %5086 = vmatprep.subr.bf16.mxu0 0
    %5087 = vmatpush1.bf16.msra.mxu0 0
    %5088 = vmatprep.subr.bf16.mxu0 0
    %5089 = vmatpush1.bf16.msra.mxu0 0
    %5090 = vmatprep.subr.bf16.mxu0 0
    %5091 = vmatpush1.bf16.msra.mxu0 0
    %5092 = vmatprep.mubr.bf16.mxu0 0
    %5093 = vmatmul.mubr.bf16.gmra.mrb[0].mxu0 %v5058
    %v5094 = vpop.f32.mrb[0].mxu0
    %v5095 = vadd.f32 0.0, %v5094
    %v5096 = vpop.f32.mrb[0].mxu0
    %v5097 = vpop.f32.mrb[0].mxu0
    %v5098 = vadd.f32 0.0, %v5097
    %v5099 = vpop.f32.mrb[0].mxu0
    %5100 = vdwg.mxu0
    %5101 = vrot.lane.b32.xlu0 %v4255, 100
    %v5102 = vpop.permute.xlu0 %5101
    %5103 = vrot.lane.b32.xlu0 %v4255, 68
    %v5104 = vpop.permute.xlu0 %5103
    %v5106 = vsel %vm254, %v5102, 0
    %v5109 = vsel %vm254, %v5104, 0
    %5111 = vmatprep.subr.bf16.mxu0 0
    %5112 = vmatpush1.bf16.xpose.msra.mxu0 %v5109
    %5113 = vmatprep.subr.bf16.mxu0 0
    %5114 = vmatpush1.bf16.xpose.msra.mxu0 0
    %5115 = vmatprep.subr.bf16.mxu0 0
    %5116 = vmatpush1.bf16.xpose.msra.mxu0 0
    %5117 = vmatprep.subr.bf16.mxu0 0
    %5118 = vmatpush1.bf16.xpose.msra.mxu0 0
    %5119 = vmatprep.subr.bf16.mxu0 0
    %5120 = vmatpush1.bf16.xpose.msra.mxu0 0
    %5121 = vmatprep.subr.bf16.mxu0 0
    %5122 = vmatpush1.bf16.xpose.msra.mxu0 0
    %5123 = vmatprep.subr.bf16.mxu0 0
    %5124 = vmatpush1.bf16.xpose.msra.mxu0 0
    %5125 = vmatprep.subr.bf16.mxu0 0
    %5126 = vmatpush1.bf16.xpose.msra.mxu0 0
    %5127 = vmatprep.subr.bf16.mxu0 0
    %5128 = vmatpush1.bf16.xpose.msra.mxu0 0
    %5129 = vmatprep.subr.bf16.mxu0 0
    %5130 = vmatpush1.bf16.xpose.msra.mxu0 0
    %5131 = vmatprep.subr.bf16.mxu0 0
    %5132 = vmatpush1.bf16.xpose.msra.mxu0 0
    %5133 = vmatprep.subr.bf16.mxu0 0
    %5134 = vmatpush1.bf16.xpose.msra.mxu0 0
    %5135 = vmatprep.subr.bf16.mxu0 0
    %5136 = vmatpush1.bf16.xpose.msra.mxu0 0
    %5137 = vmatprep.subr.bf16.mxu0 0
    %5138 = vmatpush1.bf16.xpose.msra.mxu0 0
    %5139 = vmatprep.subr.bf16.mxu0 0
    %5140 = vmatpush1.bf16.xpose.msra.mxu0 0
    %5141 = vmatprep.subr.bf16.mxu0 0
    %5142 = vmatpush1.bf16.xpose.msra.mxu0 0
    %5143 = vmatprep.mubr.bf16.mxu0 0
    %5144 = vmatmul.mubr.bf16.gmra.mrb[0].mxu0 %v5106
    %v5145 = vpop.f32.mrb[0].mxu0
    %v5146 = vadd.f32 %v113, %v5145
    %v5147 = vpop.f32.mrb[0].mxu0
    %v5148 = vpop.f32.mrb[0].mxu0
    %v5149 = vadd.f32 %v114, %v5148
    %v5150 = vpop.f32.mrb[0].mxu0
    %5151 = vdwg.mxu0
    %v5152 = vsel %vm302, %v5146, -inf
    %5153 = vmax.xlane.f32.xlu0 %v5152
    %v5154 = vpop.xlane.xlu0 %5153
    %v5155 = vsel %vm302, %v5149, -inf
    %5156 = vmax.xlane.f32.xlu0 %v5155
    %v5157 = vpop.xlane.xlu0 %5156
    %v5158 = vsub.f32 %v5146, %v5154
    %v5159 = vsub.f32 %v5149, %v5157
    %v5160 = vmul.f32 %v5158, 1.442695
    %v5161 = vpow.pop %v5160
    %v5162 = vmul.f32 %v5159, 1.442695
    %v5163 = vpow.pop %v5162
    %v5164 = vsel %vm302, %v5161, 0.0
    %5165 = vadd.xlane.f32.xlu0 %v5164
    %v5166 = vpop.xlane.xlu0 %5165
    %v5167 = vsel %vm302, %v5163, 0.0
    %5168 = vadd.xlane.f32.xlu0 %v5167
    %v5169 = vpop.xlane.xlu0 %5168
    %v5170 = vrcp.pop %v5166
    %v5171 = vmul.f32 %v5161, %v5170
    %v5172 = vrcp.pop %v5169
    %v5173 = vmul.f32 %v5163, %v5172
    %v5174 = vpack.c.bf16 %v5173, %v5171
    %5175 = vrot.lane.b32.xlu0 %v4256, 100
    %v5176 = vpop.permute.xlu0 %5175
    %v5179 = vsel %vm302, %v5174, 0
    %5181 = vmatprep.subr.bf16.mxu0 0
    %5182 = vmatpush1.bf16.msra.mxu0 %v5176
    %5183 = vmatprep.subr.bf16.mxu0 0
    %5184 = vmatpush1.bf16.msra.mxu0 0
    %5185 = vmatprep.subr.bf16.mxu0 0
    %5186 = vmatpush1.bf16.msra.mxu0 0
    %5187 = vmatprep.subr.bf16.mxu0 0
    %5188 = vmatpush1.bf16.msra.mxu0 0
    %5189 = vmatprep.subr.bf16.mxu0 0
    %5190 = vmatpush1.bf16.msra.mxu0 0
    %5191 = vmatprep.subr.bf16.mxu0 0
    %5192 = vmatpush1.bf16.msra.mxu0 0
    %5193 = vmatprep.subr.bf16.mxu0 0
    %5194 = vmatpush1.bf16.msra.mxu0 0
    %5195 = vmatprep.subr.bf16.mxu0 0
    %5196 = vmatpush1.bf16.msra.mxu0 0
    %5197 = vmatprep.subr.bf16.mxu0 0
    %5198 = vmatpush1.bf16.msra.mxu0 0
    %5199 = vmatprep.subr.bf16.mxu0 0
    %5200 = vmatpush1.bf16.msra.mxu0 0
    %5201 = vmatprep.subr.bf16.mxu0 0
    %5202 = vmatpush1.bf16.msra.mxu0 0
    %5203 = vmatprep.subr.bf16.mxu0 0
    %5204 = vmatpush1.bf16.msra.mxu0 0
    %5205 = vmatprep.subr.bf16.mxu0 0
    %5206 = vmatpush1.bf16.msra.mxu0 0
    %5207 = vmatprep.subr.bf16.mxu0 0
    %5208 = vmatpush1.bf16.msra.mxu0 0
    %5209 = vmatprep.subr.bf16.mxu0 0
    %5210 = vmatpush1.bf16.msra.mxu0 0
    %5211 = vmatprep.subr.bf16.mxu0 0
    %5212 = vmatpush1.bf16.msra.mxu0 0
    %5213 = vmatprep.mubr.bf16.mxu0 0
    %5214 = vmatmul.mubr.bf16.gmra.mrb[0].mxu0 %v5179
    %v5215 = vpop.f32.mrb[0].mxu0
    %v5216 = vadd.f32 0.0, %v5215
    %v5217 = vpop.f32.mrb[0].mxu0
    %v5218 = vpop.f32.mrb[0].mxu0
    %v5219 = vadd.f32 0.0, %v5218
    %v5220 = vpop.f32.mrb[0].mxu0
    %5221 = vdwg.mxu0
    %5224 = vrot.lane.b32.xlu0 %v4490, 4
    %v5225 = vpop.permute.xlu0 %5224
    %5226 = vrot.lane.b32.xlu0 %v4493, 4
    %v5227 = vpop.permute.xlu0 %5226
    %5232 = vrot.lane.b32.xlu0 %v4611, 8
    %v5233 = vpop.permute.xlu0 %5232
    %5234 = vrot.lane.b32.xlu0 %v4614, 8
    %v5235 = vpop.permute.xlu0 %5234
    %5240 = vrot.lane.b32.xlu0 %v4732, 12
    %v5241 = vpop.permute.xlu0 %5240
    %5242 = vrot.lane.b32.xlu0 %v4735, 12
    %v5243 = vpop.permute.xlu0 %5242
    %5248 = vrot.lane.b32.xlu0 %v4853, 16
    %v5249 = vpop.permute.xlu0 %5248
    %5250 = vrot.lane.b32.xlu0 %v4856, 16
    %v5251 = vpop.permute.xlu0 %5250
    %5256 = vrot.lane.b32.xlu0 %v4974, 20
    %v5257 = vpop.permute.xlu0 %5256
    %5258 = vrot.lane.b32.xlu0 %v4977, 20
    %v5259 = vpop.permute.xlu0 %5258
    %5264 = vrot.lane.b32.xlu0 %v5095, 24
    %v5265 = vpop.permute.xlu0 %5264
    %5266 = vrot.lane.b32.xlu0 %v5098, 24
    %v5267 = vpop.permute.xlu0 %5266
    %5272 = vrot.lane.b32.xlu0 %v5216, 28
    %v5273 = vpop.permute.xlu0 %5272
    %5274 = vrot.lane.b32.xlu0 %v5219, 28
    %v5275 = vpop.permute.xlu0 %5274
    %v5278 = vsel %vm254, %v4368, %v5225
    %v5279 = vsel %vm254, %v4371, %v5227
    %v5280 = vsel %vm1276, %v5278, %v5233
    %v5281 = vsel %vm1276, %v5279, %v5235
    %v5282 = vsel %vm1279, %v5280, %v5241
    %v5283 = vsel %vm1279, %v5281, %v5243
    %v5284 = vsel %vm302, %v5282, %v5249
    %v5285 = vsel %vm302, %v5283, %v5251
    %v5286 = vsel %vm1284, %v5284, %v5257
    %v5287 = vsel %vm1284, %v5285, %v5259
    %v5288 = vsel %vm1287, %v5286, %v5265
    %v5289 = vsel %vm1287, %v5287, %v5267
    %v5290 = vsel %vm1290, %v5288, %v5273
    %v5291 = vsel %vm1290, %v5289, %v5275
    %v5292 = vpack.c.bf16 %v5291, %v5290
    %v5294 = vlaneseq
    %v5295 = vshrl.u32 %v5294, 7
    %v5296 = vsub.s32 0, %v5295
    %v5297 = vrot.slane %v4137, %v5296
    %v5303 = vunpack.c.l.b16 %v4132
    %v5304 = vunpack.c.l.b16 %v4133
    %v5305 = vunpack.c.l.b16 %v4134
    %v5306 = vunpack.c.l.b16 %v4135
    %v5307 = vpack.c.b16 %v5304, %v5303
    %v5308 = vpack.c.b16 %v5306, %v5305
    %v5312 = vsel %vm150, %v5292, 0
    %5314 = vmatprep.subr.bf16.mxu0 0
    %5315 = vmatpush1.bf16.msra.mxu0 %v5307
    %5316 = vmatprep.subr.bf16.mxu0 0
    %5317 = vmatpush1.bf16.msra.mxu0 %v5308
    %5318 = vmatprep.subr.bf16.mxu0 0
    %5319 = vmatpush1.bf16.msra.mxu0 0
    %5320 = vmatprep.subr.bf16.mxu0 0
    %5321 = vmatpush1.bf16.msra.mxu0 0
    %5322 = vmatprep.subr.bf16.mxu0 0
    %5323 = vmatpush1.bf16.msra.mxu0 0
    %5324 = vmatprep.subr.bf16.mxu0 0
    %5325 = vmatpush1.bf16.msra.mxu0 0
    %5326 = vmatprep.subr.bf16.mxu0 0
    %5327 = vmatpush1.bf16.msra.mxu0 0
    %5328 = vmatprep.subr.bf16.mxu0 0
    %5329 = vmatpush1.bf16.msra.mxu0 0
    %5330 = vmatprep.subr.bf16.mxu0 0
    %5331 = vmatpush1.bf16.msra.mxu0 0
    %5332 = vmatprep.subr.bf16.mxu0 0
    %5333 = vmatpush1.bf16.msra.mxu0 0
    %5334 = vmatprep.subr.bf16.mxu0 0
    %5335 = vmatpush1.bf16.msra.mxu0 0
    %5336 = vmatprep.subr.bf16.mxu0 0
    %5337 = vmatpush1.bf16.msra.mxu0 0
    %5338 = vmatprep.subr.bf16.mxu0 0
    %5339 = vmatpush1.bf16.msra.mxu0 0
    %5340 = vmatprep.subr.bf16.mxu0 0
    %5341 = vmatpush1.bf16.msra.mxu0 0
    %5342 = vmatprep.subr.bf16.mxu0 0
    %5343 = vmatpush1.bf16.msra.mxu0 0
    %5344 = vmatprep.subr.bf16.mxu0 0
    %5345 = vmatpush1.bf16.msra.mxu0 0
    %5346 = vmatprep.mubr.bf16.mxu0 0
    %5347 = vmatmul.mubr.bf16.gmra.mrb[0].mxu0 %v5312
    %v5348 = vpop.f32.mrb[0].mxu0
    %v5349 = vadd.f32 %v5297, %v5348
    %v5350 = vpop.f32.mrb[0].mxu0
    %v5351 = vpop.f32.mrb[0].mxu0
    %v5352 = vadd.f32 %v5297, %v5351
    %v5353 = vpop.f32.mrb[0].mxu0
    %5354 = vdwg.mxu0
    %v5355 = vadd.f32 %v4076, %v5349
    %v5356 = vadd.f32 %v4077, %v5352
    %s5357 = scalar_lea.vmem %s18, 3
    %v5358 = vld [vmem:[%s5357] sm:$0x1]
    %s5359 = scalar_lea.vmem %s19, 3
    %v5360 = vld [vmem:[%s5359] sm:$0x1]
    %v5361 = vsel %vm150, %v5355, 0.0
    %5362 = vadd.xlane.f32.xlu0 %v5361
    %v5363 = vpop.xlane.xlu0 %5362
    %v5364 = vsel %vm150, %v5356, 0.0
    %5365 = vadd.xlane.f32.xlu0 %v5364
    %v5366 = vpop.xlane.xlu0 %5365
    %v5367 = vmul.f32 %v5363, %v1366
    %v5368 = vmul.f32 %v5366, %v1366
    %v5369 = vsub.f32 %v5355, %v5367
    %v5370 = vsub.f32 %v5356, %v5368
    %v5371 = vmul.f32 %v5369, %v5369
    %v5372 = vmul.f32 %v5370, %v5370
    %v5373 = vsel %vm150, %v5371, 0.0
    %5374 = vadd.xlane.f32.xlu0 %v5373
    %v5375 = vpop.xlane.xlu0 %5374
    %v5376 = vsel %vm150, %v5372, 0.0
    %5377 = vadd.xlane.f32.xlu0 %v5376
    %v5378 = vpop.xlane.xlu0 %5377
    %v5379 = vmul.f32 %v5375, %v1366
    %v5380 = vmul.f32 %v5378, %v1366
    %v5381 = vadd.f32 %v5379, 1e-05
    %v5382 = vadd.f32 %v5380, 1e-05
    %v5383 = vrsqrt.pop %v5381
    %v5384 = vrsqrt.pop %v5382
    %v5385 = vmul.f32 %v5369, %v5383
    %v5386 = vmul.f32 %v5370, %v5384
    %v5388 = vlaneseq
    %v5389 = vshrl.u32 %v5388, 7
    %v5390 = vsub.s32 0, %v5389
    %v5391 = vrot.slane %v5358, %v5390
    %v5393 = vmul.f32 %v5385, %v5391
    %v5394 = vmul.f32 %v5386, %v5391
    %v5396 = vlaneseq
    %v5397 = vshrl.u32 %v5396, 7
    %v5398 = vsub.s32 0, %v5397
    %v5399 = vrot.slane %v5360, %v5398
    %v5401 = vadd.f32 %v5393, %v5399
    %v5402 = vadd.f32 %v5394, %v5399
    %v5403 = vadd.f32 %v5401, %v103
    %v5404 = vadd.f32 %v5402, %v104
    %s5405 = scalar_lea.vmem %s10, 16
    %v5406 = vld [vmem:[%s5405] sm:$0xf]
    %v5407 = vld [vmem:[%s5405 + $0x4] sm:$0xf]
    %v5408 = vld [vmem:[%s5405 + $0x8] sm:$0xf]
    %v5409 = vld [vmem:[%s5405 + $0xc] sm:$0xf]
    %s5410 = scalar_lea.vmem %s11, 1
    %v5411 = vld [vmem:[%s5410] sm:$0x1]
    %s5412 = scalar_lea.vmem %s12, 16
    %v5413 = vld [vmem:[%s5412] sm:$0xf]
    %v5414 = vld [vmem:[%s5412 + $0x4] sm:$0xf]
    %v5415 = vld [vmem:[%s5412 + $0x8] sm:$0xf]
    %v5416 = vld [vmem:[%s5412 + $0xc] sm:$0xf]
    %s5417 = scalar_lea.vmem %s13, 1
    %v5418 = vld [vmem:[%s5417] sm:$0x1]
    %v5419 = vpack.c.bf16 %v5404, %v5403
    %v5421 = vlaneseq
    %v5422 = vshrl.u32 %v5421, 7
    %v5423 = vsub.s32 0, %v5422
    %v5424 = vrot.slane %v5411, %v5423
    %v5430 = vunpack.c.l.b16 %v5406
    %v5431 = vunpack.c.l.b16 %v5407
    %v5432 = vunpack.c.l.b16 %v5408
    %v5433 = vunpack.c.l.b16 %v5409
    %v5434 = vpack.c.b16 %v5431, %v5430
    %v5435 = vpack.c.b16 %v5433, %v5432
    %v5439 = vsel %vm150, %v5419, 0
    %5441 = vmatprep.subr.bf16.mxu0 0
    %5442 = vmatpush1.bf16.msra.mxu0 %v5434
    %5443 = vmatprep.subr.bf16.mxu0 0
    %5444 = vmatpush1.bf16.msra.mxu0 %v5435
    %5445 = vmatprep.subr.bf16.mxu0 0
    %5446 = vmatpush1.bf16.msra.mxu0 0
    %5447 = vmatprep.subr.bf16.mxu0 0
    %5448 = vmatpush1.bf16.msra.mxu0 0
    %5449 = vmatprep.subr.bf16.mxu0 0
    %5450 = vmatpush1.bf16.msra.mxu0 0
    %5451 = vmatprep.subr.bf16.mxu0 0
    %5452 = vmatpush1.bf16.msra.mxu0 0
    %5453 = vmatprep.subr.bf16.mxu0 0
    %5454 = vmatpush1.bf16.msra.mxu0 0
    %5455 = vmatprep.subr.bf16.mxu0 0
    %5456 = vmatpush1.bf16.msra.mxu0 0
    %5457 = vmatprep.subr.bf16.mxu0 0
    %5458 = vmatpush1.bf16.msra.mxu0 0
    %5459 = vmatprep.subr.bf16.mxu0 0
    %5460 = vmatpush1.bf16.msra.mxu0 0
    %5461 = vmatprep.subr.bf16.mxu0 0
    %5462 = vmatpush1.bf16.msra.mxu0 0
    %5463 = vmatprep.subr.bf16.mxu0 0
    %5464 = vmatpush1.bf16.msra.mxu0 0
    %5465 = vmatprep.subr.bf16.mxu0 0
    %5466 = vmatpush1.bf16.msra.mxu0 0
    %5467 = vmatprep.subr.bf16.mxu0 0
    %5468 = vmatpush1.bf16.msra.mxu0 0
    %5469 = vmatprep.subr.bf16.mxu0 0
    %5470 = vmatpush1.bf16.msra.mxu0 0
    %5471 = vmatprep.subr.bf16.mxu0 0
    %5472 = vmatpush1.bf16.msra.mxu0 0
    %5473 = vmatprep.mubr.bf16.mxu0 0
    %5474 = vmatmul.mubr.bf16.gmra.mrb[0].mxu0 %v5439
    %v5475 = vpop.f32.mrb[0].mxu0
    %v5476 = vadd.f32 %v5424, %v5475
    %v5477 = vpop.f32.mrb[0].mxu0
    %v5478 = vpop.f32.mrb[0].mxu0
    %v5479 = vadd.f32 %v5424, %v5478
    %v5480 = vpop.f32.mrb[0].mxu0
    %5481 = vdwg.mxu0
    %5482 = vrot.lane.b32.xlu0 %v5434, 96
    %v5483 = vpop.permute.xlu0 %5482
    %5484 = vrot.lane.b32.xlu0 %v5435, 96
    %v5485 = vpop.permute.xlu0 %5484
    %5488 = vrot.lane.b32.xlu0 %v5424, 96
    %v5489 = vpop.permute.xlu0 %5488
    %5491 = vmatprep.subr.bf16.mxu0 0
    %5492 = vmatpush1.bf16.msra.mxu0 %v5483
    %5493 = vmatprep.subr.bf16.mxu0 0
    %5494 = vmatpush1.bf16.msra.mxu0 %v5485
    %5495 = vmatprep.subr.bf16.mxu0 0
    %5496 = vmatpush1.bf16.msra.mxu0 0
    %5497 = vmatprep.subr.bf16.mxu0 0
    %5498 = vmatpush1.bf16.msra.mxu0 0
    %5499 = vmatprep.subr.bf16.mxu0 0
    %5500 = vmatpush1.bf16.msra.mxu0 0
    %5501 = vmatprep.subr.bf16.mxu0 0
    %5502 = vmatpush1.bf16.msra.mxu0 0
    %5503 = vmatprep.subr.bf16.mxu0 0
    %5504 = vmatpush1.bf16.msra.mxu0 0
    %5505 = vmatprep.subr.bf16.mxu0 0
    %5506 = vmatpush1.bf16.msra.mxu0 0
    %5507 = vmatprep.subr.bf16.mxu0 0
    %5508 = vmatpush1.bf16.msra.mxu0 0
    %5509 = vmatprep.subr.bf16.mxu0 0
    %5510 = vmatpush1.bf16.msra.mxu0 0
    %5511 = vmatprep.subr.bf16.mxu0 0
    %5512 = vmatpush1.bf16.msra.mxu0 0
    %5513 = vmatprep.subr.bf16.mxu0 0
    %5514 = vmatpush1.bf16.msra.mxu0 0
    %5515 = vmatprep.subr.bf16.mxu0 0
    %5516 = vmatpush1.bf16.msra.mxu0 0
    %5517 = vmatprep.subr.bf16.mxu0 0
    %5518 = vmatpush1.bf16.msra.mxu0 0
    %5519 = vmatprep.subr.bf16.mxu0 0
    %5520 = vmatpush1.bf16.msra.mxu0 0
    %5521 = vmatprep.subr.bf16.mxu0 0
    %5522 = vmatpush1.bf16.msra.mxu0 0
    %5523 = vmatprep.mubr.bf16.mxu0 0
    %5524 = vmatmul.mubr.bf16.gmra.mrb[0].mxu0 %v1490
    %v5525 = vpop.f32.mrb[0].mxu0
    %v5526 = vadd.f32 %v5489, %v5525
    %v5527 = vpop.f32.mrb[0].mxu0
    %v5528 = vpop.f32.mrb[0].mxu0
    %v5529 = vadd.f32 %v5489, %v5528
    %v5530 = vpop.f32.mrb[0].mxu0
    %5531 = vmatprep.mubr.bf16.mxu0 0
    %5532 = vmatmul.mubr.bf16.gmra.mrb[0].mxu0 %v1493
    %v5533 = vpop.f32.mrb[0].mxu0
    %v5534 = vadd.f32 %v5489, %v5533
    %v5535 = vpop.f32.mrb[0].mxu0
    %v5536 = vpop.f32.mrb[0].mxu0
    %v5537 = vadd.f32 %v5489, %v5536
    %v5538 = vpop.f32.mrb[0].mxu0
    %5539 = vdwg.mxu0
    %5540 = vrot.lane.b32.xlu0 %v5434, 64
    %v5541 = vpop.permute.xlu0 %5540
    %5542 = vrot.lane.b32.xlu0 %v5435, 64
    %v5543 = vpop.permute.xlu0 %5542
    %5546 = vrot.lane.b32.xlu0 %v5424, 64
    %v5547 = vpop.permute.xlu0 %5546
    %5549 = vmatprep.subr.bf16.mxu0 0
    %5550 = vmatpush1.bf16.msra.mxu0 %v5541
    %5551 = vmatprep.subr.bf16.mxu0 0
    %5552 = vmatpush1.bf16.msra.mxu0 %v5543
    %5553 = vmatprep.subr.bf16.mxu0 0
    %5554 = vmatpush1.bf16.msra.mxu0 0
    %5555 = vmatprep.subr.bf16.mxu0 0
    %5556 = vmatpush1.bf16.msra.mxu0 0
    %5557 = vmatprep.subr.bf16.mxu0 0
    %5558 = vmatpush1.bf16.msra.mxu0 0
    %5559 = vmatprep.subr.bf16.mxu0 0
    %5560 = vmatpush1.bf16.msra.mxu0 0
    %5561 = vmatprep.subr.bf16.mxu0 0
    %5562 = vmatpush1.bf16.msra.mxu0 0
    %5563 = vmatprep.subr.bf16.mxu0 0
    %5564 = vmatpush1.bf16.msra.mxu0 0
    %5565 = vmatprep.subr.bf16.mxu0 0
    %5566 = vmatpush1.bf16.msra.mxu0 0
    %5567 = vmatprep.subr.bf16.mxu0 0
    %5568 = vmatpush1.bf16.msra.mxu0 0
    %5569 = vmatprep.subr.bf16.mxu0 0
    %5570 = vmatpush1.bf16.msra.mxu0 0
    %5571 = vmatprep.subr.bf16.mxu0 0
    %5572 = vmatpush1.bf16.msra.mxu0 0
    %5573 = vmatprep.subr.bf16.mxu0 0
    %5574 = vmatpush1.bf16.msra.mxu0 0
    %5575 = vmatprep.subr.bf16.mxu0 0
    %5576 = vmatpush1.bf16.msra.mxu0 0
    %5577 = vmatprep.subr.bf16.mxu0 0
    %5578 = vmatpush1.bf16.msra.mxu0 0
    %5579 = vmatprep.subr.bf16.mxu0 0
    %5580 = vmatpush1.bf16.msra.mxu0 0
    %5581 = vmatprep.mubr.bf16.mxu0 0
    %5582 = vmatmul.mubr.bf16.gmra.mrb[0].mxu0 %v1556
    %v5583 = vpop.f32.mrb[0].mxu0
    %v5584 = vadd.f32 %v5547, %v5583
    %v5585 = vpop.f32.mrb[0].mxu0
    %v5586 = vpop.f32.mrb[0].mxu0
    %v5587 = vadd.f32 %v5547, %v5586
    %v5588 = vpop.f32.mrb[0].mxu0
    %5589 = vmatprep.mubr.bf16.mxu0 0
    %5590 = vmatmul.mubr.bf16.gmra.mrb[0].mxu0 %v1559
    %v5591 = vpop.f32.mrb[0].mxu0
    %v5592 = vadd.f32 %v5547, %v5591
    %v5593 = vpop.f32.mrb[0].mxu0
    %v5594 = vpop.f32.mrb[0].mxu0
    %v5595 = vadd.f32 %v5547, %v5594
    %v5596 = vpop.f32.mrb[0].mxu0
    %5597 = vdwg.mxu0
    %v5598 = vpack.c.bf16 %v5479, %v5476
    %v5599 = vpack.c.bf16 %v5529, %v5526
    %v5600 = vpack.c.bf16 %v5537, %v5534
    %v5601 = vpack.c.bf16 %v5587, %v5584
    %v5602 = vpack.c.bf16 %v5595, %v5592
    %v5604 = vsel %vm254, %v5598, 0
    %v5607 = vsel %vm254, %v5599, 0
    %v5610 = vsel %vm254, %v5600, 0
    %5612 = vmatprep.subr.bf16.mxu0 0
    %5613 = vmatpush1.bf16.xpose.msra.mxu0 %v5607
    %5614 = vmatprep.subr.bf16.mxu0 0
    %5615 = vmatpush1.bf16.xpose.msra.mxu0 %v5610
    %5616 = vmatprep.subr.bf16.mxu0 0
    %5617 = vmatpush1.bf16.xpose.msra.mxu0 0
    %5618 = vmatprep.subr.bf16.mxu0 0
    %5619 = vmatpush1.bf16.xpose.msra.mxu0 0
    %5620 = vmatprep.subr.bf16.mxu0 0
    %5621 = vmatpush1.bf16.xpose.msra.mxu0 0
    %5622 = vmatprep.subr.bf16.mxu0 0
    %5623 = vmatpush1.bf16.xpose.msra.mxu0 0
    %5624 = vmatprep.subr.bf16.mxu0 0
    %5625 = vmatpush1.bf16.xpose.msra.mxu0 0
    %5626 = vmatprep.subr.bf16.mxu0 0
    %5627 = vmatpush1.bf16.xpose.msra.mxu0 0
    %5628 = vmatprep.subr.bf16.mxu0 0
    %5629 = vmatpush1.bf16.xpose.msra.mxu0 0
    %5630 = vmatprep.subr.bf16.mxu0 0
    %5631 = vmatpush1.bf16.xpose.msra.mxu0 0
    %5632 = vmatprep.subr.bf16.mxu0 0
    %5633 = vmatpush1.bf16.xpose.msra.mxu0 0
    %5634 = vmatprep.subr.bf16.mxu0 0
    %5635 = vmatpush1.bf16.xpose.msra.mxu0 0
    %5636 = vmatprep.subr.bf16.mxu0 0
    %5637 = vmatpush1.bf16.xpose.msra.mxu0 0
    %5638 = vmatprep.subr.bf16.mxu0 0
    %5639 = vmatpush1.bf16.xpose.msra.mxu0 0
    %5640 = vmatprep.subr.bf16.mxu0 0
    %5641 = vmatpush1.bf16.xpose.msra.mxu0 0
    %5642 = vmatprep.subr.bf16.mxu0 0
    %5643 = vmatpush1.bf16.xpose.msra.mxu0 0
    %5644 = vmatprep.mubr.bf16.mxu0 0
    %5645 = vmatmul.mubr.bf16.gmra.mrb[0].mxu0 %v5604
    %v5646 = vpop.f32.mrb[0].mxu0
    %v5647 = vadd.f32 %v115, %v5646
    %v5648 = vpop.f32.mrb[0].mxu0
    %v5649 = vpop.f32.mrb[0].mxu0
    %v5650 = vadd.f32 %v116, %v5649
    %v5651 = vpop.f32.mrb[0].mxu0
    %5652 = vdwg.mxu0
    %v5653 = vsel %vm150, %v5647, -inf
    %5654 = vmax.xlane.f32.xlu0 %v5653
    %v5655 = vpop.xlane.xlu0 %5654
    %v5656 = vsel %vm150, %v5650, -inf
    %5657 = vmax.xlane.f32.xlu0 %v5656
    %v5658 = vpop.xlane.xlu0 %5657
    %v5659 = vsub.f32 %v5647, %v5655
    %v5660 = vsub.f32 %v5650, %v5658
    %v5661 = vmul.f32 %v5659, 1.442695
    %v5662 = vpow.pop %v5661
    %v5663 = vmul.f32 %v5660, 1.442695
    %v5664 = vpow.pop %v5663
    %v5665 = vsel %vm150, %v5662, 0.0
    %5666 = vadd.xlane.f32.xlu0 %v5665
    %v5667 = vpop.xlane.xlu0 %5666
    %v5668 = vsel %vm150, %v5664, 0.0
    %5669 = vadd.xlane.f32.xlu0 %v5668
    %v5670 = vpop.xlane.xlu0 %5669
    %v5671 = vrcp.pop %v5667
    %v5672 = vmul.f32 %v5662, %v5671
    %v5673 = vrcp.pop %v5670
    %v5674 = vmul.f32 %v5664, %v5673
    %v5675 = vpack.c.bf16 %v5674, %v5672
    %v5677 = vsel %vm150, %v5675, 0
    %5679 = vmatprep.subr.bf16.mxu0 0
    %5680 = vmatpush1.bf16.msra.mxu0 %v5601
    %5681 = vmatprep.subr.bf16.mxu0 0
    %5682 = vmatpush1.bf16.msra.mxu0 %v5602
    %5683 = vmatprep.subr.bf16.mxu0 0
    %5684 = vmatpush1.bf16.msra.mxu0 0
    %5685 = vmatprep.subr.bf16.mxu0 0
    %5686 = vmatpush1.bf16.msra.mxu0 0
    %5687 = vmatprep.subr.bf16.mxu0 0
    %5688 = vmatpush1.bf16.msra.mxu0 0
    %5689 = vmatprep.subr.bf16.mxu0 0
    %5690 = vmatpush1.bf16.msra.mxu0 0
    %5691 = vmatprep.subr.bf16.mxu0 0
    %5692 = vmatpush1.bf16.msra.mxu0 0
    %5693 = vmatprep.subr.bf16.mxu0 0
    %5694 = vmatpush1.bf16.msra.mxu0 0
    %5695 = vmatprep.subr.bf16.mxu0 0
    %5696 = vmatpush1.bf16.msra.mxu0 0
    %5697 = vmatprep.subr.bf16.mxu0 0
    %5698 = vmatpush1.bf16.msra.mxu0 0
    %5699 = vmatprep.subr.bf16.mxu0 0
    %5700 = vmatpush1.bf16.msra.mxu0 0
    %5701 = vmatprep.subr.bf16.mxu0 0
    %5702 = vmatpush1.bf16.msra.mxu0 0
    %5703 = vmatprep.subr.bf16.mxu0 0
    %5704 = vmatpush1.bf16.msra.mxu0 0
    %5705 = vmatprep.subr.bf16.mxu0 0
    %5706 = vmatpush1.bf16.msra.mxu0 0
    %5707 = vmatprep.subr.bf16.mxu0 0
    %5708 = vmatpush1.bf16.msra.mxu0 0
    %5709 = vmatprep.subr.bf16.mxu0 0
    %5710 = vmatpush1.bf16.msra.mxu0 0
    %5711 = vmatprep.mubr.bf16.mxu0 0
    %5712 = vmatmul.mubr.bf16.gmra.mrb[0].mxu0 %v5677
    %v5713 = vpop.f32.mrb[0].mxu0
    %v5714 = vadd.f32 0.0, %v5713
    %v5715 = vpop.f32.mrb[0].mxu0
    %v5716 = vpop.f32.mrb[0].mxu0
    %v5717 = vadd.f32 0.0, %v5716
    %v5718 = vpop.f32.mrb[0].mxu0
    %5719 = vdwg.mxu0
    %5721 = vrot.lane.b32.xlu0 %v5598, 124
    %v5722 = vpop.permute.xlu0 %5721
    %5725 = vrot.lane.b32.xlu0 %v5599, 124
    %v5726 = vpop.permute.xlu0 %5725
    %5727 = vrot.lane.b32.xlu0 %v5600, 124
    %v5728 = vpop.permute.xlu0 %5727
    %v5730 = vsel %vm254, %v5722, 0
    %v5733 = vsel %vm254, %v5726, 0
    %v5736 = vsel %vm254, %v5728, 0
    %5738 = vmatprep.subr.bf16.mxu0 0
    %5739 = vmatpush1.bf16.xpose.msra.mxu0 %v5733
    %5740 = vmatprep.subr.bf16.mxu0 0
    %5741 = vmatpush1.bf16.xpose.msra.mxu0 %v5736
    %5742 = vmatprep.subr.bf16.mxu0 0
    %5743 = vmatpush1.bf16.xpose.msra.mxu0 0
    %5744 = vmatprep.subr.bf16.mxu0 0
    %5745 = vmatpush1.bf16.xpose.msra.mxu0 0
    %5746 = vmatprep.subr.bf16.mxu0 0
    %5747 = vmatpush1.bf16.xpose.msra.mxu0 0
    %5748 = vmatprep.subr.bf16.mxu0 0
    %5749 = vmatpush1.bf16.xpose.msra.mxu0 0
    %5750 = vmatprep.subr.bf16.mxu0 0
    %5751 = vmatpush1.bf16.xpose.msra.mxu0 0
    %5752 = vmatprep.subr.bf16.mxu0 0
    %5753 = vmatpush1.bf16.xpose.msra.mxu0 0
    %5754 = vmatprep.subr.bf16.mxu0 0
    %5755 = vmatpush1.bf16.xpose.msra.mxu0 0
    %5756 = vmatprep.subr.bf16.mxu0 0
    %5757 = vmatpush1.bf16.xpose.msra.mxu0 0
    %5758 = vmatprep.subr.bf16.mxu0 0
    %5759 = vmatpush1.bf16.xpose.msra.mxu0 0
    %5760 = vmatprep.subr.bf16.mxu0 0
    %5761 = vmatpush1.bf16.xpose.msra.mxu0 0
    %5762 = vmatprep.subr.bf16.mxu0 0
    %5763 = vmatpush1.bf16.xpose.msra.mxu0 0
    %5764 = vmatprep.subr.bf16.mxu0 0
    %5765 = vmatpush1.bf16.xpose.msra.mxu0 0
    %5766 = vmatprep.subr.bf16.mxu0 0
    %5767 = vmatpush1.bf16.xpose.msra.mxu0 0
    %5768 = vmatprep.subr.bf16.mxu0 0
    %5769 = vmatpush1.bf16.xpose.msra.mxu0 0
    %5770 = vmatprep.mubr.bf16.mxu0 0
    %5771 = vmatmul.mubr.bf16.gmra.mrb[0].mxu0 %v5730
    %v5772 = vpop.f32.mrb[0].mxu0
    %v5773 = vadd.f32 %v115, %v5772
    %v5774 = vpop.f32.mrb[0].mxu0
    %v5775 = vpop.f32.mrb[0].mxu0
    %v5776 = vadd.f32 %v116, %v5775
    %v5777 = vpop.f32.mrb[0].mxu0
    %5778 = vdwg.mxu0
    %v5779 = vsel %vm150, %v5773, -inf
    %5780 = vmax.xlane.f32.xlu0 %v5779
    %v5781 = vpop.xlane.xlu0 %5780
    %v5782 = vsel %vm150, %v5776, -inf
    %5783 = vmax.xlane.f32.xlu0 %v5782
    %v5784 = vpop.xlane.xlu0 %5783
    %v5785 = vsub.f32 %v5773, %v5781
    %v5786 = vsub.f32 %v5776, %v5784
    %v5787 = vmul.f32 %v5785, 1.442695
    %v5788 = vpow.pop %v5787
    %v5789 = vmul.f32 %v5786, 1.442695
    %v5790 = vpow.pop %v5789
    %v5791 = vsel %vm150, %v5788, 0.0
    %5792 = vadd.xlane.f32.xlu0 %v5791
    %v5793 = vpop.xlane.xlu0 %5792
    %v5794 = vsel %vm150, %v5790, 0.0
    %5795 = vadd.xlane.f32.xlu0 %v5794
    %v5796 = vpop.xlane.xlu0 %5795
    %v5797 = vrcp.pop %v5793
    %v5798 = vmul.f32 %v5788, %v5797
    %v5799 = vrcp.pop %v5796
    %v5800 = vmul.f32 %v5790, %v5799
    %v5801 = vpack.c.bf16 %v5800, %v5798
    %5804 = vrot.lane.b32.xlu0 %v5601, 124
    %v5805 = vpop.permute.xlu0 %5804
    %5806 = vrot.lane.b32.xlu0 %v5602, 124
    %v5807 = vpop.permute.xlu0 %5806
    %v5811 = vsel %vm150, %v5801, 0
    %5813 = vmatprep.subr.bf16.mxu0 0
    %5814 = vmatpush1.bf16.msra.mxu0 %v5805
    %5815 = vmatprep.subr.bf16.mxu0 0
    %5816 = vmatpush1.bf16.msra.mxu0 %v5807
    %5817 = vmatprep.subr.bf16.mxu0 0
    %5818 = vmatpush1.bf16.msra.mxu0 0
    %5819 = vmatprep.subr.bf16.mxu0 0
    %5820 = vmatpush1.bf16.msra.mxu0 0
    %5821 = vmatprep.subr.bf16.mxu0 0
    %5822 = vmatpush1.bf16.msra.mxu0 0
    %5823 = vmatprep.subr.bf16.mxu0 0
    %5824 = vmatpush1.bf16.msra.mxu0 0
    %5825 = vmatprep.subr.bf16.mxu0 0
    %5826 = vmatpush1.bf16.msra.mxu0 0
    %5827 = vmatprep.subr.bf16.mxu0 0
    %5828 = vmatpush1.bf16.msra.mxu0 0
    %5829 = vmatprep.subr.bf16.mxu0 0
    %5830 = vmatpush1.bf16.msra.mxu0 0
    %5831 = vmatprep.subr.bf16.mxu0 0
    %5832 = vmatpush1.bf16.msra.mxu0 0
    %5833 = vmatprep.subr.bf16.mxu0 0
    %5834 = vmatpush1.bf16.msra.mxu0 0
    %5835 = vmatprep.subr.bf16.mxu0 0
    %5836 = vmatpush1.bf16.msra.mxu0 0
    %5837 = vmatprep.subr.bf16.mxu0 0
    %5838 = vmatpush1.bf16.msra.mxu0 0
    %5839 = vmatprep.subr.bf16.mxu0 0
    %5840 = vmatpush1.bf16.msra.mxu0 0
    %5841 = vmatprep.subr.bf16.mxu0 0
    %5842 = vmatpush1.bf16.msra.mxu0 0
    %5843 = vmatprep.subr.bf16.mxu0 0
    %5844 = vmatpush1.bf16.msra.mxu0 0
    %5845 = vmatprep.mubr.bf16.mxu0 0
    %5846 = vmatmul.mubr.bf16.gmra.mrb[0].mxu0 %v5811
    %v5847 = vpop.f32.mrb[0].mxu0
    %v5848 = vadd.f32 0.0, %v5847
    %v5849 = vpop.f32.mrb[0].mxu0
    %v5850 = vpop.f32.mrb[0].mxu0
    %v5851 = vadd.f32 0.0, %v5850
    %v5852 = vpop.f32.mrb[0].mxu0
    %5853 = vdwg.mxu0
    %5854 = vrot.lane.b32.xlu0 %v5598, 120
    %v5855 = vpop.permute.xlu0 %5854
    %5856 = vrot.lane.b32.xlu0 %v5599, 120
    %v5857 = vpop.permute.xlu0 %5856
    %5858 = vrot.lane.b32.xlu0 %v5600, 120
    %v5859 = vpop.permute.xlu0 %5858
    %v5861 = vsel %vm254, %v5855, 0
    %v5864 = vsel %vm254, %v5857, 0
    %v5867 = vsel %vm254, %v5859, 0
    %5869 = vmatprep.subr.bf16.mxu0 0
    %5870 = vmatpush1.bf16.xpose.msra.mxu0 %v5864
    %5871 = vmatprep.subr.bf16.mxu0 0
    %5872 = vmatpush1.bf16.xpose.msra.mxu0 %v5867
    %5873 = vmatprep.subr.bf16.mxu0 0
    %5874 = vmatpush1.bf16.xpose.msra.mxu0 0
    %5875 = vmatprep.subr.bf16.mxu0 0
    %5876 = vmatpush1.bf16.xpose.msra.mxu0 0
    %5877 = vmatprep.subr.bf16.mxu0 0
    %5878 = vmatpush1.bf16.xpose.msra.mxu0 0
    %5879 = vmatprep.subr.bf16.mxu0 0
    %5880 = vmatpush1.bf16.xpose.msra.mxu0 0
    %5881 = vmatprep.subr.bf16.mxu0 0
    %5882 = vmatpush1.bf16.xpose.msra.mxu0 0
    %5883 = vmatprep.subr.bf16.mxu0 0
    %5884 = vmatpush1.bf16.xpose.msra.mxu0 0
    %5885 = vmatprep.subr.bf16.mxu0 0
    %5886 = vmatpush1.bf16.xpose.msra.mxu0 0
    %5887 = vmatprep.subr.bf16.mxu0 0
    %5888 = vmatpush1.bf16.xpose.msra.mxu0 0
    %5889 = vmatprep.subr.bf16.mxu0 0
    %5890 = vmatpush1.bf16.xpose.msra.mxu0 0
    %5891 = vmatprep.subr.bf16.mxu0 0
    %5892 = vmatpush1.bf16.xpose.msra.mxu0 0
    %5893 = vmatprep.subr.bf16.mxu0 0
    %5894 = vmatpush1.bf16.xpose.msra.mxu0 0
    %5895 = vmatprep.subr.bf16.mxu0 0
    %5896 = vmatpush1.bf16.xpose.msra.mxu0 0
    %5897 = vmatprep.subr.bf16.mxu0 0
    %5898 = vmatpush1.bf16.xpose.msra.mxu0 0
    %5899 = vmatprep.subr.bf16.mxu0 0
    %5900 = vmatpush1.bf16.xpose.msra.mxu0 0
    %5901 = vmatprep.mubr.bf16.mxu0 0
    %5902 = vmatmul.mubr.bf16.gmra.mrb[0].mxu0 %v5861
    %v5903 = vpop.f32.mrb[0].mxu0
    %v5904 = vadd.f32 %v115, %v5903
    %v5905 = vpop.f32.mrb[0].mxu0
    %v5906 = vpop.f32.mrb[0].mxu0
    %v5907 = vadd.f32 %v116, %v5906
    %v5908 = vpop.f32.mrb[0].mxu0
    %5909 = vdwg.mxu0
    %v5910 = vsel %vm150, %v5904, -inf
    %5911 = vmax.xlane.f32.xlu0 %v5910
    %v5912 = vpop.xlane.xlu0 %5911
    %v5913 = vsel %vm150, %v5907, -inf
    %5914 = vmax.xlane.f32.xlu0 %v5913
    %v5915 = vpop.xlane.xlu0 %5914
    %v5916 = vsub.f32 %v5904, %v5912
    %v5917 = vsub.f32 %v5907, %v5915
    %v5918 = vmul.f32 %v5916, 1.442695
    %v5919 = vpow.pop %v5918
    %v5920 = vmul.f32 %v5917, 1.442695
    %v5921 = vpow.pop %v5920
    %v5922 = vsel %vm150, %v5919, 0.0
    %5923 = vadd.xlane.f32.xlu0 %v5922
    %v5924 = vpop.xlane.xlu0 %5923
    %v5925 = vsel %vm150, %v5921, 0.0
    %5926 = vadd.xlane.f32.xlu0 %v5925
    %v5927 = vpop.xlane.xlu0 %5926
    %v5928 = vrcp.pop %v5924
    %v5929 = vmul.f32 %v5919, %v5928
    %v5930 = vrcp.pop %v5927
    %v5931 = vmul.f32 %v5921, %v5930
    %v5932 = vpack.c.bf16 %v5931, %v5929
    %5933 = vrot.lane.b32.xlu0 %v5601, 120
    %v5934 = vpop.permute.xlu0 %5933
    %5935 = vrot.lane.b32.xlu0 %v5602, 120
    %v5936 = vpop.permute.xlu0 %5935
    %v5940 = vsel %vm150, %v5932, 0
    %5942 = vmatprep.subr.bf16.mxu0 0
    %5943 = vmatpush1.bf16.msra.mxu0 %v5934
    %5944 = vmatprep.subr.bf16.mxu0 0
    %5945 = vmatpush1.bf16.msra.mxu0 %v5936
    %5946 = vmatprep.subr.bf16.mxu0 0
    %5947 = vmatpush1.bf16.msra.mxu0 0
    %5948 = vmatprep.subr.bf16.mxu0 0
    %5949 = vmatpush1.bf16.msra.mxu0 0
    %5950 = vmatprep.subr.bf16.mxu0 0
    %5951 = vmatpush1.bf16.msra.mxu0 0
    %5952 = vmatprep.subr.bf16.mxu0 0
    %5953 = vmatpush1.bf16.msra.mxu0 0
    %5954 = vmatprep.subr.bf16.mxu0 0
    %5955 = vmatpush1.bf16.msra.mxu0 0
    %5956 = vmatprep.subr.bf16.mxu0 0
    %5957 = vmatpush1.bf16.msra.mxu0 0
    %5958 = vmatprep.subr.bf16.mxu0 0
    %5959 = vmatpush1.bf16.msra.mxu0 0
    %5960 = vmatprep.subr.bf16.mxu0 0
    %5961 = vmatpush1.bf16.msra.mxu0 0
    %5962 = vmatprep.subr.bf16.mxu0 0
    %5963 = vmatpush1.bf16.msra.mxu0 0
    %5964 = vmatprep.subr.bf16.mxu0 0
    %5965 = vmatpush1.bf16.msra.mxu0 0
    %5966 = vmatprep.subr.bf16.mxu0 0
    %5967 = vmatpush1.bf16.msra.mxu0 0
    %5968 = vmatprep.subr.bf16.mxu0 0
    %5969 = vmatpush1.bf16.msra.mxu0 0
    %5970 = vmatprep.subr.bf16.mxu0 0
    %5971 = vmatpush1.bf16.msra.mxu0 0
    %5972 = vmatprep.subr.bf16.mxu0 0
    %5973 = vmatpush1.bf16.msra.mxu0 0
    %5974 = vmatprep.mubr.bf16.mxu0 0
    %5975 = vmatmul.mubr.bf16.gmra.mrb[0].mxu0 %v5940
    %v5976 = vpop.f32.mrb[0].mxu0
    %v5977 = vadd.f32 0.0, %v5976
    %v5978 = vpop.f32.mrb[0].mxu0
    %v5979 = vpop.f32.mrb[0].mxu0
    %v5980 = vadd.f32 0.0, %v5979
    %v5981 = vpop.f32.mrb[0].mxu0
    %5982 = vdwg.mxu0
    %5983 = vrot.lane.b32.xlu0 %v5598, 116
    %v5984 = vpop.permute.xlu0 %5983
    %5985 = vrot.lane.b32.xlu0 %v5599, 116
    %v5986 = vpop.permute.xlu0 %5985
    %5987 = vrot.lane.b32.xlu0 %v5600, 116
    %v5988 = vpop.permute.xlu0 %5987
    %v5990 = vsel %vm254, %v5984, 0
    %v5993 = vsel %vm254, %v5986, 0
    %v5996 = vsel %vm254, %v5988, 0
    %5998 = vmatprep.subr.bf16.mxu0 0
    %5999 = vmatpush1.bf16.xpose.msra.mxu0 %v5993
    %6000 = vmatprep.subr.bf16.mxu0 0
    %6001 = vmatpush1.bf16.xpose.msra.mxu0 %v5996
    %6002 = vmatprep.subr.bf16.mxu0 0
    %6003 = vmatpush1.bf16.xpose.msra.mxu0 0
    %6004 = vmatprep.subr.bf16.mxu0 0
    %6005 = vmatpush1.bf16.xpose.msra.mxu0 0
    %6006 = vmatprep.subr.bf16.mxu0 0
    %6007 = vmatpush1.bf16.xpose.msra.mxu0 0
    %6008 = vmatprep.subr.bf16.mxu0 0
    %6009 = vmatpush1.bf16.xpose.msra.mxu0 0
    %6010 = vmatprep.subr.bf16.mxu0 0
    %6011 = vmatpush1.bf16.xpose.msra.mxu0 0
    %6012 = vmatprep.subr.bf16.mxu0 0
    %6013 = vmatpush1.bf16.xpose.msra.mxu0 0
    %6014 = vmatprep.subr.bf16.mxu0 0
    %6015 = vmatpush1.bf16.xpose.msra.mxu0 0
    %6016 = vmatprep.subr.bf16.mxu0 0
    %6017 = vmatpush1.bf16.xpose.msra.mxu0 0
    %6018 = vmatprep.subr.bf16.mxu0 0
    %6019 = vmatpush1.bf16.xpose.msra.mxu0 0
    %6020 = vmatprep.subr.bf16.mxu0 0
    %6021 = vmatpush1.bf16.xpose.msra.mxu0 0
    %6022 = vmatprep.subr.bf16.mxu0 0
    %6023 = vmatpush1.bf16.xpose.msra.mxu0 0
    %6024 = vmatprep.subr.bf16.mxu0 0
    %6025 = vmatpush1.bf16.xpose.msra.mxu0 0
    %6026 = vmatprep.subr.bf16.mxu0 0
    %6027 = vmatpush1.bf16.xpose.msra.mxu0 0
    %6028 = vmatprep.subr.bf16.mxu0 0
    %6029 = vmatpush1.bf16.xpose.msra.mxu0 0
    %6030 = vmatprep.mubr.bf16.mxu0 0
    %6031 = vmatmul.mubr.bf16.gmra.mrb[0].mxu0 %v5990
    %v6032 = vpop.f32.mrb[0].mxu0
    %v6033 = vadd.f32 %v115, %v6032
    %v6034 = vpop.f32.mrb[0].mxu0
    %v6035 = vpop.f32.mrb[0].mxu0
    %v6036 = vadd.f32 %v116, %v6035
    %v6037 = vpop.f32.mrb[0].mxu0
    %6038 = vdwg.mxu0
    %v6039 = vsel %vm150, %v6033, -inf
    %6040 = vmax.xlane.f32.xlu0 %v6039
    %v6041 = vpop.xlane.xlu0 %6040
    %v6042 = vsel %vm150, %v6036, -inf
    %6043 = vmax.xlane.f32.xlu0 %v6042
    %v6044 = vpop.xlane.xlu0 %6043
    %v6045 = vsub.f32 %v6033, %v6041
    %v6046 = vsub.f32 %v6036, %v6044
    %v6047 = vmul.f32 %v6045, 1.442695
    %v6048 = vpow.pop %v6047
    %v6049 = vmul.f32 %v6046, 1.442695
    %v6050 = vpow.pop %v6049
    %v6051 = vsel %vm150, %v6048, 0.0
    %6052 = vadd.xlane.f32.xlu0 %v6051
    %v6053 = vpop.xlane.xlu0 %6052
    %v6054 = vsel %vm150, %v6050, 0.0
    %6055 = vadd.xlane.f32.xlu0 %v6054
    %v6056 = vpop.xlane.xlu0 %6055
    %v6057 = vrcp.pop %v6053
    %v6058 = vmul.f32 %v6048, %v6057
    %v6059 = vrcp.pop %v6056
    %v6060 = vmul.f32 %v6050, %v6059
    %v6061 = vpack.c.bf16 %v6060, %v6058
    %6062 = vrot.lane.b32.xlu0 %v5601, 116
    %v6063 = vpop.permute.xlu0 %6062
    %6064 = vrot.lane.b32.xlu0 %v5602, 116
    %v6065 = vpop.permute.xlu0 %6064
    %v6069 = vsel %vm150, %v6061, 0
    %6071 = vmatprep.subr.bf16.mxu0 0
    %6072 = vmatpush1.bf16.msra.mxu0 %v6063
    %6073 = vmatprep.subr.bf16.mxu0 0
    %6074 = vmatpush1.bf16.msra.mxu0 %v6065
    %6075 = vmatprep.subr.bf16.mxu0 0
    %6076 = vmatpush1.bf16.msra.mxu0 0
    %6077 = vmatprep.subr.bf16.mxu0 0
    %6078 = vmatpush1.bf16.msra.mxu0 0
    %6079 = vmatprep.subr.bf16.mxu0 0
    %6080 = vmatpush1.bf16.msra.mxu0 0
    %6081 = vmatprep.subr.bf16.mxu0 0
    %6082 = vmatpush1.bf16.msra.mxu0 0
    %6083 = vmatprep.subr.bf16.mxu0 0
    %6084 = vmatpush1.bf16.msra.mxu0 0
    %6085 = vmatprep.subr.bf16.mxu0 0
    %6086 = vmatpush1.bf16.msra.mxu0 0
    %6087 = vmatprep.subr.bf16.mxu0 0
    %6088 = vmatpush1.bf16.msra.mxu0 0
    %6089 = vmatprep.subr.bf16.mxu0 0
    %6090 = vmatpush1.bf16.msra.mxu0 0
    %6091 = vmatprep.subr.bf16.mxu0 0
    %6092 = vmatpush1.bf16.msra.mxu0 0
    %6093 = vmatprep.subr.bf16.mxu0 0
    %6094 = vmatpush1.bf16.msra.mxu0 0
    %6095 = vmatprep.subr.bf16.mxu0 0
    %6096 = vmatpush1.bf16.msra.mxu0 0
    %6097 = vmatprep.subr.bf16.mxu0 0
    %6098 = vmatpush1.bf16.msra.mxu0 0
    %6099 = vmatprep.subr.bf16.mxu0 0
    %6100 = vmatpush1.bf16.msra.mxu0 0
    %6101 = vmatprep.subr.bf16.mxu0 0
    %6102 = vmatpush1.bf16.msra.mxu0 0
    %6103 = vmatprep.mubr.bf16.mxu0 0
    %6104 = vmatmul.mubr.bf16.gmra.mrb[0].mxu0 %v6069
    %v6105 = vpop.f32.mrb[0].mxu0
    %v6106 = vadd.f32 0.0, %v6105
    %v6107 = vpop.f32.mrb[0].mxu0
    %v6108 = vpop.f32.mrb[0].mxu0
    %v6109 = vadd.f32 0.0, %v6108
    %v6110 = vpop.f32.mrb[0].mxu0
    %6111 = vdwg.mxu0
    %6112 = vrot.lane.b32.xlu0 %v5598, 112
    %v6113 = vpop.permute.xlu0 %6112
    %6114 = vrot.lane.b32.xlu0 %v5599, 112
    %v6115 = vpop.permute.xlu0 %6114
    %6116 = vrot.lane.b32.xlu0 %v5600, 112
    %v6117 = vpop.permute.xlu0 %6116
    %v6119 = vsel %vm254, %v6113, 0
    %v6122 = vsel %vm254, %v6115, 0
    %v6125 = vsel %vm254, %v6117, 0
    %6127 = vmatprep.subr.bf16.mxu0 0
    %6128 = vmatpush1.bf16.xpose.msra.mxu0 %v6122
    %6129 = vmatprep.subr.bf16.mxu0 0
    %6130 = vmatpush1.bf16.xpose.msra.mxu0 %v6125
    %6131 = vmatprep.subr.bf16.mxu0 0
    %6132 = vmatpush1.bf16.xpose.msra.mxu0 0
    %6133 = vmatprep.subr.bf16.mxu0 0
    %6134 = vmatpush1.bf16.xpose.msra.mxu0 0
    %6135 = vmatprep.subr.bf16.mxu0 0
    %6136 = vmatpush1.bf16.xpose.msra.mxu0 0
    %6137 = vmatprep.subr.bf16.mxu0 0
    %6138 = vmatpush1.bf16.xpose.msra.mxu0 0
    %6139 = vmatprep.subr.bf16.mxu0 0
    %6140 = vmatpush1.bf16.xpose.msra.mxu0 0
    %6141 = vmatprep.subr.bf16.mxu0 0
    %6142 = vmatpush1.bf16.xpose.msra.mxu0 0
    %6143 = vmatprep.subr.bf16.mxu0 0
    %6144 = vmatpush1.bf16.xpose.msra.mxu0 0
    %6145 = vmatprep.subr.bf16.mxu0 0
    %6146 = vmatpush1.bf16.xpose.msra.mxu0 0
    %6147 = vmatprep.subr.bf16.mxu0 0
    %6148 = vmatpush1.bf16.xpose.msra.mxu0 0
    %6149 = vmatprep.subr.bf16.mxu0 0
    %6150 = vmatpush1.bf16.xpose.msra.mxu0 0
    %6151 = vmatprep.subr.bf16.mxu0 0
    %6152 = vmatpush1.bf16.xpose.msra.mxu0 0
    %6153 = vmatprep.subr.bf16.mxu0 0
    %6154 = vmatpush1.bf16.xpose.msra.mxu0 0
    %6155 = vmatprep.subr.bf16.mxu0 0
    %6156 = vmatpush1.bf16.xpose.msra.mxu0 0
    %6157 = vmatprep.subr.bf16.mxu0 0
    %6158 = vmatpush1.bf16.xpose.msra.mxu0 0
    %6159 = vmatprep.mubr.bf16.mxu0 0
    %6160 = vmatmul.mubr.bf16.gmra.mrb[0].mxu0 %v6119
    %v6161 = vpop.f32.mrb[0].mxu0
    %v6162 = vadd.f32 %v115, %v6161
    %v6163 = vpop.f32.mrb[0].mxu0
    %v6164 = vpop.f32.mrb[0].mxu0
    %v6165 = vadd.f32 %v116, %v6164
    %v6166 = vpop.f32.mrb[0].mxu0
    %6167 = vdwg.mxu0
    %v6168 = vsel %vm150, %v6162, -inf
    %6169 = vmax.xlane.f32.xlu0 %v6168
    %v6170 = vpop.xlane.xlu0 %6169
    %v6171 = vsel %vm150, %v6165, -inf
    %6172 = vmax.xlane.f32.xlu0 %v6171
    %v6173 = vpop.xlane.xlu0 %6172
    %v6174 = vsub.f32 %v6162, %v6170
    %v6175 = vsub.f32 %v6165, %v6173
    %v6176 = vmul.f32 %v6174, 1.442695
    %v6177 = vpow.pop %v6176
    %v6178 = vmul.f32 %v6175, 1.442695
    %v6179 = vpow.pop %v6178
    %v6180 = vsel %vm150, %v6177, 0.0
    %6181 = vadd.xlane.f32.xlu0 %v6180
    %v6182 = vpop.xlane.xlu0 %6181
    %v6183 = vsel %vm150, %v6179, 0.0
    %6184 = vadd.xlane.f32.xlu0 %v6183
    %v6185 = vpop.xlane.xlu0 %6184
    %v6186 = vrcp.pop %v6182
    %v6187 = vmul.f32 %v6177, %v6186
    %v6188 = vrcp.pop %v6185
    %v6189 = vmul.f32 %v6179, %v6188
    %v6190 = vpack.c.bf16 %v6189, %v6187
    %6191 = vrot.lane.b32.xlu0 %v5601, 112
    %v6192 = vpop.permute.xlu0 %6191
    %6193 = vrot.lane.b32.xlu0 %v5602, 112
    %v6194 = vpop.permute.xlu0 %6193
    %v6198 = vsel %vm150, %v6190, 0
    %6200 = vmatprep.subr.bf16.mxu0 0
    %6201 = vmatpush1.bf16.msra.mxu0 %v6192
    %6202 = vmatprep.subr.bf16.mxu0 0
    %6203 = vmatpush1.bf16.msra.mxu0 %v6194
    %6204 = vmatprep.subr.bf16.mxu0 0
    %6205 = vmatpush1.bf16.msra.mxu0 0
    %6206 = vmatprep.subr.bf16.mxu0 0
    %6207 = vmatpush1.bf16.msra.mxu0 0
    %6208 = vmatprep.subr.bf16.mxu0 0
    %6209 = vmatpush1.bf16.msra.mxu0 0
    %6210 = vmatprep.subr.bf16.mxu0 0
    %6211 = vmatpush1.bf16.msra.mxu0 0
    %6212 = vmatprep.subr.bf16.mxu0 0
    %6213 = vmatpush1.bf16.msra.mxu0 0
    %6214 = vmatprep.subr.bf16.mxu0 0
    %6215 = vmatpush1.bf16.msra.mxu0 0
    %6216 = vmatprep.subr.bf16.mxu0 0
    %6217 = vmatpush1.bf16.msra.mxu0 0
    %6218 = vmatprep.subr.bf16.mxu0 0
    %6219 = vmatpush1.bf16.msra.mxu0 0
    %6220 = vmatprep.subr.bf16.mxu0 0
    %6221 = vmatpush1.bf16.msra.mxu0 0
    %6222 = vmatprep.subr.bf16.mxu0 0
    %6223 = vmatpush1.bf16.msra.mxu0 0
    %6224 = vmatprep.subr.bf16.mxu0 0
    %6225 = vmatpush1.bf16.msra.mxu0 0
    %6226 = vmatprep.subr.bf16.mxu0 0
    %6227 = vmatpush1.bf16.msra.mxu0 0
    %6228 = vmatprep.subr.bf16.mxu0 0
    %6229 = vmatpush1.bf16.msra.mxu0 0
    %6230 = vmatprep.subr.bf16.mxu0 0
    %6231 = vmatpush1.bf16.msra.mxu0 0
    %6232 = vmatprep.mubr.bf16.mxu0 0
    %6233 = vmatmul.mubr.bf16.gmra.mrb[0].mxu0 %v6198
    %v6234 = vpop.f32.mrb[0].mxu0
    %v6235 = vadd.f32 0.0, %v6234
    %v6236 = vpop.f32.mrb[0].mxu0
    %v6237 = vpop.f32.mrb[0].mxu0
    %v6238 = vadd.f32 0.0, %v6237
    %v6239 = vpop.f32.mrb[0].mxu0
    %6240 = vdwg.mxu0
    %6241 = vrot.lane.b32.xlu0 %v5598, 108
    %v6242 = vpop.permute.xlu0 %6241
    %6243 = vrot.lane.b32.xlu0 %v5599, 108
    %v6244 = vpop.permute.xlu0 %6243
    %6245 = vrot.lane.b32.xlu0 %v5600, 108
    %v6246 = vpop.permute.xlu0 %6245
    %v6248 = vsel %vm254, %v6242, 0
    %v6251 = vsel %vm254, %v6244, 0
    %v6254 = vsel %vm254, %v6246, 0
    %6256 = vmatprep.subr.bf16.mxu0 0
    %6257 = vmatpush1.bf16.xpose.msra.mxu0 %v6251
    %6258 = vmatprep.subr.bf16.mxu0 0
    %6259 = vmatpush1.bf16.xpose.msra.mxu0 %v6254
    %6260 = vmatprep.subr.bf16.mxu0 0
    %6261 = vmatpush1.bf16.xpose.msra.mxu0 0
    %6262 = vmatprep.subr.bf16.mxu0 0
    %6263 = vmatpush1.bf16.xpose.msra.mxu0 0
    %6264 = vmatprep.subr.bf16.mxu0 0
    %6265 = vmatpush1.bf16.xpose.msra.mxu0 0
    %6266 = vmatprep.subr.bf16.mxu0 0
    %6267 = vmatpush1.bf16.xpose.msra.mxu0 0
    %6268 = vmatprep.subr.bf16.mxu0 0
    %6269 = vmatpush1.bf16.xpose.msra.mxu0 0
    %6270 = vmatprep.subr.bf16.mxu0 0
    %6271 = vmatpush1.bf16.xpose.msra.mxu0 0
    %6272 = vmatprep.subr.bf16.mxu0 0
    %6273 = vmatpush1.bf16.xpose.msra.mxu0 0
    %6274 = vmatprep.subr.bf16.mxu0 0
    %6275 = vmatpush1.bf16.xpose.msra.mxu0 0
    %6276 = vmatprep.subr.bf16.mxu0 0
    %6277 = vmatpush1.bf16.xpose.msra.mxu0 0
    %6278 = vmatprep.subr.bf16.mxu0 0
    %6279 = vmatpush1.bf16.xpose.msra.mxu0 0
    %6280 = vmatprep.subr.bf16.mxu0 0
    %6281 = vmatpush1.bf16.xpose.msra.mxu0 0
    %6282 = vmatprep.subr.bf16.mxu0 0
    %6283 = vmatpush1.bf16.xpose.msra.mxu0 0
    %6284 = vmatprep.subr.bf16.mxu0 0
    %6285 = vmatpush1.bf16.xpose.msra.mxu0 0
    %6286 = vmatprep.subr.bf16.mxu0 0
    %6287 = vmatpush1.bf16.xpose.msra.mxu0 0
    %6288 = vmatprep.mubr.bf16.mxu0 0
    %6289 = vmatmul.mubr.bf16.gmra.mrb[0].mxu0 %v6248
    %v6290 = vpop.f32.mrb[0].mxu0
    %v6291 = vadd.f32 %v115, %v6290
    %v6292 = vpop.f32.mrb[0].mxu0
    %v6293 = vpop.f32.mrb[0].mxu0
    %v6294 = vadd.f32 %v116, %v6293
    %v6295 = vpop.f32.mrb[0].mxu0
    %6296 = vdwg.mxu0
    %v6297 = vsel %vm150, %v6291, -inf
    %6298 = vmax.xlane.f32.xlu0 %v6297
    %v6299 = vpop.xlane.xlu0 %6298
    %v6300 = vsel %vm150, %v6294, -inf
    %6301 = vmax.xlane.f32.xlu0 %v6300
    %v6302 = vpop.xlane.xlu0 %6301
    %v6303 = vsub.f32 %v6291, %v6299
    %v6304 = vsub.f32 %v6294, %v6302
    %v6305 = vmul.f32 %v6303, 1.442695
    %v6306 = vpow.pop %v6305
    %v6307 = vmul.f32 %v6304, 1.442695
    %v6308 = vpow.pop %v6307
    %v6309 = vsel %vm150, %v6306, 0.0
    %6310 = vadd.xlane.f32.xlu0 %v6309
    %v6311 = vpop.xlane.xlu0 %6310
    %v6312 = vsel %vm150, %v6308, 0.0
    %6313 = vadd.xlane.f32.xlu0 %v6312
    %v6314 = vpop.xlane.xlu0 %6313
    %v6315 = vrcp.pop %v6311
    %v6316 = vmul.f32 %v6306, %v6315
    %v6317 = vrcp.pop %v6314
    %v6318 = vmul.f32 %v6308, %v6317
    %v6319 = vpack.c.bf16 %v6318, %v6316
    %6320 = vrot.lane.b32.xlu0 %v5601, 108
    %v6321 = vpop.permute.xlu0 %6320
    %6322 = vrot.lane.b32.xlu0 %v5602, 108
    %v6323 = vpop.permute.xlu0 %6322
    %v6327 = vsel %vm150, %v6319, 0
    %6329 = vmatprep.subr.bf16.mxu0 0
    %6330 = vmatpush1.bf16.msra.mxu0 %v6321
    %6331 = vmatprep.subr.bf16.mxu0 0
    %6332 = vmatpush1.bf16.msra.mxu0 %v6323
    %6333 = vmatprep.subr.bf16.mxu0 0
    %6334 = vmatpush1.bf16.msra.mxu0 0
    %6335 = vmatprep.subr.bf16.mxu0 0
    %6336 = vmatpush1.bf16.msra.mxu0 0
    %6337 = vmatprep.subr.bf16.mxu0 0
    %6338 = vmatpush1.bf16.msra.mxu0 0
    %6339 = vmatprep.subr.bf16.mxu0 0
    %6340 = vmatpush1.bf16.msra.mxu0 0
    %6341 = vmatprep.subr.bf16.mxu0 0
    %6342 = vmatpush1.bf16.msra.mxu0 0
    %6343 = vmatprep.subr.bf16.mxu0 0
    %6344 = vmatpush1.bf16.msra.mxu0 0
    %6345 = vmatprep.subr.bf16.mxu0 0
    %6346 = vmatpush1.bf16.msra.mxu0 0
    %6347 = vmatprep.subr.bf16.mxu0 0
    %6348 = vmatpush1.bf16.msra.mxu0 0
    %6349 = vmatprep.subr.bf16.mxu0 0
    %6350 = vmatpush1.bf16.msra.mxu0 0
    %6351 = vmatprep.subr.bf16.mxu0 0
    %6352 = vmatpush1.bf16.msra.mxu0 0
    %6353 = vmatprep.subr.bf16.mxu0 0
    %6354 = vmatpush1.bf16.msra.mxu0 0
    %6355 = vmatprep.subr.bf16.mxu0 0
    %6356 = vmatpush1.bf16.msra.mxu0 0
    %6357 = vmatprep.subr.bf16.mxu0 0
    %6358 = vmatpush1.bf16.msra.mxu0 0
    %6359 = vmatprep.subr.bf16.mxu0 0
    %6360 = vmatpush1.bf16.msra.mxu0 0
    %6361 = vmatprep.mubr.bf16.mxu0 0
    %6362 = vmatmul.mubr.bf16.gmra.mrb[0].mxu0 %v6327
    %v6363 = vpop.f32.mrb[0].mxu0
    %v6364 = vadd.f32 0.0, %v6363
    %v6365 = vpop.f32.mrb[0].mxu0
    %v6366 = vpop.f32.mrb[0].mxu0
    %v6367 = vadd.f32 0.0, %v6366
    %v6368 = vpop.f32.mrb[0].mxu0
    %6369 = vdwg.mxu0
    %6370 = vrot.lane.b32.xlu0 %v5598, 104
    %v6371 = vpop.permute.xlu0 %6370
    %6372 = vrot.lane.b32.xlu0 %v5599, 104
    %v6373 = vpop.permute.xlu0 %6372
    %6374 = vrot.lane.b32.xlu0 %v5600, 104
    %v6375 = vpop.permute.xlu0 %6374
    %v6377 = vsel %vm254, %v6371, 0
    %v6380 = vsel %vm254, %v6373, 0
    %v6383 = vsel %vm254, %v6375, 0
    %6385 = vmatprep.subr.bf16.mxu0 0
    %6386 = vmatpush1.bf16.xpose.msra.mxu0 %v6380
    %6387 = vmatprep.subr.bf16.mxu0 0
    %6388 = vmatpush1.bf16.xpose.msra.mxu0 %v6383
    %6389 = vmatprep.subr.bf16.mxu0 0
    %6390 = vmatpush1.bf16.xpose.msra.mxu0 0
    %6391 = vmatprep.subr.bf16.mxu0 0
    %6392 = vmatpush1.bf16.xpose.msra.mxu0 0
    %6393 = vmatprep.subr.bf16.mxu0 0
    %6394 = vmatpush1.bf16.xpose.msra.mxu0 0
    %6395 = vmatprep.subr.bf16.mxu0 0
    %6396 = vmatpush1.bf16.xpose.msra.mxu0 0
    %6397 = vmatprep.subr.bf16.mxu0 0
    %6398 = vmatpush1.bf16.xpose.msra.mxu0 0
    %6399 = vmatprep.subr.bf16.mxu0 0
    %6400 = vmatpush1.bf16.xpose.msra.mxu0 0
    %6401 = vmatprep.subr.bf16.mxu0 0
    %6402 = vmatpush1.bf16.xpose.msra.mxu0 0
    %6403 = vmatprep.subr.bf16.mxu0 0
    %6404 = vmatpush1.bf16.xpose.msra.mxu0 0
    %6405 = vmatprep.subr.bf16.mxu0 0
    %6406 = vmatpush1.bf16.xpose.msra.mxu0 0
    %6407 = vmatprep.subr.bf16.mxu0 0
    %6408 = vmatpush1.bf16.xpose.msra.mxu0 0
    %6409 = vmatprep.subr.bf16.mxu0 0
    %6410 = vmatpush1.bf16.xpose.msra.mxu0 0
    %6411 = vmatprep.subr.bf16.mxu0 0
    %6412 = vmatpush1.bf16.xpose.msra.mxu0 0
    %6413 = vmatprep.subr.bf16.mxu0 0
    %6414 = vmatpush1.bf16.xpose.msra.mxu0 0
    %6415 = vmatprep.subr.bf16.mxu0 0
    %6416 = vmatpush1.bf16.xpose.msra.mxu0 0
    %6417 = vmatprep.mubr.bf16.mxu0 0
    %6418 = vmatmul.mubr.bf16.gmra.mrb[0].mxu0 %v6377
    %v6419 = vpop.f32.mrb[0].mxu0
    %v6420 = vadd.f32 %v115, %v6419
    %v6421 = vpop.f32.mrb[0].mxu0
    %v6422 = vpop.f32.mrb[0].mxu0
    %v6423 = vadd.f32 %v116, %v6422
    %v6424 = vpop.f32.mrb[0].mxu0
    %6425 = vdwg.mxu0
    %v6426 = vsel %vm150, %v6420, -inf
    %6427 = vmax.xlane.f32.xlu0 %v6426
    %v6428 = vpop.xlane.xlu0 %6427
    %v6429 = vsel %vm150, %v6423, -inf
    %6430 = vmax.xlane.f32.xlu0 %v6429
    %v6431 = vpop.xlane.xlu0 %6430
    %v6432 = vsub.f32 %v6420, %v6428
    %v6433 = vsub.f32 %v6423, %v6431
    %v6434 = vmul.f32 %v6432, 1.442695
    %v6435 = vpow.pop %v6434
    %v6436 = vmul.f32 %v6433, 1.442695
    %v6437 = vpow.pop %v6436
    %v6438 = vsel %vm150, %v6435, 0.0
    %6439 = vadd.xlane.f32.xlu0 %v6438
    %v6440 = vpop.xlane.xlu0 %6439
    %v6441 = vsel %vm150, %v6437, 0.0
    %6442 = vadd.xlane.f32.xlu0 %v6441
    %v6443 = vpop.xlane.xlu0 %6442
    %v6444 = vrcp.pop %v6440
    %v6445 = vmul.f32 %v6435, %v6444
    %v6446 = vrcp.pop %v6443
    %v6447 = vmul.f32 %v6437, %v6446
    %v6448 = vpack.c.bf16 %v6447, %v6445
    %6449 = vrot.lane.b32.xlu0 %v5601, 104
    %v6450 = vpop.permute.xlu0 %6449
    %6451 = vrot.lane.b32.xlu0 %v5602, 104
    %v6452 = vpop.permute.xlu0 %6451
    %v6456 = vsel %vm150, %v6448, 0
    %6458 = vmatprep.subr.bf16.mxu0 0
    %6459 = vmatpush1.bf16.msra.mxu0 %v6450
    %6460 = vmatprep.subr.bf16.mxu0 0
    %6461 = vmatpush1.bf16.msra.mxu0 %v6452
    %6462 = vmatprep.subr.bf16.mxu0 0
    %6463 = vmatpush1.bf16.msra.mxu0 0
    %6464 = vmatprep.subr.bf16.mxu0 0
    %6465 = vmatpush1.bf16.msra.mxu0 0
    %6466 = vmatprep.subr.bf16.mxu0 0
    %6467 = vmatpush1.bf16.msra.mxu0 0
    %6468 = vmatprep.subr.bf16.mxu0 0
    %6469 = vmatpush1.bf16.msra.mxu0 0
    %6470 = vmatprep.subr.bf16.mxu0 0
    %6471 = vmatpush1.bf16.msra.mxu0 0
    %6472 = vmatprep.subr.bf16.mxu0 0
    %6473 = vmatpush1.bf16.msra.mxu0 0
    %6474 = vmatprep.subr.bf16.mxu0 0
    %6475 = vmatpush1.bf16.msra.mxu0 0
    %6476 = vmatprep.subr.bf16.mxu0 0
    %6477 = vmatpush1.bf16.msra.mxu0 0
    %6478 = vmatprep.subr.bf16.mxu0 0
    %6479 = vmatpush1.bf16.msra.mxu0 0
    %6480 = vmatprep.subr.bf16.mxu0 0
    %6481 = vmatpush1.bf16.msra.mxu0 0
    %6482 = vmatprep.subr.bf16.mxu0 0
    %6483 = vmatpush1.bf16.msra.mxu0 0
    %6484 = vmatprep.subr.bf16.mxu0 0
    %6485 = vmatpush1.bf16.msra.mxu0 0
    %6486 = vmatprep.subr.bf16.mxu0 0
    %6487 = vmatpush1.bf16.msra.mxu0 0
    %6488 = vmatprep.subr.bf16.mxu0 0
    %6489 = vmatpush1.bf16.msra.mxu0 0
    %6490 = vmatprep.mubr.bf16.mxu0 0
    %6491 = vmatmul.mubr.bf16.gmra.mrb[0].mxu0 %v6456
    %v6492 = vpop.f32.mrb[0].mxu0
    %v6493 = vadd.f32 0.0, %v6492
    %v6494 = vpop.f32.mrb[0].mxu0
    %v6495 = vpop.f32.mrb[0].mxu0
    %v6496 = vadd.f32 0.0, %v6495
    %v6497 = vpop.f32.mrb[0].mxu0
    %6498 = vdwg.mxu0
    %6499 = vrot.lane.b32.xlu0 %v5598, 100
    %v6500 = vpop.permute.xlu0 %6499
    %6501 = vrot.lane.b32.xlu0 %v5599, 100
    %v6502 = vpop.permute.xlu0 %6501
    %6503 = vrot.lane.b32.xlu0 %v5600, 100
    %v6504 = vpop.permute.xlu0 %6503
    %v6506 = vsel %vm254, %v6500, 0
    %v6509 = vsel %vm254, %v6502, 0
    %v6512 = vsel %vm254, %v6504, 0
    %6514 = vmatprep.subr.bf16.mxu0 0
    %6515 = vmatpush1.bf16.xpose.msra.mxu0 %v6509
    %6516 = vmatprep.subr.bf16.mxu0 0
    %6517 = vmatpush1.bf16.xpose.msra.mxu0 %v6512
    %6518 = vmatprep.subr.bf16.mxu0 0
    %6519 = vmatpush1.bf16.xpose.msra.mxu0 0
    %6520 = vmatprep.subr.bf16.mxu0 0
    %6521 = vmatpush1.bf16.xpose.msra.mxu0 0
    %6522 = vmatprep.subr.bf16.mxu0 0
    %6523 = vmatpush1.bf16.xpose.msra.mxu0 0
    %6524 = vmatprep.subr.bf16.mxu0 0
    %6525 = vmatpush1.bf16.xpose.msra.mxu0 0
    %6526 = vmatprep.subr.bf16.mxu0 0
    %6527 = vmatpush1.bf16.xpose.msra.mxu0 0
    %6528 = vmatprep.subr.bf16.mxu0 0
    %6529 = vmatpush1.bf16.xpose.msra.mxu0 0
    %6530 = vmatprep.subr.bf16.mxu0 0
    %6531 = vmatpush1.bf16.xpose.msra.mxu0 0
    %6532 = vmatprep.subr.bf16.mxu0 0
    %6533 = vmatpush1.bf16.xpose.msra.mxu0 0
    %6534 = vmatprep.subr.bf16.mxu0 0
    %6535 = vmatpush1.bf16.xpose.msra.mxu0 0
    %6536 = vmatprep.subr.bf16.mxu0 0
    %6537 = vmatpush1.bf16.xpose.msra.mxu0 0
    %6538 = vmatprep.subr.bf16.mxu0 0
    %6539 = vmatpush1.bf16.xpose.msra.mxu0 0
    %6540 = vmatprep.subr.bf16.mxu0 0
    %6541 = vmatpush1.bf16.xpose.msra.mxu0 0
    %6542 = vmatprep.subr.bf16.mxu0 0
    %6543 = vmatpush1.bf16.xpose.msra.mxu0 0
    %6544 = vmatprep.subr.bf16.mxu0 0
    %6545 = vmatpush1.bf16.xpose.msra.mxu0 0
    %6546 = vmatprep.mubr.bf16.mxu0 0
    %6547 = vmatmul.mubr.bf16.gmra.mrb[0].mxu0 %v6506
    %v6548 = vpop.f32.mrb[0].mxu0
    %v6549 = vadd.f32 %v115, %v6548
    %v6550 = vpop.f32.mrb[0].mxu0
    %v6551 = vpop.f32.mrb[0].mxu0
    %v6552 = vadd.f32 %v116, %v6551
    %v6553 = vpop.f32.mrb[0].mxu0
    %6554 = vdwg.mxu0
    %v6555 = vsel %vm150, %v6549, -inf
    %6556 = vmax.xlane.f32.xlu0 %v6555
    %v6557 = vpop.xlane.xlu0 %6556
    %v6558 = vsel %vm150, %v6552, -inf
    %6559 = vmax.xlane.f32.xlu0 %v6558
    %v6560 = vpop.xlane.xlu0 %6559
    %v6561 = vsub.f32 %v6549, %v6557
    %v6562 = vsub.f32 %v6552, %v6560
    %v6563 = vmul.f32 %v6561, 1.442695
    %v6564 = vpow.pop %v6563
    %v6565 = vmul.f32 %v6562, 1.442695
    %v6566 = vpow.pop %v6565
    %v6567 = vsel %vm150, %v6564, 0.0
    %6568 = vadd.xlane.f32.xlu0 %v6567
    %v6569 = vpop.xlane.xlu0 %6568
    %v6570 = vsel %vm150, %v6566, 0.0
    %6571 = vadd.xlane.f32.xlu0 %v6570
    %v6572 = vpop.xlane.xlu0 %6571
    %v6573 = vrcp.pop %v6569
    %v6574 = vmul.f32 %v6564, %v6573
    %v6575 = vrcp.pop %v6572
    %v6576 = vmul.f32 %v6566, %v6575
    %v6577 = vpack.c.bf16 %v6576, %v6574
    %6578 = vrot.lane.b32.xlu0 %v5601, 100
    %v6579 = vpop.permute.xlu0 %6578
    %6580 = vrot.lane.b32.xlu0 %v5602, 100
    %v6581 = vpop.permute.xlu0 %6580
    %v6585 = vsel %vm150, %v6577, 0
    %6587 = vmatprep.subr.bf16.mxu0 0
    %6588 = vmatpush1.bf16.msra.mxu0 %v6579
    %6589 = vmatprep.subr.bf16.mxu0 0
    %6590 = vmatpush1.bf16.msra.mxu0 %v6581
    %6591 = vmatprep.subr.bf16.mxu0 0
    %6592 = vmatpush1.bf16.msra.mxu0 0
    %6593 = vmatprep.subr.bf16.mxu0 0
    %6594 = vmatpush1.bf16.msra.mxu0 0
    %6595 = vmatprep.subr.bf16.mxu0 0
    %6596 = vmatpush1.bf16.msra.mxu0 0
    %6597 = vmatprep.subr.bf16.mxu0 0
    %6598 = vmatpush1.bf16.msra.mxu0 0
    %6599 = vmatprep.subr.bf16.mxu0 0
    %6600 = vmatpush1.bf16.msra.mxu0 0
    %6601 = vmatprep.subr.bf16.mxu0 0
    %6602 = vmatpush1.bf16.msra.mxu0 0
    %6603 = vmatprep.subr.bf16.mxu0 0
    %6604 = vmatpush1.bf16.msra.mxu0 0
    %6605 = vmatprep.subr.bf16.mxu0 0
    %6606 = vmatpush1.bf16.msra.mxu0 0
    %6607 = vmatprep.subr.bf16.mxu0 0
    %6608 = vmatpush1.bf16.msra.mxu0 0
    %6609 = vmatprep.subr.bf16.mxu0 0
    %6610 = vmatpush1.bf16.msra.mxu0 0
    %6611 = vmatprep.subr.bf16.mxu0 0
    %6612 = vmatpush1.bf16.msra.mxu0 0
    %6613 = vmatprep.subr.bf16.mxu0 0
    %6614 = vmatpush1.bf16.msra.mxu0 0
    %6615 = vmatprep.subr.bf16.mxu0 0
    %6616 = vmatpush1.bf16.msra.mxu0 0
    %6617 = vmatprep.subr.bf16.mxu0 0
    %6618 = vmatpush1.bf16.msra.mxu0 0
    %6619 = vmatprep.mubr.bf16.mxu0 0
    %6620 = vmatmul.mubr.bf16.gmra.mrb[0].mxu0 %v6585
    %v6621 = vpop.f32.mrb[0].mxu0
    %v6622 = vadd.f32 0.0, %v6621
    %v6623 = vpop.f32.mrb[0].mxu0
    %v6624 = vpop.f32.mrb[0].mxu0
    %v6625 = vadd.f32 0.0, %v6624
    %v6626 = vpop.f32.mrb[0].mxu0
    %6627 = vdwg.mxu0
    %6630 = vrot.lane.b32.xlu0 %v5848, 4
    %v6631 = vpop.permute.xlu0 %6630
    %6632 = vrot.lane.b32.xlu0 %v5851, 4
    %v6633 = vpop.permute.xlu0 %6632
    %6638 = vrot.lane.b32.xlu0 %v5977, 8
    %v6639 = vpop.permute.xlu0 %6638
    %6640 = vrot.lane.b32.xlu0 %v5980, 8
    %v6641 = vpop.permute.xlu0 %6640
    %6646 = vrot.lane.b32.xlu0 %v6106, 12
    %v6647 = vpop.permute.xlu0 %6646
    %6648 = vrot.lane.b32.xlu0 %v6109, 12
    %v6649 = vpop.permute.xlu0 %6648
    %6654 = vrot.lane.b32.xlu0 %v6235, 16
    %v6655 = vpop.permute.xlu0 %6654
    %6656 = vrot.lane.b32.xlu0 %v6238, 16
    %v6657 = vpop.permute.xlu0 %6656
    %6662 = vrot.lane.b32.xlu0 %v6364, 20
    %v6663 = vpop.permute.xlu0 %6662
    %6664 = vrot.lane.b32.xlu0 %v6367, 20
    %v6665 = vpop.permute.xlu0 %6664
    %6670 = vrot.lane.b32.xlu0 %v6493, 24
    %v6671 = vpop.permute.xlu0 %6670
    %6672 = vrot.lane.b32.xlu0 %v6496, 24
    %v6673 = vpop.permute.xlu0 %6672
    %6678 = vrot.lane.b32.xlu0 %v6622, 28
    %v6679 = vpop.permute.xlu0 %6678
    %6680 = vrot.lane.b32.xlu0 %v6625, 28
    %v6681 = vpop.permute.xlu0 %6680
    %v6684 = vsel %vm254, %v5714, %v6631
    %v6685 = vsel %vm254, %v5717, %v6633
    %v6686 = vsel %vm1276, %v6684, %v6639
    %v6687 = vsel %vm1276, %v6685, %v6641
    %v6688 = vsel %vm1279, %v6686, %v6647
    %v6689 = vsel %vm1279, %v6687, %v6649
    %v6690 = vsel %vm302, %v6688, %v6655
    %v6691 = vsel %vm302, %v6689, %v6657
    %v6692 = vsel %vm1284, %v6690, %v6663
    %v6693 = vsel %vm1284, %v6691, %v6665
    %v6694 = vsel %vm1287, %v6692, %v6671
    %v6695 = vsel %vm1287, %v6693, %v6673
    %v6696 = vsel %vm1290, %v6694, %v6679
    %v6697 = vsel %vm1290, %v6695, %v6681
    %v6698 = vpack.c.bf16 %v6697, %v6696
    %v6700 = vlaneseq
    %v6701 = vshrl.u32 %v6700, 7
    %v6702 = vsub.s32 0, %v6701
    %v6703 = vrot.slane %v5418, %v6702
    %v6709 = vunpack.c.l.b16 %v5413
    %v6710 = vunpack.c.l.b16 %v5414
    %v6711 = vunpack.c.l.b16 %v5415
    %v6712 = vunpack.c.l.b16 %v5416
    %v6713 = vpack.c.b16 %v6710, %v6709
    %v6714 = vpack.c.b16 %v6712, %v6711
    %v6718 = vsel %vm150, %v6698, 0
    %6720 = vmatprep.subr.bf16.mxu0 0
    %6721 = vmatpush1.bf16.msra.mxu0 %v6713
    %6722 = vmatprep.subr.bf16.mxu0 0
    %6723 = vmatpush1.bf16.msra.mxu0 %v6714
    %6724 = vmatprep.subr.bf16.mxu0 0
    %6725 = vmatpush1.bf16.msra.mxu0 0
    %6726 = vmatprep.subr.bf16.mxu0 0
    %6727 = vmatpush1.bf16.msra.mxu0 0
    %6728 = vmatprep.subr.bf16.mxu0 0
    %6729 = vmatpush1.bf16.msra.mxu0 0
    %6730 = vmatprep.subr.bf16.mxu0 0
    %6731 = vmatpush1.bf16.msra.mxu0 0
    %6732 = vmatprep.subr.bf16.mxu0 0
    %6733 = vmatpush1.bf16.msra.mxu0 0
    %6734 = vmatprep.subr.bf16.mxu0 0
    %6735 = vmatpush1.bf16.msra.mxu0 0
    %6736 = vmatprep.subr.bf16.mxu0 0
    %6737 = vmatpush1.bf16.msra.mxu0 0
    %6738 = vmatprep.subr.bf16.mxu0 0
    %6739 = vmatpush1.bf16.msra.mxu0 0
    %6740 = vmatprep.subr.bf16.mxu0 0
    %6741 = vmatpush1.bf16.msra.mxu0 0
    %6742 = vmatprep.subr.bf16.mxu0 0
    %6743 = vmatpush1.bf16.msra.mxu0 0
    %6744 = vmatprep.subr.bf16.mxu0 0
    %6745 = vmatpush1.bf16.msra.mxu0 0
    %6746 = vmatprep.subr.bf16.mxu0 0
    %6747 = vmatpush1.bf16.msra.mxu0 0
    %6748 = vmatprep.subr.bf16.mxu0 0
    %6749 = vmatpush1.bf16.msra.mxu0 0
    %6750 = vmatprep.subr.bf16.mxu0 0
    %6751 = vmatpush1.bf16.msra.mxu0 0
    %6752 = vmatprep.mubr.bf16.mxu0 0
    %6753 = vmatmul.mubr.bf16.gmra.mrb[0].mxu0 %v6718
    %v6754 = vpop.f32.mrb[0].mxu0
    %v6755 = vadd.f32 %v6703, %v6754
    %v6756 = vpop.f32.mrb[0].mxu0
    %v6757 = vpop.f32.mrb[0].mxu0
    %v6758 = vadd.f32 %v6703, %v6757
    %v6759 = vpop.f32.mrb[0].mxu0
    %6760 = vdwg.mxu0
    %v6761 = vadd.f32 %v5401, %v6755
    %v6762 = vadd.f32 %v5402, %v6758
    %s6763 = scalar_lea.vmem %s18, 4
    %v6764 = vld [vmem:[%s6763] sm:$0x1]
    %s6765 = scalar_lea.vmem %s19, 4
    %v6766 = vld [vmem:[%s6765] sm:$0x1]
    %v6767 = vsel %vm150, %v6761, 0.0
    %6768 = vadd.xlane.f32.xlu0 %v6767
    %v6769 = vpop.xlane.xlu0 %6768
    %v6770 = vsel %vm150, %v6762, 0.0
    %6771 = vadd.xlane.f32.xlu0 %v6770
    %v6772 = vpop.xlane.xlu0 %6771
    %v6773 = vmul.f32 %v6769, %v1366
    %v6774 = vmul.f32 %v6772, %v1366
    %v6775 = vsub.f32 %v6761, %v6773
    %v6776 = vsub.f32 %v6762, %v6774
    %v6777 = vmul.f32 %v6775, %v6775
    %v6778 = vmul.f32 %v6776, %v6776
    %v6779 = vsel %vm150, %v6777, 0.0
    %6780 = vadd.xlane.f32.xlu0 %v6779
    %v6781 = vpop.xlane.xlu0 %6780
    %v6782 = vsel %vm150, %v6778, 0.0
    %6783 = vadd.xlane.f32.xlu0 %v6782
    %v6784 = vpop.xlane.xlu0 %6783
    %v6785 = vmul.f32 %v6781, %v1366
    %v6786 = vmul.f32 %v6784, %v1366
    %v6787 = vadd.f32 %v6785, 1e-05
    %v6788 = vadd.f32 %v6786, 1e-05
    %v6789 = vrsqrt.pop %v6787
    %v6790 = vrsqrt.pop %v6788
    %v6791 = vmul.f32 %v6775, %v6789
    %v6792 = vmul.f32 %v6776, %v6790
    %v6794 = vlaneseq
    %v6795 = vshrl.u32 %v6794, 7
    %v6796 = vsub.s32 0, %v6795
    %v6797 = vrot.slane %v6764, %v6796
    %v6799 = vmul.f32 %v6791, %v6797
    %v6800 = vmul.f32 %v6792, %v6797
    %v6802 = vlaneseq
    %v6803 = vshrl.u32 %v6802, 7
    %v6804 = vsub.s32 0, %v6803
    %v6805 = vrot.slane %v6766, %v6804
    %v6807 = vadd.f32 %v6799, %v6805
    %v6808 = vadd.f32 %v6800, %v6805
    %v6809 = vpack.c.bf16 %v6808, %v6807
    %s6810 = scalar_lea.vmem [#allocation2], 256
    %v6811 = vld [vmem:[%s6810] sm:$0xff]
    %v6812 = vld [vmem:[%s6810 + $0x8] sm:$0xff]
    %v6813 = vld [vmem:[%s6810 + $0x40] sm:$0xff]
    %v6814 = vld [vmem:[%s6810 + $0x48] sm:$0xff]
    %v6815 = vld [vmem:[%s6810 + $0x80] sm:$0xff]
    %v6816 = vld [vmem:[%s6810 + $0x88] sm:$0xff]
    %v6817 = vld [vmem:[%s6810 + $0xc0] sm:$0xff]
    %v6818 = vld [vmem:[%s6810 + $0xc8] sm:$0xff]
    %s6819 = scalar_lea.vmem %s15, 16
    %v6820 = vld [vmem:[%s6819] sm:$0xf]
    %s6821 = scalar_lea.vmem [#allocation5], 256
    %v6822 = vld [vmem:[%s6821] sm:$0xff]
    %v6823 = vld [vmem:[%s6821 + $0x8] sm:$0xff]
    %v6824 = vld [vmem:[%s6821 + $0x40] sm:$0xff]
    %v6825 = vld [vmem:[%s6821 + $0x48] sm:$0xff]
    %v6826 = vld [vmem:[%s6821 + $0x80] sm:$0xff]
    %v6827 = vld [vmem:[%s6821 + $0x88] sm:$0xff]
    %v6828 = vld [vmem:[%s6821 + $0xc0] sm:$0xff]
    %v6829 = vld [vmem:[%s6821 + $0xc8] sm:$0xff]
    %v6831 = vlaneseq
    %v6832 = vshrl.u32 %v6831, 7
    %v6833 = vsub.s32 0, %v6832
    %v6834 = vrot.slane %v6820, %v6833
    %v6835 = vlaneseq
    %v6836 = vshrl.u32 %v6835, 7
    %v6837 = vsub.s32 1, %v6836
    %v6838 = vrot.slane %v6820, %v6837
    %v6839 = vlaneseq
    %v6840 = vshrl.u32 %v6839, 7
    %v6841 = vsub.s32 2, %v6840
    %v6842 = vrot.slane %v6820, %v6841
    %v6843 = vlaneseq
    %v6844 = vshrl.u32 %v6843, 7
    %v6845 = vsub.s32 3, %v6844
    %v6846 = vrot.slane %v6820, %v6845
    %v6859 = vunpack.c.l.b16 %v6811
    %v6860 = vunpack.c.h.b16 %v6811
    %v6861 = vunpack.c.l.b16 %v6812
    %v6862 = vunpack.c.h.b16 %v6812
    %v6863 = vunpack.c.l.b16 %v6813
    %v6864 = vunpack.c.h.b16 %v6813
    %v6865 = vunpack.c.l.b16 %v6814
    %v6866 = vunpack.c.h.b16 %v6814
    %v6867 = vunpack.c.l.b16 %v6815
    %v6868 = vunpack.c.h.b16 %v6815
    %v6869 = vunpack.c.l.b16 %v6816
    %v6870 = vunpack.c.h.b16 %v6816
    %v6871 = vunpack.c.l.b16 %v6817
    %v6872 = vunpack.c.h.b16 %v6817
    %v6873 = vunpack.c.l.b16 %v6818
    %v6874 = vunpack.c.h.b16 %v6818
    %v6875 = vpack.c.b16 %v6863, %v6859
    %v6876 = vpack.c.b16 %v6864, %v6860
    %v6877 = vpack.c.b16 %v6865, %v6861
    %v6878 = vpack.c.b16 %v6866, %v6862
    %v6879 = vpack.c.b16 %v6871, %v6867
    %v6880 = vpack.c.b16 %v6872, %v6868
    %v6881 = vpack.c.b16 %v6873, %v6869
    %v6882 = vpack.c.b16 %v6874, %v6870
    %v6892 = vsel %vm150, %v6809, 0
    %6894 = vmatprep.subr.bf16.mxu0 %v6876
    %6895 = vmatpush1.bf16.msra.mxu0 %v6875
    %6896 = vmatprep.subr.bf16.mxu0 %v6880
    %6897 = vmatpush1.bf16.msra.mxu0 %v6879
    %6898 = vmatprep.subr.bf16.mxu0 0
    %6899 = vmatpush1.bf16.msra.mxu0 0
    %6900 = vmatprep.subr.bf16.mxu0 0
    %6901 = vmatpush1.bf16.msra.mxu0 0
    %6902 = vmatprep.subr.bf16.mxu0 0
    %6903 = vmatpush1.bf16.msra.mxu0 0
    %6904 = vmatprep.subr.bf16.mxu0 0
    %6905 = vmatpush1.bf16.msra.mxu0 0
    %6906 = vmatprep.subr.bf16.mxu0 0
    %6907 = vmatpush1.bf16.msra.mxu0 0
    %6908 = vmatprep.subr.bf16.mxu0 0
    %6909 = vmatpush1.bf16.msra.mxu0 0
    %6910 = vmatprep.subr.bf16.mxu0 0
    %6911 = vmatpush1.bf16.msra.mxu0 0
    %6912 = vmatprep.subr.bf16.mxu0 0
    %6913 = vmatpush1.bf16.msra.mxu0 0
    %6914 = vmatprep.subr.bf16.mxu0 0
    %6915 = vmatpush1.bf16.msra.mxu0 0
    %6916 = vmatprep.subr.bf16.mxu0 0
    %6917 = vmatpush1.bf16.msra.mxu0 0
    %6918 = vmatprep.subr.bf16.mxu0 0
    %6919 = vmatpush1.bf16.msra.mxu0 0
    %6920 = vmatprep.subr.bf16.mxu0 0
    %6921 = vmatpush1.bf16.msra.mxu0 0
    %6922 = vmatprep.subr.bf16.mxu0 0
    %6923 = vmatpush1.bf16.msra.mxu0 0
    %6924 = vmatprep.subr.bf16.mxu0 0
    %6925 = vmatpush1.bf16.msra.mxu0 0
    %6926 = vmatprep.mubr.bf16.mxu0 0
    %6927 = vmatmul.mubr.bf16.gmra.mrb[0].mxu0 %v6892
    %v6928 = vpop.f32.mrb[0].mxu0
    %v6929 = vadd.f32 %v6834, %v6928
    %v6930 = vpop.f32.mrb[0].mxu0
    %v6931 = vadd.f32 %v6838, %v6930
    %v6932 = vpop.f32.mrb[0].mxu0
    %v6933 = vadd.f32 %v6834, %v6932
    %v6934 = vpop.f32.mrb[0].mxu0
    %v6935 = vadd.f32 %v6838, %v6934
    %6936 = vdwg.mxu0
    %6937 = vmatprep.subr.bf16.mxu0 %v6878
    %6938 = vmatpush1.bf16.msra.mxu0 %v6877
    %6939 = vmatprep.subr.bf16.mxu0 %v6882
    %6940 = vmatpush1.bf16.msra.mxu0 %v6881
    %6941 = vmatprep.subr.bf16.mxu0 0
    %6942 = vmatpush1.bf16.msra.mxu0 0
    %6943 = vmatprep.subr.bf16.mxu0 0
    %6944 = vmatpush1.bf16.msra.mxu0 0
    %6945 = vmatprep.subr.bf16.mxu0 0
    %6946 = vmatpush1.bf16.msra.mxu0 0
    %6947 = vmatprep.subr.bf16.mxu0 0
    %6948 = vmatpush1.bf16.msra.mxu0 0
    %6949 = vmatprep.subr.bf16.mxu0 0
    %6950 = vmatpush1.bf16.msra.mxu0 0
    %6951 = vmatprep.subr.bf16.mxu0 0
    %6952 = vmatpush1.bf16.msra.mxu0 0
    %6953 = vmatprep.subr.bf16.mxu0 0
    %6954 = vmatpush1.bf16.msra.mxu0 0
    %6955 = vmatprep.subr.bf16.mxu0 0
    %6956 = vmatpush1.bf16.msra.mxu0 0
    %6957 = vmatprep.subr.bf16.mxu0 0
    %6958 = vmatpush1.bf16.msra.mxu0 0
    %6959 = vmatprep.subr.bf16.mxu0 0
    %6960 = vmatpush1.bf16.msra.mxu0 0
    %6961 = vmatprep.subr.bf16.mxu0 0
    %6962 = vmatpush1.bf16.msra.mxu0 0
    %6963 = vmatprep.subr.bf16.mxu0 0
    %6964 = vmatpush1.bf16.msra.mxu0 0
    %6965 = vmatprep.subr.bf16.mxu0 0
    %6966 = vmatpush1.bf16.msra.mxu0 0
    %6967 = vmatprep.subr.bf16.mxu0 0
    %6968 = vmatpush1.bf16.msra.mxu0 0
    %6969 = vmatprep.mubr.bf16.mxu0 0
    %6970 = vmatmul.mubr.bf16.gmra.mrb[0].mxu0 %v6892
    %v6971 = vpop.f32.mrb[0].mxu0
    %v6972 = vadd.f32 %v6842, %v6971
    %v6973 = vpop.f32.mrb[0].mxu0
    %v6974 = vadd.f32 %v6846, %v6973
    %v6975 = vpop.f32.mrb[0].mxu0
    %v6976 = vadd.f32 %v6842, %v6975
    %v6977 = vpop.f32.mrb[0].mxu0
    %v6978 = vadd.f32 %v6846, %v6977
    %6979 = vdwg.mxu0
    %v6980 = vmax.f32 %v6929, 0.0
    %v6981 = vmax.f32 %v6931, 0.0
    %v6982 = vmax.f32 %v6972, 0.0
    %v6983 = vmax.f32 %v6974, 0.0
    %v6984 = vmax.f32 %v6933, 0.0
    %v6985 = vmax.f32 %v6935, 0.0
    %v6986 = vmax.f32 %v6976, 0.0
    %v6987 = vmax.f32 %v6978, 0.0
    %v6988 = vpack.c.bf16 %v6984, %v6980
    %v6989 = vpack.c.bf16 %v6985, %v6981
    %v6990 = vpack.c.bf16 %v6986, %v6982
    %v6991 = vpack.c.bf16 %v6987, %v6983
    %v6992 = vld [vmem:[%s6810 + $0x10] sm:$0xff]
    %v6993 = vld [vmem:[%s6810 + $0x18] sm:$0xff]
    %v6994 = vld [vmem:[%s6810 + $0x50] sm:$0xff]
    %v6995 = vld [vmem:[%s6810 + $0x58] sm:$0xff]
    %v6996 = vld [vmem:[%s6810 + $0x90] sm:$0xff]
    %v6997 = vld [vmem:[%s6810 + $0x98] sm:$0xff]
    %v6998 = vld [vmem:[%s6810 + $0xd0] sm:$0xff]
    %v6999 = vld [vmem:[%s6810 + $0xd8] sm:$0xff]
    %v7000 = vld [vmem:[%s6819 + $0x4] sm:$0xf]
    %v7001 = vld [vmem:[%s6821 + $0x10] sm:$0xff]
    %v7002 = vld [vmem:[%s6821 + $0x18] sm:$0xff]
    %v7003 = vld [vmem:[%s6821 + $0x50] sm:$0xff]
    %v7004 = vld [vmem:[%s6821 + $0x58] sm:$0xff]
    %v7005 = vld [vmem:[%s6821 + $0x90] sm:$0xff]
    %v7006 = vld [vmem:[%s6821 + $0x98] sm:$0xff]
    %v7007 = vld [vmem:[%s6821 + $0xd0] sm:$0xff]
    %v7008 = vld [vmem:[%s6821 + $0xd8] sm:$0xff]
    %v7010 = vlaneseq
    %v7011 = vshrl.u32 %v7010, 7
    %v7012 = vsub.s32 0, %v7011
    %v7013 = vrot.slane %v7000, %v7012
    %v7014 = vlaneseq
    %v7015 = vshrl.u32 %v7014, 7
    %v7016 = vsub.s32 1, %v7015
    %v7017 = vrot.slane %v7000, %v7016
    %v7018 = vlaneseq
    %v7019 = vshrl.u32 %v7018, 7
    %v7020 = vsub.s32 2, %v7019
    %v7021 = vrot.slane %v7000, %v7020
    %v7022 = vlaneseq
    %v7023 = vshrl.u32 %v7022, 7
    %v7024 = vsub.s32 3, %v7023
    %v7025 = vrot.slane %v7000, %v7024
    %v7038 = vunpack.c.l.b16 %v6992
    %v7039 = vunpack.c.h.b16 %v6992
    %v7040 = vunpack.c.l.b16 %v6993
    %v7041 = vunpack.c.h.b16 %v6993
    %v7042 = vunpack.c.l.b16 %v6994
    %v7043 = vunpack.c.h.b16 %v6994
    %v7044 = vunpack.c.l.b16 %v6995
    %v7045 = vunpack.c.h.b16 %v6995
    %v7046 = vunpack.c.l.b16 %v6996
    %v7047 = vunpack.c.h.b16 %v6996
    %v7048 = vunpack.c.l.b16 %v6997
    %v7049 = vunpack.c.h.b16 %v6997
    %v7050 = vunpack.c.l.b16 %v6998
    %v7051 = vunpack.c.h.b16 %v6998
    %v7052 = vunpack.c.l.b16 %v6999
    %v7053 = vunpack.c.h.b16 %v6999
    %v7054 = vpack.c.b16 %v7042, %v7038
    %v7055 = vpack.c.b16 %v7043, %v7039
    %v7056 = vpack.c.b16 %v7044, %v7040
    %v7057 = vpack.c.b16 %v7045, %v7041
    %v7058 = vpack.c.b16 %v7050, %v7046
    %v7059 = vpack.c.b16 %v7051, %v7047
    %v7060 = vpack.c.b16 %v7052, %v7048
    %v7061 = vpack.c.b16 %v7053, %v7049
    %7070 = vmatprep.subr.bf16.mxu0 %v7055
    %7071 = vmatpush1.bf16.msra.mxu0 %v7054
    %7072 = vmatprep.subr.bf16.mxu0 %v7059
    %7073 = vmatpush1.bf16.msra.mxu0 %v7058
    %7074 = vmatprep.subr.bf16.mxu0 0
    %7075 = vmatpush1.bf16.msra.mxu0 0
    %7076 = vmatprep.subr.bf16.mxu0 0
    %7077 = vmatpush1.bf16.msra.mxu0 0
    %7078 = vmatprep.subr.bf16.mxu0 0
    %7079 = vmatpush1.bf16.msra.mxu0 0
    %7080 = vmatprep.subr.bf16.mxu0 0
    %7081 = vmatpush1.bf16.msra.mxu0 0
    %7082 = vmatprep.subr.bf16.mxu0 0
    %7083 = vmatpush1.bf16.msra.mxu0 0
    %7084 = vmatprep.subr.bf16.mxu0 0
    %7085 = vmatpush1.bf16.msra.mxu0 0
    %7086 = vmatprep.subr.bf16.mxu0 0
    %7087 = vmatpush1.bf16.msra.mxu0 0
    %7088 = vmatprep.subr.bf16.mxu0 0
    %7089 = vmatpush1.bf16.msra.mxu0 0
    %7090 = vmatprep.subr.bf16.mxu0 0
    %7091 = vmatpush1.bf16.msra.mxu0 0
    %7092 = vmatprep.subr.bf16.mxu0 0
    %7093 = vmatpush1.bf16.msra.mxu0 0
    %7094 = vmatprep.subr.bf16.mxu0 0
    %7095 = vmatpush1.bf16.msra.mxu0 0
    %7096 = vmatprep.subr.bf16.mxu0 0
    %7097 = vmatpush1.bf16.msra.mxu0 0
    %7098 = vmatprep.subr.bf16.mxu0 0
    %7099 = vmatpush1.bf16.msra.mxu0 0
    %7100 = vmatprep.subr.bf16.mxu0 0
    %7101 = vmatpush1.bf16.msra.mxu0 0
    %7102 = vmatprep.mubr.bf16.mxu0 0
    %7103 = vmatmul.mubr.bf16.gmra.mrb[0].mxu0 %v6892
    %v7104 = vpop.f32.mrb[0].mxu0
    %v7105 = vadd.f32 %v7013, %v7104
    %v7106 = vpop.f32.mrb[0].mxu0
    %v7107 = vadd.f32 %v7017, %v7106
    %v7108 = vpop.f32.mrb[0].mxu0
    %v7109 = vadd.f32 %v7013, %v7108
    %v7110 = vpop.f32.mrb[0].mxu0
    %v7111 = vadd.f32 %v7017, %v7110
    %7112 = vdwg.mxu0
    %7113 = vmatprep.subr.bf16.mxu0 %v7057
    %7114 = vmatpush1.bf16.msra.mxu0 %v7056
    %7115 = vmatprep.subr.bf16.mxu0 %v7061
    %7116 = vmatpush1.bf16.msra.mxu0 %v7060
    %7117 = vmatprep.subr.bf16.mxu0 0
    %7118 = vmatpush1.bf16.msra.mxu0 0
    %7119 = vmatprep.subr.bf16.mxu0 0
    %7120 = vmatpush1.bf16.msra.mxu0 0
    %7121 = vmatprep.subr.bf16.mxu0 0
    %7122 = vmatpush1.bf16.msra.mxu0 0
    %7123 = vmatprep.subr.bf16.mxu0 0
    %7124 = vmatpush1.bf16.msra.mxu0 0
    %7125 = vmatprep.subr.bf16.mxu0 0
    %7126 = vmatpush1.bf16.msra.mxu0 0
    %7127 = vmatprep.subr.bf16.mxu0 0
    %7128 = vmatpush1.bf16.msra.mxu0 0
    %7129 = vmatprep.subr.bf16.mxu0 0
    %7130 = vmatpush1.bf16.msra.mxu0 0
    %7131 = vmatprep.subr.bf16.mxu0 0
    %7132 = vmatpush1.bf16.msra.mxu0 0
    %7133 = vmatprep.subr.bf16.mxu0 0
    %7134 = vmatpush1.bf16.msra.mxu0 0
    %7135 = vmatprep.subr.bf16.mxu0 0
    %7136 = vmatpush1.bf16.msra.mxu0 0
    %7137 = vmatprep.subr.bf16.mxu0 0
    %7138 = vmatpush1.bf16.msra.mxu0 0
    %7139 = vmatprep.subr.bf16.mxu0 0
    %7140 = vmatpush1.bf16.msra.mxu0 0
    %7141 = vmatprep.subr.bf16.mxu0 0
    %7142 = vmatpush1.bf16.msra.mxu0 0
    %7143 = vmatprep.subr.bf16.mxu0 0
    %7144 = vmatpush1.bf16.msra.mxu0 0
    %7145 = vmatprep.mubr.bf16.mxu0 0
    %7146 = vmatmul.mubr.bf16.gmra.mrb[0].mxu0 %v6892
    %v7147 = vpop.f32.mrb[0].mxu0
    %v7148 = vadd.f32 %v7021, %v7147
    %v7149 = vpop.f32.mrb[0].mxu0
    %v7150 = vadd.f32 %v7025, %v7149
    %v7151 = vpop.f32.mrb[0].mxu0
    %v7152 = vadd.f32 %v7021, %v7151
    %v7153 = vpop.f32.mrb[0].mxu0
    %v7154 = vadd.f32 %v7025, %v7153
    %7155 = vdwg.mxu0
    %v7156 = vmax.f32 %v7105, 0.0
    %v7157 = vmax.f32 %v7107, 0.0
    %v7158 = vmax.f32 %v7148, 0.0
    %v7159 = vmax.f32 %v7150, 0.0
    %v7160 = vmax.f32 %v7109, 0.0
    %v7161 = vmax.f32 %v7111, 0.0
    %v7162 = vmax.f32 %v7152, 0.0
    %v7163 = vmax.f32 %v7154, 0.0
    %v7164 = vpack.c.bf16 %v7160, %v7156
    %v7165 = vpack.c.bf16 %v7161, %v7157
    %v7166 = vpack.c.bf16 %v7162, %v7158
    %v7167 = vpack.c.bf16 %v7163, %v7159
    %v7176 = vunpack.c.l.b16 %v7001
    %v7177 = vunpack.c.h.b16 %v7001
    %v7178 = vunpack.c.l.b16 %v7002
    %v7179 = vunpack.c.h.b16 %v7002
    %v7180 = vunpack.c.l.b16 %v7003
    %v7181 = vunpack.c.h.b16 %v7003
    %v7182 = vunpack.c.l.b16 %v7004
    %v7183 = vunpack.c.h.b16 %v7004
    %v7184 = vunpack.c.l.b16 %v7005
    %v7185 = vunpack.c.h.b16 %v7005
    %v7186 = vunpack.c.l.b16 %v7006
    %v7187 = vunpack.c.h.b16 %v7006
    %v7188 = vunpack.c.l.b16 %v7007
    %v7189 = vunpack.c.h.b16 %v7007
    %v7190 = vunpack.c.l.b16 %v7008
    %v7191 = vunpack.c.h.b16 %v7008
    %v7192 = vpack.c.b16 %v7180, %v7176
    %v7193 = vpack.c.b16 %v7181, %v7177
    %v7194 = vpack.c.b16 %v7182, %v7178
    %v7195 = vpack.c.b16 %v7183, %v7179
    %v7196 = vpack.c.b16 %v7188, %v7184
    %v7197 = vpack.c.b16 %v7189, %v7185
    %v7198 = vpack.c.b16 %v7190, %v7186
    %v7199 = vpack.c.b16 %v7191, %v7187
    %7208 = vmatprep.subr.bf16.mxu0 %v7193
    %7209 = vmatpush1.bf16.xpose.msra.mxu0 %v7192
    %7210 = vmatprep.subr.bf16.mxu0 %v7197
    %7211 = vmatpush1.bf16.xpose.msra.mxu0 %v7196
    %7212 = vmatprep.subr.bf16.mxu0 0
    %7213 = vmatpush1.bf16.xpose.msra.mxu0 0
    %7214 = vmatprep.subr.bf16.mxu0 0
    %7215 = vmatpush1.bf16.xpose.msra.mxu0 0
    %7216 = vmatprep.subr.bf16.mxu0 0
    %7217 = vmatpush1.bf16.xpose.msra.mxu0 0
    %7218 = vmatprep.subr.bf16.mxu0 0
    %7219 = vmatpush1.bf16.xpose.msra.mxu0 0
    %7220 = vmatprep.subr.bf16.mxu0 0
    %7221 = vmatpush1.bf16.xpose.msra.mxu0 0
    %7222 = vmatprep.subr.bf16.mxu0 0
    %7223 = vmatpush1.bf16.xpose.msra.mxu0 0
    %7224 = vmatprep.subr.bf16.mxu0 0
    %7225 = vmatpush1.bf16.xpose.msra.mxu0 0
    %7226 = vmatprep.subr.bf16.mxu0 0
    %7227 = vmatpush1.bf16.xpose.msra.mxu0 0
    %7228 = vmatprep.subr.bf16.mxu0 0
    %7229 = vmatpush1.bf16.xpose.msra.mxu0 0
    %7230 = vmatprep.subr.bf16.mxu0 0
    %7231 = vmatpush1.bf16.xpose.msra.mxu0 0
    %7232 = vmatprep.subr.bf16.mxu0 0
    %7233 = vmatpush1.bf16.xpose.msra.mxu0 0
    %7234 = vmatprep.subr.bf16.mxu0 0
    %7235 = vmatpush1.bf16.xpose.msra.mxu0 0
    %7236 = vmatprep.subr.bf16.mxu0 0
    %7237 = vmatpush1.bf16.xpose.msra.mxu0 0
    %7238 = vmatprep.subr.bf16.mxu0 0
    %7239 = vmatpush1.bf16.xpose.msra.mxu0 0
    %7240 = vmatprep.mubr.bf16.mxu0 %v7165
    %7241 = vmatmul.mubr.bf16.gmra.mrb[0].mxu0 %v7164
    %v7242 = vpop.f32.mrb[0].mxu0
    %v7243 = vadd.f32 0.0, %v7242
    %v7244 = vpop.f32.mrb[0].mxu0
    %v7245 = vpop.f32.mrb[0].mxu0
    %v7246 = vadd.f32 0.0, %v7245
    %v7247 = vpop.f32.mrb[0].mxu0
    %7248 = vdwg.mxu0
    %7249 = vmatprep.subr.bf16.mxu0 %v7195
    %7250 = vmatpush1.bf16.xpose.msra.mxu0 %v7194
    %7251 = vmatprep.subr.bf16.mxu0 %v7199
    %7252 = vmatpush1.bf16.xpose.msra.mxu0 %v7198
    %7253 = vmatprep.subr.bf16.mxu0 0
    %7254 = vmatpush1.bf16.xpose.msra.mxu0 0
    %7255 = vmatprep.subr.bf16.mxu0 0
    %7256 = vmatpush1.bf16.xpose.msra.mxu0 0
    %7257 = vmatprep.subr.bf16.mxu0 0
    %7258 = vmatpush1.bf16.xpose.msra.mxu0 0
    %7259 = vmatprep.subr.bf16.mxu0 0
    %7260 = vmatpush1.bf16.xpose.msra.mxu0 0
    %7261 = vmatprep.subr.bf16.mxu0 0
    %7262 = vmatpush1.bf16.xpose.msra.mxu0 0
    %7263 = vmatprep.subr.bf16.mxu0 0
    %7264 = vmatpush1.bf16.xpose.msra.mxu0 0
    %7265 = vmatprep.subr.bf16.mxu0 0
    %7266 = vmatpush1.bf16.xpose.msra.mxu0 0
    %7267 = vmatprep.subr.bf16.mxu0 0
    %7268 = vmatpush1.bf16.xpose.msra.mxu0 0
    %7269 = vmatprep.subr.bf16.mxu0 0
    %7270 = vmatpush1.bf16.xpose.msra.mxu0 0
    %7271 = vmatprep.subr.bf16.mxu0 0
    %7272 = vmatpush1.bf16.xpose.msra.mxu0 0
    %7273 = vmatprep.subr.bf16.mxu0 0
    %7274 = vmatpush1.bf16.xpose.msra.mxu0 0
    %7275 = vmatprep.subr.bf16.mxu0 0
    %7276 = vmatpush1.bf16.xpose.msra.mxu0 0
    %7277 = vmatprep.subr.bf16.mxu0 0
    %7278 = vmatpush1.bf16.xpose.msra.mxu0 0
    %7279 = vmatprep.subr.bf16.mxu0 0
    %7280 = vmatpush1.bf16.xpose.msra.mxu0 0
    %7281 = vmatprep.mubr.bf16.mxu0 %v7167
    %7282 = vmatmul.mubr.bf16.gmra.mrb[0].mxu0 %v7166
    %v7283 = vpop.f32.mrb[0].mxu0
    %v7284 = vadd.f32 %v7243, %v7283
    %v7285 = vpop.f32.mrb[0].mxu0
    %v7286 = vpop.f32.mrb[0].mxu0
    %v7287 = vadd.f32 %v7246, %v7286
    %v7288 = vpop.f32.mrb[0].mxu0
    %7289 = vdwg.mxu0
    %v7298 = vunpack.c.l.b16 %v6822
    %v7299 = vunpack.c.h.b16 %v6822
    %v7300 = vunpack.c.l.b16 %v6823
    %v7301 = vunpack.c.h.b16 %v6823
    %v7302 = vunpack.c.l.b16 %v6824
    %v7303 = vunpack.c.h.b16 %v6824
    %v7304 = vunpack.c.l.b16 %v6825
    %v7305 = vunpack.c.h.b16 %v6825
    %v7306 = vunpack.c.l.b16 %v6826
    %v7307 = vunpack.c.h.b16 %v6826
    %v7308 = vunpack.c.l.b16 %v6827
    %v7309 = vunpack.c.h.b16 %v6827
    %v7310 = vunpack.c.l.b16 %v6828
    %v7311 = vunpack.c.h.b16 %v6828
    %v7312 = vunpack.c.l.b16 %v6829
    %v7313 = vunpack.c.h.b16 %v6829
    %v7314 = vpack.c.b16 %v7302, %v7298
    %v7315 = vpack.c.b16 %v7303, %v7299
    %v7316 = vpack.c.b16 %v7304, %v7300
    %v7317 = vpack.c.b16 %v7305, %v7301
    %v7318 = vpack.c.b16 %v7310, %v7306
    %v7319 = vpack.c.b16 %v7311, %v7307
    %v7320 = vpack.c.b16 %v7312, %v7308
    %v7321 = vpack.c.b16 %v7313, %v7309
    %7330 = vmatprep.subr.bf16.mxu0 %v7315
    %7331 = vmatpush1.bf16.xpose.msra.mxu0 %v7314
    %7332 = vmatprep.subr.bf16.mxu0 %v7319
    %7333 = vmatpush1.bf16.xpose.msra.mxu0 %v7318
    %7334 = vmatprep.subr.bf16.mxu0 0
    %7335 = vmatpush1.bf16.xpose.msra.mxu0 0
    %7336 = vmatprep.subr.bf16.mxu0 0
    %7337 = vmatpush1.bf16.xpose.msra.mxu0 0
    %7338 = vmatprep.subr.bf16.mxu0 0
    %7339 = vmatpush1.bf16.xpose.msra.mxu0 0
    %7340 = vmatprep.subr.bf16.mxu0 0
    %7341 = vmatpush1.bf16.xpose.msra.mxu0 0
    %7342 = vmatprep.subr.bf16.mxu0 0
    %7343 = vmatpush1.bf16.xpose.msra.mxu0 0
    %7344 = vmatprep.subr.bf16.mxu0 0
    %7345 = vmatpush1.bf16.xpose.msra.mxu0 0
    %7346 = vmatprep.subr.bf16.mxu0 0
    %7347 = vmatpush1.bf16.xpose.msra.mxu0 0
    %7348 = vmatprep.subr.bf16.mxu0 0
    %7349 = vmatpush1.bf16.xpose.msra.mxu0 0
    %7350 = vmatprep.subr.bf16.mxu0 0
    %7351 = vmatpush1.bf16.xpose.msra.mxu0 0
    %7352 = vmatprep.subr.bf16.mxu0 0
    %7353 = vmatpush1.bf16.xpose.msra.mxu0 0
    %7354 = vmatprep.subr.bf16.mxu0 0
    %7355 = vmatpush1.bf16.xpose.msra.mxu0 0
    %7356 = vmatprep.subr.bf16.mxu0 0
    %7357 = vmatpush1.bf16.xpose.msra.mxu0 0
    %7358 = vmatprep.subr.bf16.mxu0 0
    %7359 = vmatpush1.bf16.xpose.msra.mxu0 0
    %7360 = vmatprep.subr.bf16.mxu0 0
    %7361 = vmatpush1.bf16.xpose.msra.mxu0 0
    %7362 = vmatprep.mubr.bf16.mxu0 %v6989
    %7363 = vmatmul.mubr.bf16.gmra.mrb[0].mxu0 %v6988
    %v7364 = vpop.f32.mrb[0].mxu0
    %v7365 = vadd.f32 %v7284, %v7364
    %v7366 = vpop.f32.mrb[0].mxu0
    %v7367 = vpop.f32.mrb[0].mxu0
    %v7368 = vadd.f32 %v7287, %v7367
    %v7369 = vpop.f32.mrb[0].mxu0
    %7370 = vdwg.mxu0
    %7371 = vmatprep.subr.bf16.mxu0 %v7317
    %7372 = vmatpush1.bf16.xpose.msra.mxu0 %v7316
    %7373 = vmatprep.subr.bf16.mxu0 %v7321
    %7374 = vmatpush1.bf16.xpose.msra.mxu0 %v7320
    %7375 = vmatprep.subr.bf16.mxu0 0
    %7376 = vmatpush1.bf16.xpose.msra.mxu0 0
    %7377 = vmatprep.subr.bf16.mxu0 0
    %7378 = vmatpush1.bf16.xpose.msra.mxu0 0
    %7379 = vmatprep.subr.bf16.mxu0 0
    %7380 = vmatpush1.bf16.xpose.msra.mxu0 0
    %7381 = vmatprep.subr.bf16.mxu0 0
    %7382 = vmatpush1.bf16.xpose.msra.mxu0 0
    %7383 = vmatprep.subr.bf16.mxu0 0
    %7384 = vmatpush1.bf16.xpose.msra.mxu0 0
    %7385 = vmatprep.subr.bf16.mxu0 0
    %7386 = vmatpush1.bf16.xpose.msra.mxu0 0
    %7387 = vmatprep.subr.bf16.mxu0 0
    %7388 = vmatpush1.bf16.xpose.msra.mxu0 0
    %7389 = vmatprep.subr.bf16.mxu0 0
    %7390 = vmatpush1.bf16.xpose.msra.mxu0 0
    %7391 = vmatprep.subr.bf16.mxu0 0
    %7392 = vmatpush1.bf16.xpose.msra.mxu0 0
    %7393 = vmatprep.subr.bf16.mxu0 0
    %7394 = vmatpush1.bf16.xpose.msra.mxu0 0
    %7395 = vmatprep.subr.bf16.mxu0 0
    %7396 = vmatpush1.bf16.xpose.msra.mxu0 0
    %7397 = vmatprep.subr.bf16.mxu0 0
    %7398 = vmatpush1.bf16.xpose.msra.mxu0 0
    %7399 = vmatprep.subr.bf16.mxu0 0
    %7400 = vmatpush1.bf16.xpose.msra.mxu0 0
    %7401 = vmatprep.subr.bf16.mxu0 0
    %7402 = vmatpush1.bf16.xpose.msra.mxu0 0
    %7403 = vmatprep.mubr.bf16.mxu0 %v6991
    %7404 = vmatmul.mubr.bf16.gmra.mrb[0].mxu0 %v6990
    %v7405 = vpop.f32.mrb[0].mxu0
    %v7406 = vadd.f32 %v7365, %v7405
    %v7407 = vpop.f32.mrb[0].mxu0
    %v7408 = vpop.f32.mrb[0].mxu0
    %v7409 = vadd.f32 %v7368, %v7408
    %v7410 = vpop.f32.mrb[0].mxu0
    %7411 = vdwg.mxu0
    %v7412 = vld [vmem:[%s6810 + $0x20] sm:$0xff]
    %v7413 = vld [vmem:[%s6810 + $0x28] sm:$0xff]
    %v7414 = vld [vmem:[%s6810 + $0x60] sm:$0xff]
    %v7415 = vld [vmem:[%s6810 + $0x68] sm:$0xff]
    %v7416 = vld [vmem:[%s6810 + $0xa0] sm:$0xff]
    %v7417 = vld [vmem:[%s6810 + $0xa8] sm:$0xff]
    %v7418 = vld [vmem:[%s6810 + $0xe0] sm:$0xff]
    %v7419 = vld [vmem:[%s6810 + $0xe8] sm:$0xff]
    %v7420 = vld [vmem:[%s6819 + $0x8] sm:$0xf]
    %v7421 = vld [vmem:[%s6821 + $0x20] sm:$0xff]
    %v7422 = vld [vmem:[%s6821 + $0x28] sm:$0xff]
    %v7423 = vld [vmem:[%s6821 + $0x60] sm:$0xff]
    %v7424 = vld [vmem:[%s6821 + $0x68] sm:$0xff]
    %v7425 = vld [vmem:[%s6821 + $0xa0] sm:$0xff]
    %v7426 = vld [vmem:[%s6821 + $0xa8] sm:$0xff]
    %v7427 = vld [vmem:[%s6821 + $0xe0] sm:$0xff]
    %v7428 = vld [vmem:[%s6821 + $0xe8] sm:$0xff]
    %v7430 = vlaneseq
    %v7431 = vshrl.u32 %v7430, 7
    %v7432 = vsub.s32 0, %v7431
    %v7433 = vrot.slane %v7420, %v7432
    %v7434 = vlaneseq
    %v7435 = vshrl.u32 %v7434, 7
    %v7436 = vsub.s32 1, %v7435
    %v7437 = vrot.slane %v7420, %v7436
    %v7438 = vlaneseq
    %v7439 = vshrl.u32 %v7438, 7
    %v7440 = vsub.s32 2, %v7439
    %v7441 = vrot.slane %v7420, %v7440
    %v7442 = vlaneseq
    %v7443 = vshrl.u32 %v7442, 7
    %v7444 = vsub.s32 3, %v7443
    %v7445 = vrot.slane %v7420, %v7444
    %v7458 = vunpack.c.l.b16 %v7412
    %v7459 = vunpack.c.h.b16 %v7412
    %v7460 = vunpack.c.l.b16 %v7413
    %v7461 = vunpack.c.h.b16 %v7413
    %v7462 = vunpack.c.l.b16 %v7414
    %v7463 = vunpack.c.h.b16 %v7414
    %v7464 = vunpack.c.l.b16 %v7415
    %v7465 = vunpack.c.h.b16 %v7415
    %v7466 = vunpack.c.l.b16 %v7416
    %v7467 = vunpack.c.h.b16 %v7416
    %v7468 = vunpack.c.l.b16 %v7417
    %v7469 = vunpack.c.h.b16 %v7417
    %v7470 = vunpack.c.l.b16 %v7418
    %v7471 = vunpack.c.h.b16 %v7418
    %v7472 = vunpack.c.l.b16 %v7419
    %v7473 = vunpack.c.h.b16 %v7419
    %v7474 = vpack.c.b16 %v7462, %v7458
    %v7475 = vpack.c.b16 %v7463, %v7459
    %v7476 = vpack.c.b16 %v7464, %v7460
    %v7477 = vpack.c.b16 %v7465, %v7461
    %v7478 = vpack.c.b16 %v7470, %v7466
    %v7479 = vpack.c.b16 %v7471, %v7467
    %v7480 = vpack.c.b16 %v7472, %v7468
    %v7481 = vpack.c.b16 %v7473, %v7469
    %7490 = vmatprep.subr.bf16.mxu0 %v7475
    %7491 = vmatpush1.bf16.msra.mxu0 %v7474
    %7492 = vmatprep.subr.bf16.mxu0 %v7479
    %7493 = vmatpush1.bf16.msra.mxu0 %v7478
    %7494 = vmatprep.subr.bf16.mxu0 0
    %7495 = vmatpush1.bf16.msra.mxu0 0
    %7496 = vmatprep.subr.bf16.mxu0 0
    %7497 = vmatpush1.bf16.msra.mxu0 0
    %7498 = vmatprep.subr.bf16.mxu0 0
    %7499 = vmatpush1.bf16.msra.mxu0 0
    %7500 = vmatprep.subr.bf16.mxu0 0
    %7501 = vmatpush1.bf16.msra.mxu0 0
    %7502 = vmatprep.subr.bf16.mxu0 0
    %7503 = vmatpush1.bf16.msra.mxu0 0
    %7504 = vmatprep.subr.bf16.mxu0 0
    %7505 = vmatpush1.bf16.msra.mxu0 0
    %7506 = vmatprep.subr.bf16.mxu0 0
    %7507 = vmatpush1.bf16.msra.mxu0 0
    %7508 = vmatprep.subr.bf16.mxu0 0
    %7509 = vmatpush1.bf16.msra.mxu0 0
    %7510 = vmatprep.subr.bf16.mxu0 0
    %7511 = vmatpush1.bf16.msra.mxu0 0
    %7512 = vmatprep.subr.bf16.mxu0 0
    %7513 = vmatpush1.bf16.msra.mxu0 0
    %7514 = vmatprep.subr.bf16.mxu0 0
    %7515 = vmatpush1.bf16.msra.mxu0 0
    %7516 = vmatprep.subr.bf16.mxu0 0
    %7517 = vmatpush1.bf16.msra.mxu0 0
    %7518 = vmatprep.subr.bf16.mxu0 0
    %7519 = vmatpush1.bf16.msra.mxu0 0
    %7520 = vmatprep.subr.bf16.mxu0 0
    %7521 = vmatpush1.bf16.msra.mxu0 0
    %7522 = vmatprep.mubr.bf16.mxu0 0
    %7523 = vmatmul.mubr.bf16.gmra.mrb[0].mxu0 %v6892
    %v7524 = vpop.f32.mrb[0].mxu0
    %v7525 = vadd.f32 %v7433, %v7524
    %v7526 = vpop.f32.mrb[0].mxu0
    %v7527 = vadd.f32 %v7437, %v7526
    %v7528 = vpop.f32.mrb[0].mxu0
    %v7529 = vadd.f32 %v7433, %v7528
    %v7530 = vpop.f32.mrb[0].mxu0
    %v7531 = vadd.f32 %v7437, %v7530
    %7532 = vdwg.mxu0
    %7533 = vmatprep.subr.bf16.mxu0 %v7477
    %7534 = vmatpush1.bf16.msra.mxu0 %v7476
    %7535 = vmatprep.subr.bf16.mxu0 %v7481
    %7536 = vmatpush1.bf16.msra.mxu0 %v7480
    %7537 = vmatprep.subr.bf16.mxu0 0
    %7538 = vmatpush1.bf16.msra.mxu0 0
    %7539 = vmatprep.subr.bf16.mxu0 0
    %7540 = vmatpush1.bf16.msra.mxu0 0
    %7541 = vmatprep.subr.bf16.mxu0 0
    %7542 = vmatpush1.bf16.msra.mxu0 0
    %7543 = vmatprep.subr.bf16.mxu0 0
    %7544 = vmatpush1.bf16.msra.mxu0 0
    %7545 = vmatprep.subr.bf16.mxu0 0
    %7546 = vmatpush1.bf16.msra.mxu0 0
    %7547 = vmatprep.subr.bf16.mxu0 0
    %7548 = vmatpush1.bf16.msra.mxu0 0
    %7549 = vmatprep.subr.bf16.mxu0 0
    %7550 = vmatpush1.bf16.msra.mxu0 0
    %7551 = vmatprep.subr.bf16.mxu0 0
    %7552 = vmatpush1.bf16.msra.mxu0 0
    %7553 = vmatprep.subr.bf16.mxu0 0
    %7554 = vmatpush1.bf16.msra.mxu0 0
    %7555 = vmatprep.subr.bf16.mxu0 0
    %7556 = vmatpush1.bf16.msra.mxu0 0
    %7557 = vmatprep.subr.bf16.mxu0 0
    %7558 = vmatpush1.bf16.msra.mxu0 0
    %7559 = vmatprep.subr.bf16.mxu0 0
    %7560 = vmatpush1.bf16.msra.mxu0 0
    %7561 = vmatprep.subr.bf16.mxu0 0
    %7562 = vmatpush1.bf16.msra.mxu0 0
    %7563 = vmatprep.subr.bf16.mxu0 0
    %7564 = vmatpush1.bf16.msra.mxu0 0
    %7565 = vmatprep.mubr.bf16.mxu0 0
    %7566 = vmatmul.mubr.bf16.gmra.mrb[0].mxu0 %v6892
    %v7567 = vpop.f32.mrb[0].mxu0
    %v7568 = vadd.f32 %v7441, %v7567
    %v7569 = vpop.f32.mrb[0].mxu0
    %v7570 = vadd.f32 %v7445, %v7569
    %v7571 = vpop.f32.mrb[0].mxu0
    %v7572 = vadd.f32 %v7441, %v7571
    %v7573 = vpop.f32.mrb[0].mxu0
    %v7574 = vadd.f32 %v7445, %v7573
    %7575 = vdwg.mxu0
    %v7576 = vmax.f32 %v7525, 0.0
    %v7577 = vmax.f32 %v7527, 0.0
    %v7578 = vmax.f32 %v7568, 0.0
    %v7579 = vmax.f32 %v7570, 0.0
    %v7580 = vmax.f32 %v7529, 0.0
    %v7581 = vmax.f32 %v7531, 0.0
    %v7582 = vmax.f32 %v7572, 0.0
    %v7583 = vmax.f32 %v7574, 0.0
    %v7584 = vpack.c.bf16 %v7580, %v7576
    %v7585 = vpack.c.bf16 %v7581, %v7577
    %v7586 = vpack.c.bf16 %v7582, %v7578
    %v7587 = vpack.c.bf16 %v7583, %v7579
    %v7596 = vunpack.c.l.b16 %v7421
    %v7597 = vunpack.c.h.b16 %v7421
    %v7598 = vunpack.c.l.b16 %v7422
    %v7599 = vunpack.c.h.b16 %v7422
    %v7600 = vunpack.c.l.b16 %v7423
    %v7601 = vunpack.c.h.b16 %v7423
    %v7602 = vunpack.c.l.b16 %v7424
    %v7603 = vunpack.c.h.b16 %v7424
    %v7604 = vunpack.c.l.b16 %v7425
    %v7605 = vunpack.c.h.b16 %v7425
    %v7606 = vunpack.c.l.b16 %v7426
    %v7607 = vunpack.c.h.b16 %v7426
    %v7608 = vunpack.c.l.b16 %v7427
    %v7609 = vunpack.c.h.b16 %v7427
    %v7610 = vunpack.c.l.b16 %v7428
    %v7611 = vunpack.c.h.b16 %v7428
    %v7612 = vpack.c.b16 %v7600, %v7596
    %v7613 = vpack.c.b16 %v7601, %v7597
    %v7614 = vpack.c.b16 %v7602, %v7598
    %v7615 = vpack.c.b16 %v7603, %v7599
    %v7616 = vpack.c.b16 %v7608, %v7604
    %v7617 = vpack.c.b16 %v7609, %v7605
    %v7618 = vpack.c.b16 %v7610, %v7606
    %v7619 = vpack.c.b16 %v7611, %v7607
    %7628 = vmatprep.subr.bf16.mxu0 %v7613
    %7629 = vmatpush1.bf16.xpose.msra.mxu0 %v7612
    %7630 = vmatprep.subr.bf16.mxu0 %v7617
    %7631 = vmatpush1.bf16.xpose.msra.mxu0 %v7616
    %7632 = vmatprep.subr.bf16.mxu0 0
    %7633 = vmatpush1.bf16.xpose.msra.mxu0 0
    %7634 = vmatprep.subr.bf16.mxu0 0
    %7635 = vmatpush1.bf16.xpose.msra.mxu0 0
    %7636 = vmatprep.subr.bf16.mxu0 0
    %7637 = vmatpush1.bf16.xpose.msra.mxu0 0
    %7638 = vmatprep.subr.bf16.mxu0 0
    %7639 = vmatpush1.bf16.xpose.msra.mxu0 0
    %7640 = vmatprep.subr.bf16.mxu0 0
    %7641 = vmatpush1.bf16.xpose.msra.mxu0 0
    %7642 = vmatprep.subr.bf16.mxu0 0
    %7643 = vmatpush1.bf16.xpose.msra.mxu0 0
    %7644 = vmatprep.subr.bf16.mxu0 0
    %7645 = vmatpush1.bf16.xpose.msra.mxu0 0
    %7646 = vmatprep.subr.bf16.mxu0 0
    %7647 = vmatpush1.bf16.xpose.msra.mxu0 0
    %7648 = vmatprep.subr.bf16.mxu0 0
    %7649 = vmatpush1.bf16.xpose.msra.mxu0 0
    %7650 = vmatprep.subr.bf16.mxu0 0
    %7651 = vmatpush1.bf16.xpose.msra.mxu0 0
    %7652 = vmatprep.subr.bf16.mxu0 0
    %7653 = vmatpush1.bf16.xpose.msra.mxu0 0
    %7654 = vmatprep.subr.bf16.mxu0 0
    %7655 = vmatpush1.bf16.xpose.msra.mxu0 0
    %7656 = vmatprep.subr.bf16.mxu0 0
    %7657 = vmatpush1.bf16.xpose.msra.mxu0 0
    %7658 = vmatprep.subr.bf16.mxu0 0
    %7659 = vmatpush1.bf16.xpose.msra.mxu0 0
    %7660 = vmatprep.mubr.bf16.mxu0 %v7585
    %7661 = vmatmul.mubr.bf16.gmra.mrb[0].mxu0 %v7584
    %v7662 = vpop.f32.mrb[0].mxu0
    %v7663 = vadd.f32 0.0, %v7662
    %v7664 = vpop.f32.mrb[0].mxu0
    %v7665 = vpop.f32.mrb[0].mxu0
    %v7666 = vadd.f32 0.0, %v7665
    %v7667 = vpop.f32.mrb[0].mxu0
    %7668 = vdwg.mxu0
    %7669 = vmatprep.subr.bf16.mxu0 %v7615
    %7670 = vmatpush1.bf16.xpose.msra.mxu0 %v7614
    %7671 = vmatprep.subr.bf16.mxu0 %v7619
    %7672 = vmatpush1.bf16.xpose.msra.mxu0 %v7618
    %7673 = vmatprep.subr.bf16.mxu0 0
    %7674 = vmatpush1.bf16.xpose.msra.mxu0 0
    %7675 = vmatprep.subr.bf16.mxu0 0
    %7676 = vmatpush1.bf16.xpose.msra.mxu0 0
    %7677 = vmatprep.subr.bf16.mxu0 0
    %7678 = vmatpush1.bf16.xpose.msra.mxu0 0
    %7679 = vmatprep.subr.bf16.mxu0 0
    %7680 = vmatpush1.bf16.xpose.msra.mxu0 0
    %7681 = vmatprep.subr.bf16.mxu0 0
    %7682 = vmatpush1.bf16.xpose.msra.mxu0 0
    %7683 = vmatprep.subr.bf16.mxu0 0
    %7684 = vmatpush1.bf16.xpose.msra.mxu0 0
    %7685 = vmatprep.subr.bf16.mxu0 0
    %7686 = vmatpush1.bf16.xpose.msra.mxu0 0
    %7687 = vmatprep.subr.bf16.mxu0 0
    %7688 = vmatpush1.bf16.xpose.msra.mxu0 0
    %7689 = vmatprep.subr.bf16.mxu0 0
    %7690 = vmatpush1.bf16.xpose.msra.mxu0 0
    %7691 = vmatprep.subr.bf16.mxu0 0
    %7692 = vmatpush1.bf16.xpose.msra.mxu0 0
    %7693 = vmatprep.subr.bf16.mxu0 0
    %7694 = vmatpush1.bf16.xpose.msra.mxu0 0
    %7695 = vmatprep.subr.bf16.mxu0 0
    %7696 = vmatpush1.bf16.xpose.msra.mxu0 0
    %7697 = vmatprep.subr.bf16.mxu0 0
    %7698 = vmatpush1.bf16.xpose.msra.mxu0 0
    %7699 = vmatprep.subr.bf16.mxu0 0
    %7700 = vmatpush1.bf16.xpose.msra.mxu0 0
    %7701 = vmatprep.mubr.bf16.mxu0 %v7587
    %7702 = vmatmul.mubr.bf16.gmra.mrb[0].mxu0 %v7586
    %v7703 = vpop.f32.mrb[0].mxu0
    %v7704 = vadd.f32 %v7663, %v7703
    %v7705 = vpop.f32.mrb[0].mxu0
    %v7706 = vpop.f32.mrb[0].mxu0
    %v7707 = vadd.f32 %v7666, %v7706
    %v7708 = vpop.f32.mrb[0].mxu0
    %7709 = vdwg.mxu0
    %v7710 = vadd.f32 %v7406, %v7704
    %v7711 = vadd.f32 %v7409, %v7707
    %v7712 = vld [vmem:[%s6810 + $0x30] sm:$0xff]
    %v7713 = vld [vmem:[%s6810 + $0x38] sm:$0xff]
    %v7714 = vld [vmem:[%s6810 + $0x70] sm:$0xff]
    %v7715 = vld [vmem:[%s6810 + $0x78] sm:$0xff]
    %v7716 = vld [vmem:[%s6810 + $0xb0] sm:$0xff]
    %v7717 = vld [vmem:[%s6810 + $0xb8] sm:$0xff]
    %v7718 = vld [vmem:[%s6810 + $0xf0] sm:$0xff]
    %v7719 = vld [vmem:[%s6810 + $0xf8] sm:$0xff]
    %v7720 = vld [vmem:[%s6819 + $0xc] sm:$0xf]
    %v7721 = vld [vmem:[%s6821 + $0x30] sm:$0xff]
    %v7722 = vld [vmem:[%s6821 + $0x38] sm:$0xff]
    %v7723 = vld [vmem:[%s6821 + $0x70] sm:$0xff]
    %v7724 = vld [vmem:[%s6821 + $0x78] sm:$0xff]
    %v7725 = vld [vmem:[%s6821 + $0xb0] sm:$0xff]
    %v7726 = vld [vmem:[%s6821 + $0xb8] sm:$0xff]
    %v7727 = vld [vmem:[%s6821 + $0xf0] sm:$0xff]
    %v7728 = vld [vmem:[%s6821 + $0xf8] sm:$0xff]
    %v7730 = vlaneseq
    %v7731 = vshrl.u32 %v7730, 7
    %v7732 = vsub.s32 0, %v7731
    %v7733 = vrot.slane %v7720, %v7732
    %v7734 = vlaneseq
    %v7735 = vshrl.u32 %v7734, 7
    %v7736 = vsub.s32 1, %v7735
    %v7737 = vrot.slane %v7720, %v7736
    %v7738 = vlaneseq
    %v7739 = vshrl.u32 %v7738, 7
    %v7740 = vsub.s32 2, %v7739
    %v7741 = vrot.slane %v7720, %v7740
    %v7742 = vlaneseq
    %v7743 = vshrl.u32 %v7742, 7
    %v7744 = vsub.s32 3, %v7743
    %v7745 = vrot.slane %v7720, %v7744
    %v7758 = vunpack.c.l.b16 %v7712
    %v7759 = vunpack.c.h.b16 %v7712
    %v7760 = vunpack.c.l.b16 %v7713
    %v7761 = vunpack.c.h.b16 %v7713
    %v7762 = vunpack.c.l.b16 %v7714
    %v7763 = vunpack.c.h.b16 %v7714
    %v7764 = vunpack.c.l.b16 %v7715
    %v7765 = vunpack.c.h.b16 %v7715
    %v7766 = vunpack.c.l.b16 %v7716
    %v7767 = vunpack.c.h.b16 %v7716
    %v7768 = vunpack.c.l.b16 %v7717
    %v7769 = vunpack.c.h.b16 %v7717
    %v7770 = vunpack.c.l.b16 %v7718
    %v7771 = vunpack.c.h.b16 %v7718
    %v7772 = vunpack.c.l.b16 %v7719
    %v7773 = vunpack.c.h.b16 %v7719
    %v7774 = vpack.c.b16 %v7762, %v7758
    %v7775 = vpack.c.b16 %v7763, %v7759
    %v7776 = vpack.c.b16 %v7764, %v7760
    %v7777 = vpack.c.b16 %v7765, %v7761
    %v7778 = vpack.c.b16 %v7770, %v7766
    %v7779 = vpack.c.b16 %v7771, %v7767
    %v7780 = vpack.c.b16 %v7772, %v7768
    %v7781 = vpack.c.b16 %v7773, %v7769
    %7790 = vmatprep.subr.bf16.mxu0 %v7775
    %7791 = vmatpush1.bf16.msra.mxu0 %v7774
    %7792 = vmatprep.subr.bf16.mxu0 %v7779
    %7793 = vmatpush1.bf16.msra.mxu0 %v7778
    %7794 = vmatprep.subr.bf16.mxu0 0
    %7795 = vmatpush1.bf16.msra.mxu0 0
    %7796 = vmatprep.subr.bf16.mxu0 0
    %7797 = vmatpush1.bf16.msra.mxu0 0
    %7798 = vmatprep.subr.bf16.mxu0 0
    %7799 = vmatpush1.bf16.msra.mxu0 0
    %7800 = vmatprep.subr.bf16.mxu0 0
    %7801 = vmatpush1.bf16.msra.mxu0 0
    %7802 = vmatprep.subr.bf16.mxu0 0
    %7803 = vmatpush1.bf16.msra.mxu0 0
    %7804 = vmatprep.subr.bf16.mxu0 0
    %7805 = vmatpush1.bf16.msra.mxu0 0
    %7806 = vmatprep.subr.bf16.mxu0 0
    %7807 = vmatpush1.bf16.msra.mxu0 0
    %7808 = vmatprep.subr.bf16.mxu0 0
    %7809 = vmatpush1.bf16.msra.mxu0 0
    %7810 = vmatprep.subr.bf16.mxu0 0
    %7811 = vmatpush1.bf16.msra.mxu0 0
    %7812 = vmatprep.subr.bf16.mxu0 0
    %7813 = vmatpush1.bf16.msra.mxu0 0
    %7814 = vmatprep.subr.bf16.mxu0 0
    %7815 = vmatpush1.bf16.msra.mxu0 0
    %7816 = vmatprep.subr.bf16.mxu0 0
    %7817 = vmatpush1.bf16.msra.mxu0 0
    %7818 = vmatprep.subr.bf16.mxu0 0
    %7819 = vmatpush1.bf16.msra.mxu0 0
    %7820 = vmatprep.subr.bf16.mxu0 0
    %7821 = vmatpush1.bf16.msra.mxu0 0
    %7822 = vmatprep.mubr.bf16.mxu0 0
    %7823 = vmatmul.mubr.bf16.gmra.mrb[0].mxu0 %v6892
    %v7824 = vpop.f32.mrb[0].mxu0
    %v7825 = vadd.f32 %v7733, %v7824
    %v7826 = vpop.f32.mrb[0].mxu0
    %v7827 = vadd.f32 %v7737, %v7826
    %v7828 = vpop.f32.mrb[0].mxu0
    %v7829 = vadd.f32 %v7733, %v7828
    %v7830 = vpop.f32.mrb[0].mxu0
    %v7831 = vadd.f32 %v7737, %v7830
    %7832 = vdwg.mxu0
    %7833 = vmatprep.subr.bf16.mxu0 %v7777
    %7834 = vmatpush1.bf16.msra.mxu0 %v7776
    %7835 = vmatprep.subr.bf16.mxu0 %v7781
    %7836 = vmatpush1.bf16.msra.mxu0 %v7780
    %7837 = vmatprep.subr.bf16.mxu0 0
    %7838 = vmatpush1.bf16.msra.mxu0 0
    %7839 = vmatprep.subr.bf16.mxu0 0
    %7840 = vmatpush1.bf16.msra.mxu0 0
    %7841 = vmatprep.subr.bf16.mxu0 0
    %7842 = vmatpush1.bf16.msra.mxu0 0
    %7843 = vmatprep.subr.bf16.mxu0 0
    %7844 = vmatpush1.bf16.msra.mxu0 0
    %7845 = vmatprep.subr.bf16.mxu0 0
    %7846 = vmatpush1.bf16.msra.mxu0 0
    %7847 = vmatprep.subr.bf16.mxu0 0
    %7848 = vmatpush1.bf16.msra.mxu0 0
    %7849 = vmatprep.subr.bf16.mxu0 0
    %7850 = vmatpush1.bf16.msra.mxu0 0
    %7851 = vmatprep.subr.bf16.mxu0 0
    %7852 = vmatpush1.bf16.msra.mxu0 0
    %7853 = vmatprep.subr.bf16.mxu0 0
    %7854 = vmatpush1.bf16.msra.mxu0 0
    %7855 = vmatprep.subr.bf16.mxu0 0
    %7856 = vmatpush1.bf16.msra.mxu0 0
    %7857 = vmatprep.subr.bf16.mxu0 0
    %7858 = vmatpush1.bf16.msra.mxu0 0
    %7859 = vmatprep.subr.bf16.mxu0 0
    %7860 = vmatpush1.bf16.msra.mxu0 0
    %7861 = vmatprep.subr.bf16.mxu0 0
    %7862 = vmatpush1.bf16.msra.mxu0 0
    %7863 = vmatprep.subr.bf16.mxu0 0
    %7864 = vmatpush1.bf16.msra.mxu0 0
    %7865 = vmatprep.mubr.bf16.mxu0 0
    %7866 = vmatmul.mubr.bf16.gmra.mrb[0].mxu0 %v6892
    %v7867 = vpop.f32.mrb[0].mxu0
    %v7868 = vadd.f32 %v7741, %v7867
    %v7869 = vpop.f32.mrb[0].mxu0
    %v7870 = vadd.f32 %v7745, %v7869
    %v7871 = vpop.f32.mrb[0].mxu0
    %v7872 = vadd.f32 %v7741, %v7871
    %v7873 = vpop.f32.mrb[0].mxu0
    %v7874 = vadd.f32 %v7745, %v7873
    %7875 = vdwg.mxu0
    %v7876 = vmax.f32 %v7825, 0.0
    %v7877 = vmax.f32 %v7827, 0.0
    %v7878 = vmax.f32 %v7868, 0.0
    %v7879 = vmax.f32 %v7870, 0.0
    %v7880 = vmax.f32 %v7829, 0.0
    %v7881 = vmax.f32 %v7831, 0.0
    %v7882 = vmax.f32 %v7872, 0.0
    %v7883 = vmax.f32 %v7874, 0.0
    %v7884 = vpack.c.bf16 %v7880, %v7876
    %v7885 = vpack.c.bf16 %v7881, %v7877
    %v7886 = vpack.c.bf16 %v7882, %v7878
    %v7887 = vpack.c.bf16 %v7883, %v7879
    %v7896 = vunpack.c.l.b16 %v7721
    %v7897 = vunpack.c.h.b16 %v7721
    %v7898 = vunpack.c.l.b16 %v7722
    %v7899 = vunpack.c.h.b16 %v7722
    %v7900 = vunpack.c.l.b16 %v7723
    %v7901 = vunpack.c.h.b16 %v7723
    %v7902 = vunpack.c.l.b16 %v7724
    %v7903 = vunpack.c.h.b16 %v7724
    %v7904 = vunpack.c.l.b16 %v7725
    %v7905 = vunpack.c.h.b16 %v7725
    %v7906 = vunpack.c.l.b16 %v7726
    %v7907 = vunpack.c.h.b16 %v7726
    %v7908 = vunpack.c.l.b16 %v7727
    %v7909 = vunpack.c.h.b16 %v7727
    %v7910 = vunpack.c.l.b16 %v7728
    %v7911 = vunpack.c.h.b16 %v7728
    %v7912 = vpack.c.b16 %v7900, %v7896
    %v7913 = vpack.c.b16 %v7901, %v7897
    %v7914 = vpack.c.b16 %v7902, %v7898
    %v7915 = vpack.c.b16 %v7903, %v7899
    %v7916 = vpack.c.b16 %v7908, %v7904
    %v7917 = vpack.c.b16 %v7909, %v7905
    %v7918 = vpack.c.b16 %v7910, %v7906
    %v7919 = vpack.c.b16 %v7911, %v7907
    %7928 = vmatprep.subr.bf16.mxu0 %v7913
    %7929 = vmatpush1.bf16.xpose.msra.mxu0 %v7912
    %7930 = vmatprep.subr.bf16.mxu0 %v7917
    %7931 = vmatpush1.bf16.xpose.msra.mxu0 %v7916
    %7932 = vmatprep.subr.bf16.mxu0 0
    %7933 = vmatpush1.bf16.xpose.msra.mxu0 0
    %7934 = vmatprep.subr.bf16.mxu0 0
    %7935 = vmatpush1.bf16.xpose.msra.mxu0 0
    %7936 = vmatprep.subr.bf16.mxu0 0
    %7937 = vmatpush1.bf16.xpose.msra.mxu0 0
    %7938 = vmatprep.subr.bf16.mxu0 0
    %7939 = vmatpush1.bf16.xpose.msra.mxu0 0
    %7940 = vmatprep.subr.bf16.mxu0 0
    %7941 = vmatpush1.bf16.xpose.msra.mxu0 0
    %7942 = vmatprep.subr.bf16.mxu0 0
    %7943 = vmatpush1.bf16.xpose.msra.mxu0 0
    %7944 = vmatprep.subr.bf16.mxu0 0
    %7945 = vmatpush1.bf16.xpose.msra.mxu0 0
    %7946 = vmatprep.subr.bf16.mxu0 0
    %7947 = vmatpush1.bf16.xpose.msra.mxu0 0
    %7948 = vmatprep.subr.bf16.mxu0 0
    %7949 = vmatpush1.bf16.xpose.msra.mxu0 0
    %7950 = vmatprep.subr.bf16.mxu0 0
    %7951 = vmatpush1.bf16.xpose.msra.mxu0 0
    %7952 = vmatprep.subr.bf16.mxu0 0
    %7953 = vmatpush1.bf16.xpose.msra.mxu0 0
    %7954 = vmatprep.subr.bf16.mxu0 0
    %7955 = vmatpush1.bf16.xpose.msra.mxu0 0
    %7956 = vmatprep.subr.bf16.mxu0 0
    %7957 = vmatpush1.bf16.xpose.msra.mxu0 0
    %7958 = vmatprep.subr.bf16.mxu0 0
    %7959 = vmatpush1.bf16.xpose.msra.mxu0 0
    %7960 = vmatprep.mubr.bf16.mxu0 %v7885
    %7961 = vmatmul.mubr.bf16.gmra.mrb[0].mxu0 %v7884
    %v7962 = vpop.f32.mrb[0].mxu0
    %v7963 = vadd.f32 0.0, %v7962
    %v7964 = vpop.f32.mrb[0].mxu0
    %v7965 = vpop.f32.mrb[0].mxu0
    %v7966 = vadd.f32 0.0, %v7965
    %v7967 = vpop.f32.mrb[0].mxu0
    %7968 = vdwg.mxu0
    %7969 = vmatprep.subr.bf16.mxu0 %v7915
    %7970 = vmatpush1.bf16.xpose.msra.mxu0 %v7914
    %7971 = vmatprep.subr.bf16.mxu0 %v7919
    %7972 = vmatpush1.bf16.xpose.msra.mxu0 %v7918
    %7973 = vmatprep.subr.bf16.mxu0 0
    %7974 = vmatpush1.bf16.xpose.msra.mxu0 0
    %7975 = vmatprep.subr.bf16.mxu0 0
    %7976 = vmatpush1.bf16.xpose.msra.mxu0 0
    %7977 = vmatprep.subr.bf16.mxu0 0
    %7978 = vmatpush1.bf16.xpose.msra.mxu0 0
    %7979 = vmatprep.subr.bf16.mxu0 0
    %7980 = vmatpush1.bf16.xpose.msra.mxu0 0
    %7981 = vmatprep.subr.bf16.mxu0 0
    %7982 = vmatpush1.bf16.xpose.msra.mxu0 0
    %7983 = vmatprep.subr.bf16.mxu0 0
    %7984 = vmatpush1.bf16.xpose.msra.mxu0 0
    %7985 = vmatprep.subr.bf16.mxu0 0
    %7986 = vmatpush1.bf16.xpose.msra.mxu0 0
    %7987 = vmatprep.subr.bf16.mxu0 0
    %7988 = vmatpush1.bf16.xpose.msra.mxu0 0
    %7989 = vmatprep.subr.bf16.mxu0 0
    %7990 = vmatpush1.bf16.xpose.msra.mxu0 0
    %7991 = vmatprep.subr.bf16.mxu0 0
    %7992 = vmatpush1.bf16.xpose.msra.mxu0 0
    %7993 = vmatprep.subr.bf16.mxu0 0
    %7994 = vmatpush1.bf16.xpose.msra.mxu0 0
    %7995 = vmatprep.subr.bf16.mxu0 0
    %7996 = vmatpush1.bf16.xpose.msra.mxu0 0
    %7997 = vmatprep.subr.bf16.mxu0 0
    %7998 = vmatpush1.bf16.xpose.msra.mxu0 0
    %7999 = vmatprep.subr.bf16.mxu0 0
    %8000 = vmatpush1.bf16.xpose.msra.mxu0 0
    %8001 = vmatprep.mubr.bf16.mxu0 %v7887
    %8002 = vmatmul.mubr.bf16.gmra.mrb[0].mxu0 %v7886
    %v8003 = vpop.f32.mrb[0].mxu0
    %v8004 = vadd.f32 %v7963, %v8003
    %v8005 = vpop.f32.mrb[0].mxu0
    %v8006 = vpop.f32.mrb[0].mxu0
    %v8007 = vadd.f32 %v7966, %v8006
    %v8008 = vpop.f32.mrb[0].mxu0
    %8009 = vdwg.mxu0
    %v8010 = vadd.f32 %v7710, %v8004
    %v8011 = vadd.f32 %v7711, %v8007
    %s8012 = scalar_lea.vmem %s17, 1
    %v8013 = vld [vmem:[%s8012] sm:$0x1]
    %v8015 = vlaneseq
    %v8016 = vshrl.u32 %v8015, 7
    %v8017 = vsub.s32 0, %v8016
    %v8018 = vrot.slane %v8013, %v8017
    %v8020 = vadd.f32 %v8010, %v8018
    %v8021 = vadd.f32 %v8011, %v8018
    %v8022 = vadd.f32 %v6807, %v8020
    %v8023 = vadd.f32 %v6808, %v8021
    %s8024 = scalar_lea.vmem %s18, 5
    %v8025 = vld [vmem:[%s8024] sm:$0x1]
    %s8026 = scalar_lea.vmem %s19, 5
    %v8027 = vld [vmem:[%s8026] sm:$0x1]
    %v8028 = vsel %vm150, %v8022, 0.0
    %8029 = vadd.xlane.f32.xlu0 %v8028
    %v8030 = vpop.xlane.xlu0 %8029
    %v8031 = vsel %vm150, %v8023, 0.0
    %8032 = vadd.xlane.f32.xlu0 %v8031
    %v8033 = vpop.xlane.xlu0 %8032
    %v8034 = vmul.f32 %v8030, %v1366
    %v8035 = vmul.f32 %v8033, %v1366
    %v8036 = vsub.f32 %v8022, %v8034
    %v8037 = vsub.f32 %v8023, %v8035
    %v8038 = vmul.f32 %v8036, %v8036
    %v8039 = vmul.f32 %v8037, %v8037
    %v8040 = vsel %vm150, %v8038, 0.0
    %8041 = vadd.xlane.f32.xlu0 %v8040
    %v8042 = vpop.xlane.xlu0 %8041
    %v8043 = vsel %vm150, %v8039, 0.0
    %8044 = vadd.xlane.f32.xlu0 %v8043
    %v8045 = vpop.xlane.xlu0 %8044
    %v8046 = vmul.f32 %v8042, %v1366
    %v8047 = vmul.f32 %v8045, %v1366
    %v8048 = vadd.f32 %v8046, 1e-05
    %v8049 = vadd.f32 %v8047, 1e-05
    %v8050 = vrsqrt.pop %v8048
    %v8051 = vrsqrt.pop %v8049
    %v8052 = vmul.f32 %v8036, %v8050
    %v8053 = vmul.f32 %v8037, %v8051
    %v8055 = vlaneseq
    %v8056 = vshrl.u32 %v8055, 7
    %v8057 = vsub.s32 0, %v8056
    %v8058 = vrot.slane %v8025, %v8057
    %v8060 = vmul.f32 %v8052, %v8058
    %v8061 = vmul.f32 %v8053, %v8058
    %v8063 = vlaneseq
    %v8064 = vshrl.u32 %v8063, 7
    %v8065 = vsub.s32 0, %v8064
    %v8066 = vrot.slane %v8027, %v8065
    %v8068 = vadd.f32 %v8060, %v8066
    %v8069 = vadd.f32 %v8061, %v8066
    %v8070 = vsel %vm150, %v8068, 0.0
    %8071 = vadd.xlane.f32.xlu0 %v8070
    %v8072 = vpop.xlane.xlu0 %8071
    %v8073 = vsel %vm150, %v8069, 0.0
    %8074 = vadd.xlane.f32.xlu0 %v8073
    %v8075 = vpop.xlane.xlu0 %8074
    %v8076 = vmul.f32 %v8072, %v1366
    %v8077 = vmul.f32 %v8075, %v1366
    %v8078 = vsub.f32 %v8068, %v8076
    %v8079 = vsub.f32 %v8069, %v8077
    %v8080 = vmul.f32 %v8078, %v8078
    %v8081 = vmul.f32 %v8079, %v8079
    %v8082 = vsel %vm150, %v8080, 0.0
    %8083 = vadd.xlane.f32.xlu0 %v8082
    %v8084 = vpop.xlane.xlu0 %8083
    %v8085 = vsel %vm150, %v8081, 0.0
    %8086 = vadd.xlane.f32.xlu0 %v8085
    %v8087 = vpop.xlane.xlu0 %8086
    %v8088 = vmul.f32 %v8084, %v1366
    %v8089 = vmul.f32 %v8087, %v1366
    %v8090 = vadd.f32 %v8088, 1e-05
    %v8091 = vadd.f32 %v8089, 1e-05
    %v8092 = vrsqrt.pop %v8090
    %v8093 = vrsqrt.pop %v8091
    %v8094 = vmul.f32 %v8078, %v8092
    %v8095 = vmul.f32 %v8079, %v8093
    %v8096 = vmul.f32 %v8094, %v4108
    %v8097 = vmul.f32 %v8095, %v4108
    %v8098 = vadd.f32 %v8096, %v4116
    %v8099 = vadd.f32 %v8097, %v4116
    %s8100 = scalar_lea.vmem [#allocation7], 16
    %8101 = vst.msk [vmem:[%s8100] sm:$0xff] %vm150, %v8098
    %8102 = vst.msk [vmem:[%s8100 + $0x8] sm:$0xff] %vm150, %v8099
    // Predicated region
    $region98: #{decoder_forward.1} parent=1 // pred_check
      _
    $region99: #{decoder_forward.1} parent=1 // pred_check_branch
      %8104 = sbr.rel (0) target = $region101
    $region100: #{decoder_forward.1} parent=1 // pred_region
      %s8106 = ssub.s32 512, 512
      %8107 = vsyncadd [#allocation4], %s8106
      %s8108 = sshll.u32 [#allocation7], 4
      %s8109 = int_to_ptr.vmem [resolvable:$true] %s8108
      %8114 = dma.vmem_to_hbm [thread:$0]  %s8109, 512, %s22, [#allocation4], 128, 128, 8
    $region101: #{decoder_forward.1} parent=1 // pred_fallthru
      _
    // Predicated region
    $region102: #{decoder_forward.1} parent=1 // pred_check
      _
    $region103: #{decoder_forward.1} parent=1 // pred_check_branch
      %8116 = sbr.rel (0) target = $region105
    $region104: #{decoder_forward.1} parent=1 // pred_region
      %8117 = dma.done [#allocation4], 512
    $region105: #{decoder_forward.1} parent=1 // pred_fallthru
      _
    %8118 = vsyncpa [#allocation3], 1
    %8119 = vsyncpa [#allocation6], 1
    %8120 = vsyncpa [#allocation4], 1

</llo_original>
